<compile_context>
chip_gen: v7x
topology: tpu7x:2x2x1
jax: 0.10.0
libtpu: 0.0.40
codegen_flags: <defaults>
</compile_context>

<pallas_src>
import math

import jax
import jax.numpy as jnp
from jax.experimental import pallas as pl
from jax.experimental.pallas import tpu as pltpu

_INV_SQRT2 = 0.7071067811865476


# ----------------------------------------------------------------------------
# Pallas kernel: one row-tile of a full adapter branch
# ----------------------------------------------------------------------------
def _branch_kernel(x_ref, wp_ref, bp_ref, wl_ref, bl_ref, wm_ref, bm_ref, o_ref):
    # patch-embed conv (kernel==stride) as a matmul + bias (fp32 accumulation)
    h = jnp.dot(x_ref[...], wp_ref[...], preferred_element_type=jnp.float32) + bp_ref[...]
    # lightweight_mlp: Linear + exact-erf GELU (PyTorch nn.GELU default)
    g = jnp.dot(h.astype(jnp.bfloat16), wl_ref[...],
                preferred_element_type=jnp.float32) + bl_ref[...]
    g = 0.5 * g * (1.0 + jax.lax.erf(g * _INV_SQRT2))
    # output projection (mlpN); lane-dense store (last dim O is a 128-multiple)
    o_ref[...] = (jnp.dot(g.astype(jnp.bfloat16), wm_ref[...],
                          preferred_element_type=jnp.float32) + bm_ref[...]
                  ).astype(o_ref.dtype)


def _run_branch(x2d, br):
    N, K = x2d.shape
    Ep, O = br["Ep"], br["O"]

    # Row tile: keep double-buffered (input + output) tiles <= ~12 MiB so the
    # whole working set (plus resident weights) stays well under 48 MiB on any
    # TPU generation (v7x physical VMEM is 64 MiB).
    bytes_per_row = K * x2d.dtype.itemsize + O * 4
    cap = (12 * 1024 * 1024) // (2 * bytes_per_row)
    cap = max(256, min(4096, (cap // 256) * 256))
    tn = N if N <= cap else cap
    grid = (pl.cdiv(N, tn),)

    flops = 2 * N * (K * Ep + Ep * Ep + Ep * O)
    bytes_accessed = int(
        N * K * x2d.dtype.itemsize + N * O * 4
        + 2 * (br["wp"].size + br["wl"].size + br["wm"].size)
        + 4 * (br["bp"].size + br["bl"].size + br["bm"].size))

    return pl.pallas_call(
        _branch_kernel,
        out_shape=jax.ShapeDtypeStruct((N, O), jnp.float32),
        grid=grid,
        in_specs=[
            pl.BlockSpec((tn, K), lambda i: (i, 0)),     # activation rows (pipelined)
            pl.BlockSpec((K, Ep), lambda i: (0, 0)),     # weights: VMEM-resident
            pl.BlockSpec((1, Ep), lambda i: (0, 0)),
            pl.BlockSpec((Ep, Ep), lambda i: (0, 0)),
            pl.BlockSpec((1, Ep), lambda i: (0, 0)),
            pl.BlockSpec((Ep, O), lambda i: (0, 0)),
            pl.BlockSpec((1, O), lambda i: (0, 0)),
        ],
        out_specs=pl.BlockSpec((tn, O), lambda i: (i, 0)),
        compiler_params=pltpu.CompilerParams(
            dimension_semantics=("parallel",),
            vmem_limit_bytes=48 * 1024 * 1024),
        cost_estimate=pl.CostEstimate(
            flops=flops, transcendentals=N * Ep, bytes_accessed=bytes_accessed),
    )(x2d, br["wp"], br["bp"], br["wl"], br["bl"], br["wm"], br["bm"])


# ----------------------------------------------------------------------------
# Plain-JAX glue (FFT prefilter, patchify, parameter init)
# ----------------------------------------------------------------------------
def _fft_highpass(x, rate):
    # TODO(synk): no Pallas FFT primitive; implemented with jnp.fft.
    # Matches torch: fft2(norm='forward'), fftshift, zero centered low-freq
    # block, ifftshift, ifft2(norm='forward').real, abs().  Re(ifft2(M*F)) for
    # real x equals irfft2(M_eff * rfft2(x)) with the Hermitian-averaged mask
    # M_eff(k) = (M(k) + M(-k)) / 2, so rfft2 halves the FFT work exactly.
    B, C, H, W = x.shape
    line = int((H * W * rate) ** 0.5 // 2)

    iy = jnp.arange(H, dtype=jnp.int32)
    fy = jnp.where(iy < (H + 1) // 2, iy, iy - H)          # signed frequencies
    fx = jnp.arange(W // 2 + 1, dtype=jnp.int32)           # rfft half-spectrum

    zy = (fy >= -line) & (fy <= line - 1)                  # M(k)  == 0 along y
    zny = (fy >= -line + 1) & (fy <= line)                 # M(-k) == 0 along y
    zx = (fx >= -line) & (fx <= line - 1)
    znx = (fx >= -line + 1) & (fx <= line)

    drop = 0.5 * (zy[:, None].astype(jnp.float32) * zx[None, :].astype(jnp.float32)
                  + zny[:, None].astype(jnp.float32) * znx[None, :].astype(jnp.float32))
    m_eff = 1.0 - drop                                      # values in {0, 0.5, 1}

    f = jnp.fft.rfft2(x, norm="forward")
    inv = jnp.fft.irfft2(f * m_eff, s=(H, W), norm="forward")
    return jnp.abs(inv).astype(jnp.float32)


def _fft_highpass_ref(x, rate):
    # Direct transcription of the torch reference (complex fft2), for self-check.
    B, C, H, W = x.shape
    line = int((H * W * rate) ** 0.5 // 2)
    mask = jnp.zeros((H, W), jnp.float32)
    mask = mask.at[H // 2 - line:H // 2 + line, W // 2 - line:W // 2 + line].set(1.0)
    f = jnp.fft.fftshift(jnp.fft.fft2(x, norm="forward"), axes=(-2, -1))
    f = f * (1.0 - mask)
    f = jnp.fft.ifftshift(f, axes=(-2, -1))
    return jnp.abs(jnp.fft.ifft2(f, norm="forward").real).astype(jnp.float32)


def _patchify_nhwc(x_nhwc, p):
    # NHWC -> (B*Gh*Gw, p*p*C); inner row ordering is (kh, kw, c), which the
    # conv weights are permuted to at init.
    B, H, W, C = x_nhwc.shape
    Gh, Gw = H // p, W // p
    x = x_nhwc.reshape(B, Gh, p, Gw, p, C)
    x = x.transpose(0, 1, 3, 2, 4, 5)                      # (B, Gh, Gw, p, p, C)
    return x.reshape(B * Gh * Gw, p * p * C), (B, Gh, Gw)


def init_params(key, in_chans=3, embed_dim=16,
                out_embedding_dims=(8, 16, 32, 64), patch_sizes=(4, 8, 16, 32)):
    """Random parameters in PyTorch layouts, converted to fused-matmul layouts.

    The hidden dim E is zero-padded to Ep=128 (lane-dense intermediates); the
    padded columns of wp/bp/wl/bl and padded rows of wm are exactly zero, so
    GELU(0)=0 and the padding never leaks into the output.
    """
    branches = []
    for i, (p, odm) in enumerate(zip(patch_sizes, out_embedding_dims)):
        E = embed_dim * (2 ** i)            # 16, 32, 64, 128
        O = odm * embed_dim                 # 128, 256, 512, 1024
        K = in_chans * p * p                # 48, 192, 768, 3072
        Ep = max(128, E)
        ks = jax.random.split(jax.random.fold_in(key, i), 6)

        # PyTorch-layout parameters
        conv_w = jax.random.normal(ks[0], (E, in_chans, p, p), jnp.float32) / math.sqrt(K)
        conv_b = jax.random.normal(ks[1], (E,), jnp.float32) * 0.02
        lw_w = jax.random.normal(ks[2], (E, E), jnp.float32) / math.sqrt(E)   # (out, in)
        lw_b = jax.random.normal(ks[3], (E,), jnp.float32) * 0.02
        mlp_w = jax.random.normal(ks[4], (O, E), jnp.float32) / math.sqrt(E)  # (out, in)
        mlp_b = jax.random.normal(ks[5], (O,), jnp.float32) * 0.02

        # conv (E,C,p,p) -> matmul rows ordered (kh, kw, c) to match _patchify_nhwc
        wp = jnp.zeros((K, Ep), jnp.float32).at[:, :E].set(
            conv_w.transpose(2, 3, 1, 0).reshape(K, E))
        bp = jnp.zeros((1, Ep), jnp.float32).at[:, :E].set(conv_b[None, :])
        wl = jnp.zeros((Ep, Ep), jnp.float32).at[:E, :E].set(lw_w.T)
        bl = jnp.zeros((1, Ep), jnp.float32).at[:, :E].set(lw_b[None, :])
        wm = jnp.zeros((Ep, O), jnp.float32).at[:E, :].set(mlp_w.T)
        bm = mlp_b[None, :]

        branches.append(dict(
            patch=p, K=K, E=E, Ep=Ep, O=O,
            wp=wp.astype(jnp.bfloat16), bp=bp,
            wl=wl.astype(jnp.bfloat16), bl=bl,
            wm=wm.astype(jnp.bfloat16), bm=bm))
    return tuple(branches)


def high_frequency_adapter(x, params):
    """x: (B, 3, H, W) float32, H/W divisible by 32. Returns 4 NCHW feature maps."""
    hf = _fft_highpass(x, 0.25)                                  # (B,C,H,W) fp32
    # Single NCHW->NHWC conversion + bf16 cast shared by all four branches
    # (halves the traffic of every following patchify transpose).
    hf_nhwc = jnp.transpose(hf, (0, 2, 3, 1)).astype(jnp.bfloat16)
    outs = []
    for br in params:
        x2d, (B, Gh, Gw) = _patchify_nhwc(hf_nhwc, br["patch"])
        y = _run_branch(x2d, br)                                 # (N, O) fp32
        y = y.reshape(B, Gh, Gw, -1).transpose(0, 3, 1, 2)       # == permute(0,3,1,2)
        outs.append(y)
    return tuple(outs)


def _branch_reference(x2d, br):
    # Pure-JAX reference of the fused kernel (same bf16 inputs / fp32 accum).
    h = jnp.dot(x2d, br["wp"], preferred_element_type=jnp.float32) + br["bp"]
    g = jnp.dot(h.astype(jnp.bfloat16), br["wl"],
                preferred_element_type=jnp.float32) + br["bl"]
    g = 0.5 * g * (1.0 + jax.lax.erf(g * _INV_SQRT2))
    return jnp.dot(g.astype(jnp.bfloat16), br["wm"],
                   preferred_element_type=jnp.float32) + br["bm"]


if __name__ == "__main__":
    key = jax.random.PRNGKey(0)
    kx, kp = jax.random.split(key)

    B, C, H, W = 2, 3, 64, 64   # small, divisible by all patch sizes (4, 8, 16, 32)
    x = jax.random.normal(kx, (B, C, H, W), jnp.float32)
    params = init_params(kp)

    fwd = jax.jit(lambda inp: high_frequency_adapter(inp, params))
    outs = jax.block_until_ready(fwd(x))

    expected = [
        (B, 8 * 16, H // 4, W // 4),
        (B, 16 * 16, H // 8, W // 8),
        (B, 32 * 16, H // 16, W // 16),
        (B, 64 * 16, H // 32, W // 32),
    ]
    assert all(o.shape == e for o, e in zip(outs, expected)), [o.shape for o in outs]
    assert all(bool(jnp.all(jnp.isfinite(o))) for o in outs)

    # Self-check 1: rfft2-based high-pass matches the torch-style complex path.
    hf_fast = _fft_highpass(x, 0.25)
    hf_ref = _fft_highpass_ref(x, 0.25)
    assert bool(jnp.allclose(hf_fast, hf_ref, atol=1e-3, rtol=1e-3)), \
        float(jnp.max(jnp.abs(hf_fast - hf_ref)))

    # Self-check 2: each fused Pallas branch matches a pure-JAX reference.
    hf_nhwc = jnp.transpose(hf_fast, (0, 2, 3, 1)).astype(jnp.bfloat16)
    for bi, br in enumerate(params):
        x2d, _ = _patchify_nhwc(hf_nhwc, br["patch"])
        y_k = _run_branch(x2d, br)
        y_r = _branch_reference(x2d, br)
        assert bool(jnp.allclose(y_k, y_r, atol=2e-2, rtol=2e-2)), \
            (bi, float(jnp.max(jnp.abs(y_k - y_r))))

    print("KERNEL_OK")
</pallas_src>

<mosaic_0001>
module attributes {stable_mosaic.version = 11 : i64} {
  func.func @_branch_kernel(%arg0: i32, %arg1: memref<8x3072xbf16, #tpu.memory_space<vmem>>, %arg2: memref<3072x128xbf16, #tpu.memory_space<vmem>>, %arg3: memref<1x128xf32, #tpu.memory_space<vmem>>, %arg4: memref<128x128xbf16, #tpu.memory_space<vmem>>, %arg5: memref<1x128xf32, #tpu.memory_space<vmem>>, %arg6: memref<128x1024xbf16, #tpu.memory_space<vmem>>, %arg7: memref<1x1024xf32, #tpu.memory_space<vmem>>, %arg8: memref<8x1024xf32, #tpu.memory_space<vmem>>) attributes {dimension_semantics = [#tpu.dimension_semantics<parallel>], iteration_bounds = array<i64: 1>, scalar_prefetch = 0 : i64, scratch_operands = 0 : i64, tpu.core_type = #tpu.core_type<tc>, window_params = [{transform_indices = @transform_0, window_bounds = array<i64: 8, 3072>}, {pipeline_mode = #tpu.pipeline_mode<synchronous>, transform_indices = @transform_1, window_bounds = array<i64: 3072, 128>}, {pipeline_mode = #tpu.pipeline_mode<synchronous>, transform_indices = @transform_2, window_bounds = array<i64: 1, 128>}, {pipeline_mode = #tpu.pipeline_mode<synchronous>, transform_indices = @transform_3, window_bounds = array<i64: 128, 128>}, {pipeline_mode = #tpu.pipeline_mode<synchronous>, transform_indices = @transform_4, window_bounds = array<i64: 1, 128>}, {pipeline_mode = #tpu.pipeline_mode<synchronous>, transform_indices = @transform_5, window_bounds = array<i64: 128, 1024>}, {pipeline_mode = #tpu.pipeline_mode<synchronous>, transform_indices = @transform_6, window_bounds = array<i64: 1, 1024>}, {transform_indices = @transform_7, window_bounds = array<i64: 8, 1024>}]} {
    %c0 = arith.constant 0 : index
    %c0_0 = arith.constant 0 : index
    %0 = vector.load %arg1[%c0, %c0_0] : memref<8x3072xbf16, #tpu.memory_space<vmem>>, vector<8x3072xbf16>
    %c0_1 = arith.constant 0 : index
    %c0_2 = arith.constant 0 : index
    %1 = vector.load %arg2[%c0_1, %c0_2] : memref<3072x128xbf16, #tpu.memory_space<vmem>>, vector<3072x128xbf16>
    %cst = arith.constant dense<0.000000e+00> : vector<8x128xf32>
    %2 = tpu.matmul %0, %1, %cst {dimension_numbers = #tpu.dot_dimension_numbers<[1], [0], [0], [1], [0, 0, 1, 1], [], []>} : vector<8x3072xbf16>, vector<3072x128xbf16>, vector<8x128xf32> -> vector<8x128xf32>
    %c0_3 = arith.constant 0 : index
    %c0_4 = arith.constant 0 : index
    %3 = vector.load %arg3[%c0_3, %c0_4] : memref<1x128xf32, #tpu.memory_space<vmem>>, vector<1x128xf32>
    %4 = vector.broadcast %3 : vector<1x128xf32> to vector<8x128xf32>
    %5 = arith.addf %2, %4 : vector<8x128xf32>
    %6 = arith.truncf %5 : vector<8x128xf32> to vector<8x128xbf16>
    %c0_5 = arith.constant 0 : index
    %c0_6 = arith.constant 0 : index
    %7 = vector.load %arg4[%c0_5, %c0_6] : memref<128x128xbf16, #tpu.memory_space<vmem>>, vector<128x128xbf16>
    %cst_7 = arith.constant dense<0.000000e+00> : vector<8x128xf32>
    %8 = tpu.matmul %6, %7, %cst_7 {dimension_numbers = #tpu.dot_dimension_numbers<[1], [0], [0], [1], [0, 0, 1, 1], [], []>} : vector<8x128xbf16>, vector<128x128xbf16>, vector<8x128xf32> -> vector<8x128xf32>
    %c0_8 = arith.constant 0 : index
    %c0_9 = arith.constant 0 : index
    %9 = vector.load %arg5[%c0_8, %c0_9] : memref<1x128xf32, #tpu.memory_space<vmem>>, vector<1x128xf32>
    %10 = vector.broadcast %9 : vector<1x128xf32> to vector<8x128xf32>
    %11 = arith.addf %8, %10 : vector<8x128xf32>
    %cst_10 = arith.constant 5.000000e-01 : f32
    %12 = vector.broadcast %cst_10 : f32 to vector<8x128xf32>
    %13 = arith.mulf %12, %11 : vector<8x128xf32>
    %cst_11 = arith.constant 0.707106769 : f32
    %14 = vector.broadcast %cst_11 : f32 to vector<8x128xf32>
    %15 = arith.mulf %11, %14 : vector<8x128xf32>
    %16 = math.erf %15 : vector<8x128xf32>
    %cst_12 = arith.constant 1.000000e+00 : f32
    %17 = vector.broadcast %cst_12 : f32 to vector<8x128xf32>
    %18 = arith.addf %17, %16 : vector<8x128xf32>
    %19 = arith.mulf %13, %18 : vector<8x128xf32>
    %20 = arith.truncf %19 : vector<8x128xf32> to vector<8x128xbf16>
    %c0_13 = arith.constant 0 : index
    %c0_14 = arith.constant 0 : index
    %21 = vector.load %arg6[%c0_13, %c0_14] : memref<128x1024xbf16, #tpu.memory_space<vmem>>, vector<128x1024xbf16>
    %cst_15 = arith.constant dense<0.000000e+00> : vector<8x1024xf32>
    %22 = tpu.matmul %20, %21, %cst_15 {dimension_numbers = #tpu.dot_dimension_numbers<[1], [0], [0], [1], [0, 0, 1, 1], [], []>} : vector<8x128xbf16>, vector<128x1024xbf16>, vector<8x1024xf32> -> vector<8x1024xf32>
    %c0_16 = arith.constant 0 : index
    %c0_17 = arith.constant 0 : index
    %23 = vector.load %arg7[%c0_16, %c0_17] : memref<1x1024xf32, #tpu.memory_space<vmem>>, vector<1x1024xf32>
    %24 = vector.broadcast %23 : vector<1x1024xf32> to vector<8x1024xf32>
    %25 = arith.addf %22, %24 : vector<8x1024xf32>
    %c0_18 = arith.constant 0 : index
    %c0_19 = arith.constant 0 : index
    %26 = vector.load %arg8[%c0_18, %c0_19] : memref<8x1024xf32, #tpu.memory_space<vmem>>, vector<8x1024xf32>
    tpu.vector_store %arg8[%c0_18, %c0_19], %25 {strides = array<i32>} : memref<8x1024xf32, #tpu.memory_space<vmem>>, vector<8x1024xf32>,
    return
  }
  func.func @transform_0(%arg0: i32) -> (i32, i32) {
    %c0_i32 = arith.constant 0 : i32
    %c0_i32_0 = arith.constant 0 : i32
    return %arg0, %c0_i32 : i32, i32
  }
  func.func @transform_1(%arg0: i32) -> (i32, i32) {
    %c0_i32 = arith.constant 0 : i32
    %c0_i32_0 = arith.constant 0 : i32
    %c0_i32_1 = arith.constant 0 : i32
    return %c0_i32, %c0_i32_0 : i32, i32
  }
  func.func @transform_2(%arg0: i32) -> (i32, i32) {
    %c0_i32 = arith.constant 0 : i32
    %c0_i32_0 = arith.constant 0 : i32
    %c0_i32_1 = arith.constant 0 : i32
    return %c0_i32, %c0_i32_0 : i32, i32
  }
  func.func @transform_3(%arg0: i32) -> (i32, i32) {
    %c0_i32 = arith.constant 0 : i32
    %c0_i32_0 = arith.constant 0 : i32
    %c0_i32_1 = arith.constant 0 : i32
    return %c0_i32, %c0_i32_0 : i32, i32
  }
  func.func @transform_4(%arg0: i32) -> (i32, i32) {
    %c0_i32 = arith.constant 0 : i32
    %c0_i32_0 = arith.constant 0 : i32
    %c0_i32_1 = arith.constant 0 : i32
    return %c0_i32, %c0_i32_0 : i32, i32
  }
  func.func @transform_5(%arg0: i32) -> (i32, i32) {
    %c0_i32 = arith.constant 0 : i32
    %c0_i32_0 = arith.constant 0 : i32
    %c0_i32_1 = arith.constant 0 : i32
    return %c0_i32, %c0_i32_0 : i32, i32
  }
  func.func @transform_6(%arg0: i32) -> (i32, i32) {
    %c0_i32 = arith.constant 0 : i32
    %c0_i32_0 = arith.constant 0 : i32
    %c0_i32_1 = arith.constant 0 : i32
    return %c0_i32, %c0_i32_0 : i32, i32
  }
  func.func @transform_7(%arg0: i32) -> (i32, i32) {
    %c0_i32 = arith.constant 0 : i32
    %c0_i32_0 = arith.constant 0 : i32
    return %arg0, %c0_i32 : i32, i32
  }
}

module attributes {stable_mosaic.version = 11 : i64} {
  func.func @_branch_kernel(%arg0: i32, %arg1: memref<32x768xbf16, #tpu.memory_space<vmem>>, %arg2: memref<768x128xbf16, #tpu.memory_space<vmem>>, %arg3: memref<1x128xf32, #tpu.memory_space<vmem>>, %arg4: memref<128x128xbf16, #tpu.memory_space<vmem>>, %arg5: memref<1x128xf32, #tpu.memory_space<vmem>>, %arg6: memref<128x512xbf16, #tpu.memory_space<vmem>>, %arg7: memref<1x512xf32, #tpu.memory_space<vmem>>, %arg8: memref<32x512xf32, #tpu.memory_space<vmem>>) attributes {dimension_semantics = [#tpu.dimension_semantics<parallel>], iteration_bounds = array<i64: 1>, scalar_prefetch = 0 : i64, scratch_operands = 0 : i64, tpu.core_type = #tpu.core_type<tc>, window_params = [{transform_indices = @transform_0, window_bounds = array<i64: 32, 768>}, {pipeline_mode = #tpu.pipeline_mode<synchronous>, transform_indices = @transform_1, window_bounds = array<i64: 768, 128>}, {pipeline_mode = #tpu.pipeline_mode<synchronous>, transform_indices = @transform_2, window_bounds = array<i64: 1, 128>}, {pipeline_mode = #tpu.pipeline_mode<synchronous>, transform_indices = @transform_3, window_bounds = array<i64: 128, 128>}, {pipeline_mode = #tpu.pipeline_mode<synchronous>, transform_indices = @transform_4, window_bounds = array<i64: 1, 128>}, {pipeline_mode = #tpu.pipeline_mode<synchronous>, transform_indices = @transform_5, window_bounds = array<i64: 128, 512>}, {pipeline_mode = #tpu.pipeline_mode<synchronous>, transform_indices = @transform_6, window_bounds = array<i64: 1, 512>}, {transform_indices = @transform_7, window_bounds = array<i64: 32, 512>}]} {
    %c0 = arith.constant 0 : index
    %c0_0 = arith.constant 0 : index
    %0 = vector.load %arg1[%c0, %c0_0] : memref<32x768xbf16, #tpu.memory_space<vmem>>, vector<32x768xbf16>
    %c0_1 = arith.constant 0 : index
    %c0_2 = arith.constant 0 : index
    %1 = vector.load %arg2[%c0_1, %c0_2] : memref<768x128xbf16, #tpu.memory_space<vmem>>, vector<768x128xbf16>
    %cst = arith.constant dense<0.000000e+00> : vector<32x128xf32>
    %2 = tpu.matmul %0, %1, %cst {dimension_numbers = #tpu.dot_dimension_numbers<[1], [0], [0], [1], [0, 0, 1, 1], [], []>} : vector<32x768xbf16>, vector<768x128xbf16>, vector<32x128xf32> -> vector<32x128xf32>
    %c0_3 = arith.constant 0 : index
    %c0_4 = arith.constant 0 : index
    %3 = vector.load %arg3[%c0_3, %c0_4] : memref<1x128xf32, #tpu.memory_space<vmem>>, vector<1x128xf32>
    %4 = vector.broadcast %3 : vector<1x128xf32> to vector<32x128xf32>
    %5 = arith.addf %2, %4 : vector<32x128xf32>
    %6 = arith.truncf %5 : vector<32x128xf32> to vector<32x128xbf16>
    %c0_5 = arith.constant 0 : index
    %c0_6 = arith.constant 0 : index
    %7 = vector.load %arg4[%c0_5, %c0_6] : memref<128x128xbf16, #tpu.memory_space<vmem>>, vector<128x128xbf16>
    %cst_7 = arith.constant dense<0.000000e+00> : vector<32x128xf32>
    %8 = tpu.matmul %6, %7, %cst_7 {dimension_numbers = #tpu.dot_dimension_numbers<[1], [0], [0], [1], [0, 0, 1, 1], [], []>} : vector<32x128xbf16>, vector<128x128xbf16>, vector<32x128xf32> -> vector<32x128xf32>
    %c0_8 = arith.constant 0 : index
    %c0_9 = arith.constant 0 : index
    %9 = vector.load %arg5[%c0_8, %c0_9] : memref<1x128xf32, #tpu.memory_space<vmem>>, vector<1x128xf32>
    %10 = vector.broadcast %9 : vector<1x128xf32> to vector<32x128xf32>
    %11 = arith.addf %8, %10 : vector<32x128xf32>
    %cst_10 = arith.constant 5.000000e-01 : f32
    %12 = vector.broadcast %cst_10 : f32 to vector<32x128xf32>
    %13 = arith.mulf %12, %11 : vector<32x128xf32>
    %cst_11 = arith.constant 0.707106769 : f32
    %14 = vector.broadcast %cst_11 : f32 to vector<32x128xf32>
    %15 = arith.mulf %11, %14 : vector<32x128xf32>
    %16 = math.erf %15 : vector<32x128xf32>
    %cst_12 = arith.constant 1.000000e+00 : f32
    %17 = vector.broadcast %cst_12 : f32 to vector<32x128xf32>
    %18 = arith.addf %17, %16 : vector<32x128xf32>
    %19 = arith.mulf %13, %18 : vector<32x128xf32>
    %20 = arith.truncf %19 : vector<32x128xf32> to vector<32x128xbf16>
    %c0_13 = arith.constant 0 : index
    %c0_14 = arith.constant 0 : index
    %21 = vector.load %arg6[%c0_13, %c0_14] : memref<128x512xbf16, #tpu.memory_space<vmem>>, vector<128x512xbf16>
    %cst_15 = arith.constant dense<0.000000e+00> : vector<32x512xf32>
    %22 = tpu.matmul %20, %21, %cst_15 {dimension_numbers = #tpu.dot_dimension_numbers<[1], [0], [0], [1], [0, 0, 1, 1], [], []>} : vector<32x128xbf16>, vector<128x512xbf16>, vector<32x512xf32> -> vector<32x512xf32>
    %c0_16 = arith.constant 0 : index
    %c0_17 = arith.constant 0 : index
    %23 = vector.load %arg7[%c0_16, %c0_17] : memref<1x512xf32, #tpu.memory_space<vmem>>, vector<1x512xf32>
    %24 = vector.broadcast %23 : vector<1x512xf32> to vector<32x512xf32>
    %25 = arith.addf %22, %24 : vector<32x512xf32>
    %c0_18 = arith.constant 0 : index
    %c0_19 = arith.constant 0 : index
    %26 = vector.load %arg8[%c0_18, %c0_19] : memref<32x512xf32, #tpu.memory_space<vmem>>, vector<32x512xf32>
    tpu.vector_store %arg8[%c0_18, %c0_19], %25 {strides = array<i32>} : memref<32x512xf32, #tpu.memory_space<vmem>>, vector<32x512xf32>,
    return
  }
  func.func @transform_0(%arg0: i32) -> (i32, i32) {
    %c0_i32 = arith.constant 0 : i32
    %c0_i32_0 = arith.constant 0 : i32
    return %arg0, %c0_i32 : i32, i32
  }
  func.func @transform_1(%arg0: i32) -> (i32, i32) {
    %c0_i32 = arith.constant 0 : i32
    %c0_i32_0 = arith.constant 0 : i32
    %c0_i32_1 = arith.constant 0 : i32
    return %c0_i32, %c0_i32_0 : i32, i32
  }
  func.func @transform_2(%arg0: i32) -> (i32, i32) {
    %c0_i32 = arith.constant 0 : i32
    %c0_i32_0 = arith.constant 0 : i32
    %c0_i32_1 = arith.constant 0 : i32
    return %c0_i32, %c0_i32_0 : i32, i32
  }
  func.func @transform_3(%arg0: i32) -> (i32, i32) {
    %c0_i32 = arith.constant 0 : i32
    %c0_i32_0 = arith.constant 0 : i32
    %c0_i32_1 = arith.constant 0 : i32
    return %c0_i32, %c0_i32_0 : i32, i32
  }
  func.func @transform_4(%arg0: i32) -> (i32, i32) {
    %c0_i32 = arith.constant 0 : i32
    %c0_i32_0 = arith.constant 0 : i32
    %c0_i32_1 = arith.constant 0 : i32
    return %c0_i32, %c0_i32_0 : i32, i32
  }
  func.func @transform_5(%arg0: i32) -> (i32, i32) {
    %c0_i32 = arith.constant 0 : i32
    %c0_i32_0 = arith.constant 0 : i32
    %c0_i32_1 = arith.constant 0 : i32
    return %c0_i32, %c0_i32_0 : i32, i32
  }
  func.func @transform_6(%arg0: i32) -> (i32, i32) {
    %c0_i32 = arith.constant 0 : i32
    %c0_i32_0 = arith.constant 0 : i32
    %c0_i32_1 = arith.constant 0 : i32
    return %c0_i32, %c0_i32_0 : i32, i32
  }
  func.func @transform_7(%arg0: i32) -> (i32, i32) {
    %c0_i32 = arith.constant 0 : i32
    %c0_i32_0 = arith.constant 0 : i32
    return %arg0, %c0_i32 : i32, i32
  }
}

module attributes {stable_mosaic.version = 11 : i64} {
  func.func @_branch_kernel(%arg0: i32, %arg1: memref<512x48xbf16, #tpu.memory_space<vmem>>, %arg2: memref<48x128xbf16, #tpu.memory_space<vmem>>, %arg3: memref<1x128xf32, #tpu.memory_space<vmem>>, %arg4: memref<128x128xbf16, #tpu.memory_space<vmem>>, %arg5: memref<1x128xf32, #tpu.memory_space<vmem>>, %arg6: memref<128x128xbf16, #tpu.memory_space<vmem>>, %arg7: memref<1x128xf32, #tpu.memory_space<vmem>>, %arg8: memref<512x128xf32, #tpu.memory_space<vmem>>) attributes {dimension_semantics = [#tpu.dimension_semantics<parallel>], iteration_bounds = array<i64: 1>, scalar_prefetch = 0 : i64, scratch_operands = 0 : i64, tpu.core_type = #tpu.core_type<tc>, window_params = [{transform_indices = @transform_0, window_bounds = array<i64: 512, 48>}, {pipeline_mode = #tpu.pipeline_mode<synchronous>, transform_indices = @transform_1, window_bounds = array<i64: 48, 128>}, {pipeline_mode = #tpu.pipeline_mode<synchronous>, transform_indices = @transform_2, window_bounds = array<i64: 1, 128>}, {pipeline_mode = #tpu.pipeline_mode<synchronous>, transform_indices = @transform_3, window_bounds = array<i64: 128, 128>}, {pipeline_mode = #tpu.pipeline_mode<synchronous>, transform_indices = @transform_4, window_bounds = array<i64: 1, 128>}, {pipeline_mode = #tpu.pipeline_mode<synchronous>, transform_indices = @transform_5, window_bounds = array<i64: 128, 128>}, {pipeline_mode = #tpu.pipeline_mode<synchronous>, transform_indices = @transform_6, window_bounds = array<i64: 1, 128>}, {transform_indices = @transform_7, window_bounds = array<i64: 512, 128>}]} {
    %c0 = arith.constant 0 : index
    %c0_0 = arith.constant 0 : index
    %0 = vector.load %arg1[%c0, %c0_0] : memref<512x48xbf16, #tpu.memory_space<vmem>>, vector<512x48xbf16>
    %c0_1 = arith.constant 0 : index
    %c0_2 = arith.constant 0 : index
    %1 = vector.load %arg2[%c0_1, %c0_2] : memref<48x128xbf16, #tpu.memory_space<vmem>>, vector<48x128xbf16>
    %cst = arith.constant dense<0.000000e+00> : vector<512x128xf32>
    %2 = tpu.matmul %0, %1, %cst {dimension_numbers = #tpu.dot_dimension_numbers<[1], [0], [0], [1], [0, 0, 1, 1], [], []>} : vector<512x48xbf16>, vector<48x128xbf16>, vector<512x128xf32> -> vector<512x128xf32>
    %c0_3 = arith.constant 0 : index
    %c0_4 = arith.constant 0 : index
    %3 = vector.load %arg3[%c0_3, %c0_4] : memref<1x128xf32, #tpu.memory_space<vmem>>, vector<1x128xf32>
    %4 = vector.broadcast %3 : vector<1x128xf32> to vector<512x128xf32>
    %5 = arith.addf %2, %4 : vector<512x128xf32>
    %6 = arith.truncf %5 : vector<512x128xf32> to vector<512x128xbf16>
    %c0_5 = arith.constant 0 : index
    %c0_6 = arith.constant 0 : index
    %7 = vector.load %arg4[%c0_5, %c0_6] : memref<128x128xbf16, #tpu.memory_space<vmem>>, vector<128x128xbf16>
    %cst_7 = arith.constant dense<0.000000e+00> : vector<512x128xf32>
    %8 = tpu.matmul %6, %7, %cst_7 {dimension_numbers = #tpu.dot_dimension_numbers<[1], [0], [0], [1], [0, 0, 1, 1], [], []>} : vector<512x128xbf16>, vector<128x128xbf16>, vector<512x128xf32> -> vector<512x128xf32>
    %c0_8 = arith.constant 0 : index
    %c0_9 = arith.constant 0 : index
    %9 = vector.load %arg5[%c0_8, %c0_9] : memref<1x128xf32, #tpu.memory_space<vmem>>, vector<1x128xf32>
    %10 = vector.broadcast %9 : vector<1x128xf32> to vector<512x128xf32>
    %11 = arith.addf %8, %10 : vector<512x128xf32>
    %cst_10 = arith.constant 5.000000e-01 : f32
    %12 = vector.broadcast %cst_10 : f32 to vector<512x128xf32>
    %13 = arith.mulf %12, %11 : vector<512x128xf32>
    %cst_11 = arith.constant 0.707106769 : f32
    %14 = vector.broadcast %cst_11 : f32 to vector<512x128xf32>
    %15 = arith.mulf %11, %14 : vector<512x128xf32>
    %16 = math.erf %15 : vector<512x128xf32>
    %cst_12 = arith.constant 1.000000e+00 : f32
    %17 = vector.broadcast %cst_12 : f32 to vector<512x128xf32>
    %18 = arith.addf %17, %16 : vector<512x128xf32>
    %19 = arith.mulf %13, %18 : vector<512x128xf32>
    %20 = arith.truncf %19 : vector<512x128xf32> to vector<512x128xbf16>
    %c0_13 = arith.constant 0 : index
    %c0_14 = arith.constant 0 : index
    %21 = vector.load %arg6[%c0_13, %c0_14] : memref<128x128xbf16, #tpu.memory_space<vmem>>, vector<128x128xbf16>
    %cst_15 = arith.constant dense<0.000000e+00> : vector<512x128xf32>
    %22 = tpu.matmul %20, %21, %cst_15 {dimension_numbers = #tpu.dot_dimension_numbers<[1], [0], [0], [1], [0, 0, 1, 1], [], []>} : vector<512x128xbf16>, vector<128x128xbf16>, vector<512x128xf32> -> vector<512x128xf32>
    %c0_16 = arith.constant 0 : index
    %c0_17 = arith.constant 0 : index
    %23 = vector.load %arg7[%c0_16, %c0_17] : memref<1x128xf32, #tpu.memory_space<vmem>>, vector<1x128xf32>
    %24 = vector.broadcast %23 : vector<1x128xf32> to vector<512x128xf32>
    %25 = arith.addf %22, %24 : vector<512x128xf32>
    %c0_18 = arith.constant 0 : index
    %c0_19 = arith.constant 0 : index
    %26 = vector.load %arg8[%c0_18, %c0_19] : memref<512x128xf32, #tpu.memory_space<vmem>>, vector<512x128xf32>
    tpu.vector_store %arg8[%c0_18, %c0_19], %25 {strides = array<i32>} : memref<512x128xf32, #tpu.memory_space<vmem>>, vector<512x128xf32>,
    return
  }
  func.func @transform_0(%arg0: i32) -> (i32, i32) {
    %c0_i32 = arith.constant 0 : i32
    %c0_i32_0 = arith.constant 0 : i32
    return %arg0, %c0_i32 : i32, i32
  }
  func.func @transform_1(%arg0: i32) -> (i32, i32) {
    %c0_i32 = arith.constant 0 : i32
    %c0_i32_0 = arith.constant 0 : i32
    %c0_i32_1 = arith.constant 0 : i32
    return %c0_i32, %c0_i32_0 : i32, i32
  }
  func.func @transform_2(%arg0: i32) -> (i32, i32) {
    %c0_i32 = arith.constant 0 : i32
    %c0_i32_0 = arith.constant 0 : i32
    %c0_i32_1 = arith.constant 0 : i32
    return %c0_i32, %c0_i32_0 : i32, i32
  }
  func.func @transform_3(%arg0: i32) -> (i32, i32) {
    %c0_i32 = arith.constant 0 : i32
    %c0_i32_0 = arith.constant 0 : i32
    %c0_i32_1 = arith.constant 0 : i32
    return %c0_i32, %c0_i32_0 : i32, i32
  }
  func.func @transform_4(%arg0: i32) -> (i32, i32) {
    %c0_i32 = arith.constant 0 : i32
    %c0_i32_0 = arith.constant 0 : i32
    %c0_i32_1 = arith.constant 0 : i32
    return %c0_i32, %c0_i32_0 : i32, i32
  }
  func.func @transform_5(%arg0: i32) -> (i32, i32) {
    %c0_i32 = arith.constant 0 : i32
    %c0_i32_0 = arith.constant 0 : i32
    %c0_i32_1 = arith.constant 0 : i32
    return %c0_i32, %c0_i32_0 : i32, i32
  }
  func.func @transform_6(%arg0: i32) -> (i32, i32) {
    %c0_i32 = arith.constant 0 : i32
    %c0_i32_0 = arith.constant 0 : i32
    %c0_i32_1 = arith.constant 0 : i32
    return %c0_i32, %c0_i32_0 : i32, i32
  }
  func.func @transform_7(%arg0: i32) -> (i32, i32) {
    %c0_i32 = arith.constant 0 : i32
    %c0_i32_0 = arith.constant 0 : i32
    return %arg0, %c0_i32 : i32, i32
  }
}

module attributes {stable_mosaic.version = 11 : i64} {
  func.func @_branch_kernel(%arg0: i32, %arg1: memref<128x192xbf16, #tpu.memory_space<vmem>>, %arg2: memref<192x128xbf16, #tpu.memory_space<vmem>>, %arg3: memref<1x128xf32, #tpu.memory_space<vmem>>, %arg4: memref<128x128xbf16, #tpu.memory_space<vmem>>, %arg5: memref<1x128xf32, #tpu.memory_space<vmem>>, %arg6: memref<128x256xbf16, #tpu.memory_space<vmem>>, %arg7: memref<1x256xf32, #tpu.memory_space<vmem>>, %arg8: memref<128x256xf32, #tpu.memory_space<vmem>>) attributes {dimension_semantics = [#tpu.dimension_semantics<parallel>], iteration_bounds = array<i64: 1>, scalar_prefetch = 0 : i64, scratch_operands = 0 : i64, tpu.core_type = #tpu.core_type<tc>, window_params = [{transform_indices = @transform_0, window_bounds = array<i64: 128, 192>}, {pipeline_mode = #tpu.pipeline_mode<synchronous>, transform_indices = @transform_1, window_bounds = array<i64: 192, 128>}, {pipeline_mode = #tpu.pipeline_mode<synchronous>, transform_indices = @transform_2, window_bounds = array<i64: 1, 128>}, {pipeline_mode = #tpu.pipeline_mode<synchronous>, transform_indices = @transform_3, window_bounds = array<i64: 128, 128>}, {pipeline_mode = #tpu.pipeline_mode<synchronous>, transform_indices = @transform_4, window_bounds = array<i64: 1, 128>}, {pipeline_mode = #tpu.pipeline_mode<synchronous>, transform_indices = @transform_5, window_bounds = array<i64: 128, 256>}, {pipeline_mode = #tpu.pipeline_mode<synchronous>, transform_indices = @transform_6, window_bounds = array<i64: 1, 256>}, {transform_indices = @transform_7, window_bounds = array<i64: 128, 256>}]} {
    %c0 = arith.constant 0 : index
    %c0_0 = arith.constant 0 : index
    %0 = vector.load %arg1[%c0, %c0_0] : memref<128x192xbf16, #tpu.memory_space<vmem>>, vector<128x192xbf16>
    %c0_1 = arith.constant 0 : index
    %c0_2 = arith.constant 0 : index
    %1 = vector.load %arg2[%c0_1, %c0_2] : memref<192x128xbf16, #tpu.memory_space<vmem>>, vector<192x128xbf16>
    %cst = arith.constant dense<0.000000e+00> : vector<128x128xf32>
    %2 = tpu.matmul %0, %1, %cst {dimension_numbers = #tpu.dot_dimension_numbers<[1], [0], [0], [1], [0, 0, 1, 1], [], []>} : vector<128x192xbf16>, vector<192x128xbf16>, vector<128x128xf32> -> vector<128x128xf32>
    %c0_3 = arith.constant 0 : index
    %c0_4 = arith.constant 0 : index
    %3 = vector.load %arg3[%c0_3, %c0_4] : memref<1x128xf32, #tpu.memory_space<vmem>>, vector<1x128xf32>
    %4 = vector.broadcast %3 : vector<1x128xf32> to vector<128x128xf32>
    %5 = arith.addf %2, %4 : vector<128x128xf32>
    %6 = arith.truncf %5 : vector<128x128xf32> to vector<128x128xbf16>
    %c0_5 = arith.constant 0 : index
    %c0_6 = arith.constant 0 : index
    %7 = vector.load %arg4[%c0_5, %c0_6] : memref<128x128xbf16, #tpu.memory_space<vmem>>, vector<128x128xbf16>
    %cst_7 = arith.constant dense<0.000000e+00> : vector<128x128xf32>
    %8 = tpu.matmul %6, %7, %cst_7 {dimension_numbers = #tpu.dot_dimension_numbers<[1], [0], [0], [1], [0, 0, 1, 1], [], []>} : vector<128x128xbf16>, vector<128x128xbf16>, vector<128x128xf32> -> vector<128x128xf32>
    %c0_8 = arith.constant 0 : index
    %c0_9 = arith.constant 0 : index
    %9 = vector.load %arg5[%c0_8, %c0_9] : memref<1x128xf32, #tpu.memory_space<vmem>>, vector<1x128xf32>
    %10 = vector.broadcast %9 : vector<1x128xf32> to vector<128x128xf32>
    %11 = arith.addf %8, %10 : vector<128x128xf32>
    %cst_10 = arith.constant 5.000000e-01 : f32
    %12 = vector.broadcast %cst_10 : f32 to vector<128x128xf32>
    %13 = arith.mulf %12, %11 : vector<128x128xf32>
    %cst_11 = arith.constant 0.707106769 : f32
    %14 = vector.broadcast %cst_11 : f32 to vector<128x128xf32>
    %15 = arith.mulf %11, %14 : vector<128x128xf32>
    %16 = math.erf %15 : vector<128x128xf32>
    %cst_12 = arith.constant 1.000000e+00 : f32
    %17 = vector.broadcast %cst_12 : f32 to vector<128x128xf32>
    %18 = arith.addf %17, %16 : vector<128x128xf32>
    %19 = arith.mulf %13, %18 : vector<128x128xf32>
    %20 = arith.truncf %19 : vector<128x128xf32> to vector<128x128xbf16>
    %c0_13 = arith.constant 0 : index
    %c0_14 = arith.constant 0 : index
    %21 = vector.load %arg6[%c0_13, %c0_14] : memref<128x256xbf16, #tpu.memory_space<vmem>>, vector<128x256xbf16>
    %cst_15 = arith.constant dense<0.000000e+00> : vector<128x256xf32>
    %22 = tpu.matmul %20, %21, %cst_15 {dimension_numbers = #tpu.dot_dimension_numbers<[1], [0], [0], [1], [0, 0, 1, 1], [], []>} : vector<128x128xbf16>, vector<128x256xbf16>, vector<128x256xf32> -> vector<128x256xf32>
    %c0_16 = arith.constant 0 : index
    %c0_17 = arith.constant 0 : index
    %23 = vector.load %arg7[%c0_16, %c0_17] : memref<1x256xf32, #tpu.memory_space<vmem>>, vector<1x256xf32>
    %24 = vector.broadcast %23 : vector<1x256xf32> to vector<128x256xf32>
    %25 = arith.addf %22, %24 : vector<128x256xf32>
    %c0_18 = arith.constant 0 : index
    %c0_19 = arith.constant 0 : index
    %26 = vector.load %arg8[%c0_18, %c0_19] : memref<128x256xf32, #tpu.memory_space<vmem>>, vector<128x256xf32>
    tpu.vector_store %arg8[%c0_18, %c0_19], %25 {strides = array<i32>} : memref<128x256xf32, #tpu.memory_space<vmem>>, vector<128x256xf32>,
    return
  }
  func.func @transform_0(%arg0: i32) -> (i32, i32) {
    %c0_i32 = arith.constant 0 : i32
    %c0_i32_0 = arith.constant 0 : i32
    return %arg0, %c0_i32 : i32, i32
  }
  func.func @transform_1(%arg0: i32) -> (i32, i32) {
    %c0_i32 = arith.constant 0 : i32
    %c0_i32_0 = arith.constant 0 : i32
    %c0_i32_1 = arith.constant 0 : i32
    return %c0_i32, %c0_i32_0 : i32, i32
  }
  func.func @transform_2(%arg0: i32) -> (i32, i32) {
    %c0_i32 = arith.constant 0 : i32
    %c0_i32_0 = arith.constant 0 : i32
    %c0_i32_1 = arith.constant 0 : i32
    return %c0_i32, %c0_i32_0 : i32, i32
  }
  func.func @transform_3(%arg0: i32) -> (i32, i32) {
    %c0_i32 = arith.constant 0 : i32
    %c0_i32_0 = arith.constant 0 : i32
    %c0_i32_1 = arith.constant 0 : i32
    return %c0_i32, %c0_i32_0 : i32, i32
  }
  func.func @transform_4(%arg0: i32) -> (i32, i32) {
    %c0_i32 = arith.constant 0 : i32
    %c0_i32_0 = arith.constant 0 : i32
    %c0_i32_1 = arith.constant 0 : i32
    return %c0_i32, %c0_i32_0 : i32, i32
  }
  func.func @transform_5(%arg0: i32) -> (i32, i32) {
    %c0_i32 = arith.constant 0 : i32
    %c0_i32_0 = arith.constant 0 : i32
    %c0_i32_1 = arith.constant 0 : i32
    return %c0_i32, %c0_i32_0 : i32, i32
  }
  func.func @transform_6(%arg0: i32) -> (i32, i32) {
    %c0_i32 = arith.constant 0 : i32
    %c0_i32_0 = arith.constant 0 : i32
    %c0_i32_1 = arith.constant 0 : i32
    return %c0_i32, %c0_i32_0 : i32, i32
  }
  func.func @transform_7(%arg0: i32) -> (i32, i32) {
    %c0_i32 = arith.constant 0 : i32
    %c0_i32_0 = arith.constant 0 : i32
    return %arg0, %c0_i32 : i32, i32
  }
}

</mosaic_0001>

<llo_original>
// kernel: reverse.0
$region0: #{reverse.0}
  %s0 = inlined_call_operand.vmem [shape: f32[2,3,64,31], index: 0, kind: input, shape index: {}]
  %s1 = inlined_call_operand.vmem [shape: f32[2,3,64,31], index: 1, kind: output, shape index: {}]
  $region1: #{reverse.0} parent=0
    #allocation0 [shape = 'u8[122880]{0}', space=vmem, size = 0x1e000, scoped, tag = 'operand span for operand 0']
    #allocation1 [shape = 'u8[98304]{0}', space=vmem, size = 0x18000, scoped, tag = 'operand span for operand 1']
    %s2 = scalar_lea.vmem [#allocation0], 8
    // Predicated region
    $region2: #{reverse.0} parent=1 // pred_check
      _
    $region3: #{reverse.0} parent=1 // pred_check_branch
      %4 = sbr.rel (0) target = $region5
    $region4: #{reverse.0} parent=1 // pred_region
      // Predicated region
      $region6: #{reverse.0} parent=4 // pred_check
        _
      $region7: #{reverse.0} parent=4 // pred_check_branch
        %6 = sbr.rel (0) target = $region9
      $region8: #{reverse.0} parent=4 // pred_region
        // Predicated region
        $region21: #{reverse.0} parent=8 // pred_check
          _
        $region22: #{reverse.0} parent=8 // pred_check_branch
          %67 = sbr.rel (0) target = $region24
        $region23: #{reverse.0} parent=8 // pred_region
          loop: start=0, step=1, limit=1
          $region25: #{reverse.0} parent=23 // loop_pre_header
            _
          $region26: #{reverse.0} parent=23 // loop_header
            %s69 = sphi 0, %s73
            %p70 = scmp.ge.s32.totalorder %s69, 1
            %s74 = sphi %s0, %s0
            %s75 = sphi %s2, %s2
          $region27: #{reverse.0} parent=23 // loop_header_branch
            %72 = sbr.rel (%p70) target = $region31
          $region28: #{reverse.0} parent=23 // loop_body
            %v76 = vld [vmem:[%s74] sm:$0xff]
            %77 = vst [vmem:[%s75] sm:$0xff] %v76
            %v78 = vld [vmem:[%s74 + $0x8] sm:$0xff]
            %79 = vst [vmem:[%s75 + $0x8] sm:$0xff] %v78
            %v80 = vld [vmem:[%s74 + $0x10] sm:$0xff]
            %81 = vst [vmem:[%s75 + $0x10] sm:$0xff] %v80
            %v82 = vld [vmem:[%s74 + $0x18] sm:$0xff]
            %83 = vst [vmem:[%s75 + $0x18] sm:$0xff] %v82
            %v84 = vld [vmem:[%s74 + $0x20] sm:$0xff]
            %85 = vst [vmem:[%s75 + $0x28] sm:$0xff] %v84
            %v86 = vld [vmem:[%s74 + $0x28] sm:$0xff]
            %87 = vst [vmem:[%s75 + $0x30] sm:$0xff] %v86
            %v88 = vld [vmem:[%s74 + $0x30] sm:$0xff]
            %89 = vst [vmem:[%s75 + $0x38] sm:$0xff] %v88
            %v90 = vld [vmem:[%s74 + $0x38] sm:$0xff]
            %91 = vst [vmem:[%s75 + $0x40] sm:$0xff] %v90
            %v92 = vld [vmem:[%s74 + $0x40] sm:$0xff]
            %93 = vst [vmem:[%s75 + $0x50] sm:$0xff] %v92
            %v94 = vld [vmem:[%s74 + $0x48] sm:$0xff]
            %95 = vst [vmem:[%s75 + $0x58] sm:$0xff] %v94
            %v96 = vld [vmem:[%s74 + $0x50] sm:$0xff]
            %97 = vst [vmem:[%s75 + $0x60] sm:$0xff] %v96
            %v98 = vld [vmem:[%s74 + $0x58] sm:$0xff]
            %99 = vst [vmem:[%s75 + $0x68] sm:$0xff] %v98
            %v100 = vld [vmem:[%s74 + $0x60] sm:$0xff]
            %101 = vst [vmem:[%s75 + $0x78] sm:$0xff] %v100
            %v102 = vld [vmem:[%s74 + $0x68] sm:$0xff]
            %103 = vst [vmem:[%s75 + $0x80] sm:$0xff] %v102
            %v104 = vld [vmem:[%s74 + $0x70] sm:$0xff]
            %105 = vst [vmem:[%s75 + $0x88] sm:$0xff] %v104
            %v106 = vld [vmem:[%s74 + $0x78] sm:$0xff]
            %107 = vst [vmem:[%s75 + $0x90] sm:$0xff] %v106
            %v108 = vld [vmem:[%s74 + $0x80] sm:$0xff]
            %109 = vst [vmem:[%s75 + $0xa0] sm:$0xff] %v108
            %v110 = vld [vmem:[%s74 + $0x88] sm:$0xff]
            %111 = vst [vmem:[%s75 + $0xa8] sm:$0xff] %v110
            %v112 = vld [vmem:[%s74 + $0x90] sm:$0xff]
            %113 = vst [vmem:[%s75 + $0xb0] sm:$0xff] %v112
            %v114 = vld [vmem:[%s74 + $0x98] sm:$0xff]
            %115 = vst [vmem:[%s75 + $0xb8] sm:$0xff] %v114
            %v116 = vld [vmem:[%s74 + $0xa0] sm:$0xff]
            %117 = vst [vmem:[%s75 + $0xc8] sm:$0xff] %v116
            %v118 = vld [vmem:[%s74 + $0xa8] sm:$0xff]
            %119 = vst [vmem:[%s75 + $0xd0] sm:$0xff] %v118
            %v120 = vld [vmem:[%s74 + $0xb0] sm:$0xff]
            %121 = vst [vmem:[%s75 + $0xd8] sm:$0xff] %v120
            %v122 = vld [vmem:[%s74 + $0xb8] sm:$0xff]
            %123 = vst [vmem:[%s75 + $0xe0] sm:$0xff] %v122
          $region29: #{reverse.0} parent=23 // loop_footer
            %s73 = sadd.s32 1, %s69
          $region30: #{reverse.0} parent=23 // loop_footer_branch
            %68 = sbr.rel target = $region26
          $region31: #{reverse.0} parent=23 // loop_exit
            _
        $region24: #{reverse.0} parent=8 // pred_fallthru
          _
        // Predicated region
        $region32: #{reverse.0} parent=8 // pred_check
          _
        $region33: #{reverse.0} parent=8 // pred_check_branch
          %125 = sbr.rel target = $region35
        $region34: #{reverse.0} parent=8 // pred_region
          _
        $region35: #{reverse.0} parent=8 // pred_fallthru
          _
      $region9: #{reverse.0} parent=4 // pred_fallthru
        _
      // Predicated region
      $region10: #{reverse.0} parent=4 // pred_check
        _
      $region11: #{reverse.0} parent=4 // pred_check_branch
        %8 = sbr.rel target = $region13
      $region12: #{reverse.0} parent=4 // pred_region
        loop: start=0, step=1, limit=1
        $region14: #{reverse.0} parent=12 // loop_pre_header
          _
        $region15: #{reverse.0} parent=12 // loop_header
          %s11 = sphi 0, %s15
          %p12 = scmp.ge.s32.totalorder %s11, 1
          %s16 = sphi %s0, %s0
          %s17 = sphi %s2, %s2
        $region16: #{reverse.0} parent=12 // loop_header_branch
          %14 = sbr.rel (%p12) target = $region20
        $region17: #{reverse.0} parent=12 // loop_body
          %v18 = vld [vmem:[%s16] sm:$0xff]
          %19 = vst [vmem:[%s17] sm:$0xff] %v18
          %v20 = vld [vmem:[%s16 + $0x8] sm:$0xff]
          %21 = vst [vmem:[%s17 + $0x8] sm:$0xff] %v20
          %v22 = vld [vmem:[%s16 + $0x10] sm:$0xff]
          %23 = vst [vmem:[%s17 + $0x10] sm:$0xff] %v22
          %v24 = vld [vmem:[%s16 + $0x18] sm:$0xff]
          %25 = vst [vmem:[%s17 + $0x18] sm:$0xff] %v24
          %v26 = vld [vmem:[%s16 + $0x20] sm:$0xff]
          %27 = vst [vmem:[%s17 + $0x28] sm:$0xff] %v26
          %v28 = vld [vmem:[%s16 + $0x28] sm:$0xff]
          %29 = vst [vmem:[%s17 + $0x30] sm:$0xff] %v28
          %v30 = vld [vmem:[%s16 + $0x30] sm:$0xff]
          %31 = vst [vmem:[%s17 + $0x38] sm:$0xff] %v30
          %v32 = vld [vmem:[%s16 + $0x38] sm:$0xff]
          %33 = vst [vmem:[%s17 + $0x40] sm:$0xff] %v32
          %v34 = vld [vmem:[%s16 + $0x40] sm:$0xff]
          %35 = vst [vmem:[%s17 + $0x50] sm:$0xff] %v34
          %v36 = vld [vmem:[%s16 + $0x48] sm:$0xff]
          %37 = vst [vmem:[%s17 + $0x58] sm:$0xff] %v36
          %v38 = vld [vmem:[%s16 + $0x50] sm:$0xff]
          %39 = vst [vmem:[%s17 + $0x60] sm:$0xff] %v38
          %v40 = vld [vmem:[%s16 + $0x58] sm:$0xff]
          %41 = vst [vmem:[%s17 + $0x68] sm:$0xff] %v40
          %v42 = vld [vmem:[%s16 + $0x60] sm:$0xff]
          %43 = vst [vmem:[%s17 + $0x78] sm:$0xff] %v42
          %v44 = vld [vmem:[%s16 + $0x68] sm:$0xff]
          %45 = vst [vmem:[%s17 + $0x80] sm:$0xff] %v44
          %v46 = vld [vmem:[%s16 + $0x70] sm:$0xff]
          %47 = vst [vmem:[%s17 + $0x88] sm:$0xff] %v46
          %v48 = vld [vmem:[%s16 + $0x78] sm:$0xff]
          %49 = vst [vmem:[%s17 + $0x90] sm:$0xff] %v48
          %v50 = vld [vmem:[%s16 + $0x80] sm:$0xff]
          %51 = vst [vmem:[%s17 + $0xa0] sm:$0xff] %v50
          %v52 = vld [vmem:[%s16 + $0x88] sm:$0xff]
          %53 = vst [vmem:[%s17 + $0xa8] sm:$0xff] %v52
          %v54 = vld [vmem:[%s16 + $0x90] sm:$0xff]
          %55 = vst [vmem:[%s17 + $0xb0] sm:$0xff] %v54
          %v56 = vld [vmem:[%s16 + $0x98] sm:$0xff]
          %57 = vst [vmem:[%s17 + $0xb8] sm:$0xff] %v56
          %v58 = vld [vmem:[%s16 + $0xa0] sm:$0xff]
          %59 = vst [vmem:[%s17 + $0xc8] sm:$0xff] %v58
          %v60 = vld [vmem:[%s16 + $0xa8] sm:$0xff]
          %61 = vst [vmem:[%s17 + $0xd0] sm:$0xff] %v60
          %v62 = vld [vmem:[%s16 + $0xb0] sm:$0xff]
          %63 = vst [vmem:[%s17 + $0xd8] sm:$0xff] %v62
          %v64 = vld [vmem:[%s16 + $0xb8] sm:$0xff]
          %65 = vst [vmem:[%s17 + $0xe0] sm:$0xff] %v64
        $region18: #{reverse.0} parent=12 // loop_footer
          %s15 = sadd.s32 1, %s11
        $region19: #{reverse.0} parent=12 // loop_footer_branch
          %10 = sbr.rel target = $region15
        $region20: #{reverse.0} parent=12 // loop_exit
          _
      $region13: #{reverse.0} parent=4 // pred_fallthru
        _
    $region5: #{reverse.0} parent=1 // pred_fallthru
      _
    %126 = vnop
    %s127 = scalar_lea.vmem [#allocation0], 24
    %s128 = scalar_lea.vmem %s127, 7 [#allocation0]
    %v129 = vld [vmem:[%s128] ss:$-1 sm:$0xff]
    %v130 = vrot.slane %v129, 1
    %131 = vst [vmem:[#allocation1] sm:$0xff] %v130
    %s132 = scalar_lea.vmem [#allocation0], 32
    %s133 = scalar_lea.vmem %s132, 7 [#allocation0]
    %v134 = vld [vmem:[%s133] ss:$-1 sm:$0xff]
    %v135 = vrot.slane %v134, 1
    %v136 = vlaneseq
    %v137 = vshrl.u32 %v136, 7
    %vm138 = vcmp.lt.s32.totalorder %v137, 7
    %139 = vst.msk [vmem:[#allocation1] sm:$0xff] %vm138, %v135
    %s140 = scalar_lea.vmem [#allocation1], 8
    %s141 = scalar_lea.vmem [#allocation0], 16
    %s142 = scalar_lea.vmem %s141, 7 [#allocation0]
    %v143 = vld [vmem:[%s142] ss:$-1 sm:$0xff]
    %v144 = vrot.slane %v143, 1
    %145 = vst [vmem:[%s140] sm:$0xff] %v144
    %s146 = scalar_lea.vmem [#allocation0], 24
    %s147 = scalar_lea.vmem %s146, 7 [#allocation0]
    %v148 = vld [vmem:[%s147] ss:$-1 sm:$0xff]
    %v149 = vrot.slane %v148, 1
    %v150 = vlaneseq
    %v151 = vshrl.u32 %v150, 7
    %vm152 = vcmp.lt.s32.totalorder %v151, 7
    %153 = vst.msk [vmem:[%s140] sm:$0xff] %vm152, %v149
    %s154 = scalar_lea.vmem [#allocation1], 16
    %s155 = scalar_lea.vmem [#allocation0], 8
    %s156 = scalar_lea.vmem %s155, 7 [#allocation0]
    %v157 = vld [vmem:[%s156] ss:$-1 sm:$0xff]
    %v158 = vrot.slane %v157, 1
    %159 = vst [vmem:[%s154] sm:$0xff] %v158
    %s160 = scalar_lea.vmem [#allocation0], 16
    %s161 = scalar_lea.vmem %s160, 7 [#allocation0]
    %v162 = vld [vmem:[%s161] ss:$-1 sm:$0xff]
    %v163 = vrot.slane %v162, 1
    %v164 = vlaneseq
    %v165 = vshrl.u32 %v164, 7
    %vm166 = vcmp.lt.s32.totalorder %v165, 7
    %167 = vst.msk [vmem:[%s154] sm:$0xff] %vm166, %v163
    %s168 = scalar_lea.vmem [#allocation1], 24
    %s169 = scalar_lea.vmem [#allocation0], 7
    %v170 = vld [vmem:[%s169] ss:$-1 sm:$0xff]
    %v171 = vrot.slane %v170, 1
    %172 = vst [vmem:[%s168] sm:$0xff] %v171
    %s173 = scalar_lea.vmem [#allocation0], 8
    %s174 = scalar_lea.vmem %s173, 7 [#allocation0]
    %v175 = vld [vmem:[%s174] ss:$-1 sm:$0xff]
    %v176 = vrot.slane %v175, 1
    %v177 = vlaneseq
    %v178 = vshrl.u32 %v177, 7
    %vm179 = vcmp.lt.s32.totalorder %v178, 7
    %180 = vst.msk [vmem:[%s168] sm:$0xff] %vm179, %v176
    %s181 = scalar_lea.vmem [#allocation1], 32
    %s182 = scalar_lea.vmem [#allocation0], 40
    %s183 = scalar_lea.vmem %s182, 24 [#allocation0]
    %s184 = scalar_lea.vmem %s183, 7 [#allocation0]
    %v185 = vld [vmem:[%s184] ss:$-1 sm:$0xff]
    %v186 = vrot.slane %v185, 1
    %187 = vst [vmem:[%s181] sm:$0xff] %v186
    %s188 = scalar_lea.vmem %s182, 32 [#allocation0]
    %s189 = scalar_lea.vmem %s188, 7 [#allocation0]
    %v190 = vld [vmem:[%s189] ss:$-1 sm:$0xff]
    %v191 = vrot.slane %v190, 1
    %v192 = vlaneseq
    %v193 = vshrl.u32 %v192, 7
    %vm194 = vcmp.lt.s32.totalorder %v193, 7
    %195 = vst.msk [vmem:[%s181] sm:$0xff] %vm194, %v191
    %s196 = scalar_lea.vmem %s181, 8 [#allocation1]
    %s197 = scalar_lea.vmem %s182, 16 [#allocation0]
    %s198 = scalar_lea.vmem %s197, 7 [#allocation0]
    %v199 = vld [vmem:[%s198] ss:$-1 sm:$0xff]
    %v200 = vrot.slane %v199, 1
    %201 = vst [vmem:[%s196] sm:$0xff] %v200
    %s202 = scalar_lea.vmem %s182, 24 [#allocation0]
    %s203 = scalar_lea.vmem %s202, 7 [#allocation0]
    %v204 = vld [vmem:[%s203] ss:$-1 sm:$0xff]
    %v205 = vrot.slane %v204, 1
    %v206 = vlaneseq
    %v207 = vshrl.u32 %v206, 7
    %vm208 = vcmp.lt.s32.totalorder %v207, 7
    %209 = vst.msk [vmem:[%s196] sm:$0xff] %vm208, %v205
    %s210 = scalar_lea.vmem %s181, 16 [#allocation1]
    %s211 = scalar_lea.vmem %s182, 8 [#allocation0]
    %s212 = scalar_lea.vmem %s211, 7 [#allocation0]
    %v213 = vld [vmem:[%s212] ss:$-1 sm:$0xff]
    %v214 = vrot.slane %v213, 1
    %215 = vst [vmem:[%s210] sm:$0xff] %v214
    %s216 = scalar_lea.vmem %s182, 16 [#allocation0]
    %s217 = scalar_lea.vmem %s216, 7 [#allocation0]
    %v218 = vld [vmem:[%s217] ss:$-1 sm:$0xff]
    %v219 = vrot.slane %v218, 1
    %v220 = vlaneseq
    %v221 = vshrl.u32 %v220, 7
    %vm222 = vcmp.lt.s32.totalorder %v221, 7
    %223 = vst.msk [vmem:[%s210] sm:$0xff] %vm222, %v219
    %s224 = scalar_lea.vmem %s181, 24 [#allocation1]
    %s225 = scalar_lea.vmem %s182, 7 [#allocation0]
    %v226 = vld [vmem:[%s225] ss:$-1 sm:$0xff]
    %v227 = vrot.slane %v226, 1
    %228 = vst [vmem:[%s224] sm:$0xff] %v227
    %s229 = scalar_lea.vmem %s182, 8 [#allocation0]
    %s230 = scalar_lea.vmem %s229, 7 [#allocation0]
    %v231 = vld [vmem:[%s230] ss:$-1 sm:$0xff]
    %v232 = vrot.slane %v231, 1
    %v233 = vlaneseq
    %v234 = vshrl.u32 %v233, 7
    %vm235 = vcmp.lt.s32.totalorder %v234, 7
    %236 = vst.msk [vmem:[%s224] sm:$0xff] %vm235, %v232
    %s237 = scalar_lea.vmem [#allocation1], 64
    %s238 = scalar_lea.vmem [#allocation0], 80
    %s239 = scalar_lea.vmem %s238, 24 [#allocation0]
    %s240 = scalar_lea.vmem %s239, 7 [#allocation0]
    %v241 = vld [vmem:[%s240] ss:$-1 sm:$0xff]
    %v242 = vrot.slane %v241, 1
    %243 = vst [vmem:[%s237] sm:$0xff] %v242
    %s244 = scalar_lea.vmem %s238, 32 [#allocation0]
    %s245 = scalar_lea.vmem %s244, 7 [#allocation0]
    %v246 = vld [vmem:[%s245] ss:$-1 sm:$0xff]
    %v247 = vrot.slane %v246, 1
    %v248 = vlaneseq
    %v249 = vshrl.u32 %v248, 7
    %vm250 = vcmp.lt.s32.totalorder %v249, 7
    %251 = vst.msk [vmem:[%s237] sm:$0xff] %vm250, %v247
    %s252 = scalar_lea.vmem %s237, 8 [#allocation1]
    %s253 = scalar_lea.vmem %s238, 16 [#allocation0]
    %s254 = scalar_lea.vmem %s253, 7 [#allocation0]
    %v255 = vld [vmem:[%s254] ss:$-1 sm:$0xff]
    %v256 = vrot.slane %v255, 1
    %257 = vst [vmem:[%s252] sm:$0xff] %v256
    %s258 = scalar_lea.vmem %s238, 24 [#allocation0]
    %s259 = scalar_lea.vmem %s258, 7 [#allocation0]
    %v260 = vld [vmem:[%s259] ss:$-1 sm:$0xff]
    %v261 = vrot.slane %v260, 1
    %v262 = vlaneseq
    %v263 = vshrl.u32 %v262, 7
    %vm264 = vcmp.lt.s32.totalorder %v263, 7
    %265 = vst.msk [vmem:[%s252] sm:$0xff] %vm264, %v261
    %s266 = scalar_lea.vmem %s237, 16 [#allocation1]
    %s267 = scalar_lea.vmem %s238, 8 [#allocation0]
    %s268 = scalar_lea.vmem %s267, 7 [#allocation0]
    %v269 = vld [vmem:[%s268] ss:$-1 sm:$0xff]
    %v270 = vrot.slane %v269, 1
    %271 = vst [vmem:[%s266] sm:$0xff] %v270
    %s272 = scalar_lea.vmem %s238, 16 [#allocation0]
    %s273 = scalar_lea.vmem %s272, 7 [#allocation0]
    %v274 = vld [vmem:[%s273] ss:$-1 sm:$0xff]
    %v275 = vrot.slane %v274, 1
    %v276 = vlaneseq
    %v277 = vshrl.u32 %v276, 7
    %vm278 = vcmp.lt.s32.totalorder %v277, 7
    %279 = vst.msk [vmem:[%s266] sm:$0xff] %vm278, %v275
    %s280 = scalar_lea.vmem %s237, 24 [#allocation1]
    %s281 = scalar_lea.vmem %s238, 7 [#allocation0]
    %v282 = vld [vmem:[%s281] ss:$-1 sm:$0xff]
    %v283 = vrot.slane %v282, 1
    %284 = vst [vmem:[%s280] sm:$0xff] %v283
    %s285 = scalar_lea.vmem %s238, 8 [#allocation0]
    %s286 = scalar_lea.vmem %s285, 7 [#allocation0]
    %v287 = vld [vmem:[%s286] ss:$-1 sm:$0xff]
    %v288 = vrot.slane %v287, 1
    %v289 = vlaneseq
    %v290 = vshrl.u32 %v289, 7
    %vm291 = vcmp.lt.s32.totalorder %v290, 7
    %292 = vst.msk [vmem:[%s280] sm:$0xff] %vm291, %v288
    %s293 = scalar_lea.vmem [#allocation1], 96
    %s294 = scalar_lea.vmem [#allocation0], 120
    %s295 = scalar_lea.vmem %s294, 24 [#allocation0]
    %s296 = scalar_lea.vmem %s295, 7 [#allocation0]
    %v297 = vld [vmem:[%s296] ss:$-1 sm:$0xff]
    %v298 = vrot.slane %v297, 1
    %299 = vst [vmem:[%s293] sm:$0xff] %v298
    %s300 = scalar_lea.vmem %s294, 32 [#allocation0]
    %s301 = scalar_lea.vmem %s300, 7 [#allocation0]
    %v302 = vld [vmem:[%s301] ss:$-1 sm:$0xff]
    %v303 = vrot.slane %v302, 1
    %v304 = vlaneseq
    %v305 = vshrl.u32 %v304, 7
    %vm306 = vcmp.lt.s32.totalorder %v305, 7
    %307 = vst.msk [vmem:[%s293] sm:$0xff] %vm306, %v303
    %s308 = scalar_lea.vmem %s293, 8 [#allocation1]
    %s309 = scalar_lea.vmem %s294, 16 [#allocation0]
    %s310 = scalar_lea.vmem %s309, 7 [#allocation0]
    %v311 = vld [vmem:[%s310] ss:$-1 sm:$0xff]
    %v312 = vrot.slane %v311, 1
    %313 = vst [vmem:[%s308] sm:$0xff] %v312
    %s314 = scalar_lea.vmem %s294, 24 [#allocation0]
    %s315 = scalar_lea.vmem %s314, 7 [#allocation0]
    %v316 = vld [vmem:[%s315] ss:$-1 sm:$0xff]
    %v317 = vrot.slane %v316, 1
    %v318 = vlaneseq
    %v319 = vshrl.u32 %v318, 7
    %vm320 = vcmp.lt.s32.totalorder %v319, 7
    %321 = vst.msk [vmem:[%s308] sm:$0xff] %vm320, %v317
    %s322 = scalar_lea.vmem %s293, 16 [#allocation1]
    %s323 = scalar_lea.vmem %s294, 8 [#allocation0]
    %s324 = scalar_lea.vmem %s323, 7 [#allocation0]
    %v325 = vld [vmem:[%s324] ss:$-1 sm:$0xff]
    %v326 = vrot.slane %v325, 1
    %327 = vst [vmem:[%s322] sm:$0xff] %v326
    %s328 = scalar_lea.vmem %s294, 16 [#allocation0]
    %s329 = scalar_lea.vmem %s328, 7 [#allocation0]
    %v330 = vld [vmem:[%s329] ss:$-1 sm:$0xff]
    %v331 = vrot.slane %v330, 1
    %v332 = vlaneseq
    %v333 = vshrl.u32 %v332, 7
    %vm334 = vcmp.lt.s32.totalorder %v333, 7
    %335 = vst.msk [vmem:[%s322] sm:$0xff] %vm334, %v331
    %s336 = scalar_lea.vmem %s293, 24 [#allocation1]
    %s337 = scalar_lea.vmem %s294, 7 [#allocation0]
    %v338 = vld [vmem:[%s337] ss:$-1 sm:$0xff]
    %v339 = vrot.slane %v338, 1
    %340 = vst [vmem:[%s336] sm:$0xff] %v339
    %s341 = scalar_lea.vmem %s294, 8 [#allocation0]
    %s342 = scalar_lea.vmem %s341, 7 [#allocation0]
    %v343 = vld [vmem:[%s342] ss:$-1 sm:$0xff]
    %v344 = vrot.slane %v343, 1
    %v345 = vlaneseq
    %v346 = vshrl.u32 %v345, 7
    %vm347 = vcmp.lt.s32.totalorder %v346, 7
    %348 = vst.msk [vmem:[%s336] sm:$0xff] %vm347, %v344
    %s349 = scalar_lea.vmem [#allocation1], 128
    %s350 = scalar_lea.vmem [#allocation0], 160
    %s351 = scalar_lea.vmem %s350, 24 [#allocation0]
    %s352 = scalar_lea.vmem %s351, 7 [#allocation0]
    %v353 = vld [vmem:[%s352] ss:$-1 sm:$0xff]
    %v354 = vrot.slane %v353, 1
    %355 = vst [vmem:[%s349] sm:$0xff] %v354
    %s356 = scalar_lea.vmem %s350, 32 [#allocation0]
    %s357 = scalar_lea.vmem %s356, 7 [#allocation0]
    %v358 = vld [vmem:[%s357] ss:$-1 sm:$0xff]
    %v359 = vrot.slane %v358, 1
    %v360 = vlaneseq
    %v361 = vshrl.u32 %v360, 7
    %vm362 = vcmp.lt.s32.totalorder %v361, 7
    %363 = vst.msk [vmem:[%s349] sm:$0xff] %vm362, %v359
    %s364 = scalar_lea.vmem %s349, 8 [#allocation1]
    %s365 = scalar_lea.vmem %s350, 16 [#allocation0]
    %s366 = scalar_lea.vmem %s365, 7 [#allocation0]
    %v367 = vld [vmem:[%s366] ss:$-1 sm:$0xff]
    %v368 = vrot.slane %v367, 1
    %369 = vst [vmem:[%s364] sm:$0xff] %v368
    %s370 = scalar_lea.vmem %s350, 24 [#allocation0]
    %s371 = scalar_lea.vmem %s370, 7 [#allocation0]
    %v372 = vld [vmem:[%s371] ss:$-1 sm:$0xff]
    %v373 = vrot.slane %v372, 1
    %v374 = vlaneseq
    %v375 = vshrl.u32 %v374, 7
    %vm376 = vcmp.lt.s32.totalorder %v375, 7
    %377 = vst.msk [vmem:[%s364] sm:$0xff] %vm376, %v373
    %s378 = scalar_lea.vmem %s349, 16 [#allocation1]
    %s379 = scalar_lea.vmem %s350, 8 [#allocation0]
    %s380 = scalar_lea.vmem %s379, 7 [#allocation0]
    %v381 = vld [vmem:[%s380] ss:$-1 sm:$0xff]
    %v382 = vrot.slane %v381, 1
    %383 = vst [vmem:[%s378] sm:$0xff] %v382
    %s384 = scalar_lea.vmem %s350, 16 [#allocation0]
    %s385 = scalar_lea.vmem %s384, 7 [#allocation0]
    %v386 = vld [vmem:[%s385] ss:$-1 sm:$0xff]
    %v387 = vrot.slane %v386, 1
    %v388 = vlaneseq
    %v389 = vshrl.u32 %v388, 7
    %vm390 = vcmp.lt.s32.totalorder %v389, 7
    %391 = vst.msk [vmem:[%s378] sm:$0xff] %vm390, %v387
    %s392 = scalar_lea.vmem %s349, 24 [#allocation1]
    %s393 = scalar_lea.vmem %s350, 7 [#allocation0]
    %v394 = vld [vmem:[%s393] ss:$-1 sm:$0xff]
    %v395 = vrot.slane %v394, 1
    %396 = vst [vmem:[%s392] sm:$0xff] %v395
    %s397 = scalar_lea.vmem %s350, 8 [#allocation0]
    %s398 = scalar_lea.vmem %s397, 7 [#allocation0]
    %v399 = vld [vmem:[%s398] ss:$-1 sm:$0xff]
    %v400 = vrot.slane %v399, 1
    %v401 = vlaneseq
    %v402 = vshrl.u32 %v401, 7
    %vm403 = vcmp.lt.s32.totalorder %v402, 7
    %404 = vst.msk [vmem:[%s392] sm:$0xff] %vm403, %v400
    %s405 = scalar_lea.vmem [#allocation1], 160
    %s406 = scalar_lea.vmem [#allocation0], 200
    %s407 = scalar_lea.vmem %s406, 24 [#allocation0]
    %s408 = scalar_lea.vmem %s407, 7 [#allocation0]
    %v409 = vld [vmem:[%s408] ss:$-1 sm:$0xff]
    %v410 = vrot.slane %v409, 1
    %411 = vst [vmem:[%s405] sm:$0xff] %v410
    %s412 = scalar_lea.vmem %s406, 32 [#allocation0]
    %s413 = scalar_lea.vmem %s412, 7 [#allocation0]
    %v414 = vld [vmem:[%s413] ss:$-1 sm:$0xff]
    %v415 = vrot.slane %v414, 1
    %v416 = vlaneseq
    %v417 = vshrl.u32 %v416, 7
    %vm418 = vcmp.lt.s32.totalorder %v417, 7
    %419 = vst.msk [vmem:[%s405] sm:$0xff] %vm418, %v415
    %s420 = scalar_lea.vmem %s405, 8 [#allocation1]
    %s421 = scalar_lea.vmem %s406, 16 [#allocation0]
    %s422 = scalar_lea.vmem %s421, 7 [#allocation0]
    %v423 = vld [vmem:[%s422] ss:$-1 sm:$0xff]
    %v424 = vrot.slane %v423, 1
    %425 = vst [vmem:[%s420] sm:$0xff] %v424
    %s426 = scalar_lea.vmem %s406, 24 [#allocation0]
    %s427 = scalar_lea.vmem %s426, 7 [#allocation0]
    %v428 = vld [vmem:[%s427] ss:$-1 sm:$0xff]
    %v429 = vrot.slane %v428, 1
    %v430 = vlaneseq
    %v431 = vshrl.u32 %v430, 7
    %vm432 = vcmp.lt.s32.totalorder %v431, 7
    %433 = vst.msk [vmem:[%s420] sm:$0xff] %vm432, %v429
    %s434 = scalar_lea.vmem %s405, 16 [#allocation1]
    %s435 = scalar_lea.vmem %s406, 8 [#allocation0]
    %s436 = scalar_lea.vmem %s435, 7 [#allocation0]
    %v437 = vld [vmem:[%s436] ss:$-1 sm:$0xff]
    %v438 = vrot.slane %v437, 1
    %439 = vst [vmem:[%s434] sm:$0xff] %v438
    %s440 = scalar_lea.vmem %s406, 16 [#allocation0]
    %s441 = scalar_lea.vmem %s440, 7 [#allocation0]
    %v442 = vld [vmem:[%s441] ss:$-1 sm:$0xff]
    %v443 = vrot.slane %v442, 1
    %v444 = vlaneseq
    %v445 = vshrl.u32 %v444, 7
    %vm446 = vcmp.lt.s32.totalorder %v445, 7
    %447 = vst.msk [vmem:[%s434] sm:$0xff] %vm446, %v443
    %s448 = scalar_lea.vmem %s405, 24 [#allocation1]
    %s449 = scalar_lea.vmem %s406, 7 [#allocation0]
    %v450 = vld [vmem:[%s449] ss:$-1 sm:$0xff]
    %v451 = vrot.slane %v450, 1
    %452 = vst [vmem:[%s448] sm:$0xff] %v451
    %s453 = scalar_lea.vmem %s406, 8 [#allocation0]
    %s454 = scalar_lea.vmem %s453, 7 [#allocation0]
    %v455 = vld [vmem:[%s454] ss:$-1 sm:$0xff]
    %v456 = vrot.slane %v455, 1
    %v457 = vlaneseq
    %v458 = vshrl.u32 %v457, 7
    %vm459 = vcmp.lt.s32.totalorder %v458, 7
    %460 = vst.msk [vmem:[%s448] sm:$0xff] %vm459, %v456
    // Predicated region
    $region36: #{reverse.0} parent=1 // pred_check
      _
    $region37: #{reverse.0} parent=1 // pred_check_branch
      %462 = sbr.rel (0) target = $region39
    $region38: #{reverse.0} parent=1 // pred_region
      // Predicated region
      $region40: #{reverse.0} parent=38 // pred_check
        _
      $region41: #{reverse.0} parent=38 // pred_check_branch
        %464 = sbr.rel (0) target = $region43
      $region42: #{reverse.0} parent=38 // pred_region
        // Predicated region
        $region55: #{reverse.0} parent=42 // pred_check
          _
        $region56: #{reverse.0} parent=42 // pred_check_branch
          %525 = sbr.rel (0) target = $region58
        $region57: #{reverse.0} parent=42 // pred_region
          loop: start=0, step=1, limit=1
          $region59: #{reverse.0} parent=57 // loop_pre_header
            _
          $region60: #{reverse.0} parent=57 // loop_header
            %s527 = sphi 0, %s531
            %p528 = scmp.ge.s32.totalorder %s527, 1
            %s532 = sphi [#allocation1], [#allocation1]
            %s533 = sphi %s1, %s1
          $region61: #{reverse.0} parent=57 // loop_header_branch
            %530 = sbr.rel (%p528) target = $region65
          $region62: #{reverse.0} parent=57 // loop_body
            %v534 = vld [vmem:[%s532] sm:$0xff]
            %535 = vst [vmem:[%s533] sm:$0xff] %v534
            %v536 = vld [vmem:[%s532 + $0x8] sm:$0xff]
            %537 = vst [vmem:[%s533 + $0x8] sm:$0xff] %v536
            %v538 = vld [vmem:[%s532 + $0x10] sm:$0xff]
            %539 = vst [vmem:[%s533 + $0x10] sm:$0xff] %v538
            %v540 = vld [vmem:[%s532 + $0x18] sm:$0xff]
            %541 = vst [vmem:[%s533 + $0x18] sm:$0xff] %v540
            %v542 = vld [vmem:[%s532 + $0x20] sm:$0xff]
            %543 = vst [vmem:[%s533 + $0x20] sm:$0xff] %v542
            %v544 = vld [vmem:[%s532 + $0x28] sm:$0xff]
            %545 = vst [vmem:[%s533 + $0x28] sm:$0xff] %v544
            %v546 = vld [vmem:[%s532 + $0x30] sm:$0xff]
            %547 = vst [vmem:[%s533 + $0x30] sm:$0xff] %v546
            %v548 = vld [vmem:[%s532 + $0x38] sm:$0xff]
            %549 = vst [vmem:[%s533 + $0x38] sm:$0xff] %v548
            %v550 = vld [vmem:[%s532 + $0x40] sm:$0xff]
            %551 = vst [vmem:[%s533 + $0x40] sm:$0xff] %v550
            %v552 = vld [vmem:[%s532 + $0x48] sm:$0xff]
            %553 = vst [vmem:[%s533 + $0x48] sm:$0xff] %v552
            %v554 = vld [vmem:[%s532 + $0x50] sm:$0xff]
            %555 = vst [vmem:[%s533 + $0x50] sm:$0xff] %v554
            %v556 = vld [vmem:[%s532 + $0x58] sm:$0xff]
            %557 = vst [vmem:[%s533 + $0x58] sm:$0xff] %v556
            %v558 = vld [vmem:[%s532 + $0x60] sm:$0xff]
            %559 = vst [vmem:[%s533 + $0x60] sm:$0xff] %v558
            %v560 = vld [vmem:[%s532 + $0x68] sm:$0xff]
            %561 = vst [vmem:[%s533 + $0x68] sm:$0xff] %v560
            %v562 = vld [vmem:[%s532 + $0x70] sm:$0xff]
            %563 = vst [vmem:[%s533 + $0x70] sm:$0xff] %v562
            %v564 = vld [vmem:[%s532 + $0x78] sm:$0xff]
            %565 = vst [vmem:[%s533 + $0x78] sm:$0xff] %v564
            %v566 = vld [vmem:[%s532 + $0x80] sm:$0xff]
            %567 = vst [vmem:[%s533 + $0x80] sm:$0xff] %v566
            %v568 = vld [vmem:[%s532 + $0x88] sm:$0xff]
            %569 = vst [vmem:[%s533 + $0x88] sm:$0xff] %v568
            %v570 = vld [vmem:[%s532 + $0x90] sm:$0xff]
            %571 = vst [vmem:[%s533 + $0x90] sm:$0xff] %v570
            %v572 = vld [vmem:[%s532 + $0x98] sm:$0xff]
            %573 = vst [vmem:[%s533 + $0x98] sm:$0xff] %v572
            %v574 = vld [vmem:[%s532 + $0xa0] sm:$0xff]
            %575 = vst [vmem:[%s533 + $0xa0] sm:$0xff] %v574
            %v576 = vld [vmem:[%s532 + $0xa8] sm:$0xff]
            %577 = vst [vmem:[%s533 + $0xa8] sm:$0xff] %v576
            %v578 = vld [vmem:[%s532 + $0xb0] sm:$0xff]
            %579 = vst [vmem:[%s533 + $0xb0] sm:$0xff] %v578
            %v580 = vld [vmem:[%s532 + $0xb8] sm:$0xff]
            %581 = vst [vmem:[%s533 + $0xb8] sm:$0xff] %v580
          $region63: #{reverse.0} parent=57 // loop_footer
            %s531 = sadd.s32 1, %s527
          $region64: #{reverse.0} parent=57 // loop_footer_branch
            %526 = sbr.rel target = $region60
          $region65: #{reverse.0} parent=57 // loop_exit
            _
        $region58: #{reverse.0} parent=42 // pred_fallthru
          _
        // Predicated region
        $region66: #{reverse.0} parent=42 // pred_check
          _
        $region67: #{reverse.0} parent=42 // pred_check_branch
          %583 = sbr.rel target = $region69
        $region68: #{reverse.0} parent=42 // pred_region
          _
        $region69: #{reverse.0} parent=42 // pred_fallthru
          _
      $region43: #{reverse.0} parent=38 // pred_fallthru
        _
      // Predicated region
      $region44: #{reverse.0} parent=38 // pred_check
        _
      $region45: #{reverse.0} parent=38 // pred_check_branch
        %466 = sbr.rel target = $region47
      $region46: #{reverse.0} parent=38 // pred_region
        loop: start=0, step=1, limit=1
        $region48: #{reverse.0} parent=46 // loop_pre_header
          _
        $region49: #{reverse.0} parent=46 // loop_header
          %s469 = sphi 0, %s473
          %p470 = scmp.ge.s32.totalorder %s469, 1
          %s474 = sphi [#allocation1], [#allocation1]
          %s475 = sphi %s1, %s1
        $region50: #{reverse.0} parent=46 // loop_header_branch
          %472 = sbr.rel (%p470) target = $region54
        $region51: #{reverse.0} parent=46 // loop_body
          %v476 = vld [vmem:[%s474] sm:$0xff]
          %477 = vst [vmem:[%s475] sm:$0xff] %v476
          %v478 = vld [vmem:[%s474 + $0x8] sm:$0xff]
          %479 = vst [vmem:[%s475 + $0x8] sm:$0xff] %v478
          %v480 = vld [vmem:[%s474 + $0x10] sm:$0xff]
          %481 = vst [vmem:[%s475 + $0x10] sm:$0xff] %v480
          %v482 = vld [vmem:[%s474 + $0x18] sm:$0xff]
          %483 = vst [vmem:[%s475 + $0x18] sm:$0xff] %v482
          %v484 = vld [vmem:[%s474 + $0x20] sm:$0xff]
          %485 = vst [vmem:[%s475 + $0x20] sm:$0xff] %v484
          %v486 = vld [vmem:[%s474 + $0x28] sm:$0xff]
          %487 = vst [vmem:[%s475 + $0x28] sm:$0xff] %v486
          %v488 = vld [vmem:[%s474 + $0x30] sm:$0xff]
          %489 = vst [vmem:[%s475 + $0x30] sm:$0xff] %v488
          %v490 = vld [vmem:[%s474 + $0x38] sm:$0xff]
          %491 = vst [vmem:[%s475 + $0x38] sm:$0xff] %v490
          %v492 = vld [vmem:[%s474 + $0x40] sm:$0xff]
          %493 = vst [vmem:[%s475 + $0x40] sm:$0xff] %v492
          %v494 = vld [vmem:[%s474 + $0x48] sm:$0xff]
          %495 = vst [vmem:[%s475 + $0x48] sm:$0xff] %v494
          %v496 = vld [vmem:[%s474 + $0x50] sm:$0xff]
          %497 = vst [vmem:[%s475 + $0x50] sm:$0xff] %v496
          %v498 = vld [vmem:[%s474 + $0x58] sm:$0xff]
          %499 = vst [vmem:[%s475 + $0x58] sm:$0xff] %v498
          %v500 = vld [vmem:[%s474 + $0x60] sm:$0xff]
          %501 = vst [vmem:[%s475 + $0x60] sm:$0xff] %v500
          %v502 = vld [vmem:[%s474 + $0x68] sm:$0xff]
          %503 = vst [vmem:[%s475 + $0x68] sm:$0xff] %v502
          %v504 = vld [vmem:[%s474 + $0x70] sm:$0xff]
          %505 = vst [vmem:[%s475 + $0x70] sm:$0xff] %v504
          %v506 = vld [vmem:[%s474 + $0x78] sm:$0xff]
          %507 = vst [vmem:[%s475 + $0x78] sm:$0xff] %v506
          %v508 = vld [vmem:[%s474 + $0x80] sm:$0xff]
          %509 = vst [vmem:[%s475 + $0x80] sm:$0xff] %v508
          %v510 = vld [vmem:[%s474 + $0x88] sm:$0xff]
          %511 = vst [vmem:[%s475 + $0x88] sm:$0xff] %v510
          %v512 = vld [vmem:[%s474 + $0x90] sm:$0xff]
          %513 = vst [vmem:[%s475 + $0x90] sm:$0xff] %v512
          %v514 = vld [vmem:[%s474 + $0x98] sm:$0xff]
          %515 = vst [vmem:[%s475 + $0x98] sm:$0xff] %v514
          %v516 = vld [vmem:[%s474 + $0xa0] sm:$0xff]
          %517 = vst [vmem:[%s475 + $0xa0] sm:$0xff] %v516
          %v518 = vld [vmem:[%s474 + $0xa8] sm:$0xff]
          %519 = vst [vmem:[%s475 + $0xa8] sm:$0xff] %v518
          %v520 = vld [vmem:[%s474 + $0xb0] sm:$0xff]
          %521 = vst [vmem:[%s475 + $0xb0] sm:$0xff] %v520
          %v522 = vld [vmem:[%s474 + $0xb8] sm:$0xff]
          %523 = vst [vmem:[%s475 + $0xb8] sm:$0xff] %v522
        $region52: #{reverse.0} parent=46 // loop_footer
          %s473 = sadd.s32 1, %s469
        $region53: #{reverse.0} parent=46 // loop_footer_branch
          %468 = sbr.rel target = $region49
        $region54: #{reverse.0} parent=46 // loop_exit
          _
      $region47: #{reverse.0} parent=38 // pred_fallthru
        _
    $region39: #{reverse.0} parent=1 // pred_fallthru
      _
    %584 = vnop

// kernel: _lambda_.7
$region0: #{_lambda_.7}
  #allocation0 [shape = 'u32[]', space=smem, size = 0x4, offset = 0x4, fixed_abs, tag = 'smem constant byte address 0x4 - core index']
  #allocation1 [shape = 'u32[144,128]{1,0:T(1,128)}', space=vmem, size = 0x12000, scoped, tag = 'internal scratch']
  %s0 = inlined_call_operand.vmem [shape: bf16[8,3072], index: 0, kind: input, shape index: {}]
  %s1 = inlined_call_operand.vmem [shape: bf16[3072,128], index: 1, kind: input, shape index: {}]
  %s2 = inlined_call_operand.vmem [shape: f32[1,128], index: 2, kind: input, shape index: {}]
  %s3 = inlined_call_operand.vmem [shape: bf16[128,128], index: 3, kind: input, shape index: {}]
  %s4 = inlined_call_operand.vmem [shape: f32[1,128], index: 4, kind: input, shape index: {}]
  %s5 = inlined_call_operand.vmem [shape: bf16[128,1024], index: 5, kind: input, shape index: {}]
  %s6 = inlined_call_operand.vmem [shape: f32[1,1024], index: 6, kind: input, shape index: {}]
  %s7 = inlined_call_operand.vmem [shape: f32[8,1024], index: 7, kind: output, shape index: {}]
  %s8 = sld [smem:[#allocation0]]
  $region38: #{_lambda_.7} parent=0
    _
  %s10 = ssub.s32 1, %s8
  %s11 = scalar_select 0, %s10, %s8
  // Predicated region
  $region2: #{_lambda_.7} parent=0 // pred_check
    _
  $region3: #{_lambda_.7} parent=0 // pred_check_branch
    %13 = sbr.rel (0) target = $region5
  $region4: #{_lambda_.7} parent=0 // pred_region
    _
  $region5: #{_lambda_.7} parent=0 // pred_fallthru
    _
  // Predicated region
  $region6: #{_lambda_.7} parent=0 // pred_check
    _
  $region7: #{_lambda_.7} parent=0 // pred_check_branch
    %15 = sbr.rel (0) target = $region9
  $region8: #{_lambda_.7} parent=0 // pred_region
    _
  $region9: #{_lambda_.7} parent=0 // pred_fallthru
    _
  // Predicated region
  $region10: #{_lambda_.7} parent=0 // pred_check
    _
  $region11: #{_lambda_.7} parent=0 // pred_check_branch
    %17 = sbr.rel (0) target = $region13
  $region12: #{_lambda_.7} parent=0 // pred_region
    _
  $region13: #{_lambda_.7} parent=0 // pred_fallthru
    _
  // Predicated region
  $region14: #{_lambda_.7} parent=0 // pred_check
    _
  $region15: #{_lambda_.7} parent=0 // pred_check_branch
    %19 = sbr.rel (0) target = $region17
  $region16: #{_lambda_.7} parent=0 // pred_region
    _
  $region17: #{_lambda_.7} parent=0 // pred_fallthru
    _
  // Predicated region
  $region18: #{_lambda_.7} parent=0 // pred_check
    _
  $region19: #{_lambda_.7} parent=0 // pred_check_branch
    %21 = sbr.rel (0) target = $region21
  $region20: #{_lambda_.7} parent=0 // pred_region
    _
  $region21: #{_lambda_.7} parent=0 // pred_fallthru
    _
  // Predicated region
  $region22: #{_lambda_.7} parent=0 // pred_check
    _
  $region23: #{_lambda_.7} parent=0 // pred_check_branch
    %23 = sbr.rel (0) target = $region25
  $region24: #{_lambda_.7} parent=0 // pred_region
    _
  $region25: #{_lambda_.7} parent=0 // pred_fallthru
    _
  // Predicated region
  $region26: #{_lambda_.7} parent=0 // pred_check
    _
  $region27: #{_lambda_.7} parent=0 // pred_check_branch
    %25 = sbr.rel (0) target = $region29
  $region28: #{_lambda_.7} parent=0 // pred_region
    _
  $region29: #{_lambda_.7} parent=0 // pred_fallthru
    _
  %v27 = vld [vmem:[%s0] sm:$0xff]
  %v28 = vld [vmem:[%s0 + $0x8] sm:$0xff]
  %v29 = vld [vmem:[%s0 + $0x10] sm:$0xff]
  %v30 = vld [vmem:[%s0 + $0x18] sm:$0xff]
  %v31 = vld [vmem:[%s0 + $0x20] sm:$0xff]
  %v32 = vld [vmem:[%s0 + $0x28] sm:$0xff]
  %v33 = vld [vmem:[%s0 + $0x30] sm:$0xff]
  %v34 = vld [vmem:[%s0 + $0x38] sm:$0xff]
  %v35 = vld [vmem:[%s0 + $0x40] sm:$0xff]
  %v36 = vld [vmem:[%s0 + $0x48] sm:$0xff]
  %v37 = vld [vmem:[%s0 + $0x50] sm:$0xff]
  %v38 = vld [vmem:[%s0 + $0x58] sm:$0xff]
  %v39 = vld [vmem:[%s1] sm:$0xf]
  %v40 = vld [vmem:[%s1 + $0x4] sm:$0xf]
  %v41 = vld [vmem:[%s1 + $0x8] sm:$0xf]
  %v42 = vld [vmem:[%s1 + $0xc] sm:$0xf]
  %v43 = vld [vmem:[%s1 + $0x10] sm:$0xf]
  %v44 = vld [vmem:[%s1 + $0x14] sm:$0xf]
  %v45 = vld [vmem:[%s1 + $0x18] sm:$0xf]
  %v46 = vld [vmem:[%s1 + $0x1c] sm:$0xf]
  %v47 = vld [vmem:[%s1 + $0x20] sm:$0xf]
  %v48 = vld [vmem:[%s1 + $0x24] sm:$0xf]
  %v49 = vld [vmem:[%s1 + $0x28] sm:$0xf]
  %v50 = vld [vmem:[%s1 + $0x2c] sm:$0xf]
  %v51 = vld [vmem:[%s1 + $0x30] sm:$0xf]
  %v52 = vld [vmem:[%s1 + $0x34] sm:$0xf]
  %v53 = vld [vmem:[%s1 + $0x38] sm:$0xf]
  %v54 = vld [vmem:[%s1 + $0x3c] sm:$0xf]
  %v55 = vld [vmem:[%s1 + $0x40] sm:$0xf]
  %v56 = vld [vmem:[%s1 + $0x44] sm:$0xf]
  %v57 = vld [vmem:[%s1 + $0x48] sm:$0xf]
  %v58 = vld [vmem:[%s1 + $0x4c] sm:$0xf]
  %v59 = vld [vmem:[%s1 + $0x50] sm:$0xf]
  %v60 = vld [vmem:[%s1 + $0x54] sm:$0xf]
  %v61 = vld [vmem:[%s1 + $0x58] sm:$0xf]
  %v62 = vld [vmem:[%s1 + $0x5c] sm:$0xf]
  %v63 = vld [vmem:[%s1 + $0x60] sm:$0xf]
  %v64 = vld [vmem:[%s1 + $0x64] sm:$0xf]
  %v65 = vld [vmem:[%s1 + $0x68] sm:$0xf]
  %v66 = vld [vmem:[%s1 + $0x6c] sm:$0xf]
  %v67 = vld [vmem:[%s1 + $0x70] sm:$0xf]
  %v68 = vld [vmem:[%s1 + $0x74] sm:$0xf]
  %v69 = vld [vmem:[%s1 + $0x78] sm:$0xf]
  %v70 = vld [vmem:[%s1 + $0x7c] sm:$0xf]
  %v71 = vld [vmem:[%s1 + $0x80] sm:$0xf]
  %v72 = vld [vmem:[%s1 + $0x84] sm:$0xf]
  %v73 = vld [vmem:[%s1 + $0x88] sm:$0xf]
  %v74 = vld [vmem:[%s1 + $0x8c] sm:$0xf]
  %v75 = vld [vmem:[%s1 + $0x90] sm:$0xf]
  %v76 = vld [vmem:[%s1 + $0x94] sm:$0xf]
  %v77 = vld [vmem:[%s1 + $0x98] sm:$0xf]
  %v78 = vld [vmem:[%s1 + $0x9c] sm:$0xf]
  %v79 = vld [vmem:[%s1 + $0xa0] sm:$0xf]
  %v80 = vld [vmem:[%s1 + $0xa4] sm:$0xf]
  %v81 = vld [vmem:[%s1 + $0xa8] sm:$0xf]
  %v82 = vld [vmem:[%s1 + $0xac] sm:$0xf]
  %v83 = vld [vmem:[%s1 + $0xb0] sm:$0xf]
  %v84 = vld [vmem:[%s1 + $0xb4] sm:$0xf]
  %v85 = vld [vmem:[%s1 + $0xb8] sm:$0xf]
  %v86 = vld [vmem:[%s1 + $0xbc] sm:$0xf]
  %v87 = vld [vmem:[%s1 + $0xc0] sm:$0xf]
  %v88 = vld [vmem:[%s1 + $0xc4] sm:$0xf]
  %v89 = vld [vmem:[%s1 + $0xc8] sm:$0xf]
  %v90 = vld [vmem:[%s1 + $0xcc] sm:$0xf]
  %v91 = vld [vmem:[%s1 + $0xd0] sm:$0xf]
  %v92 = vld [vmem:[%s1 + $0xd4] sm:$0xf]
  %v93 = vld [vmem:[%s1 + $0xd8] sm:$0xf]
  %v94 = vld [vmem:[%s1 + $0xdc] sm:$0xf]
  %v95 = vld [vmem:[%s1 + $0xe0] sm:$0xf]
  %v96 = vld [vmem:[%s1 + $0xe4] sm:$0xf]
  %v97 = vld [vmem:[%s1 + $0xe8] sm:$0xf]
  %v98 = vld [vmem:[%s1 + $0xec] sm:$0xf]
  %v99 = vld [vmem:[%s1 + $0xf0] sm:$0xf]
  %v100 = vld [vmem:[%s1 + $0xf4] sm:$0xf]
  %v101 = vld [vmem:[%s1 + $0xf8] sm:$0xf]
  %v102 = vld [vmem:[%s1 + $0xfc] sm:$0xf]
  %v103 = vld [vmem:[%s1 + $0x100] sm:$0xf]
  %v104 = vld [vmem:[%s1 + $0x104] sm:$0xf]
  %v105 = vld [vmem:[%s1 + $0x108] sm:$0xf]
  %v106 = vld [vmem:[%s1 + $0x10c] sm:$0xf]
  %v107 = vld [vmem:[%s1 + $0x110] sm:$0xf]
  %v108 = vld [vmem:[%s1 + $0x114] sm:$0xf]
  %v109 = vld [vmem:[%s1 + $0x118] sm:$0xf]
  %v110 = vld [vmem:[%s1 + $0x11c] sm:$0xf]
  %v111 = vld [vmem:[%s1 + $0x120] sm:$0xf]
  %v112 = vld [vmem:[%s1 + $0x124] sm:$0xf]
  %v113 = vld [vmem:[%s1 + $0x128] sm:$0xf]
  %v114 = vld [vmem:[%s1 + $0x12c] sm:$0xf]
  %v115 = vld [vmem:[%s1 + $0x130] sm:$0xf]
  %v116 = vld [vmem:[%s1 + $0x134] sm:$0xf]
  %v117 = vld [vmem:[%s1 + $0x138] sm:$0xf]
  %v118 = vld [vmem:[%s1 + $0x13c] sm:$0xf]
  %v119 = vld [vmem:[%s1 + $0x140] sm:$0xf]
  %v120 = vld [vmem:[%s1 + $0x144] sm:$0xf]
  %v121 = vld [vmem:[%s1 + $0x148] sm:$0xf]
  %v122 = vld [vmem:[%s1 + $0x14c] sm:$0xf]
  %v123 = vld [vmem:[%s1 + $0x150] sm:$0xf]
  %v124 = vld [vmem:[%s1 + $0x154] sm:$0xf]
  %v125 = vld [vmem:[%s1 + $0x158] sm:$0xf]
  %v126 = vld [vmem:[%s1 + $0x15c] sm:$0xf]
  %v127 = vld [vmem:[%s1 + $0x160] sm:$0xf]
  %v128 = vld [vmem:[%s1 + $0x164] sm:$0xf]
  %v129 = vld [vmem:[%s1 + $0x168] sm:$0xf]
  %v130 = vld [vmem:[%s1 + $0x16c] sm:$0xf]
  %v131 = vld [vmem:[%s1 + $0x170] sm:$0xf]
  %v132 = vld [vmem:[%s1 + $0x174] sm:$0xf]
  %v133 = vld [vmem:[%s1 + $0x178] sm:$0xf]
  %v134 = vld [vmem:[%s1 + $0x17c] sm:$0xf]
  %v135 = vld [vmem:[%s1 + $0x180] sm:$0xf]
  %v136 = vld [vmem:[%s1 + $0x184] sm:$0xf]
  %v137 = vld [vmem:[%s1 + $0x188] sm:$0xf]
  %v138 = vld [vmem:[%s1 + $0x18c] sm:$0xf]
  %v139 = vld [vmem:[%s1 + $0x190] sm:$0xf]
  %v140 = vld [vmem:[%s1 + $0x194] sm:$0xf]
  %v141 = vld [vmem:[%s1 + $0x198] sm:$0xf]
  %v142 = vld [vmem:[%s1 + $0x19c] sm:$0xf]
  %v143 = vld [vmem:[%s1 + $0x1a0] sm:$0xf]
  %v144 = vld [vmem:[%s1 + $0x1a4] sm:$0xf]
  %v145 = vld [vmem:[%s1 + $0x1a8] sm:$0xf]
  %v146 = vld [vmem:[%s1 + $0x1ac] sm:$0xf]
  %v147 = vld [vmem:[%s1 + $0x1b0] sm:$0xf]
  %v148 = vld [vmem:[%s1 + $0x1b4] sm:$0xf]
  %v149 = vld [vmem:[%s1 + $0x1b8] sm:$0xf]
  %v150 = vld [vmem:[%s1 + $0x1bc] sm:$0xf]
  %v151 = vld [vmem:[%s1 + $0x1c0] sm:$0xf]
  %v152 = vld [vmem:[%s1 + $0x1c4] sm:$0xf]
  %v153 = vld [vmem:[%s1 + $0x1c8] sm:$0xf]
  %v154 = vld [vmem:[%s1 + $0x1cc] sm:$0xf]
  %v155 = vld [vmem:[%s1 + $0x1d0] sm:$0xf]
  %v156 = vld [vmem:[%s1 + $0x1d4] sm:$0xf]
  %v157 = vld [vmem:[%s1 + $0x1d8] sm:$0xf]
  %v158 = vld [vmem:[%s1 + $0x1dc] sm:$0xf]
  %v159 = vld [vmem:[%s1 + $0x1e0] sm:$0xf]
  %v160 = vld [vmem:[%s1 + $0x1e4] sm:$0xf]
  %v161 = vld [vmem:[%s1 + $0x1e8] sm:$0xf]
  %v162 = vld [vmem:[%s1 + $0x1ec] sm:$0xf]
  %v163 = vld [vmem:[%s1 + $0x1f0] sm:$0xf]
  %v164 = vld [vmem:[%s1 + $0x1f4] sm:$0xf]
  %v165 = vld [vmem:[%s1 + $0x1f8] sm:$0xf]
  %v166 = vld [vmem:[%s1 + $0x1fc] sm:$0xf]
  %v167 = vld [vmem:[%s1 + $0x200] sm:$0xf]
  %v168 = vld [vmem:[%s1 + $0x204] sm:$0xf]
  %v169 = vld [vmem:[%s1 + $0x208] sm:$0xf]
  %v170 = vld [vmem:[%s1 + $0x20c] sm:$0xf]
  %v171 = vld [vmem:[%s1 + $0x210] sm:$0xf]
  %v172 = vld [vmem:[%s1 + $0x214] sm:$0xf]
  %v173 = vld [vmem:[%s1 + $0x218] sm:$0xf]
  %v174 = vld [vmem:[%s1 + $0x21c] sm:$0xf]
  %v175 = vld [vmem:[%s1 + $0x220] sm:$0xf]
  %v176 = vld [vmem:[%s1 + $0x224] sm:$0xf]
  %v177 = vld [vmem:[%s1 + $0x228] sm:$0xf]
  %v178 = vld [vmem:[%s1 + $0x22c] sm:$0xf]
  %v179 = vld [vmem:[%s1 + $0x230] sm:$0xf]
  %v180 = vld [vmem:[%s1 + $0x234] sm:$0xf]
  %v181 = vld [vmem:[%s1 + $0x238] sm:$0xf]
  %v182 = vld [vmem:[%s1 + $0x23c] sm:$0xf]
  %v183 = vld [vmem:[%s1 + $0x240] sm:$0xf]
  %v184 = vld [vmem:[%s1 + $0x244] sm:$0xf]
  %v185 = vld [vmem:[%s1 + $0x248] sm:$0xf]
  %v186 = vld [vmem:[%s1 + $0x24c] sm:$0xf]
  %v187 = vld [vmem:[%s1 + $0x250] sm:$0xf]
  %v188 = vld [vmem:[%s1 + $0x254] sm:$0xf]
  %v189 = vld [vmem:[%s1 + $0x258] sm:$0xf]
  %v190 = vld [vmem:[%s1 + $0x25c] sm:$0xf]
  %v191 = vld [vmem:[%s1 + $0x260] sm:$0xf]
  %v192 = vld [vmem:[%s1 + $0x264] sm:$0xf]
  %v193 = vld [vmem:[%s1 + $0x268] sm:$0xf]
  %v194 = vld [vmem:[%s1 + $0x26c] sm:$0xf]
  %v195 = vld [vmem:[%s1 + $0x270] sm:$0xf]
  %v196 = vld [vmem:[%s1 + $0x274] sm:$0xf]
  %v197 = vld [vmem:[%s1 + $0x278] sm:$0xf]
  %v198 = vld [vmem:[%s1 + $0x27c] sm:$0xf]
  %v199 = vld [vmem:[%s1 + $0x280] sm:$0xf]
  %v200 = vld [vmem:[%s1 + $0x284] sm:$0xf]
  %v201 = vld [vmem:[%s1 + $0x288] sm:$0xf]
  %v202 = vld [vmem:[%s1 + $0x28c] sm:$0xf]
  %v203 = vld [vmem:[%s1 + $0x290] sm:$0xf]
  %v204 = vld [vmem:[%s1 + $0x294] sm:$0xf]
  %v205 = vld [vmem:[%s1 + $0x298] sm:$0xf]
  %v206 = vld [vmem:[%s1 + $0x29c] sm:$0xf]
  %v207 = vld [vmem:[%s1 + $0x2a0] sm:$0xf]
  %v208 = vld [vmem:[%s1 + $0x2a4] sm:$0xf]
  %v209 = vld [vmem:[%s1 + $0x2a8] sm:$0xf]
  %v210 = vld [vmem:[%s1 + $0x2ac] sm:$0xf]
  %v211 = vld [vmem:[%s1 + $0x2b0] sm:$0xf]
  %v212 = vld [vmem:[%s1 + $0x2b4] sm:$0xf]
  %v213 = vld [vmem:[%s1 + $0x2b8] sm:$0xf]
  %v214 = vld [vmem:[%s1 + $0x2bc] sm:$0xf]
  %v215 = vld [vmem:[%s1 + $0x2c0] sm:$0xf]
  %v216 = vld [vmem:[%s1 + $0x2c4] sm:$0xf]
  %v217 = vld [vmem:[%s1 + $0x2c8] sm:$0xf]
  %v218 = vld [vmem:[%s1 + $0x2cc] sm:$0xf]
  %v219 = vld [vmem:[%s1 + $0x2d0] sm:$0xf]
  %v220 = vld [vmem:[%s1 + $0x2d4] sm:$0xf]
  %v221 = vld [vmem:[%s1 + $0x2d8] sm:$0xf]
  %v222 = vld [vmem:[%s1 + $0x2dc] sm:$0xf]
  %v223 = vld [vmem:[%s1 + $0x2e0] sm:$0xf]
  %v224 = vld [vmem:[%s1 + $0x2e4] sm:$0xf]
  %v225 = vld [vmem:[%s1 + $0x2e8] sm:$0xf]
  %v226 = vld [vmem:[%s1 + $0x2ec] sm:$0xf]
  %v227 = vld [vmem:[%s1 + $0x2f0] sm:$0xf]
  %v228 = vld [vmem:[%s1 + $0x2f4] sm:$0xf]
  %v229 = vld [vmem:[%s1 + $0x2f8] sm:$0xf]
  %v230 = vld [vmem:[%s1 + $0x2fc] sm:$0xf]
  %v231 = vld [vmem:[%s1 + $0x300] sm:$0xf]
  %v232 = vld [vmem:[%s1 + $0x304] sm:$0xf]
  %v233 = vld [vmem:[%s1 + $0x308] sm:$0xf]
  %v234 = vld [vmem:[%s1 + $0x30c] sm:$0xf]
  %v235 = vld [vmem:[%s1 + $0x310] sm:$0xf]
  %v236 = vld [vmem:[%s1 + $0x314] sm:$0xf]
  %v237 = vld [vmem:[%s1 + $0x318] sm:$0xf]
  %v238 = vld [vmem:[%s1 + $0x31c] sm:$0xf]
  %v239 = vld [vmem:[%s1 + $0x320] sm:$0xf]
  %v240 = vld [vmem:[%s1 + $0x324] sm:$0xf]
  %v241 = vld [vmem:[%s1 + $0x328] sm:$0xf]
  %v242 = vld [vmem:[%s1 + $0x32c] sm:$0xf]
  %v243 = vld [vmem:[%s1 + $0x330] sm:$0xf]
  %v244 = vld [vmem:[%s1 + $0x334] sm:$0xf]
  %v245 = vld [vmem:[%s1 + $0x338] sm:$0xf]
  %v246 = vld [vmem:[%s1 + $0x33c] sm:$0xf]
  %v247 = vld [vmem:[%s1 + $0x340] sm:$0xf]
  %v248 = vld [vmem:[%s1 + $0x344] sm:$0xf]
  %v249 = vld [vmem:[%s1 + $0x348] sm:$0xf]
  %v250 = vld [vmem:[%s1 + $0x34c] sm:$0xf]
  %v251 = vld [vmem:[%s1 + $0x350] sm:$0xf]
  %v252 = vld [vmem:[%s1 + $0x354] sm:$0xf]
  %v253 = vld [vmem:[%s1 + $0x358] sm:$0xf]
  %v254 = vld [vmem:[%s1 + $0x35c] sm:$0xf]
  %v255 = vld [vmem:[%s1 + $0x360] sm:$0xf]
  %v256 = vld [vmem:[%s1 + $0x364] sm:$0xf]
  %v257 = vld [vmem:[%s1 + $0x368] sm:$0xf]
  %v258 = vld [vmem:[%s1 + $0x36c] sm:$0xf]
  %v259 = vld [vmem:[%s1 + $0x370] sm:$0xf]
  %v260 = vld [vmem:[%s1 + $0x374] sm:$0xf]
  %v261 = vld [vmem:[%s1 + $0x378] sm:$0xf]
  %v262 = vld [vmem:[%s1 + $0x37c] sm:$0xf]
  %v263 = vld [vmem:[%s1 + $0x380] sm:$0xf]
  %v264 = vld [vmem:[%s1 + $0x384] sm:$0xf]
  %v265 = vld [vmem:[%s1 + $0x388] sm:$0xf]
  %v266 = vld [vmem:[%s1 + $0x38c] sm:$0xf]
  %v267 = vld [vmem:[%s1 + $0x390] sm:$0xf]
  %v268 = vld [vmem:[%s1 + $0x394] sm:$0xf]
  %v269 = vld [vmem:[%s1 + $0x398] sm:$0xf]
  %v270 = vld [vmem:[%s1 + $0x39c] sm:$0xf]
  %v271 = vld [vmem:[%s1 + $0x3a0] sm:$0xf]
  %v272 = vld [vmem:[%s1 + $0x3a4] sm:$0xf]
  %v273 = vld [vmem:[%s1 + $0x3a8] sm:$0xf]
  %v274 = vld [vmem:[%s1 + $0x3ac] sm:$0xf]
  %v275 = vld [vmem:[%s1 + $0x3b0] sm:$0xf]
  %v276 = vld [vmem:[%s1 + $0x3b4] sm:$0xf]
  %v277 = vld [vmem:[%s1 + $0x3b8] sm:$0xf]
  %v278 = vld [vmem:[%s1 + $0x3bc] sm:$0xf]
  %v279 = vld [vmem:[%s1 + $0x3c0] sm:$0xf]
  %v280 = vld [vmem:[%s1 + $0x3c4] sm:$0xf]
  %v281 = vld [vmem:[%s1 + $0x3c8] sm:$0xf]
  %v282 = vld [vmem:[%s1 + $0x3cc] sm:$0xf]
  %v283 = vld [vmem:[%s1 + $0x3d0] sm:$0xf]
  %v284 = vld [vmem:[%s1 + $0x3d4] sm:$0xf]
  %v285 = vld [vmem:[%s1 + $0x3d8] sm:$0xf]
  %v286 = vld [vmem:[%s1 + $0x3dc] sm:$0xf]
  %v287 = vld [vmem:[%s1 + $0x3e0] sm:$0xf]
  %v288 = vld [vmem:[%s1 + $0x3e4] sm:$0xf]
  %v289 = vld [vmem:[%s1 + $0x3e8] sm:$0xf]
  %v290 = vld [vmem:[%s1 + $0x3ec] sm:$0xf]
  %v291 = vld [vmem:[%s1 + $0x3f0] sm:$0xf]
  %v292 = vld [vmem:[%s1 + $0x3f4] sm:$0xf]
  %v293 = vld [vmem:[%s1 + $0x3f8] sm:$0xf]
  %v294 = vld [vmem:[%s1 + $0x3fc] sm:$0xf]
  %v295 = vld [vmem:[%s1 + $0x400] sm:$0xf]
  %v296 = vld [vmem:[%s1 + $0x404] sm:$0xf]
  %v297 = vld [vmem:[%s1 + $0x408] sm:$0xf]
  %v298 = vld [vmem:[%s1 + $0x40c] sm:$0xf]
  %v299 = vld [vmem:[%s1 + $0x410] sm:$0xf]
  %v300 = vld [vmem:[%s1 + $0x414] sm:$0xf]
  %v301 = vld [vmem:[%s1 + $0x418] sm:$0xf]
  %v302 = vld [vmem:[%s1 + $0x41c] sm:$0xf]
  %v303 = vld [vmem:[%s1 + $0x420] sm:$0xf]
  %v304 = vld [vmem:[%s1 + $0x424] sm:$0xf]
  %v305 = vld [vmem:[%s1 + $0x428] sm:$0xf]
  %v306 = vld [vmem:[%s1 + $0x42c] sm:$0xf]
  %v307 = vld [vmem:[%s1 + $0x430] sm:$0xf]
  %v308 = vld [vmem:[%s1 + $0x434] sm:$0xf]
  %v309 = vld [vmem:[%s1 + $0x438] sm:$0xf]
  %v310 = vld [vmem:[%s1 + $0x43c] sm:$0xf]
  %v311 = vld [vmem:[%s1 + $0x440] sm:$0xf]
  %v312 = vld [vmem:[%s1 + $0x444] sm:$0xf]
  %v313 = vld [vmem:[%s1 + $0x448] sm:$0xf]
  %v314 = vld [vmem:[%s1 + $0x44c] sm:$0xf]
  %v315 = vld [vmem:[%s1 + $0x450] sm:$0xf]
  %v316 = vld [vmem:[%s1 + $0x454] sm:$0xf]
  %v317 = vld [vmem:[%s1 + $0x458] sm:$0xf]
  %v318 = vld [vmem:[%s1 + $0x45c] sm:$0xf]
  %v319 = vld [vmem:[%s1 + $0x460] sm:$0xf]
  %v320 = vld [vmem:[%s1 + $0x464] sm:$0xf]
  %v321 = vld [vmem:[%s1 + $0x468] sm:$0xf]
  %v322 = vld [vmem:[%s1 + $0x46c] sm:$0xf]
  %v323 = vld [vmem:[%s1 + $0x470] sm:$0xf]
  %v324 = vld [vmem:[%s1 + $0x474] sm:$0xf]
  %v325 = vld [vmem:[%s1 + $0x478] sm:$0xf]
  %v326 = vld [vmem:[%s1 + $0x47c] sm:$0xf]
  %v327 = vld [vmem:[%s1 + $0x480] sm:$0xf]
  %v328 = vld [vmem:[%s1 + $0x484] sm:$0xf]
  %v329 = vld [vmem:[%s1 + $0x488] sm:$0xf]
  %v330 = vld [vmem:[%s1 + $0x48c] sm:$0xf]
  %v331 = vld [vmem:[%s1 + $0x490] sm:$0xf]
  %v332 = vld [vmem:[%s1 + $0x494] sm:$0xf]
  %v333 = vld [vmem:[%s1 + $0x498] sm:$0xf]
  %v334 = vld [vmem:[%s1 + $0x49c] sm:$0xf]
  %v335 = vld [vmem:[%s1 + $0x4a0] sm:$0xf]
  %v336 = vld [vmem:[%s1 + $0x4a4] sm:$0xf]
  %v337 = vld [vmem:[%s1 + $0x4a8] sm:$0xf]
  %v338 = vld [vmem:[%s1 + $0x4ac] sm:$0xf]
  %v339 = vld [vmem:[%s1 + $0x4b0] sm:$0xf]
  %v340 = vld [vmem:[%s1 + $0x4b4] sm:$0xf]
  %v341 = vld [vmem:[%s1 + $0x4b8] sm:$0xf]
  %v342 = vld [vmem:[%s1 + $0x4bc] sm:$0xf]
  %v343 = vld [vmem:[%s1 + $0x4c0] sm:$0xf]
  %v344 = vld [vmem:[%s1 + $0x4c4] sm:$0xf]
  %v345 = vld [vmem:[%s1 + $0x4c8] sm:$0xf]
  %v346 = vld [vmem:[%s1 + $0x4cc] sm:$0xf]
  %v347 = vld [vmem:[%s1 + $0x4d0] sm:$0xf]
  %v348 = vld [vmem:[%s1 + $0x4d4] sm:$0xf]
  %v349 = vld [vmem:[%s1 + $0x4d8] sm:$0xf]
  %v350 = vld [vmem:[%s1 + $0x4dc] sm:$0xf]
  %v351 = vld [vmem:[%s1 + $0x4e0] sm:$0xf]
  %v352 = vld [vmem:[%s1 + $0x4e4] sm:$0xf]
  %v353 = vld [vmem:[%s1 + $0x4e8] sm:$0xf]
  %v354 = vld [vmem:[%s1 + $0x4ec] sm:$0xf]
  %v355 = vld [vmem:[%s1 + $0x4f0] sm:$0xf]
  %v356 = vld [vmem:[%s1 + $0x4f4] sm:$0xf]
  %v357 = vld [vmem:[%s1 + $0x4f8] sm:$0xf]
  %v358 = vld [vmem:[%s1 + $0x4fc] sm:$0xf]
  %v359 = vld [vmem:[%s1 + $0x500] sm:$0xf]
  %v360 = vld [vmem:[%s1 + $0x504] sm:$0xf]
  %v361 = vld [vmem:[%s1 + $0x508] sm:$0xf]
  %v362 = vld [vmem:[%s1 + $0x50c] sm:$0xf]
  %v363 = vld [vmem:[%s1 + $0x510] sm:$0xf]
  %v364 = vld [vmem:[%s1 + $0x514] sm:$0xf]
  %v365 = vld [vmem:[%s1 + $0x518] sm:$0xf]
  %v366 = vld [vmem:[%s1 + $0x51c] sm:$0xf]
  %v367 = vld [vmem:[%s1 + $0x520] sm:$0xf]
  %v368 = vld [vmem:[%s1 + $0x524] sm:$0xf]
  %v369 = vld [vmem:[%s1 + $0x528] sm:$0xf]
  %v370 = vld [vmem:[%s1 + $0x52c] sm:$0xf]
  %v371 = vld [vmem:[%s1 + $0x530] sm:$0xf]
  %v372 = vld [vmem:[%s1 + $0x534] sm:$0xf]
  %v373 = vld [vmem:[%s1 + $0x538] sm:$0xf]
  %v374 = vld [vmem:[%s1 + $0x53c] sm:$0xf]
  %v375 = vld [vmem:[%s1 + $0x540] sm:$0xf]
  %v376 = vld [vmem:[%s1 + $0x544] sm:$0xf]
  %v377 = vld [vmem:[%s1 + $0x548] sm:$0xf]
  %v378 = vld [vmem:[%s1 + $0x54c] sm:$0xf]
  %v379 = vld [vmem:[%s1 + $0x550] sm:$0xf]
  %v380 = vld [vmem:[%s1 + $0x554] sm:$0xf]
  %v381 = vld [vmem:[%s1 + $0x558] sm:$0xf]
  %v382 = vld [vmem:[%s1 + $0x55c] sm:$0xf]
  %v383 = vld [vmem:[%s1 + $0x560] sm:$0xf]
  %v384 = vld [vmem:[%s1 + $0x564] sm:$0xf]
  %v385 = vld [vmem:[%s1 + $0x568] sm:$0xf]
  %v386 = vld [vmem:[%s1 + $0x56c] sm:$0xf]
  %v387 = vld [vmem:[%s1 + $0x570] sm:$0xf]
  %v388 = vld [vmem:[%s1 + $0x574] sm:$0xf]
  %v389 = vld [vmem:[%s1 + $0x578] sm:$0xf]
  %v390 = vld [vmem:[%s1 + $0x57c] sm:$0xf]
  %v391 = vld [vmem:[%s1 + $0x580] sm:$0xf]
  %v392 = vld [vmem:[%s1 + $0x584] sm:$0xf]
  %v393 = vld [vmem:[%s1 + $0x588] sm:$0xf]
  %v394 = vld [vmem:[%s1 + $0x58c] sm:$0xf]
  %v395 = vld [vmem:[%s1 + $0x590] sm:$0xf]
  %v396 = vld [vmem:[%s1 + $0x594] sm:$0xf]
  %v397 = vld [vmem:[%s1 + $0x598] sm:$0xf]
  %v398 = vld [vmem:[%s1 + $0x59c] sm:$0xf]
  %v399 = vld [vmem:[%s1 + $0x5a0] sm:$0xf]
  %v400 = vld [vmem:[%s1 + $0x5a4] sm:$0xf]
  %v401 = vld [vmem:[%s1 + $0x5a8] sm:$0xf]
  %v402 = vld [vmem:[%s1 + $0x5ac] sm:$0xf]
  %v403 = vld [vmem:[%s1 + $0x5b0] sm:$0xf]
  %v404 = vld [vmem:[%s1 + $0x5b4] sm:$0xf]
  %v405 = vld [vmem:[%s1 + $0x5b8] sm:$0xf]
  %v406 = vld [vmem:[%s1 + $0x5bc] sm:$0xf]
  %v407 = vld [vmem:[%s1 + $0x5c0] sm:$0xf]
  %v408 = vld [vmem:[%s1 + $0x5c4] sm:$0xf]
  %v409 = vld [vmem:[%s1 + $0x5c8] sm:$0xf]
  %v410 = vld [vmem:[%s1 + $0x5cc] sm:$0xf]
  %v411 = vld [vmem:[%s1 + $0x5d0] sm:$0xf]
  %v412 = vld [vmem:[%s1 + $0x5d4] sm:$0xf]
  %v413 = vld [vmem:[%s1 + $0x5d8] sm:$0xf]
  %v414 = vld [vmem:[%s1 + $0x5dc] sm:$0xf]
  %v415 = vld [vmem:[%s1 + $0x5e0] sm:$0xf]
  %v416 = vld [vmem:[%s1 + $0x5e4] sm:$0xf]
  %v417 = vld [vmem:[%s1 + $0x5e8] sm:$0xf]
  %v418 = vld [vmem:[%s1 + $0x5ec] sm:$0xf]
  %v419 = vld [vmem:[%s1 + $0x5f0] sm:$0xf]
  %v420 = vld [vmem:[%s1 + $0x5f4] sm:$0xf]
  %v421 = vld [vmem:[%s1 + $0x5f8] sm:$0xf]
  %v422 = vld [vmem:[%s1 + $0x5fc] sm:$0xf]
  %v423 = vld [vmem:[%s2] sm:$0x1]
  %v425 = vlaneseq
  %v426 = vshrl.u32 %v425, 7
  %v427 = vsub.s32 0, %v426
  %v428 = vrot.slane %v423, %v427
  %v442 = vunpack.c.l.b16 %v27
  %v443 = vunpack.c.h.b16 %v27
  %v444 = vunpack.c.l.b16 %v28
  %v445 = vunpack.c.h.b16 %v28
  %v446 = vunpack.c.l.b16 %v29
  %v447 = vunpack.c.h.b16 %v29
  %v448 = vunpack.c.l.b16 %v30
  %v449 = vunpack.c.h.b16 %v30
  %v450 = vunpack.c.l.b16 %v31
  %v451 = vunpack.c.h.b16 %v31
  %v452 = vunpack.c.l.b16 %v32
  %v453 = vunpack.c.h.b16 %v32
  %v454 = vunpack.c.l.b16 %v33
  %v455 = vunpack.c.h.b16 %v33
  %v456 = vunpack.c.l.b16 %v34
  %v457 = vunpack.c.h.b16 %v34
  %v458 = vunpack.c.l.b16 %v35
  %v459 = vunpack.c.h.b16 %v35
  %v460 = vunpack.c.l.b16 %v36
  %v461 = vunpack.c.h.b16 %v36
  %v462 = vunpack.c.l.b16 %v37
  %v463 = vunpack.c.h.b16 %v37
  %v464 = vunpack.c.l.b16 %v38
  %v465 = vunpack.c.h.b16 %v38
  %v466 = vpack.c.b16 %v442, %v442
  %v467 = vpack.c.b16 %v443, %v443
  %v468 = vpack.c.b16 %v444, %v444
  %v469 = vpack.c.b16 %v445, %v445
  %v470 = vpack.c.b16 %v446, %v446
  %v471 = vpack.c.b16 %v447, %v447
  %v472 = vpack.c.b16 %v448, %v448
  %v473 = vpack.c.b16 %v449, %v449
  %v474 = vpack.c.b16 %v450, %v450
  %v475 = vpack.c.b16 %v451, %v451
  %v476 = vpack.c.b16 %v452, %v452
  %v477 = vpack.c.b16 %v453, %v453
  %v478 = vpack.c.b16 %v454, %v454
  %v479 = vpack.c.b16 %v455, %v455
  %v480 = vpack.c.b16 %v456, %v456
  %v481 = vpack.c.b16 %v457, %v457
  %v482 = vpack.c.b16 %v458, %v458
  %v483 = vpack.c.b16 %v459, %v459
  %v484 = vpack.c.b16 %v460, %v460
  %v485 = vpack.c.b16 %v461, %v461
  %v486 = vpack.c.b16 %v462, %v462
  %v487 = vpack.c.b16 %v463, %v463
  %v488 = vpack.c.b16 %v464, %v464
  %v489 = vpack.c.b16 %v465, %v465
  %v898 = vunpack.c.l.b16 %v39
  %v899 = vunpack.c.l.b16 %v40
  %v900 = vunpack.c.l.b16 %v41
  %v901 = vunpack.c.l.b16 %v42
  %v902 = vunpack.c.l.b16 %v43
  %v903 = vunpack.c.l.b16 %v44
  %v904 = vunpack.c.l.b16 %v45
  %v905 = vunpack.c.l.b16 %v46
  %v906 = vunpack.c.l.b16 %v47
  %v907 = vunpack.c.l.b16 %v48
  %v908 = vunpack.c.l.b16 %v49
  %v909 = vunpack.c.l.b16 %v50
  %v910 = vunpack.c.l.b16 %v51
  %v911 = vunpack.c.l.b16 %v52
  %v912 = vunpack.c.l.b16 %v53
  %v913 = vunpack.c.l.b16 %v54
  %v914 = vunpack.c.l.b16 %v55
  %v915 = vunpack.c.l.b16 %v56
  %v916 = vunpack.c.l.b16 %v57
  %v917 = vunpack.c.l.b16 %v58
  %v918 = vunpack.c.l.b16 %v59
  %v919 = vunpack.c.l.b16 %v60
  %v920 = vunpack.c.l.b16 %v61
  %v921 = vunpack.c.l.b16 %v62
  %v922 = vunpack.c.l.b16 %v63
  %v923 = vunpack.c.l.b16 %v64
  %v924 = vunpack.c.l.b16 %v65
  %v925 = vunpack.c.l.b16 %v66
  %v926 = vunpack.c.l.b16 %v67
  %v927 = vunpack.c.l.b16 %v68
  %v928 = vunpack.c.l.b16 %v69
  %v929 = vunpack.c.l.b16 %v70
  %v930 = vunpack.c.l.b16 %v71
  %v931 = vunpack.c.l.b16 %v72
  %v932 = vunpack.c.l.b16 %v73
  %v933 = vunpack.c.l.b16 %v74
  %v934 = vunpack.c.l.b16 %v75
  %v935 = vunpack.c.l.b16 %v76
  %v936 = vunpack.c.l.b16 %v77
  %v937 = vunpack.c.l.b16 %v78
  %v938 = vunpack.c.l.b16 %v79
  %v939 = vunpack.c.l.b16 %v80
  %v940 = vunpack.c.l.b16 %v81
  %v941 = vunpack.c.l.b16 %v82
  %v942 = vunpack.c.l.b16 %v83
  %v943 = vunpack.c.l.b16 %v84
  %v944 = vunpack.c.l.b16 %v85
  %v945 = vunpack.c.l.b16 %v86
  %v946 = vunpack.c.l.b16 %v87
  %v947 = vunpack.c.l.b16 %v88
  %v948 = vunpack.c.l.b16 %v89
  %v949 = vunpack.c.l.b16 %v90
  %v950 = vunpack.c.l.b16 %v91
  %v951 = vunpack.c.l.b16 %v92
  %v952 = vunpack.c.l.b16 %v93
  %v953 = vunpack.c.l.b16 %v94
  %v954 = vunpack.c.l.b16 %v95
  %v955 = vunpack.c.l.b16 %v96
  %v956 = vunpack.c.l.b16 %v97
  %v957 = vunpack.c.l.b16 %v98
  %v958 = vunpack.c.l.b16 %v99
  %v959 = vunpack.c.l.b16 %v100
  %v960 = vunpack.c.l.b16 %v101
  %v961 = vunpack.c.l.b16 %v102
  %v962 = vunpack.c.l.b16 %v103
  %v963 = vunpack.c.l.b16 %v104
  %v964 = vunpack.c.l.b16 %v105
  %v965 = vunpack.c.l.b16 %v106
  %v966 = vunpack.c.l.b16 %v107
  %v967 = vunpack.c.l.b16 %v108
  %v968 = vunpack.c.l.b16 %v109
  %v969 = vunpack.c.l.b16 %v110
  %v970 = vunpack.c.l.b16 %v111
  %v971 = vunpack.c.l.b16 %v112
  %v972 = vunpack.c.l.b16 %v113
  %v973 = vunpack.c.l.b16 %v114
  %v974 = vunpack.c.l.b16 %v115
  %v975 = vunpack.c.l.b16 %v116
  %v976 = vunpack.c.l.b16 %v117
  %v977 = vunpack.c.l.b16 %v118
  %v978 = vunpack.c.l.b16 %v119
  %v979 = vunpack.c.l.b16 %v120
  %v980 = vunpack.c.l.b16 %v121
  %v981 = vunpack.c.l.b16 %v122
  %v982 = vunpack.c.l.b16 %v123
  %v983 = vunpack.c.l.b16 %v124
  %v984 = vunpack.c.l.b16 %v125
  %v985 = vunpack.c.l.b16 %v126
  %v986 = vunpack.c.l.b16 %v127
  %v987 = vunpack.c.l.b16 %v128
  %v988 = vunpack.c.l.b16 %v129
  %v989 = vunpack.c.l.b16 %v130
  %v990 = vunpack.c.l.b16 %v131
  %v991 = vunpack.c.l.b16 %v132
  %v992 = vunpack.c.l.b16 %v133
  %v993 = vunpack.c.l.b16 %v134
  %v994 = vunpack.c.l.b16 %v135
  %v995 = vunpack.c.l.b16 %v136
  %v996 = vunpack.c.l.b16 %v137
  %v997 = vunpack.c.l.b16 %v138
  %v998 = vunpack.c.l.b16 %v139
  %v999 = vunpack.c.l.b16 %v140
  %v1000 = vunpack.c.l.b16 %v141
  %v1001 = vunpack.c.l.b16 %v142
  %v1002 = vunpack.c.l.b16 %v143
  %v1003 = vunpack.c.l.b16 %v144
  %v1004 = vunpack.c.l.b16 %v145
  %v1005 = vunpack.c.l.b16 %v146
  %v1006 = vunpack.c.l.b16 %v147
  %v1007 = vunpack.c.l.b16 %v148
  %v1008 = vunpack.c.l.b16 %v149
  %v1009 = vunpack.c.l.b16 %v150
  %v1010 = vunpack.c.l.b16 %v151
  %v1011 = vunpack.c.l.b16 %v152
  %v1012 = vunpack.c.l.b16 %v153
  %v1013 = vunpack.c.l.b16 %v154
  %v1014 = vunpack.c.l.b16 %v155
  %v1015 = vunpack.c.l.b16 %v156
  %v1016 = vunpack.c.l.b16 %v157
  %v1017 = vunpack.c.l.b16 %v158
  %v1018 = vunpack.c.l.b16 %v159
  %v1019 = vunpack.c.l.b16 %v160
  %v1020 = vunpack.c.l.b16 %v161
  %v1021 = vunpack.c.l.b16 %v162
  %v1022 = vunpack.c.l.b16 %v163
  %v1023 = vunpack.c.l.b16 %v164
  %v1024 = vunpack.c.l.b16 %v165
  %v1025 = vunpack.c.l.b16 %v166
  %v1026 = vunpack.c.l.b16 %v167
  %v1027 = vunpack.c.l.b16 %v168
  %v1028 = vunpack.c.l.b16 %v169
  %v1029 = vunpack.c.l.b16 %v170
  %v1030 = vunpack.c.l.b16 %v171
  %v1031 = vunpack.c.l.b16 %v172
  %v1032 = vunpack.c.l.b16 %v173
  %v1033 = vunpack.c.l.b16 %v174
  %v1034 = vunpack.c.l.b16 %v175
  %v1035 = vunpack.c.l.b16 %v176
  %v1036 = vunpack.c.l.b16 %v177
  %v1037 = vunpack.c.l.b16 %v178
  %v1038 = vunpack.c.l.b16 %v179
  %v1039 = vunpack.c.l.b16 %v180
  %v1040 = vunpack.c.l.b16 %v181
  %v1041 = vunpack.c.l.b16 %v182
  %v1042 = vunpack.c.l.b16 %v183
  %v1043 = vunpack.c.l.b16 %v184
  %v1044 = vunpack.c.l.b16 %v185
  %v1045 = vunpack.c.l.b16 %v186
  %v1046 = vunpack.c.l.b16 %v187
  %v1047 = vunpack.c.l.b16 %v188
  %v1048 = vunpack.c.l.b16 %v189
  %v1049 = vunpack.c.l.b16 %v190
  %v1050 = vunpack.c.l.b16 %v191
  %v1051 = vunpack.c.l.b16 %v192
  %v1052 = vunpack.c.l.b16 %v193
  %v1053 = vunpack.c.l.b16 %v194
  %v1054 = vunpack.c.l.b16 %v195
  %v1055 = vunpack.c.l.b16 %v196
  %v1056 = vunpack.c.l.b16 %v197
  %v1057 = vunpack.c.l.b16 %v198
  %v1058 = vunpack.c.l.b16 %v199
  %v1059 = vunpack.c.l.b16 %v200
  %v1060 = vunpack.c.l.b16 %v201
  %v1061 = vunpack.c.l.b16 %v202
  %v1062 = vunpack.c.l.b16 %v203
  %v1063 = vunpack.c.l.b16 %v204
  %v1064 = vunpack.c.l.b16 %v205
  %v1065 = vunpack.c.l.b16 %v206
  %v1066 = vunpack.c.l.b16 %v207
  %v1067 = vunpack.c.l.b16 %v208
  %v1068 = vunpack.c.l.b16 %v209
  %v1069 = vunpack.c.l.b16 %v210
  %v1070 = vunpack.c.l.b16 %v211
  %v1071 = vunpack.c.l.b16 %v212
  %v1072 = vunpack.c.l.b16 %v213
  %v1073 = vunpack.c.l.b16 %v214
  %v1074 = vunpack.c.l.b16 %v215
  %v1075 = vunpack.c.l.b16 %v216
  %v1076 = vunpack.c.l.b16 %v217
  %v1077 = vunpack.c.l.b16 %v218
  %v1078 = vunpack.c.l.b16 %v219
  %v1079 = vunpack.c.l.b16 %v220
  %v1080 = vunpack.c.l.b16 %v221
  %v1081 = vunpack.c.l.b16 %v222
  %v1082 = vunpack.c.l.b16 %v223
  %v1083 = vunpack.c.l.b16 %v224
  %v1084 = vunpack.c.l.b16 %v225
  %v1085 = vunpack.c.l.b16 %v226
  %v1086 = vunpack.c.l.b16 %v227
  %v1087 = vunpack.c.l.b16 %v228
  %v1088 = vunpack.c.l.b16 %v229
  %v1089 = vunpack.c.l.b16 %v230
  %v1090 = vunpack.c.l.b16 %v231
  %v1091 = vunpack.c.l.b16 %v232
  %v1092 = vunpack.c.l.b16 %v233
  %v1093 = vunpack.c.l.b16 %v234
  %v1094 = vunpack.c.l.b16 %v235
  %v1095 = vunpack.c.l.b16 %v236
  %v1096 = vunpack.c.l.b16 %v237
  %v1097 = vunpack.c.l.b16 %v238
  %v1098 = vunpack.c.l.b16 %v239
  %v1099 = vunpack.c.l.b16 %v240
  %v1100 = vunpack.c.l.b16 %v241
  %v1101 = vunpack.c.l.b16 %v242
  %v1102 = vunpack.c.l.b16 %v243
  %v1103 = vunpack.c.l.b16 %v244
  %v1104 = vunpack.c.l.b16 %v245
  %v1105 = vunpack.c.l.b16 %v246
  %v1106 = vunpack.c.l.b16 %v247
  %v1107 = vunpack.c.l.b16 %v248
  %v1108 = vunpack.c.l.b16 %v249
  %v1109 = vunpack.c.l.b16 %v250
  %v1110 = vunpack.c.l.b16 %v251
  %v1111 = vunpack.c.l.b16 %v252
  %v1112 = vunpack.c.l.b16 %v253
  %v1113 = vunpack.c.l.b16 %v254
  %v1114 = vunpack.c.l.b16 %v255
  %v1115 = vunpack.c.l.b16 %v256
  %v1116 = vunpack.c.l.b16 %v257
  %v1117 = vunpack.c.l.b16 %v258
  %v1118 = vunpack.c.l.b16 %v259
  %v1119 = vunpack.c.l.b16 %v260
  %v1120 = vunpack.c.l.b16 %v261
  %v1121 = vunpack.c.l.b16 %v262
  %v1122 = vunpack.c.l.b16 %v263
  %v1123 = vunpack.c.l.b16 %v264
  %v1124 = vunpack.c.l.b16 %v265
  %v1125 = vunpack.c.l.b16 %v266
  %v1126 = vunpack.c.l.b16 %v267
  %v1127 = vunpack.c.l.b16 %v268
  %v1128 = vunpack.c.l.b16 %v269
  %v1129 = vunpack.c.l.b16 %v270
  %v1130 = vunpack.c.l.b16 %v271
  %v1131 = vunpack.c.l.b16 %v272
  %v1132 = vunpack.c.l.b16 %v273
  %v1133 = vunpack.c.l.b16 %v274
  %v1134 = vunpack.c.l.b16 %v275
  %v1135 = vunpack.c.l.b16 %v276
  %v1136 = vunpack.c.l.b16 %v277
  %v1137 = vunpack.c.l.b16 %v278
  %v1138 = vunpack.c.l.b16 %v279
  %v1139 = vunpack.c.l.b16 %v280
  %v1140 = vunpack.c.l.b16 %v281
  %v1141 = vunpack.c.l.b16 %v282
  %v1142 = vunpack.c.l.b16 %v283
  %v1143 = vunpack.c.l.b16 %v284
  %v1144 = vunpack.c.l.b16 %v285
  %v1145 = vunpack.c.l.b16 %v286
  %v1146 = vunpack.c.l.b16 %v287
  %v1147 = vunpack.c.l.b16 %v288
  %v1148 = vunpack.c.l.b16 %v289
  %v1149 = vunpack.c.l.b16 %v290
  %v1150 = vunpack.c.l.b16 %v291
  %v1151 = vunpack.c.l.b16 %v292
  %v1152 = vunpack.c.l.b16 %v293
  %v1153 = vunpack.c.l.b16 %v294
  %v1154 = vunpack.c.l.b16 %v295
  %v1155 = vunpack.c.l.b16 %v296
  %v1156 = vunpack.c.l.b16 %v297
  %v1157 = vunpack.c.l.b16 %v298
  %v1158 = vunpack.c.l.b16 %v299
  %v1159 = vunpack.c.l.b16 %v300
  %v1160 = vunpack.c.l.b16 %v301
  %v1161 = vunpack.c.l.b16 %v302
  %v1162 = vunpack.c.l.b16 %v303
  %v1163 = vunpack.c.l.b16 %v304
  %v1164 = vunpack.c.l.b16 %v305
  %v1165 = vunpack.c.l.b16 %v306
  %v1166 = vunpack.c.l.b16 %v307
  %v1167 = vunpack.c.l.b16 %v308
  %v1168 = vunpack.c.l.b16 %v309
  %v1169 = vunpack.c.l.b16 %v310
  %v1170 = vunpack.c.l.b16 %v311
  %v1171 = vunpack.c.l.b16 %v312
  %v1172 = vunpack.c.l.b16 %v313
  %v1173 = vunpack.c.l.b16 %v314
  %v1174 = vunpack.c.l.b16 %v315
  %v1175 = vunpack.c.l.b16 %v316
  %v1176 = vunpack.c.l.b16 %v317
  %v1177 = vunpack.c.l.b16 %v318
  %v1178 = vunpack.c.l.b16 %v319
  %v1179 = vunpack.c.l.b16 %v320
  %v1180 = vunpack.c.l.b16 %v321
  %v1181 = vunpack.c.l.b16 %v322
  %v1182 = vunpack.c.l.b16 %v323
  %v1183 = vunpack.c.l.b16 %v324
  %v1184 = vunpack.c.l.b16 %v325
  %v1185 = vunpack.c.l.b16 %v326
  %v1186 = vunpack.c.l.b16 %v327
  %v1187 = vunpack.c.l.b16 %v328
  %v1188 = vunpack.c.l.b16 %v329
  %v1189 = vunpack.c.l.b16 %v330
  %v1190 = vunpack.c.l.b16 %v331
  %v1191 = vunpack.c.l.b16 %v332
  %v1192 = vunpack.c.l.b16 %v333
  %v1193 = vunpack.c.l.b16 %v334
  %v1194 = vunpack.c.l.b16 %v335
  %v1195 = vunpack.c.l.b16 %v336
  %v1196 = vunpack.c.l.b16 %v337
  %v1197 = vunpack.c.l.b16 %v338
  %v1198 = vunpack.c.l.b16 %v339
  %v1199 = vunpack.c.l.b16 %v340
  %v1200 = vunpack.c.l.b16 %v341
  %v1201 = vunpack.c.l.b16 %v342
  %v1202 = vunpack.c.l.b16 %v343
  %v1203 = vunpack.c.l.b16 %v344
  %v1204 = vunpack.c.l.b16 %v345
  %v1205 = vunpack.c.l.b16 %v346
  %v1206 = vunpack.c.l.b16 %v347
  %v1207 = vunpack.c.l.b16 %v348
  %v1208 = vunpack.c.l.b16 %v349
  %v1209 = vunpack.c.l.b16 %v350
  %v1210 = vunpack.c.l.b16 %v351
  %v1211 = vunpack.c.l.b16 %v352
  %v1212 = vunpack.c.l.b16 %v353
  %v1213 = vunpack.c.l.b16 %v354
  %v1214 = vunpack.c.l.b16 %v355
  %v1215 = vunpack.c.l.b16 %v356
  %v1216 = vunpack.c.l.b16 %v357
  %v1217 = vunpack.c.l.b16 %v358
  %v1218 = vunpack.c.l.b16 %v359
  %v1219 = vunpack.c.l.b16 %v360
  %v1220 = vunpack.c.l.b16 %v361
  %v1221 = vunpack.c.l.b16 %v362
  %v1222 = vunpack.c.l.b16 %v363
  %v1223 = vunpack.c.l.b16 %v364
  %v1224 = vunpack.c.l.b16 %v365
  %v1225 = vunpack.c.l.b16 %v366
  %v1226 = vunpack.c.l.b16 %v367
  %v1227 = vunpack.c.l.b16 %v368
  %v1228 = vunpack.c.l.b16 %v369
  %v1229 = vunpack.c.l.b16 %v370
  %v1230 = vunpack.c.l.b16 %v371
  %v1231 = vunpack.c.l.b16 %v372
  %v1232 = vunpack.c.l.b16 %v373
  %v1233 = vunpack.c.l.b16 %v374
  %v1234 = vunpack.c.l.b16 %v375
  %v1235 = vunpack.c.l.b16 %v376
  %v1236 = vunpack.c.l.b16 %v377
  %v1237 = vunpack.c.l.b16 %v378
  %v1238 = vunpack.c.l.b16 %v379
  %v1239 = vunpack.c.l.b16 %v380
  %v1240 = vunpack.c.l.b16 %v381
  %v1241 = vunpack.c.l.b16 %v382
  %v1242 = vunpack.c.l.b16 %v383
  %v1243 = vunpack.c.l.b16 %v384
  %v1244 = vunpack.c.l.b16 %v385
  %v1245 = vunpack.c.l.b16 %v386
  %v1246 = vunpack.c.l.b16 %v387
  %v1247 = vunpack.c.l.b16 %v388
  %v1248 = vunpack.c.l.b16 %v389
  %v1249 = vunpack.c.l.b16 %v390
  %v1250 = vunpack.c.l.b16 %v391
  %v1251 = vunpack.c.l.b16 %v392
  %v1252 = vunpack.c.l.b16 %v393
  %v1253 = vunpack.c.l.b16 %v394
  %v1254 = vunpack.c.l.b16 %v395
  %v1255 = vunpack.c.l.b16 %v396
  %v1256 = vunpack.c.l.b16 %v397
  %v1257 = vunpack.c.l.b16 %v398
  %v1258 = vunpack.c.l.b16 %v399
  %v1259 = vunpack.c.l.b16 %v400
  %v1260 = vunpack.c.l.b16 %v401
  %v1261 = vunpack.c.l.b16 %v402
  %v1262 = vunpack.c.l.b16 %v403
  %v1263 = vunpack.c.l.b16 %v404
  %v1264 = vunpack.c.l.b16 %v405
  %v1265 = vunpack.c.l.b16 %v406
  %v1266 = vunpack.c.l.b16 %v407
  %v1267 = vunpack.c.l.b16 %v408
  %v1268 = vunpack.c.l.b16 %v409
  %v1269 = vunpack.c.l.b16 %v410
  %v1270 = vunpack.c.l.b16 %v411
  %v1271 = vunpack.c.l.b16 %v412
  %v1272 = vunpack.c.l.b16 %v413
  %v1273 = vunpack.c.l.b16 %v414
  %v1274 = vunpack.c.l.b16 %v415
  %v1275 = vunpack.c.l.b16 %v416
  %v1276 = vunpack.c.l.b16 %v417
  %v1277 = vunpack.c.l.b16 %v418
  %v1278 = vunpack.c.l.b16 %v419
  %v1279 = vunpack.c.l.b16 %v420
  %v1280 = vunpack.c.l.b16 %v421
  %v1281 = vunpack.c.l.b16 %v422
  %v1282 = vpack.c.b16 %v899, %v898
  %v1283 = vpack.c.b16 %v901, %v900
  %v1284 = vpack.c.b16 %v903, %v902
  %v1285 = vpack.c.b16 %v905, %v904
  %v1286 = vpack.c.b16 %v907, %v906
  %v1287 = vpack.c.b16 %v909, %v908
  %v1288 = vpack.c.b16 %v911, %v910
  %v1289 = vpack.c.b16 %v913, %v912
  %v1290 = vpack.c.b16 %v915, %v914
  %v1291 = vpack.c.b16 %v917, %v916
  %v1292 = vpack.c.b16 %v919, %v918
  %v1293 = vpack.c.b16 %v921, %v920
  %v1294 = vpack.c.b16 %v923, %v922
  %v1295 = vpack.c.b16 %v925, %v924
  %v1296 = vpack.c.b16 %v927, %v926
  %v1297 = vpack.c.b16 %v929, %v928
  %v1298 = vpack.c.b16 %v931, %v930
  %v1299 = vpack.c.b16 %v933, %v932
  %v1300 = vpack.c.b16 %v935, %v934
  %v1301 = vpack.c.b16 %v937, %v936
  %v1302 = vpack.c.b16 %v939, %v938
  %v1303 = vpack.c.b16 %v941, %v940
  %v1304 = vpack.c.b16 %v943, %v942
  %v1305 = vpack.c.b16 %v945, %v944
  %v1306 = vpack.c.b16 %v947, %v946
  %v1307 = vpack.c.b16 %v949, %v948
  %v1308 = vpack.c.b16 %v951, %v950
  %v1309 = vpack.c.b16 %v953, %v952
  %v1310 = vpack.c.b16 %v955, %v954
  %v1311 = vpack.c.b16 %v957, %v956
  %v1312 = vpack.c.b16 %v959, %v958
  %v1313 = vpack.c.b16 %v961, %v960
  %v1314 = vpack.c.b16 %v963, %v962
  %v1315 = vpack.c.b16 %v965, %v964
  %v1316 = vpack.c.b16 %v967, %v966
  %v1317 = vpack.c.b16 %v969, %v968
  %v1318 = vpack.c.b16 %v971, %v970
  %v1319 = vpack.c.b16 %v973, %v972
  %v1320 = vpack.c.b16 %v975, %v974
  %v1321 = vpack.c.b16 %v977, %v976
  %v1322 = vpack.c.b16 %v979, %v978
  %v1323 = vpack.c.b16 %v981, %v980
  %v1324 = vpack.c.b16 %v983, %v982
  %v1325 = vpack.c.b16 %v985, %v984
  %v1326 = vpack.c.b16 %v987, %v986
  %v1327 = vpack.c.b16 %v989, %v988
  %v1328 = vpack.c.b16 %v991, %v990
  %v1329 = vpack.c.b16 %v993, %v992
  %v1330 = vpack.c.b16 %v995, %v994
  %v1331 = vpack.c.b16 %v997, %v996
  %v1332 = vpack.c.b16 %v999, %v998
  %v1333 = vpack.c.b16 %v1001, %v1000
  %v1334 = vpack.c.b16 %v1003, %v1002
  %v1335 = vpack.c.b16 %v1005, %v1004
  %v1336 = vpack.c.b16 %v1007, %v1006
  %v1337 = vpack.c.b16 %v1009, %v1008
  %v1338 = vpack.c.b16 %v1011, %v1010
  %v1339 = vpack.c.b16 %v1013, %v1012
  %v1340 = vpack.c.b16 %v1015, %v1014
  %v1341 = vpack.c.b16 %v1017, %v1016
  %v1342 = vpack.c.b16 %v1019, %v1018
  %v1343 = vpack.c.b16 %v1021, %v1020
  %v1344 = vpack.c.b16 %v1023, %v1022
  %v1345 = vpack.c.b16 %v1025, %v1024
  %v1346 = vpack.c.b16 %v1027, %v1026
  %v1347 = vpack.c.b16 %v1029, %v1028
  %v1348 = vpack.c.b16 %v1031, %v1030
  %v1349 = vpack.c.b16 %v1033, %v1032
  %v1350 = vpack.c.b16 %v1035, %v1034
  %v1351 = vpack.c.b16 %v1037, %v1036
  %v1352 = vpack.c.b16 %v1039, %v1038
  %v1353 = vpack.c.b16 %v1041, %v1040
  %v1354 = vpack.c.b16 %v1043, %v1042
  %v1355 = vpack.c.b16 %v1045, %v1044
  %v1356 = vpack.c.b16 %v1047, %v1046
  %v1357 = vpack.c.b16 %v1049, %v1048
  %v1358 = vpack.c.b16 %v1051, %v1050
  %v1359 = vpack.c.b16 %v1053, %v1052
  %v1360 = vpack.c.b16 %v1055, %v1054
  %v1361 = vpack.c.b16 %v1057, %v1056
  %v1362 = vpack.c.b16 %v1059, %v1058
  %v1363 = vpack.c.b16 %v1061, %v1060
  %v1364 = vpack.c.b16 %v1063, %v1062
  %v1365 = vpack.c.b16 %v1065, %v1064
  %v1366 = vpack.c.b16 %v1067, %v1066
  %v1367 = vpack.c.b16 %v1069, %v1068
  %v1368 = vpack.c.b16 %v1071, %v1070
  %v1369 = vpack.c.b16 %v1073, %v1072
  %v1370 = vpack.c.b16 %v1075, %v1074
  %v1371 = vpack.c.b16 %v1077, %v1076
  %v1372 = vpack.c.b16 %v1079, %v1078
  %v1373 = vpack.c.b16 %v1081, %v1080
  %v1374 = vpack.c.b16 %v1083, %v1082
  %v1375 = vpack.c.b16 %v1085, %v1084
  %v1376 = vpack.c.b16 %v1087, %v1086
  %v1377 = vpack.c.b16 %v1089, %v1088
  %v1378 = vpack.c.b16 %v1091, %v1090
  %v1379 = vpack.c.b16 %v1093, %v1092
  %v1380 = vpack.c.b16 %v1095, %v1094
  %v1381 = vpack.c.b16 %v1097, %v1096
  %v1382 = vpack.c.b16 %v1099, %v1098
  %v1383 = vpack.c.b16 %v1101, %v1100
  %v1384 = vpack.c.b16 %v1103, %v1102
  %v1385 = vpack.c.b16 %v1105, %v1104
  %v1386 = vpack.c.b16 %v1107, %v1106
  %v1387 = vpack.c.b16 %v1109, %v1108
  %v1388 = vpack.c.b16 %v1111, %v1110
  %v1389 = vpack.c.b16 %v1113, %v1112
  %v1390 = vpack.c.b16 %v1115, %v1114
  %v1391 = vpack.c.b16 %v1117, %v1116
  %v1392 = vpack.c.b16 %v1119, %v1118
  %v1393 = vpack.c.b16 %v1121, %v1120
  %v1394 = vpack.c.b16 %v1123, %v1122
  %v1395 = vpack.c.b16 %v1125, %v1124
  %v1396 = vpack.c.b16 %v1127, %v1126
  %v1397 = vpack.c.b16 %v1129, %v1128
  %v1398 = vpack.c.b16 %v1131, %v1130
  %v1399 = vpack.c.b16 %v1133, %v1132
  %v1400 = vpack.c.b16 %v1135, %v1134
  %v1401 = vpack.c.b16 %v1137, %v1136
  %v1402 = vpack.c.b16 %v1139, %v1138
  %v1403 = vpack.c.b16 %v1141, %v1140
  %v1404 = vpack.c.b16 %v1143, %v1142
  %v1405 = vpack.c.b16 %v1145, %v1144
  %v1406 = vpack.c.b16 %v1147, %v1146
  %v1407 = vpack.c.b16 %v1149, %v1148
  %v1408 = vpack.c.b16 %v1151, %v1150
  %v1409 = vpack.c.b16 %v1153, %v1152
  %v1410 = vpack.c.b16 %v1155, %v1154
  %v1411 = vpack.c.b16 %v1157, %v1156
  %v1412 = vpack.c.b16 %v1159, %v1158
  %v1413 = vpack.c.b16 %v1161, %v1160
  %v1414 = vpack.c.b16 %v1163, %v1162
  %v1415 = vpack.c.b16 %v1165, %v1164
  %v1416 = vpack.c.b16 %v1167, %v1166
  %v1417 = vpack.c.b16 %v1169, %v1168
  %v1418 = vpack.c.b16 %v1171, %v1170
  %v1419 = vpack.c.b16 %v1173, %v1172
  %v1420 = vpack.c.b16 %v1175, %v1174
  %v1421 = vpack.c.b16 %v1177, %v1176
  %v1422 = vpack.c.b16 %v1179, %v1178
  %v1423 = vpack.c.b16 %v1181, %v1180
  %v1424 = vpack.c.b16 %v1183, %v1182
  %v1425 = vpack.c.b16 %v1185, %v1184
  %v1426 = vpack.c.b16 %v1187, %v1186
  %v1427 = vpack.c.b16 %v1189, %v1188
  %v1428 = vpack.c.b16 %v1191, %v1190
  %v1429 = vpack.c.b16 %v1193, %v1192
  %v1430 = vpack.c.b16 %v1195, %v1194
  %v1431 = vpack.c.b16 %v1197, %v1196
  %v1432 = vpack.c.b16 %v1199, %v1198
  %v1433 = vpack.c.b16 %v1201, %v1200
  %v1434 = vpack.c.b16 %v1203, %v1202
  %v1435 = vpack.c.b16 %v1205, %v1204
  %v1436 = vpack.c.b16 %v1207, %v1206
  %v1437 = vpack.c.b16 %v1209, %v1208
  %v1438 = vpack.c.b16 %v1211, %v1210
  %v1439 = vpack.c.b16 %v1213, %v1212
  %v1440 = vpack.c.b16 %v1215, %v1214
  %v1441 = vpack.c.b16 %v1217, %v1216
  %v1442 = vpack.c.b16 %v1219, %v1218
  %v1443 = vpack.c.b16 %v1221, %v1220
  %v1444 = vpack.c.b16 %v1223, %v1222
  %v1445 = vpack.c.b16 %v1225, %v1224
  %v1446 = vpack.c.b16 %v1227, %v1226
  %v1447 = vpack.c.b16 %v1229, %v1228
  %v1448 = vpack.c.b16 %v1231, %v1230
  %v1449 = vpack.c.b16 %v1233, %v1232
  %v1450 = vpack.c.b16 %v1235, %v1234
  %v1451 = vpack.c.b16 %v1237, %v1236
  %v1452 = vpack.c.b16 %v1239, %v1238
  %v1453 = vpack.c.b16 %v1241, %v1240
  %v1454 = vpack.c.b16 %v1243, %v1242
  %v1455 = vpack.c.b16 %v1245, %v1244
  %v1456 = vpack.c.b16 %v1247, %v1246
  %v1457 = vpack.c.b16 %v1249, %v1248
  %v1458 = vpack.c.b16 %v1251, %v1250
  %v1459 = vpack.c.b16 %v1253, %v1252
  %v1460 = vpack.c.b16 %v1255, %v1254
  %v1461 = vpack.c.b16 %v1257, %v1256
  %v1462 = vpack.c.b16 %v1259, %v1258
  %v1463 = vpack.c.b16 %v1261, %v1260
  %v1464 = vpack.c.b16 %v1263, %v1262
  %v1465 = vpack.c.b16 %v1265, %v1264
  %v1466 = vpack.c.b16 %v1267, %v1266
  %v1467 = vpack.c.b16 %v1269, %v1268
  %v1468 = vpack.c.b16 %v1271, %v1270
  %v1469 = vpack.c.b16 %v1273, %v1272
  %v1470 = vpack.c.b16 %v1275, %v1274
  %v1471 = vpack.c.b16 %v1277, %v1276
  %v1472 = vpack.c.b16 %v1279, %v1278
  %v1473 = vpack.c.b16 %v1281, %v1280
  %1666 = vmatprep.subr.bf16.mxu0 0
  %1667 = vmatpush1.bf16.msra.mxu0 %v1282
  %1668 = vmatprep.subr.bf16.mxu0 0
  %1669 = vmatpush1.bf16.msra.mxu0 %v1283
  %1670 = vmatprep.subr.bf16.mxu0 0
  %1671 = vmatpush1.bf16.msra.mxu0 %v1284
  %1672 = vmatprep.subr.bf16.mxu0 0
  %1673 = vmatpush1.bf16.msra.mxu0 %v1285
  %1674 = vmatprep.subr.bf16.mxu0 0
  %1675 = vmatpush1.bf16.msra.mxu0 %v1286
  %1676 = vmatprep.subr.bf16.mxu0 0
  %1677 = vmatpush1.bf16.msra.mxu0 %v1287
  %1678 = vmatprep.subr.bf16.mxu0 0
  %1679 = vmatpush1.bf16.msra.mxu0 %v1288
  %1680 = vmatprep.subr.bf16.mxu0 0
  %1681 = vmatpush1.bf16.msra.mxu0 %v1289
  %1682 = vmatprep.subr.bf16.mxu0 0
  %1683 = vmatpush1.bf16.msra.mxu0 %v1290
  %1684 = vmatprep.subr.bf16.mxu0 0
  %1685 = vmatpush1.bf16.msra.mxu0 %v1291
  %1686 = vmatprep.subr.bf16.mxu0 0
  %1687 = vmatpush1.bf16.msra.mxu0 %v1292
  %1688 = vmatprep.subr.bf16.mxu0 0
  %1689 = vmatpush1.bf16.msra.mxu0 %v1293
  %1690 = vmatprep.subr.bf16.mxu0 0
  %1691 = vmatpush1.bf16.msra.mxu0 %v1294
  %1692 = vmatprep.subr.bf16.mxu0 0
  %1693 = vmatpush1.bf16.msra.mxu0 %v1295
  %1694 = vmatprep.subr.bf16.mxu0 0
  %1695 = vmatpush1.bf16.msra.mxu0 %v1296
  %1696 = vmatprep.subr.bf16.mxu0 0
  %1697 = vmatpush1.bf16.msra.mxu0 %v1297
  %1698 = vmatprep.mubr.bf16.mxu0 %v467
  %1699 = vmatmul.mubr.bf16.gmra.mrb[0].mxu0 %v466
  %v1700 = vpop.f32.mrb[0].mxu0
  %v1701 = vadd.f32 %v428, %v1700
  %v1702 = vpop.f32.mrb[0].mxu0
  %v1703 = vpop.f32.mrb[0].mxu0
  %v1704 = vpop.f32.mrb[0].mxu0
  %1705 = vdwg.mxu0
  %1706 = vmatprep.subr.bf16.mxu0 0
  %1707 = vmatpush1.bf16.msra.mxu0 %v1298
  %1708 = vmatprep.subr.bf16.mxu0 0
  %1709 = vmatpush1.bf16.msra.mxu0 %v1299
  %1710 = vmatprep.subr.bf16.mxu0 0
  %1711 = vmatpush1.bf16.msra.mxu0 %v1300
  %1712 = vmatprep.subr.bf16.mxu0 0
  %1713 = vmatpush1.bf16.msra.mxu0 %v1301
  %1714 = vmatprep.subr.bf16.mxu0 0
  %1715 = vmatpush1.bf16.msra.mxu0 %v1302
  %1716 = vmatprep.subr.bf16.mxu0 0
  %1717 = vmatpush1.bf16.msra.mxu0 %v1303
  %1718 = vmatprep.subr.bf16.mxu0 0
  %1719 = vmatpush1.bf16.msra.mxu0 %v1304
  %1720 = vmatprep.subr.bf16.mxu0 0
  %1721 = vmatpush1.bf16.msra.mxu0 %v1305
  %1722 = vmatprep.subr.bf16.mxu0 0
  %1723 = vmatpush1.bf16.msra.mxu0 %v1306
  %1724 = vmatprep.subr.bf16.mxu0 0
  %1725 = vmatpush1.bf16.msra.mxu0 %v1307
  %1726 = vmatprep.subr.bf16.mxu0 0
  %1727 = vmatpush1.bf16.msra.mxu0 %v1308
  %1728 = vmatprep.subr.bf16.mxu0 0
  %1729 = vmatpush1.bf16.msra.mxu0 %v1309
  %1730 = vmatprep.subr.bf16.mxu0 0
  %1731 = vmatpush1.bf16.msra.mxu0 %v1310
  %1732 = vmatprep.subr.bf16.mxu0 0
  %1733 = vmatpush1.bf16.msra.mxu0 %v1311
  %1734 = vmatprep.subr.bf16.mxu0 0
  %1735 = vmatpush1.bf16.msra.mxu0 %v1312
  %1736 = vmatprep.subr.bf16.mxu0 0
  %1737 = vmatpush1.bf16.msra.mxu0 %v1313
  %1738 = vmatprep.mubr.bf16.mxu0 %v469
  %1739 = vmatmul.mubr.bf16.gmra.mrb[0].mxu0 %v468
  %v1740 = vpop.f32.mrb[0].mxu0
  %v1741 = vadd.f32 %v1701, %v1740
  %v1742 = vpop.f32.mrb[0].mxu0
  %v1743 = vpop.f32.mrb[0].mxu0
  %v1744 = vpop.f32.mrb[0].mxu0
  %1745 = vdwg.mxu0
  %1746 = vmatprep.subr.bf16.mxu0 0
  %1747 = vmatpush1.bf16.msra.mxu0 %v1314
  %1748 = vmatprep.subr.bf16.mxu0 0
  %1749 = vmatpush1.bf16.msra.mxu0 %v1315
  %1750 = vmatprep.subr.bf16.mxu0 0
  %1751 = vmatpush1.bf16.msra.mxu0 %v1316
  %1752 = vmatprep.subr.bf16.mxu0 0
  %1753 = vmatpush1.bf16.msra.mxu0 %v1317
  %1754 = vmatprep.subr.bf16.mxu0 0
  %1755 = vmatpush1.bf16.msra.mxu0 %v1318
  %1756 = vmatprep.subr.bf16.mxu0 0
  %1757 = vmatpush1.bf16.msra.mxu0 %v1319
  %1758 = vmatprep.subr.bf16.mxu0 0
  %1759 = vmatpush1.bf16.msra.mxu0 %v1320
  %1760 = vmatprep.subr.bf16.mxu0 0
  %1761 = vmatpush1.bf16.msra.mxu0 %v1321
  %1762 = vmatprep.subr.bf16.mxu0 0
  %1763 = vmatpush1.bf16.msra.mxu0 %v1322
  %1764 = vmatprep.subr.bf16.mxu0 0
  %1765 = vmatpush1.bf16.msra.mxu0 %v1323
  %1766 = vmatprep.subr.bf16.mxu0 0
  %1767 = vmatpush1.bf16.msra.mxu0 %v1324
  %1768 = vmatprep.subr.bf16.mxu0 0
  %1769 = vmatpush1.bf16.msra.mxu0 %v1325
  %1770 = vmatprep.subr.bf16.mxu0 0
  %1771 = vmatpush1.bf16.msra.mxu0 %v1326
  %1772 = vmatprep.subr.bf16.mxu0 0
  %1773 = vmatpush1.bf16.msra.mxu0 %v1327
  %1774 = vmatprep.subr.bf16.mxu0 0
  %1775 = vmatpush1.bf16.msra.mxu0 %v1328
  %1776 = vmatprep.subr.bf16.mxu0 0
  %1777 = vmatpush1.bf16.msra.mxu0 %v1329
  %1778 = vmatprep.mubr.bf16.mxu0 %v471
  %1779 = vmatmul.mubr.bf16.gmra.mrb[0].mxu0 %v470
  %v1780 = vpop.f32.mrb[0].mxu0
  %v1781 = vadd.f32 %v1741, %v1780
  %v1782 = vpop.f32.mrb[0].mxu0
  %v1783 = vpop.f32.mrb[0].mxu0
  %v1784 = vpop.f32.mrb[0].mxu0
  %1785 = vdwg.mxu0
  %1786 = vmatprep.subr.bf16.mxu0 0
  %1787 = vmatpush1.bf16.msra.mxu0 %v1330
  %1788 = vmatprep.subr.bf16.mxu0 0
  %1789 = vmatpush1.bf16.msra.mxu0 %v1331
  %1790 = vmatprep.subr.bf16.mxu0 0
  %1791 = vmatpush1.bf16.msra.mxu0 %v1332
  %1792 = vmatprep.subr.bf16.mxu0 0
  %1793 = vmatpush1.bf16.msra.mxu0 %v1333
  %1794 = vmatprep.subr.bf16.mxu0 0
  %1795 = vmatpush1.bf16.msra.mxu0 %v1334
  %1796 = vmatprep.subr.bf16.mxu0 0
  %1797 = vmatpush1.bf16.msra.mxu0 %v1335
  %1798 = vmatprep.subr.bf16.mxu0 0
  %1799 = vmatpush1.bf16.msra.mxu0 %v1336
  %1800 = vmatprep.subr.bf16.mxu0 0
  %1801 = vmatpush1.bf16.msra.mxu0 %v1337
  %1802 = vmatprep.subr.bf16.mxu0 0
  %1803 = vmatpush1.bf16.msra.mxu0 %v1338
  %1804 = vmatprep.subr.bf16.mxu0 0
  %1805 = vmatpush1.bf16.msra.mxu0 %v1339
  %1806 = vmatprep.subr.bf16.mxu0 0
  %1807 = vmatpush1.bf16.msra.mxu0 %v1340
  %1808 = vmatprep.subr.bf16.mxu0 0
  %1809 = vmatpush1.bf16.msra.mxu0 %v1341
  %1810 = vmatprep.subr.bf16.mxu0 0
  %1811 = vmatpush1.bf16.msra.mxu0 %v1342
  %1812 = vmatprep.subr.bf16.mxu0 0
  %1813 = vmatpush1.bf16.msra.mxu0 %v1343
  %1814 = vmatprep.subr.bf16.mxu0 0
  %1815 = vmatpush1.bf16.msra.mxu0 %v1344
  %1816 = vmatprep.subr.bf16.mxu0 0
  %1817 = vmatpush1.bf16.msra.mxu0 %v1345
  %1818 = vmatprep.mubr.bf16.mxu0 %v473
  %1819 = vmatmul.mubr.bf16.gmra.mrb[0].mxu0 %v472
  %v1820 = vpop.f32.mrb[0].mxu0
  %v1821 = vadd.f32 %v1781, %v1820
  %v1822 = vpop.f32.mrb[0].mxu0
  %v1823 = vpop.f32.mrb[0].mxu0
  %v1824 = vpop.f32.mrb[0].mxu0
  %1825 = vdwg.mxu0
  %1826 = vmatprep.subr.bf16.mxu0 0
  %1827 = vmatpush1.bf16.msra.mxu0 %v1346
  %1828 = vmatprep.subr.bf16.mxu0 0
  %1829 = vmatpush1.bf16.msra.mxu0 %v1347
  %1830 = vmatprep.subr.bf16.mxu0 0
  %1831 = vmatpush1.bf16.msra.mxu0 %v1348
  %1832 = vmatprep.subr.bf16.mxu0 0
  %1833 = vmatpush1.bf16.msra.mxu0 %v1349
  %1834 = vmatprep.subr.bf16.mxu0 0
  %1835 = vmatpush1.bf16.msra.mxu0 %v1350
  %1836 = vmatprep.subr.bf16.mxu0 0
  %1837 = vmatpush1.bf16.msra.mxu0 %v1351
  %1838 = vmatprep.subr.bf16.mxu0 0
  %1839 = vmatpush1.bf16.msra.mxu0 %v1352
  %1840 = vmatprep.subr.bf16.mxu0 0
  %1841 = vmatpush1.bf16.msra.mxu0 %v1353
  %1842 = vmatprep.subr.bf16.mxu0 0
  %1843 = vmatpush1.bf16.msra.mxu0 %v1354
  %1844 = vmatprep.subr.bf16.mxu0 0
  %1845 = vmatpush1.bf16.msra.mxu0 %v1355
  %1846 = vmatprep.subr.bf16.mxu0 0
  %1847 = vmatpush1.bf16.msra.mxu0 %v1356
  %1848 = vmatprep.subr.bf16.mxu0 0
  %1849 = vmatpush1.bf16.msra.mxu0 %v1357
  %1850 = vmatprep.subr.bf16.mxu0 0
  %1851 = vmatpush1.bf16.msra.mxu0 %v1358
  %1852 = vmatprep.subr.bf16.mxu0 0
  %1853 = vmatpush1.bf16.msra.mxu0 %v1359
  %1854 = vmatprep.subr.bf16.mxu0 0
  %1855 = vmatpush1.bf16.msra.mxu0 %v1360
  %1856 = vmatprep.subr.bf16.mxu0 0
  %1857 = vmatpush1.bf16.msra.mxu0 %v1361
  %1858 = vmatprep.mubr.bf16.mxu0 %v475
  %1859 = vmatmul.mubr.bf16.gmra.mrb[0].mxu0 %v474
  %v1860 = vpop.f32.mrb[0].mxu0
  %v1861 = vadd.f32 %v1821, %v1860
  %v1862 = vpop.f32.mrb[0].mxu0
  %v1863 = vpop.f32.mrb[0].mxu0
  %v1864 = vpop.f32.mrb[0].mxu0
  %1865 = vdwg.mxu0
  %1866 = vmatprep.subr.bf16.mxu0 0
  %1867 = vmatpush1.bf16.msra.mxu0 %v1362
  %1868 = vmatprep.subr.bf16.mxu0 0
  %1869 = vmatpush1.bf16.msra.mxu0 %v1363
  %1870 = vmatprep.subr.bf16.mxu0 0
  %1871 = vmatpush1.bf16.msra.mxu0 %v1364
  %1872 = vmatprep.subr.bf16.mxu0 0
  %1873 = vmatpush1.bf16.msra.mxu0 %v1365
  %1874 = vmatprep.subr.bf16.mxu0 0
  %1875 = vmatpush1.bf16.msra.mxu0 %v1366
  %1876 = vmatprep.subr.bf16.mxu0 0
  %1877 = vmatpush1.bf16.msra.mxu0 %v1367
  %1878 = vmatprep.subr.bf16.mxu0 0
  %1879 = vmatpush1.bf16.msra.mxu0 %v1368
  %1880 = vmatprep.subr.bf16.mxu0 0
  %1881 = vmatpush1.bf16.msra.mxu0 %v1369
  %1882 = vmatprep.subr.bf16.mxu0 0
  %1883 = vmatpush1.bf16.msra.mxu0 %v1370
  %1884 = vmatprep.subr.bf16.mxu0 0
  %1885 = vmatpush1.bf16.msra.mxu0 %v1371
  %1886 = vmatprep.subr.bf16.mxu0 0
  %1887 = vmatpush1.bf16.msra.mxu0 %v1372
  %1888 = vmatprep.subr.bf16.mxu0 0
  %1889 = vmatpush1.bf16.msra.mxu0 %v1373
  %1890 = vmatprep.subr.bf16.mxu0 0
  %1891 = vmatpush1.bf16.msra.mxu0 %v1374
  %1892 = vmatprep.subr.bf16.mxu0 0
  %1893 = vmatpush1.bf16.msra.mxu0 %v1375
  %1894 = vmatprep.subr.bf16.mxu0 0
  %1895 = vmatpush1.bf16.msra.mxu0 %v1376
  %1896 = vmatprep.subr.bf16.mxu0 0
  %1897 = vmatpush1.bf16.msra.mxu0 %v1377
  %1898 = vmatprep.mubr.bf16.mxu0 %v477
  %1899 = vmatmul.mubr.bf16.gmra.mrb[0].mxu0 %v476
  %v1900 = vpop.f32.mrb[0].mxu0
  %v1901 = vadd.f32 %v1861, %v1900
  %v1902 = vpop.f32.mrb[0].mxu0
  %v1903 = vpop.f32.mrb[0].mxu0
  %v1904 = vpop.f32.mrb[0].mxu0
  %1905 = vdwg.mxu0
  %1906 = vmatprep.subr.bf16.mxu0 0
  %1907 = vmatpush1.bf16.msra.mxu0 %v1378
  %1908 = vmatprep.subr.bf16.mxu0 0
  %1909 = vmatpush1.bf16.msra.mxu0 %v1379
  %1910 = vmatprep.subr.bf16.mxu0 0
  %1911 = vmatpush1.bf16.msra.mxu0 %v1380
  %1912 = vmatprep.subr.bf16.mxu0 0
  %1913 = vmatpush1.bf16.msra.mxu0 %v1381
  %1914 = vmatprep.subr.bf16.mxu0 0
  %1915 = vmatpush1.bf16.msra.mxu0 %v1382
  %1916 = vmatprep.subr.bf16.mxu0 0
  %1917 = vmatpush1.bf16.msra.mxu0 %v1383
  %1918 = vmatprep.subr.bf16.mxu0 0
  %1919 = vmatpush1.bf16.msra.mxu0 %v1384
  %1920 = vmatprep.subr.bf16.mxu0 0
  %1921 = vmatpush1.bf16.msra.mxu0 %v1385
  %1922 = vmatprep.subr.bf16.mxu0 0
  %1923 = vmatpush1.bf16.msra.mxu0 %v1386
  %1924 = vmatprep.subr.bf16.mxu0 0
  %1925 = vmatpush1.bf16.msra.mxu0 %v1387
  %1926 = vmatprep.subr.bf16.mxu0 0
  %1927 = vmatpush1.bf16.msra.mxu0 %v1388
  %1928 = vmatprep.subr.bf16.mxu0 0
  %1929 = vmatpush1.bf16.msra.mxu0 %v1389
  %1930 = vmatprep.subr.bf16.mxu0 0
  %1931 = vmatpush1.bf16.msra.mxu0 %v1390
  %1932 = vmatprep.subr.bf16.mxu0 0
  %1933 = vmatpush1.bf16.msra.mxu0 %v1391
  %1934 = vmatprep.subr.bf16.mxu0 0
  %1935 = vmatpush1.bf16.msra.mxu0 %v1392
  %1936 = vmatprep.subr.bf16.mxu0 0
  %1937 = vmatpush1.bf16.msra.mxu0 %v1393
  %1938 = vmatprep.mubr.bf16.mxu0 %v479
  %1939 = vmatmul.mubr.bf16.gmra.mrb[0].mxu0 %v478
  %v1940 = vpop.f32.mrb[0].mxu0
  %v1941 = vadd.f32 %v1901, %v1940
  %v1942 = vpop.f32.mrb[0].mxu0
  %v1943 = vpop.f32.mrb[0].mxu0
  %v1944 = vpop.f32.mrb[0].mxu0
  %1945 = vdwg.mxu0
  %1946 = vmatprep.subr.bf16.mxu0 0
  %1947 = vmatpush1.bf16.msra.mxu0 %v1394
  %1948 = vmatprep.subr.bf16.mxu0 0
  %1949 = vmatpush1.bf16.msra.mxu0 %v1395
  %1950 = vmatprep.subr.bf16.mxu0 0
  %1951 = vmatpush1.bf16.msra.mxu0 %v1396
  %1952 = vmatprep.subr.bf16.mxu0 0
  %1953 = vmatpush1.bf16.msra.mxu0 %v1397
  %1954 = vmatprep.subr.bf16.mxu0 0
  %1955 = vmatpush1.bf16.msra.mxu0 %v1398
  %1956 = vmatprep.subr.bf16.mxu0 0
  %1957 = vmatpush1.bf16.msra.mxu0 %v1399
  %1958 = vmatprep.subr.bf16.mxu0 0
  %1959 = vmatpush1.bf16.msra.mxu0 %v1400
  %1960 = vmatprep.subr.bf16.mxu0 0
  %1961 = vmatpush1.bf16.msra.mxu0 %v1401
  %1962 = vmatprep.subr.bf16.mxu0 0
  %1963 = vmatpush1.bf16.msra.mxu0 %v1402
  %1964 = vmatprep.subr.bf16.mxu0 0
  %1965 = vmatpush1.bf16.msra.mxu0 %v1403
  %1966 = vmatprep.subr.bf16.mxu0 0
  %1967 = vmatpush1.bf16.msra.mxu0 %v1404
  %1968 = vmatprep.subr.bf16.mxu0 0
  %1969 = vmatpush1.bf16.msra.mxu0 %v1405
  %1970 = vmatprep.subr.bf16.mxu0 0
  %1971 = vmatpush1.bf16.msra.mxu0 %v1406
  %1972 = vmatprep.subr.bf16.mxu0 0
  %1973 = vmatpush1.bf16.msra.mxu0 %v1407
  %1974 = vmatprep.subr.bf16.mxu0 0
  %1975 = vmatpush1.bf16.msra.mxu0 %v1408
  %1976 = vmatprep.subr.bf16.mxu0 0
  %1977 = vmatpush1.bf16.msra.mxu0 %v1409
  %1978 = vmatprep.mubr.bf16.mxu0 %v481
  %1979 = vmatmul.mubr.bf16.gmra.mrb[0].mxu0 %v480
  %v1980 = vpop.f32.mrb[0].mxu0
  %v1981 = vadd.f32 %v1941, %v1980
  %v1982 = vpop.f32.mrb[0].mxu0
  %v1983 = vpop.f32.mrb[0].mxu0
  %v1984 = vpop.f32.mrb[0].mxu0
  %1985 = vdwg.mxu0
  %1986 = vmatprep.subr.bf16.mxu0 0
  %1987 = vmatpush1.bf16.msra.mxu0 %v1410
  %1988 = vmatprep.subr.bf16.mxu0 0
  %1989 = vmatpush1.bf16.msra.mxu0 %v1411
  %1990 = vmatprep.subr.bf16.mxu0 0
  %1991 = vmatpush1.bf16.msra.mxu0 %v1412
  %1992 = vmatprep.subr.bf16.mxu0 0
  %1993 = vmatpush1.bf16.msra.mxu0 %v1413
  %1994 = vmatprep.subr.bf16.mxu0 0
  %1995 = vmatpush1.bf16.msra.mxu0 %v1414
  %1996 = vmatprep.subr.bf16.mxu0 0
  %1997 = vmatpush1.bf16.msra.mxu0 %v1415
  %1998 = vmatprep.subr.bf16.mxu0 0
  %1999 = vmatpush1.bf16.msra.mxu0 %v1416
  %2000 = vmatprep.subr.bf16.mxu0 0
  %2001 = vmatpush1.bf16.msra.mxu0 %v1417
  %2002 = vmatprep.subr.bf16.mxu0 0
  %2003 = vmatpush1.bf16.msra.mxu0 %v1418
  %2004 = vmatprep.subr.bf16.mxu0 0
  %2005 = vmatpush1.bf16.msra.mxu0 %v1419
  %2006 = vmatprep.subr.bf16.mxu0 0
  %2007 = vmatpush1.bf16.msra.mxu0 %v1420
  %2008 = vmatprep.subr.bf16.mxu0 0
  %2009 = vmatpush1.bf16.msra.mxu0 %v1421
  %2010 = vmatprep.subr.bf16.mxu0 0
  %2011 = vmatpush1.bf16.msra.mxu0 %v1422
  %2012 = vmatprep.subr.bf16.mxu0 0
  %2013 = vmatpush1.bf16.msra.mxu0 %v1423
  %2014 = vmatprep.subr.bf16.mxu0 0
  %2015 = vmatpush1.bf16.msra.mxu0 %v1424
  %2016 = vmatprep.subr.bf16.mxu0 0
  %2017 = vmatpush1.bf16.msra.mxu0 %v1425
  %2018 = vmatprep.mubr.bf16.mxu0 %v483
  %2019 = vmatmul.mubr.bf16.gmra.mrb[0].mxu0 %v482
  %v2020 = vpop.f32.mrb[0].mxu0
  %v2021 = vadd.f32 %v1981, %v2020
  %v2022 = vpop.f32.mrb[0].mxu0
  %v2023 = vpop.f32.mrb[0].mxu0
  %v2024 = vpop.f32.mrb[0].mxu0
  %2025 = vdwg.mxu0
  %2026 = vmatprep.subr.bf16.mxu0 0
  %2027 = vmatpush1.bf16.msra.mxu0 %v1426
  %2028 = vmatprep.subr.bf16.mxu0 0
  %2029 = vmatpush1.bf16.msra.mxu0 %v1427
  %2030 = vmatprep.subr.bf16.mxu0 0
  %2031 = vmatpush1.bf16.msra.mxu0 %v1428
  %2032 = vmatprep.subr.bf16.mxu0 0
  %2033 = vmatpush1.bf16.msra.mxu0 %v1429
  %2034 = vmatprep.subr.bf16.mxu0 0
  %2035 = vmatpush1.bf16.msra.mxu0 %v1430
  %2036 = vmatprep.subr.bf16.mxu0 0
  %2037 = vmatpush1.bf16.msra.mxu0 %v1431
  %2038 = vmatprep.subr.bf16.mxu0 0
  %2039 = vmatpush1.bf16.msra.mxu0 %v1432
  %2040 = vmatprep.subr.bf16.mxu0 0
  %2041 = vmatpush1.bf16.msra.mxu0 %v1433
  %2042 = vmatprep.subr.bf16.mxu0 0
  %2043 = vmatpush1.bf16.msra.mxu0 %v1434
  %2044 = vmatprep.subr.bf16.mxu0 0
  %2045 = vmatpush1.bf16.msra.mxu0 %v1435
  %2046 = vmatprep.subr.bf16.mxu0 0
  %2047 = vmatpush1.bf16.msra.mxu0 %v1436
  %2048 = vmatprep.subr.bf16.mxu0 0
  %2049 = vmatpush1.bf16.msra.mxu0 %v1437
  %2050 = vmatprep.subr.bf16.mxu0 0
  %2051 = vmatpush1.bf16.msra.mxu0 %v1438
  %2052 = vmatprep.subr.bf16.mxu0 0
  %2053 = vmatpush1.bf16.msra.mxu0 %v1439
  %2054 = vmatprep.subr.bf16.mxu0 0
  %2055 = vmatpush1.bf16.msra.mxu0 %v1440
  %2056 = vmatprep.subr.bf16.mxu0 0
  %2057 = vmatpush1.bf16.msra.mxu0 %v1441
  %2058 = vmatprep.mubr.bf16.mxu0 %v485
  %2059 = vmatmul.mubr.bf16.gmra.mrb[0].mxu0 %v484
  %v2060 = vpop.f32.mrb[0].mxu0
  %v2061 = vadd.f32 %v2021, %v2060
  %v2062 = vpop.f32.mrb[0].mxu0
  %v2063 = vpop.f32.mrb[0].mxu0
  %v2064 = vpop.f32.mrb[0].mxu0
  %2065 = vdwg.mxu0
  %2066 = vmatprep.subr.bf16.mxu0 0
  %2067 = vmatpush1.bf16.msra.mxu0 %v1442
  %2068 = vmatprep.subr.bf16.mxu0 0
  %2069 = vmatpush1.bf16.msra.mxu0 %v1443
  %2070 = vmatprep.subr.bf16.mxu0 0
  %2071 = vmatpush1.bf16.msra.mxu0 %v1444
  %2072 = vmatprep.subr.bf16.mxu0 0
  %2073 = vmatpush1.bf16.msra.mxu0 %v1445
  %2074 = vmatprep.subr.bf16.mxu0 0
  %2075 = vmatpush1.bf16.msra.mxu0 %v1446
  %2076 = vmatprep.subr.bf16.mxu0 0
  %2077 = vmatpush1.bf16.msra.mxu0 %v1447
  %2078 = vmatprep.subr.bf16.mxu0 0
  %2079 = vmatpush1.bf16.msra.mxu0 %v1448
  %2080 = vmatprep.subr.bf16.mxu0 0
  %2081 = vmatpush1.bf16.msra.mxu0 %v1449
  %2082 = vmatprep.subr.bf16.mxu0 0
  %2083 = vmatpush1.bf16.msra.mxu0 %v1450
  %2084 = vmatprep.subr.bf16.mxu0 0
  %2085 = vmatpush1.bf16.msra.mxu0 %v1451
  %2086 = vmatprep.subr.bf16.mxu0 0
  %2087 = vmatpush1.bf16.msra.mxu0 %v1452
  %2088 = vmatprep.subr.bf16.mxu0 0
  %2089 = vmatpush1.bf16.msra.mxu0 %v1453
  %2090 = vmatprep.subr.bf16.mxu0 0
  %2091 = vmatpush1.bf16.msra.mxu0 %v1454
  %2092 = vmatprep.subr.bf16.mxu0 0
  %2093 = vmatpush1.bf16.msra.mxu0 %v1455
  %2094 = vmatprep.subr.bf16.mxu0 0
  %2095 = vmatpush1.bf16.msra.mxu0 %v1456
  %2096 = vmatprep.subr.bf16.mxu0 0
  %2097 = vmatpush1.bf16.msra.mxu0 %v1457
  %2098 = vmatprep.mubr.bf16.mxu0 %v487
  %2099 = vmatmul.mubr.bf16.gmra.mrb[0].mxu0 %v486
  %v2100 = vpop.f32.mrb[0].mxu0
  %v2101 = vadd.f32 %v2061, %v2100
  %v2102 = vpop.f32.mrb[0].mxu0
  %v2103 = vpop.f32.mrb[0].mxu0
  %v2104 = vpop.f32.mrb[0].mxu0
  %2105 = vdwg.mxu0
  %2106 = vmatprep.subr.bf16.mxu0 0
  %2107 = vmatpush1.bf16.msra.mxu0 %v1458
  %2108 = vmatprep.subr.bf16.mxu0 0
  %2109 = vmatpush1.bf16.msra.mxu0 %v1459
  %2110 = vmatprep.subr.bf16.mxu0 0
  %2111 = vmatpush1.bf16.msra.mxu0 %v1460
  %2112 = vmatprep.subr.bf16.mxu0 0
  %2113 = vmatpush1.bf16.msra.mxu0 %v1461
  %2114 = vmatprep.subr.bf16.mxu0 0
  %2115 = vmatpush1.bf16.msra.mxu0 %v1462
  %2116 = vmatprep.subr.bf16.mxu0 0
  %2117 = vmatpush1.bf16.msra.mxu0 %v1463
  %2118 = vmatprep.subr.bf16.mxu0 0
  %2119 = vmatpush1.bf16.msra.mxu0 %v1464
  %2120 = vmatprep.subr.bf16.mxu0 0
  %2121 = vmatpush1.bf16.msra.mxu0 %v1465
  %2122 = vmatprep.subr.bf16.mxu0 0
  %2123 = vmatpush1.bf16.msra.mxu0 %v1466
  %2124 = vmatprep.subr.bf16.mxu0 0
  %2125 = vmatpush1.bf16.msra.mxu0 %v1467
  %2126 = vmatprep.subr.bf16.mxu0 0
  %2127 = vmatpush1.bf16.msra.mxu0 %v1468
  %2128 = vmatprep.subr.bf16.mxu0 0
  %2129 = vmatpush1.bf16.msra.mxu0 %v1469
  %2130 = vmatprep.subr.bf16.mxu0 0
  %2131 = vmatpush1.bf16.msra.mxu0 %v1470
  %2132 = vmatprep.subr.bf16.mxu0 0
  %2133 = vmatpush1.bf16.msra.mxu0 %v1471
  %2134 = vmatprep.subr.bf16.mxu0 0
  %2135 = vmatpush1.bf16.msra.mxu0 %v1472
  %2136 = vmatprep.subr.bf16.mxu0 0
  %2137 = vmatpush1.bf16.msra.mxu0 %v1473
  %2138 = vmatprep.mubr.bf16.mxu0 %v489
  %2139 = vmatmul.mubr.bf16.gmra.mrb[0].mxu0 %v488
  %v2140 = vpop.f32.mrb[0].mxu0
  %v2141 = vadd.f32 %v2101, %v2140
  %v2142 = vpop.f32.mrb[0].mxu0
  %v2143 = vpop.f32.mrb[0].mxu0
  %v2144 = vpop.f32.mrb[0].mxu0
  %2145 = vdwg.mxu0
  %v2146 = vpack.c.bf16 %v2141, %v2141
  %v2147 = vld [vmem:[%s3] sm:$0xf]
  %v2148 = vld [vmem:[%s3 + $0x4] sm:$0xf]
  %v2149 = vld [vmem:[%s3 + $0x8] sm:$0xf]
  %v2150 = vld [vmem:[%s3 + $0xc] sm:$0xf]
  %v2151 = vld [vmem:[%s3 + $0x10] sm:$0xf]
  %v2152 = vld [vmem:[%s3 + $0x14] sm:$0xf]
  %v2153 = vld [vmem:[%s3 + $0x18] sm:$0xf]
  %v2154 = vld [vmem:[%s3 + $0x1c] sm:$0xf]
  %v2155 = vld [vmem:[%s3 + $0x20] sm:$0xf]
  %v2156 = vld [vmem:[%s3 + $0x24] sm:$0xf]
  %v2157 = vld [vmem:[%s3 + $0x28] sm:$0xf]
  %v2158 = vld [vmem:[%s3 + $0x2c] sm:$0xf]
  %v2159 = vld [vmem:[%s3 + $0x30] sm:$0xf]
  %v2160 = vld [vmem:[%s3 + $0x34] sm:$0xf]
  %v2161 = vld [vmem:[%s3 + $0x38] sm:$0xf]
  %v2162 = vld [vmem:[%s3 + $0x3c] sm:$0xf]
  %v2163 = vld [vmem:[%s4] sm:$0x1]
  %v2165 = vlaneseq
  %v2166 = vshrl.u32 %v2165, 7
  %v2167 = vsub.s32 0, %v2166
  %v2168 = vrot.slane %v2163, %v2167
  %v2186 = vunpack.c.l.b16 %v2147
  %v2187 = vunpack.c.l.b16 %v2148
  %v2188 = vunpack.c.l.b16 %v2149
  %v2189 = vunpack.c.l.b16 %v2150
  %v2190 = vunpack.c.l.b16 %v2151
  %v2191 = vunpack.c.l.b16 %v2152
  %v2192 = vunpack.c.l.b16 %v2153
  %v2193 = vunpack.c.l.b16 %v2154
  %v2194 = vunpack.c.l.b16 %v2155
  %v2195 = vunpack.c.l.b16 %v2156
  %v2196 = vunpack.c.l.b16 %v2157
  %v2197 = vunpack.c.l.b16 %v2158
  %v2198 = vunpack.c.l.b16 %v2159
  %v2199 = vunpack.c.l.b16 %v2160
  %v2200 = vunpack.c.l.b16 %v2161
  %v2201 = vunpack.c.l.b16 %v2162
  %v2202 = vpack.c.b16 %v2187, %v2186
  %v2203 = vpack.c.b16 %v2189, %v2188
  %v2204 = vpack.c.b16 %v2191, %v2190
  %v2205 = vpack.c.b16 %v2193, %v2192
  %v2206 = vpack.c.b16 %v2195, %v2194
  %v2207 = vpack.c.b16 %v2197, %v2196
  %v2208 = vpack.c.b16 %v2199, %v2198
  %v2209 = vpack.c.b16 %v2201, %v2200
  %2218 = vmatprep.subr.bf16.mxu0 0
  %2219 = vmatpush1.bf16.msra.mxu0 %v2202
  %2220 = vmatprep.subr.bf16.mxu0 0
  %2221 = vmatpush1.bf16.msra.mxu0 %v2203
  %2222 = vmatprep.subr.bf16.mxu0 0
  %2223 = vmatpush1.bf16.msra.mxu0 %v2204
  %2224 = vmatprep.subr.bf16.mxu0 0
  %2225 = vmatpush1.bf16.msra.mxu0 %v2205
  %2226 = vmatprep.subr.bf16.mxu0 0
  %2227 = vmatpush1.bf16.msra.mxu0 %v2206
  %2228 = vmatprep.subr.bf16.mxu0 0
  %2229 = vmatpush1.bf16.msra.mxu0 %v2207
  %2230 = vmatprep.subr.bf16.mxu0 0
  %2231 = vmatpush1.bf16.msra.mxu0 %v2208
  %2232 = vmatprep.subr.bf16.mxu0 0
  %2233 = vmatpush1.bf16.msra.mxu0 %v2209
  %2234 = vmatprep.subr.bf16.mxu0 0
  %2235 = vmatpush1.bf16.msra.mxu0 0
  %2236 = vmatprep.subr.bf16.mxu0 0
  %2237 = vmatpush1.bf16.msra.mxu0 0
  %2238 = vmatprep.subr.bf16.mxu0 0
  %2239 = vmatpush1.bf16.msra.mxu0 0
  %2240 = vmatprep.subr.bf16.mxu0 0
  %2241 = vmatpush1.bf16.msra.mxu0 0
  %2242 = vmatprep.subr.bf16.mxu0 0
  %2243 = vmatpush1.bf16.msra.mxu0 0
  %2244 = vmatprep.subr.bf16.mxu0 0
  %2245 = vmatpush1.bf16.msra.mxu0 0
  %2246 = vmatprep.subr.bf16.mxu0 0
  %2247 = vmatpush1.bf16.msra.mxu0 0
  %2248 = vmatprep.subr.bf16.mxu0 0
  %2249 = vmatpush1.bf16.msra.mxu0 0
  %2250 = vmatprep.mubr.bf16.mxu0 0
  %2251 = vmatmul.mubr.bf16.gmra.mrb[0].mxu0 %v2146
  %v2252 = vpop.f32.mrb[0].mxu0
  %v2253 = vadd.f32 %v2168, %v2252
  %v2254 = vpop.f32.mrb[0].mxu0
  %v2255 = vpop.f32.mrb[0].mxu0
  %v2256 = vpop.f32.mrb[0].mxu0
  %2257 = vdwg.mxu0
  %v2258 = vmul.f32 %v2253, 0.5
  %v2259 = vmul.f32 %v2253, 0.70710677
  %v2260 = verf.f32.pop %v2259
  %v2261 = vadd.f32 %v2260, 1.0
  %v2262 = vmul.f32 %v2258, %v2261
  %v2263 = vpack.c.bf16 %v2262, %v2262
  %v2264 = vld [vmem:[%s5] sm:$0xff]
  %v2265 = vld [vmem:[%s5 + $0x8] sm:$0xff]
  %v2266 = vld [vmem:[%s5 + $0x10] sm:$0xff]
  %v2267 = vld [vmem:[%s5 + $0x18] sm:$0xff]
  %v2268 = vld [vmem:[%s5 + $0x20] sm:$0xff]
  %v2269 = vld [vmem:[%s5 + $0x28] sm:$0xff]
  %v2270 = vld [vmem:[%s5 + $0x30] sm:$0xff]
  %v2271 = vld [vmem:[%s5 + $0x38] sm:$0xff]
  %v2272 = vld [vmem:[%s5 + $0x40] sm:$0xff]
  %v2273 = vld [vmem:[%s5 + $0x48] sm:$0xff]
  %v2274 = vld [vmem:[%s5 + $0x50] sm:$0xff]
  %v2275 = vld [vmem:[%s5 + $0x58] sm:$0xff]
  %v2276 = vld [vmem:[%s5 + $0x60] sm:$0xff]
  %v2277 = vld [vmem:[%s5 + $0x68] sm:$0xff]
  %v2278 = vld [vmem:[%s5 + $0x70] sm:$0xff]
  %v2279 = vld [vmem:[%s5 + $0x78] sm:$0xff]
  %v2280 = vld [vmem:[%s5 + $0x80] sm:$0xff]
  %v2281 = vld [vmem:[%s5 + $0x88] sm:$0xff]
  %v2282 = vld [vmem:[%s5 + $0x90] sm:$0xff]
  %v2283 = vld [vmem:[%s5 + $0x98] sm:$0xff]
  %v2284 = vld [vmem:[%s5 + $0xa0] sm:$0xff]
  %v2285 = vld [vmem:[%s5 + $0xa8] sm:$0xff]
  %v2286 = vld [vmem:[%s5 + $0xb0] sm:$0xff]
  %v2287 = vld [vmem:[%s5 + $0xb8] sm:$0xff]
  %v2288 = vld [vmem:[%s5 + $0xc0] sm:$0xff]
  %v2289 = vld [vmem:[%s5 + $0xc8] sm:$0xff]
  %v2290 = vld [vmem:[%s5 + $0xd0] sm:$0xff]
  %v2291 = vld [vmem:[%s5 + $0xd8] sm:$0xff]
  %v2292 = vld [vmem:[%s5 + $0xe0] sm:$0xff]
  %v2293 = vld [vmem:[%s5 + $0xe8] sm:$0xff]
  %v2294 = vld [vmem:[%s5 + $0xf0] sm:$0xff]
  %v2295 = vld [vmem:[%s5 + $0xf8] sm:$0xff]
  %v2296 = vld [vmem:[%s5 + $0x100] sm:$0xff]
  %v2297 = vld [vmem:[%s5 + $0x108] sm:$0xff]
  %v2298 = vld [vmem:[%s5 + $0x110] sm:$0xff]
  %v2299 = vld [vmem:[%s5 + $0x118] sm:$0xff]
  %v2300 = vld [vmem:[%s5 + $0x120] sm:$0xff]
  %v2301 = vld [vmem:[%s5 + $0x128] sm:$0xff]
  %v2302 = vld [vmem:[%s5 + $0x130] sm:$0xff]
  %v2303 = vld [vmem:[%s5 + $0x138] sm:$0xff]
  %v2304 = vld [vmem:[%s5 + $0x140] sm:$0xff]
  %v2305 = vld [vmem:[%s5 + $0x148] sm:$0xff]
  %v2306 = vld [vmem:[%s5 + $0x150] sm:$0xff]
  %v2307 = vld [vmem:[%s5 + $0x158] sm:$0xff]
  %v2308 = vld [vmem:[%s5 + $0x160] sm:$0xff]
  %v2309 = vld [vmem:[%s5 + $0x168] sm:$0xff]
  %v2310 = vld [vmem:[%s5 + $0x170] sm:$0xff]
  %v2311 = vld [vmem:[%s5 + $0x178] sm:$0xff]
  %v2312 = vld [vmem:[%s5 + $0x180] sm:$0xff]
  %v2313 = vld [vmem:[%s5 + $0x188] sm:$0xff]
  %v2314 = vld [vmem:[%s5 + $0x190] sm:$0xff]
  %v2315 = vld [vmem:[%s5 + $0x198] sm:$0xff]
  %v2316 = vld [vmem:[%s5 + $0x1a0] sm:$0xff]
  %v2317 = vld [vmem:[%s5 + $0x1a8] sm:$0xff]
  %v2318 = vld [vmem:[%s5 + $0x1b0] sm:$0xff]
  %v2319 = vld [vmem:[%s5 + $0x1b8] sm:$0xff]
  %v2320 = vld [vmem:[%s5 + $0x1c0] sm:$0xff]
  %v2321 = vld [vmem:[%s5 + $0x1c8] sm:$0xff]
  %v2322 = vld [vmem:[%s5 + $0x1d0] sm:$0xff]
  %v2323 = vld [vmem:[%s5 + $0x1d8] sm:$0xff]
  %v2324 = vld [vmem:[%s5 + $0x1e0] sm:$0xff]
  %v2325 = vld [vmem:[%s5 + $0x1e8] sm:$0xff]
  %v2326 = vld [vmem:[%s5 + $0x1f0] sm:$0xff]
  %v2327 = vld [vmem:[%s5 + $0x1f8] sm:$0xff]
  %v2328 = vld [vmem:[%s6] sm:$0xff]
  %v2330 = vlaneseq
  %v2331 = vshrl.u32 %v2330, 7
  %v2332 = vsub.s32 0, %v2331
  %v2333 = vrot.slane %v2328, %v2332
  %v2334 = vlaneseq
  %v2335 = vshrl.u32 %v2334, 7
  %v2336 = vsub.s32 1, %v2335
  %v2337 = vrot.slane %v2328, %v2336
  %v2338 = vlaneseq
  %v2339 = vshrl.u32 %v2338, 7
  %v2340 = vsub.s32 2, %v2339
  %v2341 = vrot.slane %v2328, %v2340
  %v2342 = vlaneseq
  %v2343 = vshrl.u32 %v2342, 7
  %v2344 = vsub.s32 3, %v2343
  %v2345 = vrot.slane %v2328, %v2344
  %v2346 = vlaneseq
  %v2347 = vshrl.u32 %v2346, 7
  %v2348 = vsub.s32 4, %v2347
  %v2349 = vrot.slane %v2328, %v2348
  %v2350 = vlaneseq
  %v2351 = vshrl.u32 %v2350, 7
  %v2352 = vsub.s32 5, %v2351
  %v2353 = vrot.slane %v2328, %v2352
  %v2354 = vlaneseq
  %v2355 = vshrl.u32 %v2354, 7
  %v2356 = vsub.s32 6, %v2355
  %v2357 = vrot.slane %v2328, %v2356
  %v2358 = vlaneseq
  %v2359 = vshrl.u32 %v2358, 7
  %v2360 = vsub.s32 7, %v2359
  %v2361 = vrot.slane %v2328, %v2360
  %v2434 = vunpack.c.l.b16 %v2264
  %v2435 = vunpack.c.h.b16 %v2264
  %v2436 = vunpack.c.l.b16 %v2265
  %v2437 = vunpack.c.h.b16 %v2265
  %v2438 = vunpack.c.l.b16 %v2266
  %v2439 = vunpack.c.h.b16 %v2266
  %v2440 = vunpack.c.l.b16 %v2267
  %v2441 = vunpack.c.h.b16 %v2267
  %v2442 = vunpack.c.l.b16 %v2268
  %v2443 = vunpack.c.h.b16 %v2268
  %v2444 = vunpack.c.l.b16 %v2269
  %v2445 = vunpack.c.h.b16 %v2269
  %v2446 = vunpack.c.l.b16 %v2270
  %v2447 = vunpack.c.h.b16 %v2270
  %v2448 = vunpack.c.l.b16 %v2271
  %v2449 = vunpack.c.h.b16 %v2271
  %v2450 = vunpack.c.l.b16 %v2272
  %v2451 = vunpack.c.h.b16 %v2272
  %v2452 = vunpack.c.l.b16 %v2273
  %v2453 = vunpack.c.h.b16 %v2273
  %v2454 = vunpack.c.l.b16 %v2274
  %v2455 = vunpack.c.h.b16 %v2274
  %v2456 = vunpack.c.l.b16 %v2275
  %v2457 = vunpack.c.h.b16 %v2275
  %v2458 = vunpack.c.l.b16 %v2276
  %v2459 = vunpack.c.h.b16 %v2276
  %v2460 = vunpack.c.l.b16 %v2277
  %v2461 = vunpack.c.h.b16 %v2277
  %v2462 = vunpack.c.l.b16 %v2278
  %v2463 = vunpack.c.h.b16 %v2278
  %v2464 = vunpack.c.l.b16 %v2279
  %v2465 = vunpack.c.h.b16 %v2279
  %v2466 = vunpack.c.l.b16 %v2280
  %v2467 = vunpack.c.h.b16 %v2280
  %v2468 = vunpack.c.l.b16 %v2281
  %v2469 = vunpack.c.h.b16 %v2281
  %v2470 = vunpack.c.l.b16 %v2282
  %v2471 = vunpack.c.h.b16 %v2282
  %v2472 = vunpack.c.l.b16 %v2283
  %v2473 = vunpack.c.h.b16 %v2283
  %v2474 = vunpack.c.l.b16 %v2284
  %v2475 = vunpack.c.h.b16 %v2284
  %v2476 = vunpack.c.l.b16 %v2285
  %v2477 = vunpack.c.h.b16 %v2285
  %v2478 = vunpack.c.l.b16 %v2286
  %v2479 = vunpack.c.h.b16 %v2286
  %v2480 = vunpack.c.l.b16 %v2287
  %v2481 = vunpack.c.h.b16 %v2287
  %v2482 = vunpack.c.l.b16 %v2288
  %v2483 = vunpack.c.h.b16 %v2288
  %v2484 = vunpack.c.l.b16 %v2289
  %v2485 = vunpack.c.h.b16 %v2289
  %v2486 = vunpack.c.l.b16 %v2290
  %v2487 = vunpack.c.h.b16 %v2290
  %v2488 = vunpack.c.l.b16 %v2291
  %v2489 = vunpack.c.h.b16 %v2291
  %v2490 = vunpack.c.l.b16 %v2292
  %v2491 = vunpack.c.h.b16 %v2292
  %v2492 = vunpack.c.l.b16 %v2293
  %v2493 = vunpack.c.h.b16 %v2293
  %v2494 = vunpack.c.l.b16 %v2294
  %v2495 = vunpack.c.h.b16 %v2294
  %v2496 = vunpack.c.l.b16 %v2295
  %v2497 = vunpack.c.h.b16 %v2295
  %v2498 = vunpack.c.l.b16 %v2296
  %v2499 = vunpack.c.h.b16 %v2296
  %v2500 = vunpack.c.l.b16 %v2297
  %v2501 = vunpack.c.h.b16 %v2297
  %v2502 = vunpack.c.l.b16 %v2298
  %v2503 = vunpack.c.h.b16 %v2298
  %v2504 = vunpack.c.l.b16 %v2299
  %v2505 = vunpack.c.h.b16 %v2299
  %v2506 = vunpack.c.l.b16 %v2300
  %v2507 = vunpack.c.h.b16 %v2300
  %v2508 = vunpack.c.l.b16 %v2301
  %v2509 = vunpack.c.h.b16 %v2301
  %v2510 = vunpack.c.l.b16 %v2302
  %v2511 = vunpack.c.h.b16 %v2302
  %v2512 = vunpack.c.l.b16 %v2303
  %v2513 = vunpack.c.h.b16 %v2303
  %v2514 = vunpack.c.l.b16 %v2304
  %v2515 = vunpack.c.h.b16 %v2304
  %v2516 = vunpack.c.l.b16 %v2305
  %v2517 = vunpack.c.h.b16 %v2305
  %v2518 = vunpack.c.l.b16 %v2306
  %v2519 = vunpack.c.h.b16 %v2306
  %v2520 = vunpack.c.l.b16 %v2307
  %v2521 = vunpack.c.h.b16 %v2307
  %v2522 = vunpack.c.l.b16 %v2308
  %v2523 = vunpack.c.h.b16 %v2308
  %v2524 = vunpack.c.l.b16 %v2309
  %v2525 = vunpack.c.h.b16 %v2309
  %v2526 = vunpack.c.l.b16 %v2310
  %v2527 = vunpack.c.h.b16 %v2310
  %v2528 = vunpack.c.l.b16 %v2311
  %v2529 = vunpack.c.h.b16 %v2311
  %v2530 = vunpack.c.l.b16 %v2312
  %v2531 = vunpack.c.h.b16 %v2312
  %v2532 = vunpack.c.l.b16 %v2313
  %v2533 = vunpack.c.h.b16 %v2313
  %v2534 = vunpack.c.l.b16 %v2314
  %v2535 = vunpack.c.h.b16 %v2314
  %v2536 = vunpack.c.l.b16 %v2315
  %v2537 = vunpack.c.h.b16 %v2315
  %v2538 = vunpack.c.l.b16 %v2316
  %v2539 = vunpack.c.h.b16 %v2316
  %v2540 = vunpack.c.l.b16 %v2317
  %v2541 = vunpack.c.h.b16 %v2317
  %v2542 = vunpack.c.l.b16 %v2318
  %v2543 = vunpack.c.h.b16 %v2318
  %v2544 = vunpack.c.l.b16 %v2319
  %v2545 = vunpack.c.h.b16 %v2319
  %v2546 = vunpack.c.l.b16 %v2320
  %v2547 = vunpack.c.h.b16 %v2320
  %v2548 = vunpack.c.l.b16 %v2321
  %v2549 = vunpack.c.h.b16 %v2321
  %v2550 = vunpack.c.l.b16 %v2322
  %v2551 = vunpack.c.h.b16 %v2322
  %v2552 = vunpack.c.l.b16 %v2323
  %v2553 = vunpack.c.h.b16 %v2323
  %v2554 = vunpack.c.l.b16 %v2324
  %v2555 = vunpack.c.h.b16 %v2324
  %v2556 = vunpack.c.l.b16 %v2325
  %v2557 = vunpack.c.h.b16 %v2325
  %v2558 = vunpack.c.l.b16 %v2326
  %v2559 = vunpack.c.h.b16 %v2326
  %v2560 = vunpack.c.l.b16 %v2327
  %v2561 = vunpack.c.h.b16 %v2327
  %v2562 = vpack.c.b16 %v2442, %v2434
  %v2563 = vpack.c.b16 %v2443, %v2435
  %v2564 = vpack.c.b16 %v2444, %v2436
  %v2565 = vpack.c.b16 %v2445, %v2437
  %v2566 = vpack.c.b16 %v2446, %v2438
  %v2567 = vpack.c.b16 %v2447, %v2439
  %v2568 = vpack.c.b16 %v2448, %v2440
  %v2569 = vpack.c.b16 %v2449, %v2441
  %v2570 = vpack.c.b16 %v2458, %v2450
  %v2571 = vpack.c.b16 %v2459, %v2451
  %v2572 = vpack.c.b16 %v2460, %v2452
  %v2573 = vpack.c.b16 %v2461, %v2453
  %v2574 = vpack.c.b16 %v2462, %v2454
  %v2575 = vpack.c.b16 %v2463, %v2455
  %v2576 = vpack.c.b16 %v2464, %v2456
  %v2577 = vpack.c.b16 %v2465, %v2457
  %v2578 = vpack.c.b16 %v2474, %v2466
  %v2579 = vpack.c.b16 %v2475, %v2467
  %v2580 = vpack.c.b16 %v2476, %v2468
  %v2581 = vpack.c.b16 %v2477, %v2469
  %v2582 = vpack.c.b16 %v2478, %v2470
  %v2583 = vpack.c.b16 %v2479, %v2471
  %v2584 = vpack.c.b16 %v2480, %v2472
  %v2585 = vpack.c.b16 %v2481, %v2473
  %v2586 = vpack.c.b16 %v2490, %v2482
  %v2587 = vpack.c.b16 %v2491, %v2483
  %v2588 = vpack.c.b16 %v2492, %v2484
  %v2589 = vpack.c.b16 %v2493, %v2485
  %v2590 = vpack.c.b16 %v2494, %v2486
  %v2591 = vpack.c.b16 %v2495, %v2487
  %v2592 = vpack.c.b16 %v2496, %v2488
  %v2593 = vpack.c.b16 %v2497, %v2489
  %v2594 = vpack.c.b16 %v2506, %v2498
  %v2595 = vpack.c.b16 %v2507, %v2499
  %v2596 = vpack.c.b16 %v2508, %v2500
  %v2597 = vpack.c.b16 %v2509, %v2501
  %v2598 = vpack.c.b16 %v2510, %v2502
  %v2599 = vpack.c.b16 %v2511, %v2503
  %v2600 = vpack.c.b16 %v2512, %v2504
  %v2601 = vpack.c.b16 %v2513, %v2505
  %v2602 = vpack.c.b16 %v2522, %v2514
  %v2603 = vpack.c.b16 %v2523, %v2515
  %v2604 = vpack.c.b16 %v2524, %v2516
  %v2605 = vpack.c.b16 %v2525, %v2517
  %v2606 = vpack.c.b16 %v2526, %v2518
  %v2607 = vpack.c.b16 %v2527, %v2519
  %v2608 = vpack.c.b16 %v2528, %v2520
  %v2609 = vpack.c.b16 %v2529, %v2521
  %v2610 = vpack.c.b16 %v2538, %v2530
  %v2611 = vpack.c.b16 %v2539, %v2531
  %v2612 = vpack.c.b16 %v2540, %v2532
  %v2613 = vpack.c.b16 %v2541, %v2533
  %v2614 = vpack.c.b16 %v2542, %v2534
  %v2615 = vpack.c.b16 %v2543, %v2535
  %v2616 = vpack.c.b16 %v2544, %v2536
  %v2617 = vpack.c.b16 %v2545, %v2537
  %v2618 = vpack.c.b16 %v2554, %v2546
  %v2619 = vpack.c.b16 %v2555, %v2547
  %v2620 = vpack.c.b16 %v2556, %v2548
  %v2621 = vpack.c.b16 %v2557, %v2549
  %v2622 = vpack.c.b16 %v2558, %v2550
  %v2623 = vpack.c.b16 %v2559, %v2551
  %v2624 = vpack.c.b16 %v2560, %v2552
  %v2625 = vpack.c.b16 %v2561, %v2553
  %2690 = vmatprep.subr.bf16.mxu0 %v2563
  %2691 = vmatpush1.bf16.msra.mxu0 %v2562
  %2692 = vmatprep.subr.bf16.mxu0 %v2571
  %2693 = vmatpush1.bf16.msra.mxu0 %v2570
  %2694 = vmatprep.subr.bf16.mxu0 %v2579
  %2695 = vmatpush1.bf16.msra.mxu0 %v2578
  %2696 = vmatprep.subr.bf16.mxu0 %v2587
  %2697 = vmatpush1.bf16.msra.mxu0 %v2586
  %2698 = vmatprep.subr.bf16.mxu0 %v2595
  %2699 = vmatpush1.bf16.msra.mxu0 %v2594
  %2700 = vmatprep.subr.bf16.mxu0 %v2603
  %2701 = vmatpush1.bf16.msra.mxu0 %v2602
  %2702 = vmatprep.subr.bf16.mxu0 %v2611
  %2703 = vmatpush1.bf16.msra.mxu0 %v2610
  %2704 = vmatprep.subr.bf16.mxu0 %v2619
  %2705 = vmatpush1.bf16.msra.mxu0 %v2618
  %2706 = vmatprep.subr.bf16.mxu0 0
  %2707 = vmatpush1.bf16.msra.mxu0 0
  %2708 = vmatprep.subr.bf16.mxu0 0
  %2709 = vmatpush1.bf16.msra.mxu0 0
  %2710 = vmatprep.subr.bf16.mxu0 0
  %2711 = vmatpush1.bf16.msra.mxu0 0
  %2712 = vmatprep.subr.bf16.mxu0 0
  %2713 = vmatpush1.bf16.msra.mxu0 0
  %2714 = vmatprep.subr.bf16.mxu0 0
  %2715 = vmatpush1.bf16.msra.mxu0 0
  %2716 = vmatprep.subr.bf16.mxu0 0
  %2717 = vmatpush1.bf16.msra.mxu0 0
  %2718 = vmatprep.subr.bf16.mxu0 0
  %2719 = vmatpush1.bf16.msra.mxu0 0
  %2720 = vmatprep.subr.bf16.mxu0 0
  %2721 = vmatpush1.bf16.msra.mxu0 0
  %2722 = vmatprep.mubr.bf16.mxu0 0
  %2723 = vmatmul.mubr.bf16.gmra.mrb[0].mxu0 %v2263
  %v2724 = vpop.f32.mrb[0].mxu0
  %v2725 = vadd.f32 %v2333, %v2724
  %v2726 = vpop.f32.mrb[0].mxu0
  %v2727 = vadd.f32 %v2337, %v2726
  %v2728 = vpop.f32.mrb[0].mxu0
  %v2729 = vpop.f32.mrb[0].mxu0
  %2730 = vdwg.mxu0
  %2731 = vmatprep.subr.bf16.mxu0 %v2565
  %2732 = vmatpush1.bf16.msra.mxu0 %v2564
  %2733 = vmatprep.subr.bf16.mxu0 %v2573
  %2734 = vmatpush1.bf16.msra.mxu0 %v2572
  %2735 = vmatprep.subr.bf16.mxu0 %v2581
  %2736 = vmatpush1.bf16.msra.mxu0 %v2580
  %2737 = vmatprep.subr.bf16.mxu0 %v2589
  %2738 = vmatpush1.bf16.msra.mxu0 %v2588
  %2739 = vmatprep.subr.bf16.mxu0 %v2597
  %2740 = vmatpush1.bf16.msra.mxu0 %v2596
  %2741 = vmatprep.subr.bf16.mxu0 %v2605
  %2742 = vmatpush1.bf16.msra.mxu0 %v2604
  %2743 = vmatprep.subr.bf16.mxu0 %v2613
  %2744 = vmatpush1.bf16.msra.mxu0 %v2612
  %2745 = vmatprep.subr.bf16.mxu0 %v2621
  %2746 = vmatpush1.bf16.msra.mxu0 %v2620
  %2747 = vmatprep.subr.bf16.mxu0 0
  %2748 = vmatpush1.bf16.msra.mxu0 0
  %2749 = vmatprep.subr.bf16.mxu0 0
  %2750 = vmatpush1.bf16.msra.mxu0 0
  %2751 = vmatprep.subr.bf16.mxu0 0
  %2752 = vmatpush1.bf16.msra.mxu0 0
  %2753 = vmatprep.subr.bf16.mxu0 0
  %2754 = vmatpush1.bf16.msra.mxu0 0
  %2755 = vmatprep.subr.bf16.mxu0 0
  %2756 = vmatpush1.bf16.msra.mxu0 0
  %2757 = vmatprep.subr.bf16.mxu0 0
  %2758 = vmatpush1.bf16.msra.mxu0 0
  %2759 = vmatprep.subr.bf16.mxu0 0
  %2760 = vmatpush1.bf16.msra.mxu0 0
  %2761 = vmatprep.subr.bf16.mxu0 0
  %2762 = vmatpush1.bf16.msra.mxu0 0
  %2763 = vmatprep.mubr.bf16.mxu0 0
  %2764 = vmatmul.mubr.bf16.gmra.mrb[0].mxu0 %v2263
  %v2765 = vpop.f32.mrb[0].mxu0
  %v2766 = vadd.f32 %v2341, %v2765
  %v2767 = vpop.f32.mrb[0].mxu0
  %v2768 = vadd.f32 %v2345, %v2767
  %v2769 = vpop.f32.mrb[0].mxu0
  %v2770 = vpop.f32.mrb[0].mxu0
  %2771 = vdwg.mxu0
  %2772 = vmatprep.subr.bf16.mxu0 %v2567
  %2773 = vmatpush1.bf16.msra.mxu0 %v2566
  %2774 = vmatprep.subr.bf16.mxu0 %v2575
  %2775 = vmatpush1.bf16.msra.mxu0 %v2574
  %2776 = vmatprep.subr.bf16.mxu0 %v2583
  %2777 = vmatpush1.bf16.msra.mxu0 %v2582
  %2778 = vmatprep.subr.bf16.mxu0 %v2591
  %2779 = vmatpush1.bf16.msra.mxu0 %v2590
  %2780 = vmatprep.subr.bf16.mxu0 %v2599
  %2781 = vmatpush1.bf16.msra.mxu0 %v2598
  %2782 = vmatprep.subr.bf16.mxu0 %v2607
  %2783 = vmatpush1.bf16.msra.mxu0 %v2606
  %2784 = vmatprep.subr.bf16.mxu0 %v2615
  %2785 = vmatpush1.bf16.msra.mxu0 %v2614
  %2786 = vmatprep.subr.bf16.mxu0 %v2623
  %2787 = vmatpush1.bf16.msra.mxu0 %v2622
  %2788 = vmatprep.subr.bf16.mxu0 0
  %2789 = vmatpush1.bf16.msra.mxu0 0
  %2790 = vmatprep.subr.bf16.mxu0 0
  %2791 = vmatpush1.bf16.msra.mxu0 0
  %2792 = vmatprep.subr.bf16.mxu0 0
  %2793 = vmatpush1.bf16.msra.mxu0 0
  %2794 = vmatprep.subr.bf16.mxu0 0
  %2795 = vmatpush1.bf16.msra.mxu0 0
  %2796 = vmatprep.subr.bf16.mxu0 0
  %2797 = vmatpush1.bf16.msra.mxu0 0
  %2798 = vmatprep.subr.bf16.mxu0 0
  %2799 = vmatpush1.bf16.msra.mxu0 0
  %2800 = vmatprep.subr.bf16.mxu0 0
  %2801 = vmatpush1.bf16.msra.mxu0 0
  %2802 = vmatprep.subr.bf16.mxu0 0
  %2803 = vmatpush1.bf16.msra.mxu0 0
  %2804 = vmatprep.mubr.bf16.mxu0 0
  %2805 = vmatmul.mubr.bf16.gmra.mrb[0].mxu0 %v2263
  %v2806 = vpop.f32.mrb[0].mxu0
  %v2807 = vadd.f32 %v2349, %v2806
  %v2808 = vpop.f32.mrb[0].mxu0
  %v2809 = vadd.f32 %v2353, %v2808
  %v2810 = vpop.f32.mrb[0].mxu0
  %v2811 = vpop.f32.mrb[0].mxu0
  %2812 = vdwg.mxu0
  %2813 = vmatprep.subr.bf16.mxu0 %v2569
  %2814 = vmatpush1.bf16.msra.mxu0 %v2568
  %2815 = vmatprep.subr.bf16.mxu0 %v2577
  %2816 = vmatpush1.bf16.msra.mxu0 %v2576
  %2817 = vmatprep.subr.bf16.mxu0 %v2585
  %2818 = vmatpush1.bf16.msra.mxu0 %v2584
  %2819 = vmatprep.subr.bf16.mxu0 %v2593
  %2820 = vmatpush1.bf16.msra.mxu0 %v2592
  %2821 = vmatprep.subr.bf16.mxu0 %v2601
  %2822 = vmatpush1.bf16.msra.mxu0 %v2600
  %2823 = vmatprep.subr.bf16.mxu0 %v2609
  %2824 = vmatpush1.bf16.msra.mxu0 %v2608
  %2825 = vmatprep.subr.bf16.mxu0 %v2617
  %2826 = vmatpush1.bf16.msra.mxu0 %v2616
  %2827 = vmatprep.subr.bf16.mxu0 %v2625
  %2828 = vmatpush1.bf16.msra.mxu0 %v2624
  %2829 = vmatprep.subr.bf16.mxu0 0
  %2830 = vmatpush1.bf16.msra.mxu0 0
  %2831 = vmatprep.subr.bf16.mxu0 0
  %2832 = vmatpush1.bf16.msra.mxu0 0
  %2833 = vmatprep.subr.bf16.mxu0 0
  %2834 = vmatpush1.bf16.msra.mxu0 0
  %2835 = vmatprep.subr.bf16.mxu0 0
  %2836 = vmatpush1.bf16.msra.mxu0 0
  %2837 = vmatprep.subr.bf16.mxu0 0
  %2838 = vmatpush1.bf16.msra.mxu0 0
  %2839 = vmatprep.subr.bf16.mxu0 0
  %2840 = vmatpush1.bf16.msra.mxu0 0
  %2841 = vmatprep.subr.bf16.mxu0 0
  %2842 = vmatpush1.bf16.msra.mxu0 0
  %2843 = vmatprep.subr.bf16.mxu0 0
  %2844 = vmatpush1.bf16.msra.mxu0 0
  %2845 = vmatprep.mubr.bf16.mxu0 0
  %2846 = vmatmul.mubr.bf16.gmra.mrb[0].mxu0 %v2263
  %v2847 = vpop.f32.mrb[0].mxu0
  %v2848 = vadd.f32 %v2357, %v2847
  %v2849 = vpop.f32.mrb[0].mxu0
  %v2850 = vadd.f32 %v2361, %v2849
  %v2851 = vpop.f32.mrb[0].mxu0
  %v2852 = vpop.f32.mrb[0].mxu0
  %2853 = vdwg.mxu0
  %2854 = vst [vmem:[%s7] sm:$0xff] %v2725
  %2855 = vst [vmem:[%s7 + $0x8] sm:$0xff] %v2727
  %2856 = vst [vmem:[%s7 + $0x10] sm:$0xff] %v2766
  %2857 = vst [vmem:[%s7 + $0x18] sm:$0xff] %v2768
  %2858 = vst [vmem:[%s7 + $0x20] sm:$0xff] %v2807
  %2859 = vst [vmem:[%s7 + $0x28] sm:$0xff] %v2809
  %2860 = vst [vmem:[%s7 + $0x30] sm:$0xff] %v2848
  %2861 = vst [vmem:[%s7 + $0x38] sm:$0xff] %v2850
  // Predicated region
  $region30: #{_lambda_.7} parent=0 // pred_check
    _
  $region31: #{_lambda_.7} parent=0 // pred_check_branch
    %2863 = sbr.rel (0) target = $region33
  $region32: #{_lambda_.7} parent=0 // pred_region
    _
  $region33: #{_lambda_.7} parent=0 // pred_fallthru
    _
  // Predicated region
  $region34: #{_lambda_.7} parent=0 // pred_check
    _
  $region35: #{_lambda_.7} parent=0 // pred_check_branch
    %2865 = sbr.rel (0) target = $region37
  $region36: #{_lambda_.7} parent=0 // pred_region
    _
  $region37: #{_lambda_.7} parent=0 // pred_fallthru
    _

// kernel: _lambda_.6
$region0: #{_lambda_.6}
  #allocation0 [shape = 'u32[]', space=smem, size = 0x4, offset = 0x4, fixed_abs, tag = 'smem constant byte address 0x4 - core index']
  #allocation1 [shape = 'u32[144,128]{1,0:T(1,128)}', space=vmem, size = 0x12000, scoped, tag = 'internal scratch']
  %s0 = inlined_call_operand.vmem [shape: bf16[32,768], index: 0, kind: input, shape index: {}]
  %s1 = inlined_call_operand.vmem [shape: bf16[768,128], index: 1, kind: input, shape index: {}]
  %s2 = inlined_call_operand.vmem [shape: f32[1,128], index: 2, kind: input, shape index: {}]
  %s3 = inlined_call_operand.vmem [shape: bf16[128,128], index: 3, kind: input, shape index: {}]
  %s4 = inlined_call_operand.vmem [shape: f32[1,128], index: 4, kind: input, shape index: {}]
  %s5 = inlined_call_operand.vmem [shape: bf16[128,512], index: 5, kind: input, shape index: {}]
  %s6 = inlined_call_operand.vmem [shape: f32[1,512], index: 6, kind: input, shape index: {}]
  %s7 = inlined_call_operand.vmem [shape: f32[32,512], index: 7, kind: output, shape index: {}]
  %s8 = sld [smem:[#allocation0]]
  $region38: #{_lambda_.6} parent=0
    _
  %s10 = ssub.s32 1, %s8
  %s11 = scalar_select 0, %s10, %s8
  // Predicated region
  $region2: #{_lambda_.6} parent=0 // pred_check
    _
  $region3: #{_lambda_.6} parent=0 // pred_check_branch
    %13 = sbr.rel (0) target = $region5
  $region4: #{_lambda_.6} parent=0 // pred_region
    _
  $region5: #{_lambda_.6} parent=0 // pred_fallthru
    _
  // Predicated region
  $region6: #{_lambda_.6} parent=0 // pred_check
    _
  $region7: #{_lambda_.6} parent=0 // pred_check_branch
    %15 = sbr.rel (0) target = $region9
  $region8: #{_lambda_.6} parent=0 // pred_region
    _
  $region9: #{_lambda_.6} parent=0 // pred_fallthru
    _
  // Predicated region
  $region10: #{_lambda_.6} parent=0 // pred_check
    _
  $region11: #{_lambda_.6} parent=0 // pred_check_branch
    %17 = sbr.rel (0) target = $region13
  $region12: #{_lambda_.6} parent=0 // pred_region
    _
  $region13: #{_lambda_.6} parent=0 // pred_fallthru
    _
  // Predicated region
  $region14: #{_lambda_.6} parent=0 // pred_check
    _
  $region15: #{_lambda_.6} parent=0 // pred_check_branch
    %19 = sbr.rel (0) target = $region17
  $region16: #{_lambda_.6} parent=0 // pred_region
    _
  $region17: #{_lambda_.6} parent=0 // pred_fallthru
    _
  // Predicated region
  $region18: #{_lambda_.6} parent=0 // pred_check
    _
  $region19: #{_lambda_.6} parent=0 // pred_check_branch
    %21 = sbr.rel (0) target = $region21
  $region20: #{_lambda_.6} parent=0 // pred_region
    _
  $region21: #{_lambda_.6} parent=0 // pred_fallthru
    _
  // Predicated region
  $region22: #{_lambda_.6} parent=0 // pred_check
    _
  $region23: #{_lambda_.6} parent=0 // pred_check_branch
    %23 = sbr.rel (0) target = $region25
  $region24: #{_lambda_.6} parent=0 // pred_region
    _
  $region25: #{_lambda_.6} parent=0 // pred_fallthru
    _
  // Predicated region
  $region26: #{_lambda_.6} parent=0 // pred_check
    _
  $region27: #{_lambda_.6} parent=0 // pred_check_branch
    %25 = sbr.rel (0) target = $region29
  $region28: #{_lambda_.6} parent=0 // pred_region
    _
  $region29: #{_lambda_.6} parent=0 // pred_fallthru
    _
  %v27 = vld [vmem:[%s0] sm:$0xff]
  %v28 = vld [vmem:[%s0 + $0x8] sm:$0xff]
  %v29 = vld [vmem:[%s0 + $0x10] sm:$0xff]
  %v30 = vld [vmem:[%s0 + $0x18] sm:$0xff]
  %v31 = vld [vmem:[%s0 + $0x20] sm:$0xff]
  %v32 = vld [vmem:[%s0 + $0x28] sm:$0xff]
  %v33 = vld [vmem:[%s0 + $0x30] sm:$0xff]
  %v34 = vld [vmem:[%s0 + $0x38] sm:$0xff]
  %v35 = vld [vmem:[%s0 + $0x40] sm:$0xff]
  %v36 = vld [vmem:[%s0 + $0x48] sm:$0xff]
  %v37 = vld [vmem:[%s0 + $0x50] sm:$0xff]
  %v38 = vld [vmem:[%s0 + $0x58] sm:$0xff]
  %v39 = vld [vmem:[%s1] sm:$0xf]
  %v40 = vld [vmem:[%s1 + $0x4] sm:$0xf]
  %v41 = vld [vmem:[%s1 + $0x8] sm:$0xf]
  %v42 = vld [vmem:[%s1 + $0xc] sm:$0xf]
  %v43 = vld [vmem:[%s1 + $0x10] sm:$0xf]
  %v44 = vld [vmem:[%s1 + $0x14] sm:$0xf]
  %v45 = vld [vmem:[%s1 + $0x18] sm:$0xf]
  %v46 = vld [vmem:[%s1 + $0x1c] sm:$0xf]
  %v47 = vld [vmem:[%s1 + $0x20] sm:$0xf]
  %v48 = vld [vmem:[%s1 + $0x24] sm:$0xf]
  %v49 = vld [vmem:[%s1 + $0x28] sm:$0xf]
  %v50 = vld [vmem:[%s1 + $0x2c] sm:$0xf]
  %v51 = vld [vmem:[%s1 + $0x30] sm:$0xf]
  %v52 = vld [vmem:[%s1 + $0x34] sm:$0xf]
  %v53 = vld [vmem:[%s1 + $0x38] sm:$0xf]
  %v54 = vld [vmem:[%s1 + $0x3c] sm:$0xf]
  %v55 = vld [vmem:[%s1 + $0x40] sm:$0xf]
  %v56 = vld [vmem:[%s1 + $0x44] sm:$0xf]
  %v57 = vld [vmem:[%s1 + $0x48] sm:$0xf]
  %v58 = vld [vmem:[%s1 + $0x4c] sm:$0xf]
  %v59 = vld [vmem:[%s1 + $0x50] sm:$0xf]
  %v60 = vld [vmem:[%s1 + $0x54] sm:$0xf]
  %v61 = vld [vmem:[%s1 + $0x58] sm:$0xf]
  %v62 = vld [vmem:[%s1 + $0x5c] sm:$0xf]
  %v63 = vld [vmem:[%s1 + $0x60] sm:$0xf]
  %v64 = vld [vmem:[%s1 + $0x64] sm:$0xf]
  %v65 = vld [vmem:[%s1 + $0x68] sm:$0xf]
  %v66 = vld [vmem:[%s1 + $0x6c] sm:$0xf]
  %v67 = vld [vmem:[%s1 + $0x70] sm:$0xf]
  %v68 = vld [vmem:[%s1 + $0x74] sm:$0xf]
  %v69 = vld [vmem:[%s1 + $0x78] sm:$0xf]
  %v70 = vld [vmem:[%s1 + $0x7c] sm:$0xf]
  %v71 = vld [vmem:[%s1 + $0x80] sm:$0xf]
  %v72 = vld [vmem:[%s1 + $0x84] sm:$0xf]
  %v73 = vld [vmem:[%s1 + $0x88] sm:$0xf]
  %v74 = vld [vmem:[%s1 + $0x8c] sm:$0xf]
  %v75 = vld [vmem:[%s1 + $0x90] sm:$0xf]
  %v76 = vld [vmem:[%s1 + $0x94] sm:$0xf]
  %v77 = vld [vmem:[%s1 + $0x98] sm:$0xf]
  %v78 = vld [vmem:[%s1 + $0x9c] sm:$0xf]
  %v79 = vld [vmem:[%s1 + $0xa0] sm:$0xf]
  %v80 = vld [vmem:[%s1 + $0xa4] sm:$0xf]
  %v81 = vld [vmem:[%s1 + $0xa8] sm:$0xf]
  %v82 = vld [vmem:[%s1 + $0xac] sm:$0xf]
  %v83 = vld [vmem:[%s1 + $0xb0] sm:$0xf]
  %v84 = vld [vmem:[%s1 + $0xb4] sm:$0xf]
  %v85 = vld [vmem:[%s1 + $0xb8] sm:$0xf]
  %v86 = vld [vmem:[%s1 + $0xbc] sm:$0xf]
  %v87 = vld [vmem:[%s1 + $0xc0] sm:$0xf]
  %v88 = vld [vmem:[%s1 + $0xc4] sm:$0xf]
  %v89 = vld [vmem:[%s1 + $0xc8] sm:$0xf]
  %v90 = vld [vmem:[%s1 + $0xcc] sm:$0xf]
  %v91 = vld [vmem:[%s1 + $0xd0] sm:$0xf]
  %v92 = vld [vmem:[%s1 + $0xd4] sm:$0xf]
  %v93 = vld [vmem:[%s1 + $0xd8] sm:$0xf]
  %v94 = vld [vmem:[%s1 + $0xdc] sm:$0xf]
  %v95 = vld [vmem:[%s1 + $0xe0] sm:$0xf]
  %v96 = vld [vmem:[%s1 + $0xe4] sm:$0xf]
  %v97 = vld [vmem:[%s1 + $0xe8] sm:$0xf]
  %v98 = vld [vmem:[%s1 + $0xec] sm:$0xf]
  %v99 = vld [vmem:[%s1 + $0xf0] sm:$0xf]
  %v100 = vld [vmem:[%s1 + $0xf4] sm:$0xf]
  %v101 = vld [vmem:[%s1 + $0xf8] sm:$0xf]
  %v102 = vld [vmem:[%s1 + $0xfc] sm:$0xf]
  %v103 = vld [vmem:[%s1 + $0x100] sm:$0xf]
  %v104 = vld [vmem:[%s1 + $0x104] sm:$0xf]
  %v105 = vld [vmem:[%s1 + $0x108] sm:$0xf]
  %v106 = vld [vmem:[%s1 + $0x10c] sm:$0xf]
  %v107 = vld [vmem:[%s1 + $0x110] sm:$0xf]
  %v108 = vld [vmem:[%s1 + $0x114] sm:$0xf]
  %v109 = vld [vmem:[%s1 + $0x118] sm:$0xf]
  %v110 = vld [vmem:[%s1 + $0x11c] sm:$0xf]
  %v111 = vld [vmem:[%s1 + $0x120] sm:$0xf]
  %v112 = vld [vmem:[%s1 + $0x124] sm:$0xf]
  %v113 = vld [vmem:[%s1 + $0x128] sm:$0xf]
  %v114 = vld [vmem:[%s1 + $0x12c] sm:$0xf]
  %v115 = vld [vmem:[%s1 + $0x130] sm:$0xf]
  %v116 = vld [vmem:[%s1 + $0x134] sm:$0xf]
  %v117 = vld [vmem:[%s1 + $0x138] sm:$0xf]
  %v118 = vld [vmem:[%s1 + $0x13c] sm:$0xf]
  %v119 = vld [vmem:[%s1 + $0x140] sm:$0xf]
  %v120 = vld [vmem:[%s1 + $0x144] sm:$0xf]
  %v121 = vld [vmem:[%s1 + $0x148] sm:$0xf]
  %v122 = vld [vmem:[%s1 + $0x14c] sm:$0xf]
  %v123 = vld [vmem:[%s1 + $0x150] sm:$0xf]
  %v124 = vld [vmem:[%s1 + $0x154] sm:$0xf]
  %v125 = vld [vmem:[%s1 + $0x158] sm:$0xf]
  %v126 = vld [vmem:[%s1 + $0x15c] sm:$0xf]
  %v127 = vld [vmem:[%s1 + $0x160] sm:$0xf]
  %v128 = vld [vmem:[%s1 + $0x164] sm:$0xf]
  %v129 = vld [vmem:[%s1 + $0x168] sm:$0xf]
  %v130 = vld [vmem:[%s1 + $0x16c] sm:$0xf]
  %v131 = vld [vmem:[%s1 + $0x170] sm:$0xf]
  %v132 = vld [vmem:[%s1 + $0x174] sm:$0xf]
  %v133 = vld [vmem:[%s1 + $0x178] sm:$0xf]
  %v134 = vld [vmem:[%s1 + $0x17c] sm:$0xf]
  %v135 = vld [vmem:[%s2] sm:$0x1]
  %v137 = vlaneseq
  %v138 = vshrl.u32 %v137, 7
  %v139 = vsub.s32 0, %v138
  %v140 = vrot.slane %v135, %v139
  %v154 = vunpack.c.l.b16 %v27
  %v155 = vunpack.c.h.b16 %v27
  %v156 = vunpack.c.l.b16 %v28
  %v157 = vunpack.c.h.b16 %v28
  %v158 = vunpack.c.l.b16 %v29
  %v159 = vunpack.c.h.b16 %v29
  %v160 = vunpack.c.l.b16 %v30
  %v161 = vunpack.c.h.b16 %v30
  %v162 = vunpack.c.l.b16 %v31
  %v163 = vunpack.c.h.b16 %v31
  %v164 = vunpack.c.l.b16 %v32
  %v165 = vunpack.c.h.b16 %v32
  %v166 = vunpack.c.l.b16 %v33
  %v167 = vunpack.c.h.b16 %v33
  %v168 = vunpack.c.l.b16 %v34
  %v169 = vunpack.c.h.b16 %v34
  %v170 = vunpack.c.l.b16 %v35
  %v171 = vunpack.c.h.b16 %v35
  %v172 = vunpack.c.l.b16 %v36
  %v173 = vunpack.c.h.b16 %v36
  %v174 = vunpack.c.l.b16 %v37
  %v175 = vunpack.c.h.b16 %v37
  %v176 = vunpack.c.l.b16 %v38
  %v177 = vunpack.c.h.b16 %v38
  %v178 = vpack.c.b16 %v160, %v154
  %v179 = vpack.c.b16 %v161, %v155
  %v180 = vpack.c.b16 %v162, %v156
  %v181 = vpack.c.b16 %v163, %v157
  %v182 = vpack.c.b16 %v164, %v158
  %v183 = vpack.c.b16 %v165, %v159
  %v184 = vpack.c.b16 %v172, %v166
  %v185 = vpack.c.b16 %v173, %v167
  %v186 = vpack.c.b16 %v174, %v168
  %v187 = vpack.c.b16 %v175, %v169
  %v188 = vpack.c.b16 %v176, %v170
  %v189 = vpack.c.b16 %v177, %v171
  %v298 = vunpack.c.l.b16 %v39
  %v299 = vunpack.c.l.b16 %v40
  %v300 = vunpack.c.l.b16 %v41
  %v301 = vunpack.c.l.b16 %v42
  %v302 = vunpack.c.l.b16 %v43
  %v303 = vunpack.c.l.b16 %v44
  %v304 = vunpack.c.l.b16 %v45
  %v305 = vunpack.c.l.b16 %v46
  %v306 = vunpack.c.l.b16 %v47
  %v307 = vunpack.c.l.b16 %v48
  %v308 = vunpack.c.l.b16 %v49
  %v309 = vunpack.c.l.b16 %v50
  %v310 = vunpack.c.l.b16 %v51
  %v311 = vunpack.c.l.b16 %v52
  %v312 = vunpack.c.l.b16 %v53
  %v313 = vunpack.c.l.b16 %v54
  %v314 = vunpack.c.l.b16 %v55
  %v315 = vunpack.c.l.b16 %v56
  %v316 = vunpack.c.l.b16 %v57
  %v317 = vunpack.c.l.b16 %v58
  %v318 = vunpack.c.l.b16 %v59
  %v319 = vunpack.c.l.b16 %v60
  %v320 = vunpack.c.l.b16 %v61
  %v321 = vunpack.c.l.b16 %v62
  %v322 = vunpack.c.l.b16 %v63
  %v323 = vunpack.c.l.b16 %v64
  %v324 = vunpack.c.l.b16 %v65
  %v325 = vunpack.c.l.b16 %v66
  %v326 = vunpack.c.l.b16 %v67
  %v327 = vunpack.c.l.b16 %v68
  %v328 = vunpack.c.l.b16 %v69
  %v329 = vunpack.c.l.b16 %v70
  %v330 = vunpack.c.l.b16 %v71
  %v331 = vunpack.c.l.b16 %v72
  %v332 = vunpack.c.l.b16 %v73
  %v333 = vunpack.c.l.b16 %v74
  %v334 = vunpack.c.l.b16 %v75
  %v335 = vunpack.c.l.b16 %v76
  %v336 = vunpack.c.l.b16 %v77
  %v337 = vunpack.c.l.b16 %v78
  %v338 = vunpack.c.l.b16 %v79
  %v339 = vunpack.c.l.b16 %v80
  %v340 = vunpack.c.l.b16 %v81
  %v341 = vunpack.c.l.b16 %v82
  %v342 = vunpack.c.l.b16 %v83
  %v343 = vunpack.c.l.b16 %v84
  %v344 = vunpack.c.l.b16 %v85
  %v345 = vunpack.c.l.b16 %v86
  %v346 = vunpack.c.l.b16 %v87
  %v347 = vunpack.c.l.b16 %v88
  %v348 = vunpack.c.l.b16 %v89
  %v349 = vunpack.c.l.b16 %v90
  %v350 = vunpack.c.l.b16 %v91
  %v351 = vunpack.c.l.b16 %v92
  %v352 = vunpack.c.l.b16 %v93
  %v353 = vunpack.c.l.b16 %v94
  %v354 = vunpack.c.l.b16 %v95
  %v355 = vunpack.c.l.b16 %v96
  %v356 = vunpack.c.l.b16 %v97
  %v357 = vunpack.c.l.b16 %v98
  %v358 = vunpack.c.l.b16 %v99
  %v359 = vunpack.c.l.b16 %v100
  %v360 = vunpack.c.l.b16 %v101
  %v361 = vunpack.c.l.b16 %v102
  %v362 = vunpack.c.l.b16 %v103
  %v363 = vunpack.c.l.b16 %v104
  %v364 = vunpack.c.l.b16 %v105
  %v365 = vunpack.c.l.b16 %v106
  %v366 = vunpack.c.l.b16 %v107
  %v367 = vunpack.c.l.b16 %v108
  %v368 = vunpack.c.l.b16 %v109
  %v369 = vunpack.c.l.b16 %v110
  %v370 = vunpack.c.l.b16 %v111
  %v371 = vunpack.c.l.b16 %v112
  %v372 = vunpack.c.l.b16 %v113
  %v373 = vunpack.c.l.b16 %v114
  %v374 = vunpack.c.l.b16 %v115
  %v375 = vunpack.c.l.b16 %v116
  %v376 = vunpack.c.l.b16 %v117
  %v377 = vunpack.c.l.b16 %v118
  %v378 = vunpack.c.l.b16 %v119
  %v379 = vunpack.c.l.b16 %v120
  %v380 = vunpack.c.l.b16 %v121
  %v381 = vunpack.c.l.b16 %v122
  %v382 = vunpack.c.l.b16 %v123
  %v383 = vunpack.c.l.b16 %v124
  %v384 = vunpack.c.l.b16 %v125
  %v385 = vunpack.c.l.b16 %v126
  %v386 = vunpack.c.l.b16 %v127
  %v387 = vunpack.c.l.b16 %v128
  %v388 = vunpack.c.l.b16 %v129
  %v389 = vunpack.c.l.b16 %v130
  %v390 = vunpack.c.l.b16 %v131
  %v391 = vunpack.c.l.b16 %v132
  %v392 = vunpack.c.l.b16 %v133
  %v393 = vunpack.c.l.b16 %v134
  %v394 = vpack.c.b16 %v299, %v298
  %v395 = vpack.c.b16 %v301, %v300
  %v396 = vpack.c.b16 %v303, %v302
  %v397 = vpack.c.b16 %v305, %v304
  %v398 = vpack.c.b16 %v307, %v306
  %v399 = vpack.c.b16 %v309, %v308
  %v400 = vpack.c.b16 %v311, %v310
  %v401 = vpack.c.b16 %v313, %v312
  %v402 = vpack.c.b16 %v315, %v314
  %v403 = vpack.c.b16 %v317, %v316
  %v404 = vpack.c.b16 %v319, %v318
  %v405 = vpack.c.b16 %v321, %v320
  %v406 = vpack.c.b16 %v323, %v322
  %v407 = vpack.c.b16 %v325, %v324
  %v408 = vpack.c.b16 %v327, %v326
  %v409 = vpack.c.b16 %v329, %v328
  %v410 = vpack.c.b16 %v331, %v330
  %v411 = vpack.c.b16 %v333, %v332
  %v412 = vpack.c.b16 %v335, %v334
  %v413 = vpack.c.b16 %v337, %v336
  %v414 = vpack.c.b16 %v339, %v338
  %v415 = vpack.c.b16 %v341, %v340
  %v416 = vpack.c.b16 %v343, %v342
  %v417 = vpack.c.b16 %v345, %v344
  %v418 = vpack.c.b16 %v347, %v346
  %v419 = vpack.c.b16 %v349, %v348
  %v420 = vpack.c.b16 %v351, %v350
  %v421 = vpack.c.b16 %v353, %v352
  %v422 = vpack.c.b16 %v355, %v354
  %v423 = vpack.c.b16 %v357, %v356
  %v424 = vpack.c.b16 %v359, %v358
  %v425 = vpack.c.b16 %v361, %v360
  %v426 = vpack.c.b16 %v363, %v362
  %v427 = vpack.c.b16 %v365, %v364
  %v428 = vpack.c.b16 %v367, %v366
  %v429 = vpack.c.b16 %v369, %v368
  %v430 = vpack.c.b16 %v371, %v370
  %v431 = vpack.c.b16 %v373, %v372
  %v432 = vpack.c.b16 %v375, %v374
  %v433 = vpack.c.b16 %v377, %v376
  %v434 = vpack.c.b16 %v379, %v378
  %v435 = vpack.c.b16 %v381, %v380
  %v436 = vpack.c.b16 %v383, %v382
  %v437 = vpack.c.b16 %v385, %v384
  %v438 = vpack.c.b16 %v387, %v386
  %v439 = vpack.c.b16 %v389, %v388
  %v440 = vpack.c.b16 %v391, %v390
  %v441 = vpack.c.b16 %v393, %v392
  %490 = vmatprep.subr.bf16.mxu0 0
  %491 = vmatpush1.bf16.msra.mxu0 %v394
  %492 = vmatprep.subr.bf16.mxu0 0
  %493 = vmatpush1.bf16.msra.mxu0 %v395
  %494 = vmatprep.subr.bf16.mxu0 0
  %495 = vmatpush1.bf16.msra.mxu0 %v396
  %496 = vmatprep.subr.bf16.mxu0 0
  %497 = vmatpush1.bf16.msra.mxu0 %v397
  %498 = vmatprep.subr.bf16.mxu0 0
  %499 = vmatpush1.bf16.msra.mxu0 %v398
  %500 = vmatprep.subr.bf16.mxu0 0
  %501 = vmatpush1.bf16.msra.mxu0 %v399
  %502 = vmatprep.subr.bf16.mxu0 0
  %503 = vmatpush1.bf16.msra.mxu0 %v400
  %504 = vmatprep.subr.bf16.mxu0 0
  %505 = vmatpush1.bf16.msra.mxu0 %v401
  %506 = vmatprep.subr.bf16.mxu0 0
  %507 = vmatpush1.bf16.msra.mxu0 %v402
  %508 = vmatprep.subr.bf16.mxu0 0
  %509 = vmatpush1.bf16.msra.mxu0 %v403
  %510 = vmatprep.subr.bf16.mxu0 0
  %511 = vmatpush1.bf16.msra.mxu0 %v404
  %512 = vmatprep.subr.bf16.mxu0 0
  %513 = vmatpush1.bf16.msra.mxu0 %v405
  %514 = vmatprep.subr.bf16.mxu0 0
  %515 = vmatpush1.bf16.msra.mxu0 %v406
  %516 = vmatprep.subr.bf16.mxu0 0
  %517 = vmatpush1.bf16.msra.mxu0 %v407
  %518 = vmatprep.subr.bf16.mxu0 0
  %519 = vmatpush1.bf16.msra.mxu0 %v408
  %520 = vmatprep.subr.bf16.mxu0 0
  %521 = vmatpush1.bf16.msra.mxu0 %v409
  %522 = vmatprep.mubr.bf16.mxu0 %v179
  %523 = vmatmul.mubr.bf16.gmra.mrb[0].mxu0 %v178
  %v524 = vpop.f32.mrb[0].mxu0
  %v525 = vadd.f32 %v140, %v524
  %v526 = vpop.f32.mrb[0].mxu0
  %v527 = vpop.f32.mrb[0].mxu0
  %v528 = vadd.f32 %v140, %v527
  %v529 = vpop.f32.mrb[0].mxu0
  %530 = vmatprep.mubr.bf16.mxu0 %v185
  %531 = vmatmul.mubr.bf16.gmra.mrb[0].mxu0 %v184
  %v532 = vpop.f32.mrb[0].mxu0
  %v533 = vadd.f32 %v140, %v532
  %v534 = vpop.f32.mrb[0].mxu0
  %v535 = vpop.f32.mrb[0].mxu0
  %v536 = vadd.f32 %v140, %v535
  %v537 = vpop.f32.mrb[0].mxu0
  %538 = vdwg.mxu0
  %539 = vmatprep.subr.bf16.mxu0 0
  %540 = vmatpush1.bf16.msra.mxu0 %v410
  %541 = vmatprep.subr.bf16.mxu0 0
  %542 = vmatpush1.bf16.msra.mxu0 %v411
  %543 = vmatprep.subr.bf16.mxu0 0
  %544 = vmatpush1.bf16.msra.mxu0 %v412
  %545 = vmatprep.subr.bf16.mxu0 0
  %546 = vmatpush1.bf16.msra.mxu0 %v413
  %547 = vmatprep.subr.bf16.mxu0 0
  %548 = vmatpush1.bf16.msra.mxu0 %v414
  %549 = vmatprep.subr.bf16.mxu0 0
  %550 = vmatpush1.bf16.msra.mxu0 %v415
  %551 = vmatprep.subr.bf16.mxu0 0
  %552 = vmatpush1.bf16.msra.mxu0 %v416
  %553 = vmatprep.subr.bf16.mxu0 0
  %554 = vmatpush1.bf16.msra.mxu0 %v417
  %555 = vmatprep.subr.bf16.mxu0 0
  %556 = vmatpush1.bf16.msra.mxu0 %v418
  %557 = vmatprep.subr.bf16.mxu0 0
  %558 = vmatpush1.bf16.msra.mxu0 %v419
  %559 = vmatprep.subr.bf16.mxu0 0
  %560 = vmatpush1.bf16.msra.mxu0 %v420
  %561 = vmatprep.subr.bf16.mxu0 0
  %562 = vmatpush1.bf16.msra.mxu0 %v421
  %563 = vmatprep.subr.bf16.mxu0 0
  %564 = vmatpush1.bf16.msra.mxu0 %v422
  %565 = vmatprep.subr.bf16.mxu0 0
  %566 = vmatpush1.bf16.msra.mxu0 %v423
  %567 = vmatprep.subr.bf16.mxu0 0
  %568 = vmatpush1.bf16.msra.mxu0 %v424
  %569 = vmatprep.subr.bf16.mxu0 0
  %570 = vmatpush1.bf16.msra.mxu0 %v425
  %571 = vmatprep.mubr.bf16.mxu0 %v181
  %572 = vmatmul.mubr.bf16.gmra.mrb[0].mxu0 %v180
  %v573 = vpop.f32.mrb[0].mxu0
  %v574 = vadd.f32 %v525, %v573
  %v575 = vpop.f32.mrb[0].mxu0
  %v576 = vpop.f32.mrb[0].mxu0
  %v577 = vadd.f32 %v528, %v576
  %v578 = vpop.f32.mrb[0].mxu0
  %579 = vmatprep.mubr.bf16.mxu0 %v187
  %580 = vmatmul.mubr.bf16.gmra.mrb[0].mxu0 %v186
  %v581 = vpop.f32.mrb[0].mxu0
  %v582 = vadd.f32 %v533, %v581
  %v583 = vpop.f32.mrb[0].mxu0
  %v584 = vpop.f32.mrb[0].mxu0
  %v585 = vadd.f32 %v536, %v584
  %v586 = vpop.f32.mrb[0].mxu0
  %587 = vdwg.mxu0
  %588 = vmatprep.subr.bf16.mxu0 0
  %589 = vmatpush1.bf16.msra.mxu0 %v426
  %590 = vmatprep.subr.bf16.mxu0 0
  %591 = vmatpush1.bf16.msra.mxu0 %v427
  %592 = vmatprep.subr.bf16.mxu0 0
  %593 = vmatpush1.bf16.msra.mxu0 %v428
  %594 = vmatprep.subr.bf16.mxu0 0
  %595 = vmatpush1.bf16.msra.mxu0 %v429
  %596 = vmatprep.subr.bf16.mxu0 0
  %597 = vmatpush1.bf16.msra.mxu0 %v430
  %598 = vmatprep.subr.bf16.mxu0 0
  %599 = vmatpush1.bf16.msra.mxu0 %v431
  %600 = vmatprep.subr.bf16.mxu0 0
  %601 = vmatpush1.bf16.msra.mxu0 %v432
  %602 = vmatprep.subr.bf16.mxu0 0
  %603 = vmatpush1.bf16.msra.mxu0 %v433
  %604 = vmatprep.subr.bf16.mxu0 0
  %605 = vmatpush1.bf16.msra.mxu0 %v434
  %606 = vmatprep.subr.bf16.mxu0 0
  %607 = vmatpush1.bf16.msra.mxu0 %v435
  %608 = vmatprep.subr.bf16.mxu0 0
  %609 = vmatpush1.bf16.msra.mxu0 %v436
  %610 = vmatprep.subr.bf16.mxu0 0
  %611 = vmatpush1.bf16.msra.mxu0 %v437
  %612 = vmatprep.subr.bf16.mxu0 0
  %613 = vmatpush1.bf16.msra.mxu0 %v438
  %614 = vmatprep.subr.bf16.mxu0 0
  %615 = vmatpush1.bf16.msra.mxu0 %v439
  %616 = vmatprep.subr.bf16.mxu0 0
  %617 = vmatpush1.bf16.msra.mxu0 %v440
  %618 = vmatprep.subr.bf16.mxu0 0
  %619 = vmatpush1.bf16.msra.mxu0 %v441
  %620 = vmatprep.mubr.bf16.mxu0 %v183
  %621 = vmatmul.mubr.bf16.gmra.mrb[0].mxu0 %v182
  %v622 = vpop.f32.mrb[0].mxu0
  %v623 = vadd.f32 %v574, %v622
  %v624 = vpop.f32.mrb[0].mxu0
  %v625 = vpop.f32.mrb[0].mxu0
  %v626 = vadd.f32 %v577, %v625
  %v627 = vpop.f32.mrb[0].mxu0
  %628 = vmatprep.mubr.bf16.mxu0 %v189
  %629 = vmatmul.mubr.bf16.gmra.mrb[0].mxu0 %v188
  %v630 = vpop.f32.mrb[0].mxu0
  %v631 = vadd.f32 %v582, %v630
  %v632 = vpop.f32.mrb[0].mxu0
  %v633 = vpop.f32.mrb[0].mxu0
  %v634 = vadd.f32 %v585, %v633
  %v635 = vpop.f32.mrb[0].mxu0
  %636 = vdwg.mxu0
  %v637 = vpack.c.bf16 %v626, %v623
  %v638 = vpack.c.bf16 %v634, %v631
  %v639 = vld [vmem:[%s3] sm:$0xf]
  %v640 = vld [vmem:[%s3 + $0x4] sm:$0xf]
  %v641 = vld [vmem:[%s3 + $0x8] sm:$0xf]
  %v642 = vld [vmem:[%s3 + $0xc] sm:$0xf]
  %v643 = vld [vmem:[%s3 + $0x10] sm:$0xf]
  %v644 = vld [vmem:[%s3 + $0x14] sm:$0xf]
  %v645 = vld [vmem:[%s3 + $0x18] sm:$0xf]
  %v646 = vld [vmem:[%s3 + $0x1c] sm:$0xf]
  %v647 = vld [vmem:[%s3 + $0x20] sm:$0xf]
  %v648 = vld [vmem:[%s3 + $0x24] sm:$0xf]
  %v649 = vld [vmem:[%s3 + $0x28] sm:$0xf]
  %v650 = vld [vmem:[%s3 + $0x2c] sm:$0xf]
  %v651 = vld [vmem:[%s3 + $0x30] sm:$0xf]
  %v652 = vld [vmem:[%s3 + $0x34] sm:$0xf]
  %v653 = vld [vmem:[%s3 + $0x38] sm:$0xf]
  %v654 = vld [vmem:[%s3 + $0x3c] sm:$0xf]
  %v655 = vld [vmem:[%s4] sm:$0x1]
  %v657 = vlaneseq
  %v658 = vshrl.u32 %v657, 7
  %v659 = vsub.s32 0, %v658
  %v660 = vrot.slane %v655, %v659
  %v678 = vunpack.c.l.b16 %v639
  %v679 = vunpack.c.l.b16 %v640
  %v680 = vunpack.c.l.b16 %v641
  %v681 = vunpack.c.l.b16 %v642
  %v682 = vunpack.c.l.b16 %v643
  %v683 = vunpack.c.l.b16 %v644
  %v684 = vunpack.c.l.b16 %v645
  %v685 = vunpack.c.l.b16 %v646
  %v686 = vunpack.c.l.b16 %v647
  %v687 = vunpack.c.l.b16 %v648
  %v688 = vunpack.c.l.b16 %v649
  %v689 = vunpack.c.l.b16 %v650
  %v690 = vunpack.c.l.b16 %v651
  %v691 = vunpack.c.l.b16 %v652
  %v692 = vunpack.c.l.b16 %v653
  %v693 = vunpack.c.l.b16 %v654
  %v694 = vpack.c.b16 %v679, %v678
  %v695 = vpack.c.b16 %v681, %v680
  %v696 = vpack.c.b16 %v683, %v682
  %v697 = vpack.c.b16 %v685, %v684
  %v698 = vpack.c.b16 %v687, %v686
  %v699 = vpack.c.b16 %v689, %v688
  %v700 = vpack.c.b16 %v691, %v690
  %v701 = vpack.c.b16 %v693, %v692
  %710 = vmatprep.subr.bf16.mxu0 0
  %711 = vmatpush1.bf16.msra.mxu0 %v694
  %712 = vmatprep.subr.bf16.mxu0 0
  %713 = vmatpush1.bf16.msra.mxu0 %v695
  %714 = vmatprep.subr.bf16.mxu0 0
  %715 = vmatpush1.bf16.msra.mxu0 %v696
  %716 = vmatprep.subr.bf16.mxu0 0
  %717 = vmatpush1.bf16.msra.mxu0 %v697
  %718 = vmatprep.subr.bf16.mxu0 0
  %719 = vmatpush1.bf16.msra.mxu0 %v698
  %720 = vmatprep.subr.bf16.mxu0 0
  %721 = vmatpush1.bf16.msra.mxu0 %v699
  %722 = vmatprep.subr.bf16.mxu0 0
  %723 = vmatpush1.bf16.msra.mxu0 %v700
  %724 = vmatprep.subr.bf16.mxu0 0
  %725 = vmatpush1.bf16.msra.mxu0 %v701
  %726 = vmatprep.subr.bf16.mxu0 0
  %727 = vmatpush1.bf16.msra.mxu0 0
  %728 = vmatprep.subr.bf16.mxu0 0
  %729 = vmatpush1.bf16.msra.mxu0 0
  %730 = vmatprep.subr.bf16.mxu0 0
  %731 = vmatpush1.bf16.msra.mxu0 0
  %732 = vmatprep.subr.bf16.mxu0 0
  %733 = vmatpush1.bf16.msra.mxu0 0
  %734 = vmatprep.subr.bf16.mxu0 0
  %735 = vmatpush1.bf16.msra.mxu0 0
  %736 = vmatprep.subr.bf16.mxu0 0
  %737 = vmatpush1.bf16.msra.mxu0 0
  %738 = vmatprep.subr.bf16.mxu0 0
  %739 = vmatpush1.bf16.msra.mxu0 0
  %740 = vmatprep.subr.bf16.mxu0 0
  %741 = vmatpush1.bf16.msra.mxu0 0
  %742 = vmatprep.mubr.bf16.mxu0 0
  %743 = vmatmul.mubr.bf16.gmra.mrb[0].mxu0 %v637
  %v744 = vpop.f32.mrb[0].mxu0
  %v745 = vadd.f32 %v660, %v744
  %v746 = vpop.f32.mrb[0].mxu0
  %v747 = vpop.f32.mrb[0].mxu0
  %v748 = vadd.f32 %v660, %v747
  %v749 = vpop.f32.mrb[0].mxu0
  %750 = vmatprep.mubr.bf16.mxu0 0
  %751 = vmatmul.mubr.bf16.gmra.mrb[0].mxu0 %v638
  %v752 = vpop.f32.mrb[0].mxu0
  %v753 = vadd.f32 %v660, %v752
  %v754 = vpop.f32.mrb[0].mxu0
  %v755 = vpop.f32.mrb[0].mxu0
  %v756 = vadd.f32 %v660, %v755
  %v757 = vpop.f32.mrb[0].mxu0
  %758 = vdwg.mxu0
  %v759 = vmul.f32 %v745, 0.5
  %v760 = vmul.f32 %v748, 0.5
  %v761 = vmul.f32 %v753, 0.5
  %v762 = vmul.f32 %v756, 0.5
  %v763 = vmul.f32 %v745, 0.70710677
  %v764 = vmul.f32 %v748, 0.70710677
  %v765 = vmul.f32 %v753, 0.70710677
  %v766 = vmul.f32 %v756, 0.70710677
  %v767 = verf.f32.pop %v763
  %v768 = verf.f32.pop %v764
  %v769 = verf.f32.pop %v765
  %v770 = verf.f32.pop %v766
  %v771 = vadd.f32 %v767, 1.0
  %v772 = vadd.f32 %v768, 1.0
  %v773 = vadd.f32 %v769, 1.0
  %v774 = vadd.f32 %v770, 1.0
  %v775 = vmul.f32 %v759, %v771
  %v776 = vmul.f32 %v760, %v772
  %v777 = vmul.f32 %v761, %v773
  %v778 = vmul.f32 %v762, %v774
  %v779 = vpack.c.bf16 %v776, %v775
  %v780 = vpack.c.bf16 %v778, %v777
  %v781 = vld [vmem:[%s5] sm:$0xff]
  %v782 = vld [vmem:[%s5 + $0x8] sm:$0xff]
  %v783 = vld [vmem:[%s5 + $0x10] sm:$0xff]
  %v784 = vld [vmem:[%s5 + $0x18] sm:$0xff]
  %v785 = vld [vmem:[%s5 + $0x20] sm:$0xff]
  %v786 = vld [vmem:[%s5 + $0x28] sm:$0xff]
  %v787 = vld [vmem:[%s5 + $0x30] sm:$0xff]
  %v788 = vld [vmem:[%s5 + $0x38] sm:$0xff]
  %v789 = vld [vmem:[%s5 + $0x40] sm:$0xff]
  %v790 = vld [vmem:[%s5 + $0x48] sm:$0xff]
  %v791 = vld [vmem:[%s5 + $0x50] sm:$0xff]
  %v792 = vld [vmem:[%s5 + $0x58] sm:$0xff]
  %v793 = vld [vmem:[%s5 + $0x60] sm:$0xff]
  %v794 = vld [vmem:[%s5 + $0x68] sm:$0xff]
  %v795 = vld [vmem:[%s5 + $0x70] sm:$0xff]
  %v796 = vld [vmem:[%s5 + $0x78] sm:$0xff]
  %v797 = vld [vmem:[%s5 + $0x80] sm:$0xff]
  %v798 = vld [vmem:[%s5 + $0x88] sm:$0xff]
  %v799 = vld [vmem:[%s5 + $0x90] sm:$0xff]
  %v800 = vld [vmem:[%s5 + $0x98] sm:$0xff]
  %v801 = vld [vmem:[%s5 + $0xa0] sm:$0xff]
  %v802 = vld [vmem:[%s5 + $0xa8] sm:$0xff]
  %v803 = vld [vmem:[%s5 + $0xb0] sm:$0xff]
  %v804 = vld [vmem:[%s5 + $0xb8] sm:$0xff]
  %v805 = vld [vmem:[%s5 + $0xc0] sm:$0xff]
  %v806 = vld [vmem:[%s5 + $0xc8] sm:$0xff]
  %v807 = vld [vmem:[%s5 + $0xd0] sm:$0xff]
  %v808 = vld [vmem:[%s5 + $0xd8] sm:$0xff]
  %v809 = vld [vmem:[%s5 + $0xe0] sm:$0xff]
  %v810 = vld [vmem:[%s5 + $0xe8] sm:$0xff]
  %v811 = vld [vmem:[%s5 + $0xf0] sm:$0xff]
  %v812 = vld [vmem:[%s5 + $0xf8] sm:$0xff]
  %v813 = vld [vmem:[%s6] sm:$0xf]
  %v815 = vlaneseq
  %v816 = vshrl.u32 %v815, 7
  %v817 = vsub.s32 0, %v816
  %v818 = vrot.slane %v813, %v817
  %v819 = vlaneseq
  %v820 = vshrl.u32 %v819, 7
  %v821 = vsub.s32 1, %v820
  %v822 = vrot.slane %v813, %v821
  %v823 = vlaneseq
  %v824 = vshrl.u32 %v823, 7
  %v825 = vsub.s32 2, %v824
  %v826 = vrot.slane %v813, %v825
  %v827 = vlaneseq
  %v828 = vshrl.u32 %v827, 7
  %v829 = vsub.s32 3, %v828
  %v830 = vrot.slane %v813, %v829
  %v867 = vunpack.c.l.b16 %v781
  %v868 = vunpack.c.h.b16 %v781
  %v869 = vunpack.c.l.b16 %v782
  %v870 = vunpack.c.h.b16 %v782
  %v871 = vunpack.c.l.b16 %v783
  %v872 = vunpack.c.h.b16 %v783
  %v873 = vunpack.c.l.b16 %v784
  %v874 = vunpack.c.h.b16 %v784
  %v875 = vunpack.c.l.b16 %v785
  %v876 = vunpack.c.h.b16 %v785
  %v877 = vunpack.c.l.b16 %v786
  %v878 = vunpack.c.h.b16 %v786
  %v879 = vunpack.c.l.b16 %v787
  %v880 = vunpack.c.h.b16 %v787
  %v881 = vunpack.c.l.b16 %v788
  %v882 = vunpack.c.h.b16 %v788
  %v883 = vunpack.c.l.b16 %v789
  %v884 = vunpack.c.h.b16 %v789
  %v885 = vunpack.c.l.b16 %v790
  %v886 = vunpack.c.h.b16 %v790
  %v887 = vunpack.c.l.b16 %v791
  %v888 = vunpack.c.h.b16 %v791
  %v889 = vunpack.c.l.b16 %v792
  %v890 = vunpack.c.h.b16 %v792
  %v891 = vunpack.c.l.b16 %v793
  %v892 = vunpack.c.h.b16 %v793
  %v893 = vunpack.c.l.b16 %v794
  %v894 = vunpack.c.h.b16 %v794
  %v895 = vunpack.c.l.b16 %v795
  %v896 = vunpack.c.h.b16 %v795
  %v897 = vunpack.c.l.b16 %v796
  %v898 = vunpack.c.h.b16 %v796
  %v899 = vunpack.c.l.b16 %v797
  %v900 = vunpack.c.h.b16 %v797
  %v901 = vunpack.c.l.b16 %v798
  %v902 = vunpack.c.h.b16 %v798
  %v903 = vunpack.c.l.b16 %v799
  %v904 = vunpack.c.h.b16 %v799
  %v905 = vunpack.c.l.b16 %v800
  %v906 = vunpack.c.h.b16 %v800
  %v907 = vunpack.c.l.b16 %v801
  %v908 = vunpack.c.h.b16 %v801
  %v909 = vunpack.c.l.b16 %v802
  %v910 = vunpack.c.h.b16 %v802
  %v911 = vunpack.c.l.b16 %v803
  %v912 = vunpack.c.h.b16 %v803
  %v913 = vunpack.c.l.b16 %v804
  %v914 = vunpack.c.h.b16 %v804
  %v915 = vunpack.c.l.b16 %v805
  %v916 = vunpack.c.h.b16 %v805
  %v917 = vunpack.c.l.b16 %v806
  %v918 = vunpack.c.h.b16 %v806
  %v919 = vunpack.c.l.b16 %v807
  %v920 = vunpack.c.h.b16 %v807
  %v921 = vunpack.c.l.b16 %v808
  %v922 = vunpack.c.h.b16 %v808
  %v923 = vunpack.c.l.b16 %v809
  %v924 = vunpack.c.h.b16 %v809
  %v925 = vunpack.c.l.b16 %v810
  %v926 = vunpack.c.h.b16 %v810
  %v927 = vunpack.c.l.b16 %v811
  %v928 = vunpack.c.h.b16 %v811
  %v929 = vunpack.c.l.b16 %v812
  %v930 = vunpack.c.h.b16 %v812
  %v931 = vpack.c.b16 %v871, %v867
  %v932 = vpack.c.b16 %v872, %v868
  %v933 = vpack.c.b16 %v873, %v869
  %v934 = vpack.c.b16 %v874, %v870
  %v935 = vpack.c.b16 %v879, %v875
  %v936 = vpack.c.b16 %v880, %v876
  %v937 = vpack.c.b16 %v881, %v877
  %v938 = vpack.c.b16 %v882, %v878
  %v939 = vpack.c.b16 %v887, %v883
  %v940 = vpack.c.b16 %v888, %v884
  %v941 = vpack.c.b16 %v889, %v885
  %v942 = vpack.c.b16 %v890, %v886
  %v943 = vpack.c.b16 %v895, %v891
  %v944 = vpack.c.b16 %v896, %v892
  %v945 = vpack.c.b16 %v897, %v893
  %v946 = vpack.c.b16 %v898, %v894
  %v947 = vpack.c.b16 %v903, %v899
  %v948 = vpack.c.b16 %v904, %v900
  %v949 = vpack.c.b16 %v905, %v901
  %v950 = vpack.c.b16 %v906, %v902
  %v951 = vpack.c.b16 %v911, %v907
  %v952 = vpack.c.b16 %v912, %v908
  %v953 = vpack.c.b16 %v913, %v909
  %v954 = vpack.c.b16 %v914, %v910
  %v955 = vpack.c.b16 %v919, %v915
  %v956 = vpack.c.b16 %v920, %v916
  %v957 = vpack.c.b16 %v921, %v917
  %v958 = vpack.c.b16 %v922, %v918
  %v959 = vpack.c.b16 %v927, %v923
  %v960 = vpack.c.b16 %v928, %v924
  %v961 = vpack.c.b16 %v929, %v925
  %v962 = vpack.c.b16 %v930, %v926
  %995 = vmatprep.subr.bf16.mxu0 %v932
  %996 = vmatpush1.bf16.msra.mxu0 %v931
  %997 = vmatprep.subr.bf16.mxu0 %v936
  %998 = vmatpush1.bf16.msra.mxu0 %v935
  %999 = vmatprep.subr.bf16.mxu0 %v940
  %1000 = vmatpush1.bf16.msra.mxu0 %v939
  %1001 = vmatprep.subr.bf16.mxu0 %v944
  %1002 = vmatpush1.bf16.msra.mxu0 %v943
  %1003 = vmatprep.subr.bf16.mxu0 %v948
  %1004 = vmatpush1.bf16.msra.mxu0 %v947
  %1005 = vmatprep.subr.bf16.mxu0 %v952
  %1006 = vmatpush1.bf16.msra.mxu0 %v951
  %1007 = vmatprep.subr.bf16.mxu0 %v956
  %1008 = vmatpush1.bf16.msra.mxu0 %v955
  %1009 = vmatprep.subr.bf16.mxu0 %v960
  %1010 = vmatpush1.bf16.msra.mxu0 %v959
  %1011 = vmatprep.subr.bf16.mxu0 0
  %1012 = vmatpush1.bf16.msra.mxu0 0
  %1013 = vmatprep.subr.bf16.mxu0 0
  %1014 = vmatpush1.bf16.msra.mxu0 0
  %1015 = vmatprep.subr.bf16.mxu0 0
  %1016 = vmatpush1.bf16.msra.mxu0 0
  %1017 = vmatprep.subr.bf16.mxu0 0
  %1018 = vmatpush1.bf16.msra.mxu0 0
  %1019 = vmatprep.subr.bf16.mxu0 0
  %1020 = vmatpush1.bf16.msra.mxu0 0
  %1021 = vmatprep.subr.bf16.mxu0 0
  %1022 = vmatpush1.bf16.msra.mxu0 0
  %1023 = vmatprep.subr.bf16.mxu0 0
  %1024 = vmatpush1.bf16.msra.mxu0 0
  %1025 = vmatprep.subr.bf16.mxu0 0
  %1026 = vmatpush1.bf16.msra.mxu0 0
  %1027 = vmatprep.mubr.bf16.mxu0 0
  %1028 = vmatmul.mubr.bf16.gmra.mrb[0].mxu0 %v779
  %v1029 = vpop.f32.mrb[0].mxu0
  %v1030 = vadd.f32 %v818, %v1029
  %v1031 = vpop.f32.mrb[0].mxu0
  %v1032 = vadd.f32 %v822, %v1031
  %v1033 = vpop.f32.mrb[0].mxu0
  %v1034 = vadd.f32 %v818, %v1033
  %v1035 = vpop.f32.mrb[0].mxu0
  %v1036 = vadd.f32 %v822, %v1035
  %1037 = vmatprep.mubr.bf16.mxu0 0
  %1038 = vmatmul.mubr.bf16.gmra.mrb[0].mxu0 %v780
  %v1039 = vpop.f32.mrb[0].mxu0
  %v1040 = vadd.f32 %v818, %v1039
  %v1041 = vpop.f32.mrb[0].mxu0
  %v1042 = vadd.f32 %v822, %v1041
  %v1043 = vpop.f32.mrb[0].mxu0
  %v1044 = vadd.f32 %v818, %v1043
  %v1045 = vpop.f32.mrb[0].mxu0
  %v1046 = vadd.f32 %v822, %v1045
  %1047 = vdwg.mxu0
  %1048 = vmatprep.subr.bf16.mxu0 %v934
  %1049 = vmatpush1.bf16.msra.mxu0 %v933
  %1050 = vmatprep.subr.bf16.mxu0 %v938
  %1051 = vmatpush1.bf16.msra.mxu0 %v937
  %1052 = vmatprep.subr.bf16.mxu0 %v942
  %1053 = vmatpush1.bf16.msra.mxu0 %v941
  %1054 = vmatprep.subr.bf16.mxu0 %v946
  %1055 = vmatpush1.bf16.msra.mxu0 %v945
  %1056 = vmatprep.subr.bf16.mxu0 %v950
  %1057 = vmatpush1.bf16.msra.mxu0 %v949
  %1058 = vmatprep.subr.bf16.mxu0 %v954
  %1059 = vmatpush1.bf16.msra.mxu0 %v953
  %1060 = vmatprep.subr.bf16.mxu0 %v958
  %1061 = vmatpush1.bf16.msra.mxu0 %v957
  %1062 = vmatprep.subr.bf16.mxu0 %v962
  %1063 = vmatpush1.bf16.msra.mxu0 %v961
  %1064 = vmatprep.subr.bf16.mxu0 0
  %1065 = vmatpush1.bf16.msra.mxu0 0
  %1066 = vmatprep.subr.bf16.mxu0 0
  %1067 = vmatpush1.bf16.msra.mxu0 0
  %1068 = vmatprep.subr.bf16.mxu0 0
  %1069 = vmatpush1.bf16.msra.mxu0 0
  %1070 = vmatprep.subr.bf16.mxu0 0
  %1071 = vmatpush1.bf16.msra.mxu0 0
  %1072 = vmatprep.subr.bf16.mxu0 0
  %1073 = vmatpush1.bf16.msra.mxu0 0
  %1074 = vmatprep.subr.bf16.mxu0 0
  %1075 = vmatpush1.bf16.msra.mxu0 0
  %1076 = vmatprep.subr.bf16.mxu0 0
  %1077 = vmatpush1.bf16.msra.mxu0 0
  %1078 = vmatprep.subr.bf16.mxu0 0
  %1079 = vmatpush1.bf16.msra.mxu0 0
  %1080 = vmatprep.mubr.bf16.mxu0 0
  %1081 = vmatmul.mubr.bf16.gmra.mrb[0].mxu0 %v779
  %v1082 = vpop.f32.mrb[0].mxu0
  %v1083 = vadd.f32 %v826, %v1082
  %v1084 = vpop.f32.mrb[0].mxu0
  %v1085 = vadd.f32 %v830, %v1084
  %v1086 = vpop.f32.mrb[0].mxu0
  %v1087 = vadd.f32 %v826, %v1086
  %v1088 = vpop.f32.mrb[0].mxu0
  %v1089 = vadd.f32 %v830, %v1088
  %1090 = vmatprep.mubr.bf16.mxu0 0
  %1091 = vmatmul.mubr.bf16.gmra.mrb[0].mxu0 %v780
  %v1092 = vpop.f32.mrb[0].mxu0
  %v1093 = vadd.f32 %v826, %v1092
  %v1094 = vpop.f32.mrb[0].mxu0
  %v1095 = vadd.f32 %v830, %v1094
  %v1096 = vpop.f32.mrb[0].mxu0
  %v1097 = vadd.f32 %v826, %v1096
  %v1098 = vpop.f32.mrb[0].mxu0
  %v1099 = vadd.f32 %v830, %v1098
  %1100 = vdwg.mxu0
  %1101 = vst [vmem:[%s7] sm:$0xff] %v1030
  %1102 = vst [vmem:[%s7 + $0x8] sm:$0xff] %v1032
  %1103 = vst [vmem:[%s7 + $0x10] sm:$0xff] %v1083
  %1104 = vst [vmem:[%s7 + $0x18] sm:$0xff] %v1085
  %1105 = vst [vmem:[%s7 + $0x20] sm:$0xff] %v1034
  %1106 = vst [vmem:[%s7 + $0x28] sm:$0xff] %v1036
  %1107 = vst [vmem:[%s7 + $0x30] sm:$0xff] %v1087
  %1108 = vst [vmem:[%s7 + $0x38] sm:$0xff] %v1089
  %1109 = vst [vmem:[%s7 + $0x40] sm:$0xff] %v1040
  %1110 = vst [vmem:[%s7 + $0x48] sm:$0xff] %v1042
  %1111 = vst [vmem:[%s7 + $0x50] sm:$0xff] %v1093
  %1112 = vst [vmem:[%s7 + $0x58] sm:$0xff] %v1095
  %1113 = vst [vmem:[%s7 + $0x60] sm:$0xff] %v1044
  %1114 = vst [vmem:[%s7 + $0x68] sm:$0xff] %v1046
  %1115 = vst [vmem:[%s7 + $0x70] sm:$0xff] %v1097
  %1116 = vst [vmem:[%s7 + $0x78] sm:$0xff] %v1099
  // Predicated region
  $region30: #{_lambda_.6} parent=0 // pred_check
    _
  $region31: #{_lambda_.6} parent=0 // pred_check_branch
    %1118 = sbr.rel (0) target = $region33
  $region32: #{_lambda_.6} parent=0 // pred_region
    _
  $region33: #{_lambda_.6} parent=0 // pred_fallthru
    _
  // Predicated region
  $region34: #{_lambda_.6} parent=0 // pred_check
    _
  $region35: #{_lambda_.6} parent=0 // pred_check_branch
    %1120 = sbr.rel (0) target = $region37
  $region36: #{_lambda_.6} parent=0 // pred_region
    _
  $region37: #{_lambda_.6} parent=0 // pred_fallthru
    _

// kernel: _lambda_.4
$region0: #{_lambda_.4}
  #allocation0 [shape = 'u32[]', space=smem, size = 0x4, offset = 0x4, fixed_abs, tag = 'smem constant byte address 0x4 - core index']
  #allocation1 [shape = 'u32[144,128]{1,0:T(1,128)}', space=vmem, size = 0x12000, scoped, tag = 'internal scratch']
  %s0 = inlined_call_operand.vmem [shape: bf16[512,48], index: 0, kind: input, shape index: {}]
  %s1 = inlined_call_operand.vmem [shape: bf16[48,128], index: 1, kind: input, shape index: {}]
  %s2 = inlined_call_operand.vmem [shape: f32[1,128], index: 2, kind: input, shape index: {}]
  %s3 = inlined_call_operand.vmem [shape: bf16[128,128], index: 3, kind: input, shape index: {}]
  %s4 = inlined_call_operand.vmem [shape: f32[1,128], index: 4, kind: input, shape index: {}]
  %s5 = inlined_call_operand.vmem [shape: bf16[128,128], index: 5, kind: input, shape index: {}]
  %s6 = inlined_call_operand.vmem [shape: f32[1,128], index: 6, kind: input, shape index: {}]
  %s7 = inlined_call_operand.hbm [shape: f32[512,128], index: 7, kind: output, shape index: {}]
  %s8 = sld [smem:[#allocation0]]
  $region38: #{_lambda_.4} parent=0
    _
  %s10 = ssub.s32 1, %s8
  %s11 = scalar_select 0, %s10, %s8
  $region1: #{_lambda_.4} parent=0
    #allocation2 [shape = 'u8[262144]{0}', space=vmem, size = 0x40000, scoped, tag = 'output window, operand 0, single buffered']
    #allocation3 [shape = 's32[1]{0}', space=sflag, size = 0x4, scoped, tag = 'scoped memory for _lambda_.4']
    %12 = vsyncpa [#allocation3], 0
    // Predicated region
    $region2: #{_lambda_.4} parent=1 // pred_check
      _
    $region3: #{_lambda_.4} parent=1 // pred_check_branch
      %14 = sbr.rel (0) target = $region5
    $region4: #{_lambda_.4} parent=1 // pred_region
      _
    $region5: #{_lambda_.4} parent=1 // pred_fallthru
      _
    // Predicated region
    $region6: #{_lambda_.4} parent=1 // pred_check
      _
    $region7: #{_lambda_.4} parent=1 // pred_check_branch
      %16 = sbr.rel (0) target = $region9
    $region8: #{_lambda_.4} parent=1 // pred_region
      _
    $region9: #{_lambda_.4} parent=1 // pred_fallthru
      _
    // Predicated region
    $region10: #{_lambda_.4} parent=1 // pred_check
      _
    $region11: #{_lambda_.4} parent=1 // pred_check_branch
      %18 = sbr.rel (0) target = $region13
    $region12: #{_lambda_.4} parent=1 // pred_region
      _
    $region13: #{_lambda_.4} parent=1 // pred_fallthru
      _
    // Predicated region
    $region14: #{_lambda_.4} parent=1 // pred_check
      _
    $region15: #{_lambda_.4} parent=1 // pred_check_branch
      %20 = sbr.rel (0) target = $region17
    $region16: #{_lambda_.4} parent=1 // pred_region
      _
    $region17: #{_lambda_.4} parent=1 // pred_fallthru
      _
    // Predicated region
    $region18: #{_lambda_.4} parent=1 // pred_check
      _
    $region19: #{_lambda_.4} parent=1 // pred_check_branch
      %22 = sbr.rel (0) target = $region21
    $region20: #{_lambda_.4} parent=1 // pred_region
      _
    $region21: #{_lambda_.4} parent=1 // pred_fallthru
      _
    // Predicated region
    $region22: #{_lambda_.4} parent=1 // pred_check
      _
    $region23: #{_lambda_.4} parent=1 // pred_check_branch
      %24 = sbr.rel (0) target = $region25
    $region24: #{_lambda_.4} parent=1 // pred_region
      _
    $region25: #{_lambda_.4} parent=1 // pred_fallthru
      _
    // Predicated region
    $region26: #{_lambda_.4} parent=1 // pred_check
      _
    $region27: #{_lambda_.4} parent=1 // pred_check_branch
      %26 = sbr.rel (0) target = $region29
    $region28: #{_lambda_.4} parent=1 // pred_region
      _
    $region29: #{_lambda_.4} parent=1 // pred_fallthru
      _
    %v28 = vld [vmem:[%s0] sm:$0xf]
    %v29 = vld [vmem:[%s0 + $0x4] sm:$0xf]
    %v30 = vld [vmem:[%s0 + $0x8] sm:$0xf]
    %v31 = vld [vmem:[%s0 + $0xc] sm:$0xf]
    %v32 = vld [vmem:[%s0 + $0x10] sm:$0xf]
    %v33 = vld [vmem:[%s0 + $0x14] sm:$0xf]
    %v34 = vld [vmem:[%s0 + $0x18] sm:$0xf]
    %v35 = vld [vmem:[%s0 + $0x1c] sm:$0xf]
    %v36 = vld [vmem:[%s0 + $0x20] sm:$0xf]
    %v37 = vld [vmem:[%s0 + $0x24] sm:$0xf]
    %v38 = vld [vmem:[%s0 + $0x28] sm:$0xf]
    %v39 = vld [vmem:[%s0 + $0x2c] sm:$0xf]
    %v40 = vld [vmem:[%s0 + $0x30] sm:$0xf]
    %v41 = vld [vmem:[%s0 + $0x34] sm:$0xf]
    %v42 = vld [vmem:[%s0 + $0x38] sm:$0xf]
    %v43 = vld [vmem:[%s0 + $0x3c] sm:$0xf]
    %v44 = vld [vmem:[%s0 + $0x40] sm:$0xf]
    %v45 = vld [vmem:[%s0 + $0x44] sm:$0xf]
    %v46 = vld [vmem:[%s0 + $0x48] sm:$0xf]
    %v47 = vld [vmem:[%s0 + $0x4c] sm:$0xf]
    %v48 = vld [vmem:[%s0 + $0x50] sm:$0xf]
    %v49 = vld [vmem:[%s0 + $0x54] sm:$0xf]
    %v50 = vld [vmem:[%s0 + $0x58] sm:$0xf]
    %v51 = vld [vmem:[%s0 + $0x5c] sm:$0xf]
    %v52 = vld [vmem:[%s0 + $0x60] sm:$0xf]
    %v53 = vld [vmem:[%s0 + $0x64] sm:$0xf]
    %v54 = vld [vmem:[%s0 + $0x68] sm:$0xf]
    %v55 = vld [vmem:[%s0 + $0x6c] sm:$0xf]
    %v56 = vld [vmem:[%s0 + $0x70] sm:$0xf]
    %v57 = vld [vmem:[%s0 + $0x74] sm:$0xf]
    %v58 = vld [vmem:[%s0 + $0x78] sm:$0xf]
    %v59 = vld [vmem:[%s0 + $0x7c] sm:$0xf]
    %v60 = vld [vmem:[%s0 + $0x80] sm:$0xf]
    %v61 = vld [vmem:[%s0 + $0x84] sm:$0xf]
    %v62 = vld [vmem:[%s0 + $0x88] sm:$0xf]
    %v63 = vld [vmem:[%s0 + $0x8c] sm:$0xf]
    %v64 = vld [vmem:[%s0 + $0x90] sm:$0xf]
    %v65 = vld [vmem:[%s0 + $0x94] sm:$0xf]
    %v66 = vld [vmem:[%s0 + $0x98] sm:$0xf]
    %v67 = vld [vmem:[%s0 + $0x9c] sm:$0xf]
    %v68 = vld [vmem:[%s0 + $0xa0] sm:$0xf]
    %v69 = vld [vmem:[%s0 + $0xa4] sm:$0xf]
    %v70 = vld [vmem:[%s0 + $0xa8] sm:$0xf]
    %v71 = vld [vmem:[%s0 + $0xac] sm:$0xf]
    %v72 = vld [vmem:[%s0 + $0xb0] sm:$0xf]
    %v73 = vld [vmem:[%s0 + $0xb4] sm:$0xf]
    %v74 = vld [vmem:[%s0 + $0xb8] sm:$0xf]
    %v75 = vld [vmem:[%s0 + $0xbc] sm:$0xf]
    %v76 = vld [vmem:[%s0 + $0xc0] sm:$0xf]
    %v77 = vld [vmem:[%s0 + $0xc4] sm:$0xf]
    %v78 = vld [vmem:[%s0 + $0xc8] sm:$0xf]
    %v79 = vld [vmem:[%s0 + $0xcc] sm:$0xf]
    %v80 = vld [vmem:[%s0 + $0xd0] sm:$0xf]
    %v81 = vld [vmem:[%s0 + $0xd4] sm:$0xf]
    %v82 = vld [vmem:[%s0 + $0xd8] sm:$0xf]
    %v83 = vld [vmem:[%s0 + $0xdc] sm:$0xf]
    %v84 = vld [vmem:[%s0 + $0xe0] sm:$0xf]
    %v85 = vld [vmem:[%s0 + $0xe4] sm:$0xf]
    %v86 = vld [vmem:[%s0 + $0xe8] sm:$0xf]
    %v87 = vld [vmem:[%s0 + $0xec] sm:$0xf]
    %v88 = vld [vmem:[%s0 + $0xf0] sm:$0xf]
    %v89 = vld [vmem:[%s0 + $0xf4] sm:$0xf]
    %v90 = vld [vmem:[%s0 + $0xf8] sm:$0xf]
    %v91 = vld [vmem:[%s0 + $0xfc] sm:$0xf]
    %v92 = vld [vmem:[%s1] sm:$0xf]
    %v93 = vld [vmem:[%s1 + $0x4] sm:$0xf]
    %v94 = vld [vmem:[%s1 + $0x8] sm:$0xf]
    %v95 = vld [vmem:[%s1 + $0xc] sm:$0xf]
    %v96 = vld [vmem:[%s1 + $0x10] sm:$0xf]
    %v97 = vld [vmem:[%s1 + $0x14] sm:$0xf]
    %v98 = vld [vmem:[%s2] sm:$0x1]
    %v100 = vlaneseq
    %v101 = vshrl.u32 %v100, 7
    %v102 = vsub.s32 0, %v101
    %v103 = vrot.slane %v98, %v102
    %v169 = vunpack.c.l.b16 %v28
    %v170 = vunpack.c.l.b16 %v29
    %v171 = vunpack.c.l.b16 %v30
    %v172 = vunpack.c.l.b16 %v31
    %v173 = vunpack.c.l.b16 %v32
    %v174 = vunpack.c.l.b16 %v33
    %v175 = vunpack.c.l.b16 %v34
    %v176 = vunpack.c.l.b16 %v35
    %v177 = vunpack.c.l.b16 %v36
    %v178 = vunpack.c.l.b16 %v37
    %v179 = vunpack.c.l.b16 %v38
    %v180 = vunpack.c.l.b16 %v39
    %v181 = vunpack.c.l.b16 %v40
    %v182 = vunpack.c.l.b16 %v41
    %v183 = vunpack.c.l.b16 %v42
    %v184 = vunpack.c.l.b16 %v43
    %v185 = vunpack.c.l.b16 %v44
    %v186 = vunpack.c.l.b16 %v45
    %v187 = vunpack.c.l.b16 %v46
    %v188 = vunpack.c.l.b16 %v47
    %v189 = vunpack.c.l.b16 %v48
    %v190 = vunpack.c.l.b16 %v49
    %v191 = vunpack.c.l.b16 %v50
    %v192 = vunpack.c.l.b16 %v51
    %v193 = vunpack.c.l.b16 %v52
    %v194 = vunpack.c.l.b16 %v53
    %v195 = vunpack.c.l.b16 %v54
    %v196 = vunpack.c.l.b16 %v55
    %v197 = vunpack.c.l.b16 %v56
    %v198 = vunpack.c.l.b16 %v57
    %v199 = vunpack.c.l.b16 %v58
    %v200 = vunpack.c.l.b16 %v59
    %v201 = vunpack.c.l.b16 %v60
    %v202 = vunpack.c.l.b16 %v61
    %v203 = vunpack.c.l.b16 %v62
    %v204 = vunpack.c.l.b16 %v63
    %v205 = vunpack.c.l.b16 %v64
    %v206 = vunpack.c.l.b16 %v65
    %v207 = vunpack.c.l.b16 %v66
    %v208 = vunpack.c.l.b16 %v67
    %v209 = vunpack.c.l.b16 %v68
    %v210 = vunpack.c.l.b16 %v69
    %v211 = vunpack.c.l.b16 %v70
    %v212 = vunpack.c.l.b16 %v71
    %v213 = vunpack.c.l.b16 %v72
    %v214 = vunpack.c.l.b16 %v73
    %v215 = vunpack.c.l.b16 %v74
    %v216 = vunpack.c.l.b16 %v75
    %v217 = vunpack.c.l.b16 %v76
    %v218 = vunpack.c.l.b16 %v77
    %v219 = vunpack.c.l.b16 %v78
    %v220 = vunpack.c.l.b16 %v79
    %v221 = vunpack.c.l.b16 %v80
    %v222 = vunpack.c.l.b16 %v81
    %v223 = vunpack.c.l.b16 %v82
    %v224 = vunpack.c.l.b16 %v83
    %v225 = vunpack.c.l.b16 %v84
    %v226 = vunpack.c.l.b16 %v85
    %v227 = vunpack.c.l.b16 %v86
    %v228 = vunpack.c.l.b16 %v87
    %v229 = vunpack.c.l.b16 %v88
    %v230 = vunpack.c.l.b16 %v89
    %v231 = vunpack.c.l.b16 %v90
    %v232 = vunpack.c.l.b16 %v91
    %v233 = vpack.c.b16 %v170, %v169
    %v234 = vpack.c.b16 %v172, %v171
    %v235 = vpack.c.b16 %v174, %v173
    %v236 = vpack.c.b16 %v176, %v175
    %v237 = vpack.c.b16 %v178, %v177
    %v238 = vpack.c.b16 %v180, %v179
    %v239 = vpack.c.b16 %v182, %v181
    %v240 = vpack.c.b16 %v184, %v183
    %v241 = vpack.c.b16 %v186, %v185
    %v242 = vpack.c.b16 %v188, %v187
    %v243 = vpack.c.b16 %v190, %v189
    %v244 = vpack.c.b16 %v192, %v191
    %v245 = vpack.c.b16 %v194, %v193
    %v246 = vpack.c.b16 %v196, %v195
    %v247 = vpack.c.b16 %v198, %v197
    %v248 = vpack.c.b16 %v200, %v199
    %v249 = vpack.c.b16 %v202, %v201
    %v250 = vpack.c.b16 %v204, %v203
    %v251 = vpack.c.b16 %v206, %v205
    %v252 = vpack.c.b16 %v208, %v207
    %v253 = vpack.c.b16 %v210, %v209
    %v254 = vpack.c.b16 %v212, %v211
    %v255 = vpack.c.b16 %v214, %v213
    %v256 = vpack.c.b16 %v216, %v215
    %v257 = vpack.c.b16 %v218, %v217
    %v258 = vpack.c.b16 %v220, %v219
    %v259 = vpack.c.b16 %v222, %v221
    %v260 = vpack.c.b16 %v224, %v223
    %v261 = vpack.c.b16 %v226, %v225
    %v262 = vpack.c.b16 %v228, %v227
    %v263 = vpack.c.b16 %v230, %v229
    %v264 = vpack.c.b16 %v232, %v231
    %v271 = vunpack.c.l.b16 %v92
    %v272 = vunpack.c.l.b16 %v93
    %v273 = vunpack.c.l.b16 %v94
    %v274 = vunpack.c.l.b16 %v95
    %v275 = vunpack.c.l.b16 %v96
    %v276 = vunpack.c.l.b16 %v97
    %v277 = vpack.c.b16 %v272, %v271
    %v278 = vpack.c.b16 %v274, %v273
    %v279 = vpack.c.b16 %v276, %v275
    %vm283 = vcmask 392192
    %v285 = vsel %vm283, %v233, 0
    %v288 = vsel %vm283, %v234, 0
    %v291 = vsel %vm283, %v235, 0
    %v294 = vsel %vm283, %v236, 0
    %v297 = vsel %vm283, %v237, 0
    %v300 = vsel %vm283, %v238, 0
    %v303 = vsel %vm283, %v239, 0
    %v306 = vsel %vm283, %v240, 0
    %v309 = vsel %vm283, %v241, 0
    %v312 = vsel %vm283, %v242, 0
    %v315 = vsel %vm283, %v243, 0
    %v318 = vsel %vm283, %v244, 0
    %v321 = vsel %vm283, %v245, 0
    %v324 = vsel %vm283, %v246, 0
    %v327 = vsel %vm283, %v247, 0
    %v330 = vsel %vm283, %v248, 0
    %v333 = vsel %vm283, %v249, 0
    %v336 = vsel %vm283, %v250, 0
    %v339 = vsel %vm283, %v251, 0
    %v342 = vsel %vm283, %v252, 0
    %v345 = vsel %vm283, %v253, 0
    %v348 = vsel %vm283, %v254, 0
    %v351 = vsel %vm283, %v255, 0
    %v354 = vsel %vm283, %v256, 0
    %v357 = vsel %vm283, %v257, 0
    %v360 = vsel %vm283, %v258, 0
    %v363 = vsel %vm283, %v259, 0
    %v366 = vsel %vm283, %v260, 0
    %v369 = vsel %vm283, %v261, 0
    %v372 = vsel %vm283, %v262, 0
    %v375 = vsel %vm283, %v263, 0
    %v378 = vsel %vm283, %v264, 0
    %380 = vmatprep.subr.bf16.mxu0 0
    %381 = vmatpush1.bf16.msra.mxu0 %v277
    %382 = vmatprep.subr.bf16.mxu0 0
    %383 = vmatpush1.bf16.msra.mxu0 %v278
    %384 = vmatprep.subr.bf16.mxu0 0
    %385 = vmatpush1.bf16.msra.mxu0 %v279
    %386 = vmatprep.subr.bf16.mxu0 0
    %387 = vmatpush1.bf16.msra.mxu0 0
    %388 = vmatprep.subr.bf16.mxu0 0
    %389 = vmatpush1.bf16.msra.mxu0 0
    %390 = vmatprep.subr.bf16.mxu0 0
    %391 = vmatpush1.bf16.msra.mxu0 0
    %392 = vmatprep.subr.bf16.mxu0 0
    %393 = vmatpush1.bf16.msra.mxu0 0
    %394 = vmatprep.subr.bf16.mxu0 0
    %395 = vmatpush1.bf16.msra.mxu0 0
    %396 = vmatprep.subr.bf16.mxu0 0
    %397 = vmatpush1.bf16.msra.mxu0 0
    %398 = vmatprep.subr.bf16.mxu0 0
    %399 = vmatpush1.bf16.msra.mxu0 0
    %400 = vmatprep.subr.bf16.mxu0 0
    %401 = vmatpush1.bf16.msra.mxu0 0
    %402 = vmatprep.subr.bf16.mxu0 0
    %403 = vmatpush1.bf16.msra.mxu0 0
    %404 = vmatprep.subr.bf16.mxu0 0
    %405 = vmatpush1.bf16.msra.mxu0 0
    %406 = vmatprep.subr.bf16.mxu0 0
    %407 = vmatpush1.bf16.msra.mxu0 0
    %408 = vmatprep.subr.bf16.mxu0 0
    %409 = vmatpush1.bf16.msra.mxu0 0
    %410 = vmatprep.subr.bf16.mxu0 0
    %411 = vmatpush1.bf16.msra.mxu0 0
    %412 = vmatprep.mubr.bf16.mxu0 0
    %413 = vmatmul.mubr.bf16.gmra.mrb[0].mxu0 %v285
    %v414 = vpop.f32.mrb[0].mxu0
    %v415 = vadd.f32 %v103, %v414
    %v416 = vpop.f32.mrb[0].mxu0
    %v417 = vpop.f32.mrb[0].mxu0
    %v418 = vadd.f32 %v103, %v417
    %v419 = vpop.f32.mrb[0].mxu0
    %420 = vmatprep.mubr.bf16.mxu0 0
    %421 = vmatmul.mubr.bf16.gmra.mrb[0].mxu0 %v288
    %v422 = vpop.f32.mrb[0].mxu0
    %v423 = vadd.f32 %v103, %v422
    %v424 = vpop.f32.mrb[0].mxu0
    %v425 = vpop.f32.mrb[0].mxu0
    %v426 = vadd.f32 %v103, %v425
    %v427 = vpop.f32.mrb[0].mxu0
    %428 = vmatprep.mubr.bf16.mxu0 0
    %429 = vmatmul.mubr.bf16.gmra.mrb[0].mxu0 %v291
    %v430 = vpop.f32.mrb[0].mxu0
    %v431 = vadd.f32 %v103, %v430
    %v432 = vpop.f32.mrb[0].mxu0
    %v433 = vpop.f32.mrb[0].mxu0
    %v434 = vadd.f32 %v103, %v433
    %v435 = vpop.f32.mrb[0].mxu0
    %436 = vmatprep.mubr.bf16.mxu0 0
    %437 = vmatmul.mubr.bf16.gmra.mrb[0].mxu0 %v294
    %v438 = vpop.f32.mrb[0].mxu0
    %v439 = vadd.f32 %v103, %v438
    %v440 = vpop.f32.mrb[0].mxu0
    %v441 = vpop.f32.mrb[0].mxu0
    %v442 = vadd.f32 %v103, %v441
    %v443 = vpop.f32.mrb[0].mxu0
    %444 = vmatprep.mubr.bf16.mxu0 0
    %445 = vmatmul.mubr.bf16.gmra.mrb[0].mxu0 %v297
    %v446 = vpop.f32.mrb[0].mxu0
    %v447 = vadd.f32 %v103, %v446
    %v448 = vpop.f32.mrb[0].mxu0
    %v449 = vpop.f32.mrb[0].mxu0
    %v450 = vadd.f32 %v103, %v449
    %v451 = vpop.f32.mrb[0].mxu0
    %452 = vmatprep.mubr.bf16.mxu0 0
    %453 = vmatmul.mubr.bf16.gmra.mrb[0].mxu0 %v300
    %v454 = vpop.f32.mrb[0].mxu0
    %v455 = vadd.f32 %v103, %v454
    %v456 = vpop.f32.mrb[0].mxu0
    %v457 = vpop.f32.mrb[0].mxu0
    %v458 = vadd.f32 %v103, %v457
    %v459 = vpop.f32.mrb[0].mxu0
    %460 = vmatprep.mubr.bf16.mxu0 0
    %461 = vmatmul.mubr.bf16.gmra.mrb[0].mxu0 %v303
    %v462 = vpop.f32.mrb[0].mxu0
    %v463 = vadd.f32 %v103, %v462
    %v464 = vpop.f32.mrb[0].mxu0
    %v465 = vpop.f32.mrb[0].mxu0
    %v466 = vadd.f32 %v103, %v465
    %v467 = vpop.f32.mrb[0].mxu0
    %468 = vmatprep.mubr.bf16.mxu0 0
    %469 = vmatmul.mubr.bf16.gmra.mrb[0].mxu0 %v306
    %v470 = vpop.f32.mrb[0].mxu0
    %v471 = vadd.f32 %v103, %v470
    %v472 = vpop.f32.mrb[0].mxu0
    %v473 = vpop.f32.mrb[0].mxu0
    %v474 = vadd.f32 %v103, %v473
    %v475 = vpop.f32.mrb[0].mxu0
    %476 = vmatprep.mubr.bf16.mxu0 0
    %477 = vmatmul.mubr.bf16.gmra.mrb[0].mxu0 %v309
    %v478 = vpop.f32.mrb[0].mxu0
    %v479 = vadd.f32 %v103, %v478
    %v480 = vpop.f32.mrb[0].mxu0
    %v481 = vpop.f32.mrb[0].mxu0
    %v482 = vadd.f32 %v103, %v481
    %v483 = vpop.f32.mrb[0].mxu0
    %484 = vmatprep.mubr.bf16.mxu0 0
    %485 = vmatmul.mubr.bf16.gmra.mrb[0].mxu0 %v312
    %v486 = vpop.f32.mrb[0].mxu0
    %v487 = vadd.f32 %v103, %v486
    %v488 = vpop.f32.mrb[0].mxu0
    %v489 = vpop.f32.mrb[0].mxu0
    %v490 = vadd.f32 %v103, %v489
    %v491 = vpop.f32.mrb[0].mxu0
    %492 = vmatprep.mubr.bf16.mxu0 0
    %493 = vmatmul.mubr.bf16.gmra.mrb[0].mxu0 %v315
    %v494 = vpop.f32.mrb[0].mxu0
    %v495 = vadd.f32 %v103, %v494
    %v496 = vpop.f32.mrb[0].mxu0
    %v497 = vpop.f32.mrb[0].mxu0
    %v498 = vadd.f32 %v103, %v497
    %v499 = vpop.f32.mrb[0].mxu0
    %500 = vmatprep.mubr.bf16.mxu0 0
    %501 = vmatmul.mubr.bf16.gmra.mrb[0].mxu0 %v318
    %v502 = vpop.f32.mrb[0].mxu0
    %v503 = vadd.f32 %v103, %v502
    %v504 = vpop.f32.mrb[0].mxu0
    %v505 = vpop.f32.mrb[0].mxu0
    %v506 = vadd.f32 %v103, %v505
    %v507 = vpop.f32.mrb[0].mxu0
    %508 = vmatprep.mubr.bf16.mxu0 0
    %509 = vmatmul.mubr.bf16.gmra.mrb[0].mxu0 %v321
    %v510 = vpop.f32.mrb[0].mxu0
    %v511 = vadd.f32 %v103, %v510
    %v512 = vpop.f32.mrb[0].mxu0
    %v513 = vpop.f32.mrb[0].mxu0
    %v514 = vadd.f32 %v103, %v513
    %v515 = vpop.f32.mrb[0].mxu0
    %516 = vmatprep.mubr.bf16.mxu0 0
    %517 = vmatmul.mubr.bf16.gmra.mrb[0].mxu0 %v324
    %v518 = vpop.f32.mrb[0].mxu0
    %v519 = vadd.f32 %v103, %v518
    %v520 = vpop.f32.mrb[0].mxu0
    %v521 = vpop.f32.mrb[0].mxu0
    %v522 = vadd.f32 %v103, %v521
    %v523 = vpop.f32.mrb[0].mxu0
    %524 = vmatprep.mubr.bf16.mxu0 0
    %525 = vmatmul.mubr.bf16.gmra.mrb[0].mxu0 %v327
    %v526 = vpop.f32.mrb[0].mxu0
    %v527 = vadd.f32 %v103, %v526
    %v528 = vpop.f32.mrb[0].mxu0
    %v529 = vpop.f32.mrb[0].mxu0
    %v530 = vadd.f32 %v103, %v529
    %v531 = vpop.f32.mrb[0].mxu0
    %532 = vmatprep.mubr.bf16.mxu0 0
    %533 = vmatmul.mubr.bf16.gmra.mrb[0].mxu0 %v330
    %v534 = vpop.f32.mrb[0].mxu0
    %v535 = vadd.f32 %v103, %v534
    %v536 = vpop.f32.mrb[0].mxu0
    %v537 = vpop.f32.mrb[0].mxu0
    %v538 = vadd.f32 %v103, %v537
    %v539 = vpop.f32.mrb[0].mxu0
    %540 = vmatprep.mubr.bf16.mxu0 0
    %541 = vmatmul.mubr.bf16.gmra.mrb[0].mxu0 %v333
    %v542 = vpop.f32.mrb[0].mxu0
    %v543 = vadd.f32 %v103, %v542
    %v544 = vpop.f32.mrb[0].mxu0
    %v545 = vpop.f32.mrb[0].mxu0
    %v546 = vadd.f32 %v103, %v545
    %v547 = vpop.f32.mrb[0].mxu0
    %548 = vmatprep.mubr.bf16.mxu0 0
    %549 = vmatmul.mubr.bf16.gmra.mrb[0].mxu0 %v336
    %v550 = vpop.f32.mrb[0].mxu0
    %v551 = vadd.f32 %v103, %v550
    %v552 = vpop.f32.mrb[0].mxu0
    %v553 = vpop.f32.mrb[0].mxu0
    %v554 = vadd.f32 %v103, %v553
    %v555 = vpop.f32.mrb[0].mxu0
    %556 = vmatprep.mubr.bf16.mxu0 0
    %557 = vmatmul.mubr.bf16.gmra.mrb[0].mxu0 %v339
    %v558 = vpop.f32.mrb[0].mxu0
    %v559 = vadd.f32 %v103, %v558
    %v560 = vpop.f32.mrb[0].mxu0
    %v561 = vpop.f32.mrb[0].mxu0
    %v562 = vadd.f32 %v103, %v561
    %v563 = vpop.f32.mrb[0].mxu0
    %564 = vmatprep.mubr.bf16.mxu0 0
    %565 = vmatmul.mubr.bf16.gmra.mrb[0].mxu0 %v342
    %v566 = vpop.f32.mrb[0].mxu0
    %v567 = vadd.f32 %v103, %v566
    %v568 = vpop.f32.mrb[0].mxu0
    %v569 = vpop.f32.mrb[0].mxu0
    %v570 = vadd.f32 %v103, %v569
    %v571 = vpop.f32.mrb[0].mxu0
    %572 = vmatprep.mubr.bf16.mxu0 0
    %573 = vmatmul.mubr.bf16.gmra.mrb[0].mxu0 %v345
    %v574 = vpop.f32.mrb[0].mxu0
    %v575 = vadd.f32 %v103, %v574
    %v576 = vpop.f32.mrb[0].mxu0
    %v577 = vpop.f32.mrb[0].mxu0
    %v578 = vadd.f32 %v103, %v577
    %v579 = vpop.f32.mrb[0].mxu0
    %580 = vmatprep.mubr.bf16.mxu0 0
    %581 = vmatmul.mubr.bf16.gmra.mrb[0].mxu0 %v348
    %v582 = vpop.f32.mrb[0].mxu0
    %v583 = vadd.f32 %v103, %v582
    %v584 = vpop.f32.mrb[0].mxu0
    %v585 = vpop.f32.mrb[0].mxu0
    %v586 = vadd.f32 %v103, %v585
    %v587 = vpop.f32.mrb[0].mxu0
    %588 = vmatprep.mubr.bf16.mxu0 0
    %589 = vmatmul.mubr.bf16.gmra.mrb[0].mxu0 %v351
    %v590 = vpop.f32.mrb[0].mxu0
    %v591 = vadd.f32 %v103, %v590
    %v592 = vpop.f32.mrb[0].mxu0
    %v593 = vpop.f32.mrb[0].mxu0
    %v594 = vadd.f32 %v103, %v593
    %v595 = vpop.f32.mrb[0].mxu0
    %596 = vmatprep.mubr.bf16.mxu0 0
    %597 = vmatmul.mubr.bf16.gmra.mrb[0].mxu0 %v354
    %v598 = vpop.f32.mrb[0].mxu0
    %v599 = vadd.f32 %v103, %v598
    %v600 = vpop.f32.mrb[0].mxu0
    %v601 = vpop.f32.mrb[0].mxu0
    %v602 = vadd.f32 %v103, %v601
    %v603 = vpop.f32.mrb[0].mxu0
    %604 = vmatprep.mubr.bf16.mxu0 0
    %605 = vmatmul.mubr.bf16.gmra.mrb[0].mxu0 %v357
    %v606 = vpop.f32.mrb[0].mxu0
    %v607 = vadd.f32 %v103, %v606
    %v608 = vpop.f32.mrb[0].mxu0
    %v609 = vpop.f32.mrb[0].mxu0
    %v610 = vadd.f32 %v103, %v609
    %v611 = vpop.f32.mrb[0].mxu0
    %612 = vmatprep.mubr.bf16.mxu0 0
    %613 = vmatmul.mubr.bf16.gmra.mrb[0].mxu0 %v360
    %v614 = vpop.f32.mrb[0].mxu0
    %v615 = vadd.f32 %v103, %v614
    %v616 = vpop.f32.mrb[0].mxu0
    %v617 = vpop.f32.mrb[0].mxu0
    %v618 = vadd.f32 %v103, %v617
    %v619 = vpop.f32.mrb[0].mxu0
    %620 = vmatprep.mubr.bf16.mxu0 0
    %621 = vmatmul.mubr.bf16.gmra.mrb[0].mxu0 %v363
    %v622 = vpop.f32.mrb[0].mxu0
    %v623 = vadd.f32 %v103, %v622
    %v624 = vpop.f32.mrb[0].mxu0
    %v625 = vpop.f32.mrb[0].mxu0
    %v626 = vadd.f32 %v103, %v625
    %v627 = vpop.f32.mrb[0].mxu0
    %628 = vmatprep.mubr.bf16.mxu0 0
    %629 = vmatmul.mubr.bf16.gmra.mrb[0].mxu0 %v366
    %v630 = vpop.f32.mrb[0].mxu0
    %v631 = vadd.f32 %v103, %v630
    %v632 = vpop.f32.mrb[0].mxu0
    %v633 = vpop.f32.mrb[0].mxu0
    %v634 = vadd.f32 %v103, %v633
    %v635 = vpop.f32.mrb[0].mxu0
    %636 = vmatprep.mubr.bf16.mxu0 0
    %637 = vmatmul.mubr.bf16.gmra.mrb[0].mxu0 %v369
    %v638 = vpop.f32.mrb[0].mxu0
    %v639 = vadd.f32 %v103, %v638
    %v640 = vpop.f32.mrb[0].mxu0
    %v641 = vpop.f32.mrb[0].mxu0
    %v642 = vadd.f32 %v103, %v641
    %v643 = vpop.f32.mrb[0].mxu0
    %644 = vmatprep.mubr.bf16.mxu0 0
    %645 = vmatmul.mubr.bf16.gmra.mrb[0].mxu0 %v372
    %v646 = vpop.f32.mrb[0].mxu0
    %v647 = vadd.f32 %v103, %v646
    %v648 = vpop.f32.mrb[0].mxu0
    %v649 = vpop.f32.mrb[0].mxu0
    %v650 = vadd.f32 %v103, %v649
    %v651 = vpop.f32.mrb[0].mxu0
    %652 = vmatprep.mubr.bf16.mxu0 0
    %653 = vmatmul.mubr.bf16.gmra.mrb[0].mxu0 %v375
    %v654 = vpop.f32.mrb[0].mxu0
    %v655 = vadd.f32 %v103, %v654
    %v656 = vpop.f32.mrb[0].mxu0
    %v657 = vpop.f32.mrb[0].mxu0
    %v658 = vadd.f32 %v103, %v657
    %v659 = vpop.f32.mrb[0].mxu0
    %660 = vmatprep.mubr.bf16.mxu0 0
    %661 = vmatmul.mubr.bf16.gmra.mrb[0].mxu0 %v378
    %v662 = vpop.f32.mrb[0].mxu0
    %v663 = vadd.f32 %v103, %v662
    %v664 = vpop.f32.mrb[0].mxu0
    %v665 = vpop.f32.mrb[0].mxu0
    %v666 = vadd.f32 %v103, %v665
    %v667 = vpop.f32.mrb[0].mxu0
    %668 = vdwg.mxu0
    %v669 = vpack.c.bf16 %v418, %v415
    %v670 = vpack.c.bf16 %v426, %v423
    %v671 = vpack.c.bf16 %v434, %v431
    %v672 = vpack.c.bf16 %v442, %v439
    %v673 = vpack.c.bf16 %v450, %v447
    %v674 = vpack.c.bf16 %v458, %v455
    %v675 = vpack.c.bf16 %v466, %v463
    %v676 = vpack.c.bf16 %v474, %v471
    %v677 = vpack.c.bf16 %v482, %v479
    %v678 = vpack.c.bf16 %v490, %v487
    %v679 = vpack.c.bf16 %v498, %v495
    %v680 = vpack.c.bf16 %v506, %v503
    %v681 = vpack.c.bf16 %v514, %v511
    %v682 = vpack.c.bf16 %v522, %v519
    %v683 = vpack.c.bf16 %v530, %v527
    %v684 = vpack.c.bf16 %v538, %v535
    %v685 = vpack.c.bf16 %v546, %v543
    %v686 = vpack.c.bf16 %v554, %v551
    %v687 = vpack.c.bf16 %v562, %v559
    %v688 = vpack.c.bf16 %v570, %v567
    %v689 = vpack.c.bf16 %v578, %v575
    %v690 = vpack.c.bf16 %v586, %v583
    %v691 = vpack.c.bf16 %v594, %v591
    %v692 = vpack.c.bf16 %v602, %v599
    %v693 = vpack.c.bf16 %v610, %v607
    %v694 = vpack.c.bf16 %v618, %v615
    %v695 = vpack.c.bf16 %v626, %v623
    %v696 = vpack.c.bf16 %v634, %v631
    %v697 = vpack.c.bf16 %v642, %v639
    %v698 = vpack.c.bf16 %v650, %v647
    %v699 = vpack.c.bf16 %v658, %v655
    %v700 = vpack.c.bf16 %v666, %v663
    %v701 = vld [vmem:[%s3] sm:$0xf]
    %v702 = vld [vmem:[%s3 + $0x4] sm:$0xf]
    %v703 = vld [vmem:[%s3 + $0x8] sm:$0xf]
    %v704 = vld [vmem:[%s3 + $0xc] sm:$0xf]
    %v705 = vld [vmem:[%s3 + $0x10] sm:$0xf]
    %v706 = vld [vmem:[%s3 + $0x14] sm:$0xf]
    %v707 = vld [vmem:[%s3 + $0x18] sm:$0xf]
    %v708 = vld [vmem:[%s3 + $0x1c] sm:$0xf]
    %v709 = vld [vmem:[%s3 + $0x20] sm:$0xf]
    %v710 = vld [vmem:[%s3 + $0x24] sm:$0xf]
    %v711 = vld [vmem:[%s3 + $0x28] sm:$0xf]
    %v712 = vld [vmem:[%s3 + $0x2c] sm:$0xf]
    %v713 = vld [vmem:[%s3 + $0x30] sm:$0xf]
    %v714 = vld [vmem:[%s3 + $0x34] sm:$0xf]
    %v715 = vld [vmem:[%s3 + $0x38] sm:$0xf]
    %v716 = vld [vmem:[%s3 + $0x3c] sm:$0xf]
    %v717 = vld [vmem:[%s4] sm:$0x1]
    %v719 = vlaneseq
    %v720 = vshrl.u32 %v719, 7
    %v721 = vsub.s32 0, %v720
    %v722 = vrot.slane %v717, %v721
    %v740 = vunpack.c.l.b16 %v701
    %v741 = vunpack.c.l.b16 %v702
    %v742 = vunpack.c.l.b16 %v703
    %v743 = vunpack.c.l.b16 %v704
    %v744 = vunpack.c.l.b16 %v705
    %v745 = vunpack.c.l.b16 %v706
    %v746 = vunpack.c.l.b16 %v707
    %v747 = vunpack.c.l.b16 %v708
    %v748 = vunpack.c.l.b16 %v709
    %v749 = vunpack.c.l.b16 %v710
    %v750 = vunpack.c.l.b16 %v711
    %v751 = vunpack.c.l.b16 %v712
    %v752 = vunpack.c.l.b16 %v713
    %v753 = vunpack.c.l.b16 %v714
    %v754 = vunpack.c.l.b16 %v715
    %v755 = vunpack.c.l.b16 %v716
    %v756 = vpack.c.b16 %v741, %v740
    %v757 = vpack.c.b16 %v743, %v742
    %v758 = vpack.c.b16 %v745, %v744
    %v759 = vpack.c.b16 %v747, %v746
    %v760 = vpack.c.b16 %v749, %v748
    %v761 = vpack.c.b16 %v751, %v750
    %v762 = vpack.c.b16 %v753, %v752
    %v763 = vpack.c.b16 %v755, %v754
    %772 = vmatprep.subr.bf16.mxu0 0
    %773 = vmatpush1.bf16.msra.mxu0 %v756
    %774 = vmatprep.subr.bf16.mxu0 0
    %775 = vmatpush1.bf16.msra.mxu0 %v757
    %776 = vmatprep.subr.bf16.mxu0 0
    %777 = vmatpush1.bf16.msra.mxu0 %v758
    %778 = vmatprep.subr.bf16.mxu0 0
    %779 = vmatpush1.bf16.msra.mxu0 %v759
    %780 = vmatprep.subr.bf16.mxu0 0
    %781 = vmatpush1.bf16.msra.mxu0 %v760
    %782 = vmatprep.subr.bf16.mxu0 0
    %783 = vmatpush1.bf16.msra.mxu0 %v761
    %784 = vmatprep.subr.bf16.mxu0 0
    %785 = vmatpush1.bf16.msra.mxu0 %v762
    %786 = vmatprep.subr.bf16.mxu0 0
    %787 = vmatpush1.bf16.msra.mxu0 %v763
    %788 = vmatprep.subr.bf16.mxu0 0
    %789 = vmatpush1.bf16.msra.mxu0 0
    %790 = vmatprep.subr.bf16.mxu0 0
    %791 = vmatpush1.bf16.msra.mxu0 0
    %792 = vmatprep.subr.bf16.mxu0 0
    %793 = vmatpush1.bf16.msra.mxu0 0
    %794 = vmatprep.subr.bf16.mxu0 0
    %795 = vmatpush1.bf16.msra.mxu0 0
    %796 = vmatprep.subr.bf16.mxu0 0
    %797 = vmatpush1.bf16.msra.mxu0 0
    %798 = vmatprep.subr.bf16.mxu0 0
    %799 = vmatpush1.bf16.msra.mxu0 0
    %800 = vmatprep.subr.bf16.mxu0 0
    %801 = vmatpush1.bf16.msra.mxu0 0
    %802 = vmatprep.subr.bf16.mxu0 0
    %803 = vmatpush1.bf16.msra.mxu0 0
    %804 = vmatprep.mubr.bf16.mxu0 0
    %805 = vmatmul.mubr.bf16.gmra.mrb[0].mxu0 %v669
    %v806 = vpop.f32.mrb[0].mxu0
    %v807 = vadd.f32 %v722, %v806
    %v808 = vpop.f32.mrb[0].mxu0
    %v809 = vpop.f32.mrb[0].mxu0
    %v810 = vadd.f32 %v722, %v809
    %v811 = vpop.f32.mrb[0].mxu0
    %812 = vmatprep.mubr.bf16.mxu0 0
    %813 = vmatmul.mubr.bf16.gmra.mrb[0].mxu0 %v670
    %v814 = vpop.f32.mrb[0].mxu0
    %v815 = vadd.f32 %v722, %v814
    %v816 = vpop.f32.mrb[0].mxu0
    %v817 = vpop.f32.mrb[0].mxu0
    %v818 = vadd.f32 %v722, %v817
    %v819 = vpop.f32.mrb[0].mxu0
    %820 = vmatprep.mubr.bf16.mxu0 0
    %821 = vmatmul.mubr.bf16.gmra.mrb[0].mxu0 %v671
    %v822 = vpop.f32.mrb[0].mxu0
    %v823 = vadd.f32 %v722, %v822
    %v824 = vpop.f32.mrb[0].mxu0
    %v825 = vpop.f32.mrb[0].mxu0
    %v826 = vadd.f32 %v722, %v825
    %v827 = vpop.f32.mrb[0].mxu0
    %828 = vmatprep.mubr.bf16.mxu0 0
    %829 = vmatmul.mubr.bf16.gmra.mrb[0].mxu0 %v672
    %v830 = vpop.f32.mrb[0].mxu0
    %v831 = vadd.f32 %v722, %v830
    %v832 = vpop.f32.mrb[0].mxu0
    %v833 = vpop.f32.mrb[0].mxu0
    %v834 = vadd.f32 %v722, %v833
    %v835 = vpop.f32.mrb[0].mxu0
    %836 = vmatprep.mubr.bf16.mxu0 0
    %837 = vmatmul.mubr.bf16.gmra.mrb[0].mxu0 %v673
    %v838 = vpop.f32.mrb[0].mxu0
    %v839 = vadd.f32 %v722, %v838
    %v840 = vpop.f32.mrb[0].mxu0
    %v841 = vpop.f32.mrb[0].mxu0
    %v842 = vadd.f32 %v722, %v841
    %v843 = vpop.f32.mrb[0].mxu0
    %844 = vmatprep.mubr.bf16.mxu0 0
    %845 = vmatmul.mubr.bf16.gmra.mrb[0].mxu0 %v674
    %v846 = vpop.f32.mrb[0].mxu0
    %v847 = vadd.f32 %v722, %v846
    %v848 = vpop.f32.mrb[0].mxu0
    %v849 = vpop.f32.mrb[0].mxu0
    %v850 = vadd.f32 %v722, %v849
    %v851 = vpop.f32.mrb[0].mxu0
    %852 = vmatprep.mubr.bf16.mxu0 0
    %853 = vmatmul.mubr.bf16.gmra.mrb[0].mxu0 %v675
    %v854 = vpop.f32.mrb[0].mxu0
    %v855 = vadd.f32 %v722, %v854
    %v856 = vpop.f32.mrb[0].mxu0
    %v857 = vpop.f32.mrb[0].mxu0
    %v858 = vadd.f32 %v722, %v857
    %v859 = vpop.f32.mrb[0].mxu0
    %860 = vmatprep.mubr.bf16.mxu0 0
    %861 = vmatmul.mubr.bf16.gmra.mrb[0].mxu0 %v676
    %v862 = vpop.f32.mrb[0].mxu0
    %v863 = vadd.f32 %v722, %v862
    %v864 = vpop.f32.mrb[0].mxu0
    %v865 = vpop.f32.mrb[0].mxu0
    %v866 = vadd.f32 %v722, %v865
    %v867 = vpop.f32.mrb[0].mxu0
    %868 = vmatprep.mubr.bf16.mxu0 0
    %869 = vmatmul.mubr.bf16.gmra.mrb[0].mxu0 %v677
    %v870 = vpop.f32.mrb[0].mxu0
    %v871 = vadd.f32 %v722, %v870
    %v872 = vpop.f32.mrb[0].mxu0
    %v873 = vpop.f32.mrb[0].mxu0
    %v874 = vadd.f32 %v722, %v873
    %v875 = vpop.f32.mrb[0].mxu0
    %876 = vmatprep.mubr.bf16.mxu0 0
    %877 = vmatmul.mubr.bf16.gmra.mrb[0].mxu0 %v678
    %v878 = vpop.f32.mrb[0].mxu0
    %v879 = vadd.f32 %v722, %v878
    %v880 = vpop.f32.mrb[0].mxu0
    %v881 = vpop.f32.mrb[0].mxu0
    %v882 = vadd.f32 %v722, %v881
    %v883 = vpop.f32.mrb[0].mxu0
    %884 = vmatprep.mubr.bf16.mxu0 0
    %885 = vmatmul.mubr.bf16.gmra.mrb[0].mxu0 %v679
    %v886 = vpop.f32.mrb[0].mxu0
    %v887 = vadd.f32 %v722, %v886
    %v888 = vpop.f32.mrb[0].mxu0
    %v889 = vpop.f32.mrb[0].mxu0
    %v890 = vadd.f32 %v722, %v889
    %v891 = vpop.f32.mrb[0].mxu0
    %892 = vmatprep.mubr.bf16.mxu0 0
    %893 = vmatmul.mubr.bf16.gmra.mrb[0].mxu0 %v680
    %v894 = vpop.f32.mrb[0].mxu0
    %v895 = vadd.f32 %v722, %v894
    %v896 = vpop.f32.mrb[0].mxu0
    %v897 = vpop.f32.mrb[0].mxu0
    %v898 = vadd.f32 %v722, %v897
    %v899 = vpop.f32.mrb[0].mxu0
    %900 = vmatprep.mubr.bf16.mxu0 0
    %901 = vmatmul.mubr.bf16.gmra.mrb[0].mxu0 %v681
    %v902 = vpop.f32.mrb[0].mxu0
    %v903 = vadd.f32 %v722, %v902
    %v904 = vpop.f32.mrb[0].mxu0
    %v905 = vpop.f32.mrb[0].mxu0
    %v906 = vadd.f32 %v722, %v905
    %v907 = vpop.f32.mrb[0].mxu0
    %908 = vmatprep.mubr.bf16.mxu0 0
    %909 = vmatmul.mubr.bf16.gmra.mrb[0].mxu0 %v682
    %v910 = vpop.f32.mrb[0].mxu0
    %v911 = vadd.f32 %v722, %v910
    %v912 = vpop.f32.mrb[0].mxu0
    %v913 = vpop.f32.mrb[0].mxu0
    %v914 = vadd.f32 %v722, %v913
    %v915 = vpop.f32.mrb[0].mxu0
    %916 = vmatprep.mubr.bf16.mxu0 0
    %917 = vmatmul.mubr.bf16.gmra.mrb[0].mxu0 %v683
    %v918 = vpop.f32.mrb[0].mxu0
    %v919 = vadd.f32 %v722, %v918
    %v920 = vpop.f32.mrb[0].mxu0
    %v921 = vpop.f32.mrb[0].mxu0
    %v922 = vadd.f32 %v722, %v921
    %v923 = vpop.f32.mrb[0].mxu0
    %924 = vmatprep.mubr.bf16.mxu0 0
    %925 = vmatmul.mubr.bf16.gmra.mrb[0].mxu0 %v684
    %v926 = vpop.f32.mrb[0].mxu0
    %v927 = vadd.f32 %v722, %v926
    %v928 = vpop.f32.mrb[0].mxu0
    %v929 = vpop.f32.mrb[0].mxu0
    %v930 = vadd.f32 %v722, %v929
    %v931 = vpop.f32.mrb[0].mxu0
    %932 = vmatprep.mubr.bf16.mxu0 0
    %933 = vmatmul.mubr.bf16.gmra.mrb[0].mxu0 %v685
    %v934 = vpop.f32.mrb[0].mxu0
    %v935 = vadd.f32 %v722, %v934
    %v936 = vpop.f32.mrb[0].mxu0
    %v937 = vpop.f32.mrb[0].mxu0
    %v938 = vadd.f32 %v722, %v937
    %v939 = vpop.f32.mrb[0].mxu0
    %940 = vmatprep.mubr.bf16.mxu0 0
    %941 = vmatmul.mubr.bf16.gmra.mrb[0].mxu0 %v686
    %v942 = vpop.f32.mrb[0].mxu0
    %v943 = vadd.f32 %v722, %v942
    %v944 = vpop.f32.mrb[0].mxu0
    %v945 = vpop.f32.mrb[0].mxu0
    %v946 = vadd.f32 %v722, %v945
    %v947 = vpop.f32.mrb[0].mxu0
    %948 = vmatprep.mubr.bf16.mxu0 0
    %949 = vmatmul.mubr.bf16.gmra.mrb[0].mxu0 %v687
    %v950 = vpop.f32.mrb[0].mxu0
    %v951 = vadd.f32 %v722, %v950
    %v952 = vpop.f32.mrb[0].mxu0
    %v953 = vpop.f32.mrb[0].mxu0
    %v954 = vadd.f32 %v722, %v953
    %v955 = vpop.f32.mrb[0].mxu0
    %956 = vmatprep.mubr.bf16.mxu0 0
    %957 = vmatmul.mubr.bf16.gmra.mrb[0].mxu0 %v688
    %v958 = vpop.f32.mrb[0].mxu0
    %v959 = vadd.f32 %v722, %v958
    %v960 = vpop.f32.mrb[0].mxu0
    %v961 = vpop.f32.mrb[0].mxu0
    %v962 = vadd.f32 %v722, %v961
    %v963 = vpop.f32.mrb[0].mxu0
    %964 = vmatprep.mubr.bf16.mxu0 0
    %965 = vmatmul.mubr.bf16.gmra.mrb[0].mxu0 %v689
    %v966 = vpop.f32.mrb[0].mxu0
    %v967 = vadd.f32 %v722, %v966
    %v968 = vpop.f32.mrb[0].mxu0
    %v969 = vpop.f32.mrb[0].mxu0
    %v970 = vadd.f32 %v722, %v969
    %v971 = vpop.f32.mrb[0].mxu0
    %972 = vmatprep.mubr.bf16.mxu0 0
    %973 = vmatmul.mubr.bf16.gmra.mrb[0].mxu0 %v690
    %v974 = vpop.f32.mrb[0].mxu0
    %v975 = vadd.f32 %v722, %v974
    %v976 = vpop.f32.mrb[0].mxu0
    %v977 = vpop.f32.mrb[0].mxu0
    %v978 = vadd.f32 %v722, %v977
    %v979 = vpop.f32.mrb[0].mxu0
    %980 = vmatprep.mubr.bf16.mxu0 0
    %981 = vmatmul.mubr.bf16.gmra.mrb[0].mxu0 %v691
    %v982 = vpop.f32.mrb[0].mxu0
    %v983 = vadd.f32 %v722, %v982
    %v984 = vpop.f32.mrb[0].mxu0
    %v985 = vpop.f32.mrb[0].mxu0
    %v986 = vadd.f32 %v722, %v985
    %v987 = vpop.f32.mrb[0].mxu0
    %988 = vmatprep.mubr.bf16.mxu0 0
    %989 = vmatmul.mubr.bf16.gmra.mrb[0].mxu0 %v692
    %v990 = vpop.f32.mrb[0].mxu0
    %v991 = vadd.f32 %v722, %v990
    %v992 = vpop.f32.mrb[0].mxu0
    %v993 = vpop.f32.mrb[0].mxu0
    %v994 = vadd.f32 %v722, %v993
    %v995 = vpop.f32.mrb[0].mxu0
    %996 = vmatprep.mubr.bf16.mxu0 0
    %997 = vmatmul.mubr.bf16.gmra.mrb[0].mxu0 %v693
    %v998 = vpop.f32.mrb[0].mxu0
    %v999 = vadd.f32 %v722, %v998
    %v1000 = vpop.f32.mrb[0].mxu0
    %v1001 = vpop.f32.mrb[0].mxu0
    %v1002 = vadd.f32 %v722, %v1001
    %v1003 = vpop.f32.mrb[0].mxu0
    %1004 = vmatprep.mubr.bf16.mxu0 0
    %1005 = vmatmul.mubr.bf16.gmra.mrb[0].mxu0 %v694
    %v1006 = vpop.f32.mrb[0].mxu0
    %v1007 = vadd.f32 %v722, %v1006
    %v1008 = vpop.f32.mrb[0].mxu0
    %v1009 = vpop.f32.mrb[0].mxu0
    %v1010 = vadd.f32 %v722, %v1009
    %v1011 = vpop.f32.mrb[0].mxu0
    %1012 = vmatprep.mubr.bf16.mxu0 0
    %1013 = vmatmul.mubr.bf16.gmra.mrb[0].mxu0 %v695
    %v1014 = vpop.f32.mrb[0].mxu0
    %v1015 = vadd.f32 %v722, %v1014
    %v1016 = vpop.f32.mrb[0].mxu0
    %v1017 = vpop.f32.mrb[0].mxu0
    %v1018 = vadd.f32 %v722, %v1017
    %v1019 = vpop.f32.mrb[0].mxu0
    %1020 = vmatprep.mubr.bf16.mxu0 0
    %1021 = vmatmul.mubr.bf16.gmra.mrb[0].mxu0 %v696
    %v1022 = vpop.f32.mrb[0].mxu0
    %v1023 = vadd.f32 %v722, %v1022
    %v1024 = vpop.f32.mrb[0].mxu0
    %v1025 = vpop.f32.mrb[0].mxu0
    %v1026 = vadd.f32 %v722, %v1025
    %v1027 = vpop.f32.mrb[0].mxu0
    %1028 = vmatprep.mubr.bf16.mxu0 0
    %1029 = vmatmul.mubr.bf16.gmra.mrb[0].mxu0 %v697
    %v1030 = vpop.f32.mrb[0].mxu0
    %v1031 = vadd.f32 %v722, %v1030
    %v1032 = vpop.f32.mrb[0].mxu0
    %v1033 = vpop.f32.mrb[0].mxu0
    %v1034 = vadd.f32 %v722, %v1033
    %v1035 = vpop.f32.mrb[0].mxu0
    %1036 = vmatprep.mubr.bf16.mxu0 0
    %1037 = vmatmul.mubr.bf16.gmra.mrb[0].mxu0 %v698
    %v1038 = vpop.f32.mrb[0].mxu0
    %v1039 = vadd.f32 %v722, %v1038
    %v1040 = vpop.f32.mrb[0].mxu0
    %v1041 = vpop.f32.mrb[0].mxu0
    %v1042 = vadd.f32 %v722, %v1041
    %v1043 = vpop.f32.mrb[0].mxu0
    %1044 = vmatprep.mubr.bf16.mxu0 0
    %1045 = vmatmul.mubr.bf16.gmra.mrb[0].mxu0 %v699
    %v1046 = vpop.f32.mrb[0].mxu0
    %v1047 = vadd.f32 %v722, %v1046
    %v1048 = vpop.f32.mrb[0].mxu0
    %v1049 = vpop.f32.mrb[0].mxu0
    %v1050 = vadd.f32 %v722, %v1049
    %v1051 = vpop.f32.mrb[0].mxu0
    %1052 = vmatprep.mubr.bf16.mxu0 0
    %1053 = vmatmul.mubr.bf16.gmra.mrb[0].mxu0 %v700
    %v1054 = vpop.f32.mrb[0].mxu0
    %v1055 = vadd.f32 %v722, %v1054
    %v1056 = vpop.f32.mrb[0].mxu0
    %v1057 = vpop.f32.mrb[0].mxu0
    %v1058 = vadd.f32 %v722, %v1057
    %v1059 = vpop.f32.mrb[0].mxu0
    %1060 = vdwg.mxu0
    %v1061 = vmul.f32 %v807, 0.5
    %v1062 = vmul.f32 %v810, 0.5
    %v1063 = vmul.f32 %v815, 0.5
    %v1064 = vmul.f32 %v818, 0.5
    %v1065 = vmul.f32 %v823, 0.5
    %v1066 = vmul.f32 %v826, 0.5
    %v1067 = vmul.f32 %v831, 0.5
    %v1068 = vmul.f32 %v834, 0.5
    %v1069 = vmul.f32 %v839, 0.5
    %v1070 = vmul.f32 %v842, 0.5
    %v1071 = vmul.f32 %v847, 0.5
    %v1072 = vmul.f32 %v850, 0.5
    %v1073 = vmul.f32 %v855, 0.5
    %v1074 = vmul.f32 %v858, 0.5
    %v1075 = vmul.f32 %v863, 0.5
    %v1076 = vmul.f32 %v866, 0.5
    %v1077 = vmul.f32 %v871, 0.5
    %v1078 = vmul.f32 %v874, 0.5
    %v1079 = vmul.f32 %v879, 0.5
    %v1080 = vmul.f32 %v882, 0.5
    %v1081 = vmul.f32 %v887, 0.5
    %v1082 = vmul.f32 %v890, 0.5
    %v1083 = vmul.f32 %v895, 0.5
    %v1084 = vmul.f32 %v898, 0.5
    %v1085 = vmul.f32 %v903, 0.5
    %v1086 = vmul.f32 %v906, 0.5
    %v1087 = vmul.f32 %v911, 0.5
    %v1088 = vmul.f32 %v914, 0.5
    %v1089 = vmul.f32 %v919, 0.5
    %v1090 = vmul.f32 %v922, 0.5
    %v1091 = vmul.f32 %v927, 0.5
    %v1092 = vmul.f32 %v930, 0.5
    %v1093 = vmul.f32 %v935, 0.5
    %v1094 = vmul.f32 %v938, 0.5
    %v1095 = vmul.f32 %v943, 0.5
    %v1096 = vmul.f32 %v946, 0.5
    %v1097 = vmul.f32 %v951, 0.5
    %v1098 = vmul.f32 %v954, 0.5
    %v1099 = vmul.f32 %v959, 0.5
    %v1100 = vmul.f32 %v962, 0.5
    %v1101 = vmul.f32 %v967, 0.5
    %v1102 = vmul.f32 %v970, 0.5
    %v1103 = vmul.f32 %v975, 0.5
    %v1104 = vmul.f32 %v978, 0.5
    %v1105 = vmul.f32 %v983, 0.5
    %v1106 = vmul.f32 %v986, 0.5
    %v1107 = vmul.f32 %v991, 0.5
    %v1108 = vmul.f32 %v994, 0.5
    %v1109 = vmul.f32 %v999, 0.5
    %v1110 = vmul.f32 %v1002, 0.5
    %v1111 = vmul.f32 %v1007, 0.5
    %v1112 = vmul.f32 %v1010, 0.5
    %v1113 = vmul.f32 %v1015, 0.5
    %v1114 = vmul.f32 %v1018, 0.5
    %v1115 = vmul.f32 %v1023, 0.5
    %v1116 = vmul.f32 %v1026, 0.5
    %v1117 = vmul.f32 %v1031, 0.5
    %v1118 = vmul.f32 %v1034, 0.5
    %v1119 = vmul.f32 %v1039, 0.5
    %v1120 = vmul.f32 %v1042, 0.5
    %v1121 = vmul.f32 %v1047, 0.5
    %v1122 = vmul.f32 %v1050, 0.5
    %v1123 = vmul.f32 %v1055, 0.5
    %v1124 = vmul.f32 %v1058, 0.5
    %v1125 = vmul.f32 %v807, 0.70710677
    %v1126 = vmul.f32 %v810, 0.70710677
    %v1127 = vmul.f32 %v815, 0.70710677
    %v1128 = vmul.f32 %v818, 0.70710677
    %v1129 = vmul.f32 %v823, 0.70710677
    %v1130 = vmul.f32 %v826, 0.70710677
    %v1131 = vmul.f32 %v831, 0.70710677
    %v1132 = vmul.f32 %v834, 0.70710677
    %v1133 = vmul.f32 %v839, 0.70710677
    %v1134 = vmul.f32 %v842, 0.70710677
    %v1135 = vmul.f32 %v847, 0.70710677
    %v1136 = vmul.f32 %v850, 0.70710677
    %v1137 = vmul.f32 %v855, 0.70710677
    %v1138 = vmul.f32 %v858, 0.70710677
    %v1139 = vmul.f32 %v863, 0.70710677
    %v1140 = vmul.f32 %v866, 0.70710677
    %v1141 = vmul.f32 %v871, 0.70710677
    %v1142 = vmul.f32 %v874, 0.70710677
    %v1143 = vmul.f32 %v879, 0.70710677
    %v1144 = vmul.f32 %v882, 0.70710677
    %v1145 = vmul.f32 %v887, 0.70710677
    %v1146 = vmul.f32 %v890, 0.70710677
    %v1147 = vmul.f32 %v895, 0.70710677
    %v1148 = vmul.f32 %v898, 0.70710677
    %v1149 = vmul.f32 %v903, 0.70710677
    %v1150 = vmul.f32 %v906, 0.70710677
    %v1151 = vmul.f32 %v911, 0.70710677
    %v1152 = vmul.f32 %v914, 0.70710677
    %v1153 = vmul.f32 %v919, 0.70710677
    %v1154 = vmul.f32 %v922, 0.70710677
    %v1155 = vmul.f32 %v927, 0.70710677
    %v1156 = vmul.f32 %v930, 0.70710677
    %v1157 = vmul.f32 %v935, 0.70710677
    %v1158 = vmul.f32 %v938, 0.70710677
    %v1159 = vmul.f32 %v943, 0.70710677
    %v1160 = vmul.f32 %v946, 0.70710677
    %v1161 = vmul.f32 %v951, 0.70710677
    %v1162 = vmul.f32 %v954, 0.70710677
    %v1163 = vmul.f32 %v959, 0.70710677
    %v1164 = vmul.f32 %v962, 0.70710677
    %v1165 = vmul.f32 %v967, 0.70710677
    %v1166 = vmul.f32 %v970, 0.70710677
    %v1167 = vmul.f32 %v975, 0.70710677
    %v1168 = vmul.f32 %v978, 0.70710677
    %v1169 = vmul.f32 %v983, 0.70710677
    %v1170 = vmul.f32 %v986, 0.70710677
    %v1171 = vmul.f32 %v991, 0.70710677
    %v1172 = vmul.f32 %v994, 0.70710677
    %v1173 = vmul.f32 %v999, 0.70710677
    %v1174 = vmul.f32 %v1002, 0.70710677
    %v1175 = vmul.f32 %v1007, 0.70710677
    %v1176 = vmul.f32 %v1010, 0.70710677
    %v1177 = vmul.f32 %v1015, 0.70710677
    %v1178 = vmul.f32 %v1018, 0.70710677
    %v1179 = vmul.f32 %v1023, 0.70710677
    %v1180 = vmul.f32 %v1026, 0.70710677
    %v1181 = vmul.f32 %v1031, 0.70710677
    %v1182 = vmul.f32 %v1034, 0.70710677
    %v1183 = vmul.f32 %v1039, 0.70710677
    %v1184 = vmul.f32 %v1042, 0.70710677
    %v1185 = vmul.f32 %v1047, 0.70710677
    %v1186 = vmul.f32 %v1050, 0.70710677
    %v1187 = vmul.f32 %v1055, 0.70710677
    %v1188 = vmul.f32 %v1058, 0.70710677
    %v1189 = verf.f32.pop %v1125
    %v1190 = verf.f32.pop %v1126
    %v1191 = verf.f32.pop %v1127
    %v1192 = verf.f32.pop %v1128
    %v1193 = verf.f32.pop %v1129
    %v1194 = verf.f32.pop %v1130
    %v1195 = verf.f32.pop %v1131
    %v1196 = verf.f32.pop %v1132
    %v1197 = verf.f32.pop %v1133
    %v1198 = verf.f32.pop %v1134
    %v1199 = verf.f32.pop %v1135
    %v1200 = verf.f32.pop %v1136
    %v1201 = verf.f32.pop %v1137
    %v1202 = verf.f32.pop %v1138
    %v1203 = verf.f32.pop %v1139
    %v1204 = verf.f32.pop %v1140
    %v1205 = verf.f32.pop %v1141
    %v1206 = verf.f32.pop %v1142
    %v1207 = verf.f32.pop %v1143
    %v1208 = verf.f32.pop %v1144
    %v1209 = verf.f32.pop %v1145
    %v1210 = verf.f32.pop %v1146
    %v1211 = verf.f32.pop %v1147
    %v1212 = verf.f32.pop %v1148
    %v1213 = verf.f32.pop %v1149
    %v1214 = verf.f32.pop %v1150
    %v1215 = verf.f32.pop %v1151
    %v1216 = verf.f32.pop %v1152
    %v1217 = verf.f32.pop %v1153
    %v1218 = verf.f32.pop %v1154
    %v1219 = verf.f32.pop %v1155
    %v1220 = verf.f32.pop %v1156
    %v1221 = verf.f32.pop %v1157
    %v1222 = verf.f32.pop %v1158
    %v1223 = verf.f32.pop %v1159
    %v1224 = verf.f32.pop %v1160
    %v1225 = verf.f32.pop %v1161
    %v1226 = verf.f32.pop %v1162
    %v1227 = verf.f32.pop %v1163
    %v1228 = verf.f32.pop %v1164
    %v1229 = verf.f32.pop %v1165
    %v1230 = verf.f32.pop %v1166
    %v1231 = verf.f32.pop %v1167
    %v1232 = verf.f32.pop %v1168
    %v1233 = verf.f32.pop %v1169
    %v1234 = verf.f32.pop %v1170
    %v1235 = verf.f32.pop %v1171
    %v1236 = verf.f32.pop %v1172
    %v1237 = verf.f32.pop %v1173
    %v1238 = verf.f32.pop %v1174
    %v1239 = verf.f32.pop %v1175
    %v1240 = verf.f32.pop %v1176
    %v1241 = verf.f32.pop %v1177
    %v1242 = verf.f32.pop %v1178
    %v1243 = verf.f32.pop %v1179
    %v1244 = verf.f32.pop %v1180
    %v1245 = verf.f32.pop %v1181
    %v1246 = verf.f32.pop %v1182
    %v1247 = verf.f32.pop %v1183
    %v1248 = verf.f32.pop %v1184
    %v1249 = verf.f32.pop %v1185
    %v1250 = verf.f32.pop %v1186
    %v1251 = verf.f32.pop %v1187
    %v1252 = verf.f32.pop %v1188
    %v1253 = vadd.f32 %v1189, 1.0
    %v1254 = vadd.f32 %v1190, 1.0
    %v1255 = vadd.f32 %v1191, 1.0
    %v1256 = vadd.f32 %v1192, 1.0
    %v1257 = vadd.f32 %v1193, 1.0
    %v1258 = vadd.f32 %v1194, 1.0
    %v1259 = vadd.f32 %v1195, 1.0
    %v1260 = vadd.f32 %v1196, 1.0
    %v1261 = vadd.f32 %v1197, 1.0
    %v1262 = vadd.f32 %v1198, 1.0
    %v1263 = vadd.f32 %v1199, 1.0
    %v1264 = vadd.f32 %v1200, 1.0
    %v1265 = vadd.f32 %v1201, 1.0
    %v1266 = vadd.f32 %v1202, 1.0
    %v1267 = vadd.f32 %v1203, 1.0
    %v1268 = vadd.f32 %v1204, 1.0
    %v1269 = vadd.f32 %v1205, 1.0
    %v1270 = vadd.f32 %v1206, 1.0
    %v1271 = vadd.f32 %v1207, 1.0
    %v1272 = vadd.f32 %v1208, 1.0
    %v1273 = vadd.f32 %v1209, 1.0
    %v1274 = vadd.f32 %v1210, 1.0
    %v1275 = vadd.f32 %v1211, 1.0
    %v1276 = vadd.f32 %v1212, 1.0
    %v1277 = vadd.f32 %v1213, 1.0
    %v1278 = vadd.f32 %v1214, 1.0
    %v1279 = vadd.f32 %v1215, 1.0
    %v1280 = vadd.f32 %v1216, 1.0
    %v1281 = vadd.f32 %v1217, 1.0
    %v1282 = vadd.f32 %v1218, 1.0
    %v1283 = vadd.f32 %v1219, 1.0
    %v1284 = vadd.f32 %v1220, 1.0
    %v1285 = vadd.f32 %v1221, 1.0
    %v1286 = vadd.f32 %v1222, 1.0
    %v1287 = vadd.f32 %v1223, 1.0
    %v1288 = vadd.f32 %v1224, 1.0
    %v1289 = vadd.f32 %v1225, 1.0
    %v1290 = vadd.f32 %v1226, 1.0
    %v1291 = vadd.f32 %v1227, 1.0
    %v1292 = vadd.f32 %v1228, 1.0
    %v1293 = vadd.f32 %v1229, 1.0
    %v1294 = vadd.f32 %v1230, 1.0
    %v1295 = vadd.f32 %v1231, 1.0
    %v1296 = vadd.f32 %v1232, 1.0
    %v1297 = vadd.f32 %v1233, 1.0
    %v1298 = vadd.f32 %v1234, 1.0
    %v1299 = vadd.f32 %v1235, 1.0
    %v1300 = vadd.f32 %v1236, 1.0
    %v1301 = vadd.f32 %v1237, 1.0
    %v1302 = vadd.f32 %v1238, 1.0
    %v1303 = vadd.f32 %v1239, 1.0
    %v1304 = vadd.f32 %v1240, 1.0
    %v1305 = vadd.f32 %v1241, 1.0
    %v1306 = vadd.f32 %v1242, 1.0
    %v1307 = vadd.f32 %v1243, 1.0
    %v1308 = vadd.f32 %v1244, 1.0
    %v1309 = vadd.f32 %v1245, 1.0
    %v1310 = vadd.f32 %v1246, 1.0
    %v1311 = vadd.f32 %v1247, 1.0
    %v1312 = vadd.f32 %v1248, 1.0
    %v1313 = vadd.f32 %v1249, 1.0
    %v1314 = vadd.f32 %v1250, 1.0
    %v1315 = vadd.f32 %v1251, 1.0
    %v1316 = vadd.f32 %v1252, 1.0
    %v1317 = vmul.f32 %v1061, %v1253
    %v1318 = vmul.f32 %v1062, %v1254
    %v1319 = vmul.f32 %v1063, %v1255
    %v1320 = vmul.f32 %v1064, %v1256
    %v1321 = vmul.f32 %v1065, %v1257
    %v1322 = vmul.f32 %v1066, %v1258
    %v1323 = vmul.f32 %v1067, %v1259
    %v1324 = vmul.f32 %v1068, %v1260
    %v1325 = vmul.f32 %v1069, %v1261
    %v1326 = vmul.f32 %v1070, %v1262
    %v1327 = vmul.f32 %v1071, %v1263
    %v1328 = vmul.f32 %v1072, %v1264
    %v1329 = vmul.f32 %v1073, %v1265
    %v1330 = vmul.f32 %v1074, %v1266
    %v1331 = vmul.f32 %v1075, %v1267
    %v1332 = vmul.f32 %v1076, %v1268
    %v1333 = vmul.f32 %v1077, %v1269
    %v1334 = vmul.f32 %v1078, %v1270
    %v1335 = vmul.f32 %v1079, %v1271
    %v1336 = vmul.f32 %v1080, %v1272
    %v1337 = vmul.f32 %v1081, %v1273
    %v1338 = vmul.f32 %v1082, %v1274
    %v1339 = vmul.f32 %v1083, %v1275
    %v1340 = vmul.f32 %v1084, %v1276
    %v1341 = vmul.f32 %v1085, %v1277
    %v1342 = vmul.f32 %v1086, %v1278
    %v1343 = vmul.f32 %v1087, %v1279
    %v1344 = vmul.f32 %v1088, %v1280
    %v1345 = vmul.f32 %v1089, %v1281
    %v1346 = vmul.f32 %v1090, %v1282
    %v1347 = vmul.f32 %v1091, %v1283
    %v1348 = vmul.f32 %v1092, %v1284
    %v1349 = vmul.f32 %v1093, %v1285
    %v1350 = vmul.f32 %v1094, %v1286
    %v1351 = vmul.f32 %v1095, %v1287
    %v1352 = vmul.f32 %v1096, %v1288
    %v1353 = vmul.f32 %v1097, %v1289
    %v1354 = vmul.f32 %v1098, %v1290
    %v1355 = vmul.f32 %v1099, %v1291
    %v1356 = vmul.f32 %v1100, %v1292
    %v1357 = vmul.f32 %v1101, %v1293
    %v1358 = vmul.f32 %v1102, %v1294
    %v1359 = vmul.f32 %v1103, %v1295
    %v1360 = vmul.f32 %v1104, %v1296
    %v1361 = vmul.f32 %v1105, %v1297
    %v1362 = vmul.f32 %v1106, %v1298
    %v1363 = vmul.f32 %v1107, %v1299
    %v1364 = vmul.f32 %v1108, %v1300
    %v1365 = vmul.f32 %v1109, %v1301
    %v1366 = vmul.f32 %v1110, %v1302
    %v1367 = vmul.f32 %v1111, %v1303
    %v1368 = vmul.f32 %v1112, %v1304
    %v1369 = vmul.f32 %v1113, %v1305
    %v1370 = vmul.f32 %v1114, %v1306
    %v1371 = vmul.f32 %v1115, %v1307
    %v1372 = vmul.f32 %v1116, %v1308
    %v1373 = vmul.f32 %v1117, %v1309
    %v1374 = vmul.f32 %v1118, %v1310
    %v1375 = vmul.f32 %v1119, %v1311
    %v1376 = vmul.f32 %v1120, %v1312
    %v1377 = vmul.f32 %v1121, %v1313
    %v1378 = vmul.f32 %v1122, %v1314
    %v1379 = vmul.f32 %v1123, %v1315
    %v1380 = vmul.f32 %v1124, %v1316
    %v1381 = vpack.c.bf16 %v1318, %v1317
    %v1382 = vpack.c.bf16 %v1320, %v1319
    %v1383 = vpack.c.bf16 %v1322, %v1321
    %v1384 = vpack.c.bf16 %v1324, %v1323
    %v1385 = vpack.c.bf16 %v1326, %v1325
    %v1386 = vpack.c.bf16 %v1328, %v1327
    %v1387 = vpack.c.bf16 %v1330, %v1329
    %v1388 = vpack.c.bf16 %v1332, %v1331
    %v1389 = vpack.c.bf16 %v1334, %v1333
    %v1390 = vpack.c.bf16 %v1336, %v1335
    %v1391 = vpack.c.bf16 %v1338, %v1337
    %v1392 = vpack.c.bf16 %v1340, %v1339
    %v1393 = vpack.c.bf16 %v1342, %v1341
    %v1394 = vpack.c.bf16 %v1344, %v1343
    %v1395 = vpack.c.bf16 %v1346, %v1345
    %v1396 = vpack.c.bf16 %v1348, %v1347
    %v1397 = vpack.c.bf16 %v1350, %v1349
    %v1398 = vpack.c.bf16 %v1352, %v1351
    %v1399 = vpack.c.bf16 %v1354, %v1353
    %v1400 = vpack.c.bf16 %v1356, %v1355
    %v1401 = vpack.c.bf16 %v1358, %v1357
    %v1402 = vpack.c.bf16 %v1360, %v1359
    %v1403 = vpack.c.bf16 %v1362, %v1361
    %v1404 = vpack.c.bf16 %v1364, %v1363
    %v1405 = vpack.c.bf16 %v1366, %v1365
    %v1406 = vpack.c.bf16 %v1368, %v1367
    %v1407 = vpack.c.bf16 %v1370, %v1369
    %v1408 = vpack.c.bf16 %v1372, %v1371
    %v1409 = vpack.c.bf16 %v1374, %v1373
    %v1410 = vpack.c.bf16 %v1376, %v1375
    %v1411 = vpack.c.bf16 %v1378, %v1377
    %v1412 = vpack.c.bf16 %v1380, %v1379
    %v1413 = vld [vmem:[%s5] sm:$0xf]
    %v1414 = vld [vmem:[%s5 + $0x4] sm:$0xf]
    %v1415 = vld [vmem:[%s5 + $0x8] sm:$0xf]
    %v1416 = vld [vmem:[%s5 + $0xc] sm:$0xf]
    %v1417 = vld [vmem:[%s5 + $0x10] sm:$0xf]
    %v1418 = vld [vmem:[%s5 + $0x14] sm:$0xf]
    %v1419 = vld [vmem:[%s5 + $0x18] sm:$0xf]
    %v1420 = vld [vmem:[%s5 + $0x1c] sm:$0xf]
    %v1421 = vld [vmem:[%s5 + $0x20] sm:$0xf]
    %v1422 = vld [vmem:[%s5 + $0x24] sm:$0xf]
    %v1423 = vld [vmem:[%s5 + $0x28] sm:$0xf]
    %v1424 = vld [vmem:[%s5 + $0x2c] sm:$0xf]
    %v1425 = vld [vmem:[%s5 + $0x30] sm:$0xf]
    %v1426 = vld [vmem:[%s5 + $0x34] sm:$0xf]
    %v1427 = vld [vmem:[%s5 + $0x38] sm:$0xf]
    %v1428 = vld [vmem:[%s5 + $0x3c] sm:$0xf]
    %v1429 = vld [vmem:[%s6] sm:$0x1]
    %v1431 = vlaneseq
    %v1432 = vshrl.u32 %v1431, 7
    %v1433 = vsub.s32 0, %v1432
    %v1434 = vrot.slane %v1429, %v1433
    %v1452 = vunpack.c.l.b16 %v1413
    %v1453 = vunpack.c.l.b16 %v1414
    %v1454 = vunpack.c.l.b16 %v1415
    %v1455 = vunpack.c.l.b16 %v1416
    %v1456 = vunpack.c.l.b16 %v1417
    %v1457 = vunpack.c.l.b16 %v1418
    %v1458 = vunpack.c.l.b16 %v1419
    %v1459 = vunpack.c.l.b16 %v1420
    %v1460 = vunpack.c.l.b16 %v1421
    %v1461 = vunpack.c.l.b16 %v1422
    %v1462 = vunpack.c.l.b16 %v1423
    %v1463 = vunpack.c.l.b16 %v1424
    %v1464 = vunpack.c.l.b16 %v1425
    %v1465 = vunpack.c.l.b16 %v1426
    %v1466 = vunpack.c.l.b16 %v1427
    %v1467 = vunpack.c.l.b16 %v1428
    %v1468 = vpack.c.b16 %v1453, %v1452
    %v1469 = vpack.c.b16 %v1455, %v1454
    %v1470 = vpack.c.b16 %v1457, %v1456
    %v1471 = vpack.c.b16 %v1459, %v1458
    %v1472 = vpack.c.b16 %v1461, %v1460
    %v1473 = vpack.c.b16 %v1463, %v1462
    %v1474 = vpack.c.b16 %v1465, %v1464
    %v1475 = vpack.c.b16 %v1467, %v1466
    %1484 = vmatprep.subr.bf16.mxu0 0
    %1485 = vmatpush1.bf16.msra.mxu0 %v1468
    %1486 = vmatprep.subr.bf16.mxu0 0
    %1487 = vmatpush1.bf16.msra.mxu0 %v1469
    %1488 = vmatprep.subr.bf16.mxu0 0
    %1489 = vmatpush1.bf16.msra.mxu0 %v1470
    %1490 = vmatprep.subr.bf16.mxu0 0
    %1491 = vmatpush1.bf16.msra.mxu0 %v1471
    %1492 = vmatprep.subr.bf16.mxu0 0
    %1493 = vmatpush1.bf16.msra.mxu0 %v1472
    %1494 = vmatprep.subr.bf16.mxu0 0
    %1495 = vmatpush1.bf16.msra.mxu0 %v1473
    %1496 = vmatprep.subr.bf16.mxu0 0
    %1497 = vmatpush1.bf16.msra.mxu0 %v1474
    %1498 = vmatprep.subr.bf16.mxu0 0
    %1499 = vmatpush1.bf16.msra.mxu0 %v1475
    %1500 = vmatprep.subr.bf16.mxu0 0
    %1501 = vmatpush1.bf16.msra.mxu0 0
    %1502 = vmatprep.subr.bf16.mxu0 0
    %1503 = vmatpush1.bf16.msra.mxu0 0
    %1504 = vmatprep.subr.bf16.mxu0 0
    %1505 = vmatpush1.bf16.msra.mxu0 0
    %1506 = vmatprep.subr.bf16.mxu0 0
    %1507 = vmatpush1.bf16.msra.mxu0 0
    %1508 = vmatprep.subr.bf16.mxu0 0
    %1509 = vmatpush1.bf16.msra.mxu0 0
    %1510 = vmatprep.subr.bf16.mxu0 0
    %1511 = vmatpush1.bf16.msra.mxu0 0
    %1512 = vmatprep.subr.bf16.mxu0 0
    %1513 = vmatpush1.bf16.msra.mxu0 0
    %1514 = vmatprep.subr.bf16.mxu0 0
    %1515 = vmatpush1.bf16.msra.mxu0 0
    %1516 = vmatprep.mubr.bf16.mxu0 0
    %1517 = vmatmul.mubr.bf16.gmra.mrb[0].mxu0 %v1381
    %v1518 = vpop.f32.mrb[0].mxu0
    %v1519 = vadd.f32 %v1434, %v1518
    %v1520 = vpop.f32.mrb[0].mxu0
    %v1521 = vpop.f32.mrb[0].mxu0
    %v1522 = vadd.f32 %v1434, %v1521
    %v1523 = vpop.f32.mrb[0].mxu0
    %1524 = vmatprep.mubr.bf16.mxu0 0
    %1525 = vmatmul.mubr.bf16.gmra.mrb[0].mxu0 %v1382
    %v1526 = vpop.f32.mrb[0].mxu0
    %v1527 = vadd.f32 %v1434, %v1526
    %v1528 = vpop.f32.mrb[0].mxu0
    %v1529 = vpop.f32.mrb[0].mxu0
    %v1530 = vadd.f32 %v1434, %v1529
    %v1531 = vpop.f32.mrb[0].mxu0
    %1532 = vmatprep.mubr.bf16.mxu0 0
    %1533 = vmatmul.mubr.bf16.gmra.mrb[0].mxu0 %v1383
    %v1534 = vpop.f32.mrb[0].mxu0
    %v1535 = vadd.f32 %v1434, %v1534
    %v1536 = vpop.f32.mrb[0].mxu0
    %v1537 = vpop.f32.mrb[0].mxu0
    %v1538 = vadd.f32 %v1434, %v1537
    %v1539 = vpop.f32.mrb[0].mxu0
    %1540 = vmatprep.mubr.bf16.mxu0 0
    %1541 = vmatmul.mubr.bf16.gmra.mrb[0].mxu0 %v1384
    %v1542 = vpop.f32.mrb[0].mxu0
    %v1543 = vadd.f32 %v1434, %v1542
    %v1544 = vpop.f32.mrb[0].mxu0
    %v1545 = vpop.f32.mrb[0].mxu0
    %v1546 = vadd.f32 %v1434, %v1545
    %v1547 = vpop.f32.mrb[0].mxu0
    %1548 = vmatprep.mubr.bf16.mxu0 0
    %1549 = vmatmul.mubr.bf16.gmra.mrb[0].mxu0 %v1385
    %v1550 = vpop.f32.mrb[0].mxu0
    %v1551 = vadd.f32 %v1434, %v1550
    %v1552 = vpop.f32.mrb[0].mxu0
    %v1553 = vpop.f32.mrb[0].mxu0
    %v1554 = vadd.f32 %v1434, %v1553
    %v1555 = vpop.f32.mrb[0].mxu0
    %1556 = vmatprep.mubr.bf16.mxu0 0
    %1557 = vmatmul.mubr.bf16.gmra.mrb[0].mxu0 %v1386
    %v1558 = vpop.f32.mrb[0].mxu0
    %v1559 = vadd.f32 %v1434, %v1558
    %v1560 = vpop.f32.mrb[0].mxu0
    %v1561 = vpop.f32.mrb[0].mxu0
    %v1562 = vadd.f32 %v1434, %v1561
    %v1563 = vpop.f32.mrb[0].mxu0
    %1564 = vmatprep.mubr.bf16.mxu0 0
    %1565 = vmatmul.mubr.bf16.gmra.mrb[0].mxu0 %v1387
    %v1566 = vpop.f32.mrb[0].mxu0
    %v1567 = vadd.f32 %v1434, %v1566
    %v1568 = vpop.f32.mrb[0].mxu0
    %v1569 = vpop.f32.mrb[0].mxu0
    %v1570 = vadd.f32 %v1434, %v1569
    %v1571 = vpop.f32.mrb[0].mxu0
    %1572 = vmatprep.mubr.bf16.mxu0 0
    %1573 = vmatmul.mubr.bf16.gmra.mrb[0].mxu0 %v1388
    %v1574 = vpop.f32.mrb[0].mxu0
    %v1575 = vadd.f32 %v1434, %v1574
    %v1576 = vpop.f32.mrb[0].mxu0
    %v1577 = vpop.f32.mrb[0].mxu0
    %v1578 = vadd.f32 %v1434, %v1577
    %v1579 = vpop.f32.mrb[0].mxu0
    %1580 = vmatprep.mubr.bf16.mxu0 0
    %1581 = vmatmul.mubr.bf16.gmra.mrb[0].mxu0 %v1389
    %v1582 = vpop.f32.mrb[0].mxu0
    %v1583 = vadd.f32 %v1434, %v1582
    %v1584 = vpop.f32.mrb[0].mxu0
    %v1585 = vpop.f32.mrb[0].mxu0
    %v1586 = vadd.f32 %v1434, %v1585
    %v1587 = vpop.f32.mrb[0].mxu0
    %1588 = vmatprep.mubr.bf16.mxu0 0
    %1589 = vmatmul.mubr.bf16.gmra.mrb[0].mxu0 %v1390
    %v1590 = vpop.f32.mrb[0].mxu0
    %v1591 = vadd.f32 %v1434, %v1590
    %v1592 = vpop.f32.mrb[0].mxu0
    %v1593 = vpop.f32.mrb[0].mxu0
    %v1594 = vadd.f32 %v1434, %v1593
    %v1595 = vpop.f32.mrb[0].mxu0
    %1596 = vmatprep.mubr.bf16.mxu0 0
    %1597 = vmatmul.mubr.bf16.gmra.mrb[0].mxu0 %v1391
    %v1598 = vpop.f32.mrb[0].mxu0
    %v1599 = vadd.f32 %v1434, %v1598
    %v1600 = vpop.f32.mrb[0].mxu0
    %v1601 = vpop.f32.mrb[0].mxu0
    %v1602 = vadd.f32 %v1434, %v1601
    %v1603 = vpop.f32.mrb[0].mxu0
    %1604 = vmatprep.mubr.bf16.mxu0 0
    %1605 = vmatmul.mubr.bf16.gmra.mrb[0].mxu0 %v1392
    %v1606 = vpop.f32.mrb[0].mxu0
    %v1607 = vadd.f32 %v1434, %v1606
    %v1608 = vpop.f32.mrb[0].mxu0
    %v1609 = vpop.f32.mrb[0].mxu0
    %v1610 = vadd.f32 %v1434, %v1609
    %v1611 = vpop.f32.mrb[0].mxu0
    %1612 = vmatprep.mubr.bf16.mxu0 0
    %1613 = vmatmul.mubr.bf16.gmra.mrb[0].mxu0 %v1393
    %v1614 = vpop.f32.mrb[0].mxu0
    %v1615 = vadd.f32 %v1434, %v1614
    %v1616 = vpop.f32.mrb[0].mxu0
    %v1617 = vpop.f32.mrb[0].mxu0
    %v1618 = vadd.f32 %v1434, %v1617
    %v1619 = vpop.f32.mrb[0].mxu0
    %1620 = vmatprep.mubr.bf16.mxu0 0
    %1621 = vmatmul.mubr.bf16.gmra.mrb[0].mxu0 %v1394
    %v1622 = vpop.f32.mrb[0].mxu0
    %v1623 = vadd.f32 %v1434, %v1622
    %v1624 = vpop.f32.mrb[0].mxu0
    %v1625 = vpop.f32.mrb[0].mxu0
    %v1626 = vadd.f32 %v1434, %v1625
    %v1627 = vpop.f32.mrb[0].mxu0
    %1628 = vmatprep.mubr.bf16.mxu0 0
    %1629 = vmatmul.mubr.bf16.gmra.mrb[0].mxu0 %v1395
    %v1630 = vpop.f32.mrb[0].mxu0
    %v1631 = vadd.f32 %v1434, %v1630
    %v1632 = vpop.f32.mrb[0].mxu0
    %v1633 = vpop.f32.mrb[0].mxu0
    %v1634 = vadd.f32 %v1434, %v1633
    %v1635 = vpop.f32.mrb[0].mxu0
    %1636 = vmatprep.mubr.bf16.mxu0 0
    %1637 = vmatmul.mubr.bf16.gmra.mrb[0].mxu0 %v1396
    %v1638 = vpop.f32.mrb[0].mxu0
    %v1639 = vadd.f32 %v1434, %v1638
    %v1640 = vpop.f32.mrb[0].mxu0
    %v1641 = vpop.f32.mrb[0].mxu0
    %v1642 = vadd.f32 %v1434, %v1641
    %v1643 = vpop.f32.mrb[0].mxu0
    %1644 = vmatprep.mubr.bf16.mxu0 0
    %1645 = vmatmul.mubr.bf16.gmra.mrb[0].mxu0 %v1397
    %v1646 = vpop.f32.mrb[0].mxu0
    %v1647 = vadd.f32 %v1434, %v1646
    %v1648 = vpop.f32.mrb[0].mxu0
    %v1649 = vpop.f32.mrb[0].mxu0
    %v1650 = vadd.f32 %v1434, %v1649
    %v1651 = vpop.f32.mrb[0].mxu0
    %1652 = vmatprep.mubr.bf16.mxu0 0
    %1653 = vmatmul.mubr.bf16.gmra.mrb[0].mxu0 %v1398
    %v1654 = vpop.f32.mrb[0].mxu0
    %v1655 = vadd.f32 %v1434, %v1654
    %v1656 = vpop.f32.mrb[0].mxu0
    %v1657 = vpop.f32.mrb[0].mxu0
    %v1658 = vadd.f32 %v1434, %v1657
    %v1659 = vpop.f32.mrb[0].mxu0
    %1660 = vmatprep.mubr.bf16.mxu0 0
    %1661 = vmatmul.mubr.bf16.gmra.mrb[0].mxu0 %v1399
    %v1662 = vpop.f32.mrb[0].mxu0
    %v1663 = vadd.f32 %v1434, %v1662
    %v1664 = vpop.f32.mrb[0].mxu0
    %v1665 = vpop.f32.mrb[0].mxu0
    %v1666 = vadd.f32 %v1434, %v1665
    %v1667 = vpop.f32.mrb[0].mxu0
    %1668 = vmatprep.mubr.bf16.mxu0 0
    %1669 = vmatmul.mubr.bf16.gmra.mrb[0].mxu0 %v1400
    %v1670 = vpop.f32.mrb[0].mxu0
    %v1671 = vadd.f32 %v1434, %v1670
    %v1672 = vpop.f32.mrb[0].mxu0
    %v1673 = vpop.f32.mrb[0].mxu0
    %v1674 = vadd.f32 %v1434, %v1673
    %v1675 = vpop.f32.mrb[0].mxu0
    %1676 = vmatprep.mubr.bf16.mxu0 0
    %1677 = vmatmul.mubr.bf16.gmra.mrb[0].mxu0 %v1401
    %v1678 = vpop.f32.mrb[0].mxu0
    %v1679 = vadd.f32 %v1434, %v1678
    %v1680 = vpop.f32.mrb[0].mxu0
    %v1681 = vpop.f32.mrb[0].mxu0
    %v1682 = vadd.f32 %v1434, %v1681
    %v1683 = vpop.f32.mrb[0].mxu0
    %1684 = vmatprep.mubr.bf16.mxu0 0
    %1685 = vmatmul.mubr.bf16.gmra.mrb[0].mxu0 %v1402
    %v1686 = vpop.f32.mrb[0].mxu0
    %v1687 = vadd.f32 %v1434, %v1686
    %v1688 = vpop.f32.mrb[0].mxu0
    %v1689 = vpop.f32.mrb[0].mxu0
    %v1690 = vadd.f32 %v1434, %v1689
    %v1691 = vpop.f32.mrb[0].mxu0
    %1692 = vmatprep.mubr.bf16.mxu0 0
    %1693 = vmatmul.mubr.bf16.gmra.mrb[0].mxu0 %v1403
    %v1694 = vpop.f32.mrb[0].mxu0
    %v1695 = vadd.f32 %v1434, %v1694
    %v1696 = vpop.f32.mrb[0].mxu0
    %v1697 = vpop.f32.mrb[0].mxu0
    %v1698 = vadd.f32 %v1434, %v1697
    %v1699 = vpop.f32.mrb[0].mxu0
    %1700 = vmatprep.mubr.bf16.mxu0 0
    %1701 = vmatmul.mubr.bf16.gmra.mrb[0].mxu0 %v1404
    %v1702 = vpop.f32.mrb[0].mxu0
    %v1703 = vadd.f32 %v1434, %v1702
    %v1704 = vpop.f32.mrb[0].mxu0
    %v1705 = vpop.f32.mrb[0].mxu0
    %v1706 = vadd.f32 %v1434, %v1705
    %v1707 = vpop.f32.mrb[0].mxu0
    %1708 = vmatprep.mubr.bf16.mxu0 0
    %1709 = vmatmul.mubr.bf16.gmra.mrb[0].mxu0 %v1405
    %v1710 = vpop.f32.mrb[0].mxu0
    %v1711 = vadd.f32 %v1434, %v1710
    %v1712 = vpop.f32.mrb[0].mxu0
    %v1713 = vpop.f32.mrb[0].mxu0
    %v1714 = vadd.f32 %v1434, %v1713
    %v1715 = vpop.f32.mrb[0].mxu0
    %1716 = vmatprep.mubr.bf16.mxu0 0
    %1717 = vmatmul.mubr.bf16.gmra.mrb[0].mxu0 %v1406
    %v1718 = vpop.f32.mrb[0].mxu0
    %v1719 = vadd.f32 %v1434, %v1718
    %v1720 = vpop.f32.mrb[0].mxu0
    %v1721 = vpop.f32.mrb[0].mxu0
    %v1722 = vadd.f32 %v1434, %v1721
    %v1723 = vpop.f32.mrb[0].mxu0
    %1724 = vmatprep.mubr.bf16.mxu0 0
    %1725 = vmatmul.mubr.bf16.gmra.mrb[0].mxu0 %v1407
    %v1726 = vpop.f32.mrb[0].mxu0
    %v1727 = vadd.f32 %v1434, %v1726
    %v1728 = vpop.f32.mrb[0].mxu0
    %v1729 = vpop.f32.mrb[0].mxu0
    %v1730 = vadd.f32 %v1434, %v1729
    %v1731 = vpop.f32.mrb[0].mxu0
    %1732 = vmatprep.mubr.bf16.mxu0 0
    %1733 = vmatmul.mubr.bf16.gmra.mrb[0].mxu0 %v1408
    %v1734 = vpop.f32.mrb[0].mxu0
    %v1735 = vadd.f32 %v1434, %v1734
    %v1736 = vpop.f32.mrb[0].mxu0
    %v1737 = vpop.f32.mrb[0].mxu0
    %v1738 = vadd.f32 %v1434, %v1737
    %v1739 = vpop.f32.mrb[0].mxu0
    %1740 = vmatprep.mubr.bf16.mxu0 0
    %1741 = vmatmul.mubr.bf16.gmra.mrb[0].mxu0 %v1409
    %v1742 = vpop.f32.mrb[0].mxu0
    %v1743 = vadd.f32 %v1434, %v1742
    %v1744 = vpop.f32.mrb[0].mxu0
    %v1745 = vpop.f32.mrb[0].mxu0
    %v1746 = vadd.f32 %v1434, %v1745
    %v1747 = vpop.f32.mrb[0].mxu0
    %1748 = vmatprep.mubr.bf16.mxu0 0
    %1749 = vmatmul.mubr.bf16.gmra.mrb[0].mxu0 %v1410
    %v1750 = vpop.f32.mrb[0].mxu0
    %v1751 = vadd.f32 %v1434, %v1750
    %v1752 = vpop.f32.mrb[0].mxu0
    %v1753 = vpop.f32.mrb[0].mxu0
    %v1754 = vadd.f32 %v1434, %v1753
    %v1755 = vpop.f32.mrb[0].mxu0
    %1756 = vmatprep.mubr.bf16.mxu0 0
    %1757 = vmatmul.mubr.bf16.gmra.mrb[0].mxu0 %v1411
    %v1758 = vpop.f32.mrb[0].mxu0
    %v1759 = vadd.f32 %v1434, %v1758
    %v1760 = vpop.f32.mrb[0].mxu0
    %v1761 = vpop.f32.mrb[0].mxu0
    %v1762 = vadd.f32 %v1434, %v1761
    %v1763 = vpop.f32.mrb[0].mxu0
    %1764 = vmatprep.mubr.bf16.mxu0 0
    %1765 = vmatmul.mubr.bf16.gmra.mrb[0].mxu0 %v1412
    %v1766 = vpop.f32.mrb[0].mxu0
    %v1767 = vadd.f32 %v1434, %v1766
    %v1768 = vpop.f32.mrb[0].mxu0
    %v1769 = vpop.f32.mrb[0].mxu0
    %v1770 = vadd.f32 %v1434, %v1769
    %v1771 = vpop.f32.mrb[0].mxu0
    %1772 = vdwg.mxu0
    %1773 = vst [vmem:[#allocation2] sm:$0xff] %v1519
    %1774 = vst [vmem:[#allocation2 + $0x8] sm:$0xff] %v1522
    %1775 = vst [vmem:[#allocation2 + $0x10] sm:$0xff] %v1527
    %1776 = vst [vmem:[#allocation2 + $0x18] sm:$0xff] %v1530
    %1777 = vst [vmem:[#allocation2 + $0x20] sm:$0xff] %v1535
    %1778 = vst [vmem:[#allocation2 + $0x28] sm:$0xff] %v1538
    %1779 = vst [vmem:[#allocation2 + $0x30] sm:$0xff] %v1543
    %1780 = vst [vmem:[#allocation2 + $0x38] sm:$0xff] %v1546
    %1781 = vst [vmem:[#allocation2 + $0x40] sm:$0xff] %v1551
    %1782 = vst [vmem:[#allocation2 + $0x48] sm:$0xff] %v1554
    %1783 = vst [vmem:[#allocation2 + $0x50] sm:$0xff] %v1559
    %1784 = vst [vmem:[#allocation2 + $0x58] sm:$0xff] %v1562
    %1785 = vst [vmem:[#allocation2 + $0x60] sm:$0xff] %v1567
    %1786 = vst [vmem:[#allocation2 + $0x68] sm:$0xff] %v1570
    %1787 = vst [vmem:[#allocation2 + $0x70] sm:$0xff] %v1575
    %1788 = vst [vmem:[#allocation2 + $0x78] sm:$0xff] %v1578
    %1789 = vst [vmem:[#allocation2 + $0x80] sm:$0xff] %v1583
    %1790 = vst [vmem:[#allocation2 + $0x88] sm:$0xff] %v1586
    %1791 = vst [vmem:[#allocation2 + $0x90] sm:$0xff] %v1591
    %1792 = vst [vmem:[#allocation2 + $0x98] sm:$0xff] %v1594
    %1793 = vst [vmem:[#allocation2 + $0xa0] sm:$0xff] %v1599
    %1794 = vst [vmem:[#allocation2 + $0xa8] sm:$0xff] %v1602
    %1795 = vst [vmem:[#allocation2 + $0xb0] sm:$0xff] %v1607
    %1796 = vst [vmem:[#allocation2 + $0xb8] sm:$0xff] %v1610
    %1797 = vst [vmem:[#allocation2 + $0xc0] sm:$0xff] %v1615
    %1798 = vst [vmem:[#allocation2 + $0xc8] sm:$0xff] %v1618
    %1799 = vst [vmem:[#allocation2 + $0xd0] sm:$0xff] %v1623
    %1800 = vst [vmem:[#allocation2 + $0xd8] sm:$0xff] %v1626
    %1801 = vst [vmem:[#allocation2 + $0xe0] sm:$0xff] %v1631
    %1802 = vst [vmem:[#allocation2 + $0xe8] sm:$0xff] %v1634
    %1803 = vst [vmem:[#allocation2 + $0xf0] sm:$0xff] %v1639
    %1804 = vst [vmem:[#allocation2 + $0xf8] sm:$0xff] %v1642
    %1805 = vst [vmem:[#allocation2 + $0x100] sm:$0xff] %v1647
    %1806 = vst [vmem:[#allocation2 + $0x108] sm:$0xff] %v1650
    %1807 = vst [vmem:[#allocation2 + $0x110] sm:$0xff] %v1655
    %1808 = vst [vmem:[#allocation2 + $0x118] sm:$0xff] %v1658
    %1809 = vst [vmem:[#allocation2 + $0x120] sm:$0xff] %v1663
    %1810 = vst [vmem:[#allocation2 + $0x128] sm:$0xff] %v1666
    %1811 = vst [vmem:[#allocation2 + $0x130] sm:$0xff] %v1671
    %1812 = vst [vmem:[#allocation2 + $0x138] sm:$0xff] %v1674
    %1813 = vst [vmem:[#allocation2 + $0x140] sm:$0xff] %v1679
    %1814 = vst [vmem:[#allocation2 + $0x148] sm:$0xff] %v1682
    %1815 = vst [vmem:[#allocation2 + $0x150] sm:$0xff] %v1687
    %1816 = vst [vmem:[#allocation2 + $0x158] sm:$0xff] %v1690
    %1817 = vst [vmem:[#allocation2 + $0x160] sm:$0xff] %v1695
    %1818 = vst [vmem:[#allocation2 + $0x168] sm:$0xff] %v1698
    %1819 = vst [vmem:[#allocation2 + $0x170] sm:$0xff] %v1703
    %1820 = vst [vmem:[#allocation2 + $0x178] sm:$0xff] %v1706
    %1821 = vst [vmem:[#allocation2 + $0x180] sm:$0xff] %v1711
    %1822 = vst [vmem:[#allocation2 + $0x188] sm:$0xff] %v1714
    %1823 = vst [vmem:[#allocation2 + $0x190] sm:$0xff] %v1719
    %1824 = vst [vmem:[#allocation2 + $0x198] sm:$0xff] %v1722
    %1825 = vst [vmem:[#allocation2 + $0x1a0] sm:$0xff] %v1727
    %1826 = vst [vmem:[#allocation2 + $0x1a8] sm:$0xff] %v1730
    %1827 = vst [vmem:[#allocation2 + $0x1b0] sm:$0xff] %v1735
    %1828 = vst [vmem:[#allocation2 + $0x1b8] sm:$0xff] %v1738
    %1829 = vst [vmem:[#allocation2 + $0x1c0] sm:$0xff] %v1743
    %1830 = vst [vmem:[#allocation2 + $0x1c8] sm:$0xff] %v1746
    %1831 = vst [vmem:[#allocation2 + $0x1d0] sm:$0xff] %v1751
    %1832 = vst [vmem:[#allocation2 + $0x1d8] sm:$0xff] %v1754
    %1833 = vst [vmem:[#allocation2 + $0x1e0] sm:$0xff] %v1759
    %1834 = vst [vmem:[#allocation2 + $0x1e8] sm:$0xff] %v1762
    %1835 = vst [vmem:[#allocation2 + $0x1f0] sm:$0xff] %v1767
    %1836 = vst [vmem:[#allocation2 + $0x1f8] sm:$0xff] %v1770
    // Predicated region
    $region30: #{_lambda_.4} parent=1 // pred_check
      _
    $region31: #{_lambda_.4} parent=1 // pred_check_branch
      %1838 = sbr.rel (0) target = $region33
    $region32: #{_lambda_.4} parent=1 // pred_region
      %s1840 = ssub.s32 8192, 8192
      %1841 = vsyncadd [#allocation3], %s1840
      %s1842 = sshll.u32 [#allocation2], 4
      %s1843 = int_to_ptr.vmem [resolvable:$true] %s1842
      %1848 = dma.vmem_to_hbm [thread:$0]  %s1843, 8192, %s7, [#allocation3], 128, 128, 8
    $region33: #{_lambda_.4} parent=1 // pred_fallthru
      _
    // Predicated region
    $region34: #{_lambda_.4} parent=1 // pred_check
      _
    $region35: #{_lambda_.4} parent=1 // pred_check_branch
      %1850 = sbr.rel (0) target = $region37
    $region36: #{_lambda_.4} parent=1 // pred_region
      %1851 = dma.done [#allocation3], 8192
    $region37: #{_lambda_.4} parent=1 // pred_fallthru
      _
    %1852 = vsyncpa [#allocation3], 1

// kernel: _lambda_.5
$region0: #{_lambda_.5}
  #allocation0 [shape = 'u32[]', space=smem, size = 0x4, offset = 0x4, fixed_abs, tag = 'smem constant byte address 0x4 - core index']
  #allocation1 [shape = 'u32[144,128]{1,0:T(1,128)}', space=vmem, size = 0x12000, scoped, tag = 'internal scratch']
  %s0 = inlined_call_operand.vmem [shape: bf16[128,192], index: 0, kind: input, shape index: {}]
  %s1 = inlined_call_operand.vmem [shape: bf16[192,128], index: 1, kind: input, shape index: {}]
  %s2 = inlined_call_operand.vmem [shape: f32[1,128], index: 2, kind: input, shape index: {}]
  %s3 = inlined_call_operand.vmem [shape: bf16[128,128], index: 3, kind: input, shape index: {}]
  %s4 = inlined_call_operand.vmem [shape: f32[1,128], index: 4, kind: input, shape index: {}]
  %s5 = inlined_call_operand.vmem [shape: bf16[128,256], index: 5, kind: input, shape index: {}]
  %s6 = inlined_call_operand.vmem [shape: f32[1,256], index: 6, kind: input, shape index: {}]
  %s7 = inlined_call_operand.hbm [shape: f32[128,256], index: 7, kind: output, shape index: {}]
  %s8 = sld [smem:[#allocation0]]
  $region38: #{_lambda_.5} parent=0
    _
  %s10 = ssub.s32 1, %s8
  %s11 = scalar_select 0, %s10, %s8
  $region1: #{_lambda_.5} parent=0
    #allocation2 [shape = 'u8[131072]{0}', space=vmem, size = 0x20000, scoped, tag = 'output window, operand 0, single buffered']
    #allocation3 [shape = 's32[1]{0}', space=sflag, size = 0x4, scoped, tag = 'scoped memory for _lambda_.5']
    %12 = vsyncpa [#allocation3], 0
    // Predicated region
    $region2: #{_lambda_.5} parent=1 // pred_check
      _
    $region3: #{_lambda_.5} parent=1 // pred_check_branch
      %14 = sbr.rel (0) target = $region5
    $region4: #{_lambda_.5} parent=1 // pred_region
      _
    $region5: #{_lambda_.5} parent=1 // pred_fallthru
      _
    // Predicated region
    $region6: #{_lambda_.5} parent=1 // pred_check
      _
    $region7: #{_lambda_.5} parent=1 // pred_check_branch
      %16 = sbr.rel (0) target = $region9
    $region8: #{_lambda_.5} parent=1 // pred_region
      _
    $region9: #{_lambda_.5} parent=1 // pred_fallthru
      _
    // Predicated region
    $region10: #{_lambda_.5} parent=1 // pred_check
      _
    $region11: #{_lambda_.5} parent=1 // pred_check_branch
      %18 = sbr.rel (0) target = $region13
    $region12: #{_lambda_.5} parent=1 // pred_region
      _
    $region13: #{_lambda_.5} parent=1 // pred_fallthru
      _
    // Predicated region
    $region14: #{_lambda_.5} parent=1 // pred_check
      _
    $region15: #{_lambda_.5} parent=1 // pred_check_branch
      %20 = sbr.rel (0) target = $region17
    $region16: #{_lambda_.5} parent=1 // pred_region
      _
    $region17: #{_lambda_.5} parent=1 // pred_fallthru
      _
    // Predicated region
    $region18: #{_lambda_.5} parent=1 // pred_check
      _
    $region19: #{_lambda_.5} parent=1 // pred_check_branch
      %22 = sbr.rel (0) target = $region21
    $region20: #{_lambda_.5} parent=1 // pred_region
      _
    $region21: #{_lambda_.5} parent=1 // pred_fallthru
      _
    // Predicated region
    $region22: #{_lambda_.5} parent=1 // pred_check
      _
    $region23: #{_lambda_.5} parent=1 // pred_check_branch
      %24 = sbr.rel (0) target = $region25
    $region24: #{_lambda_.5} parent=1 // pred_region
      _
    $region25: #{_lambda_.5} parent=1 // pred_fallthru
      _
    // Predicated region
    $region26: #{_lambda_.5} parent=1 // pred_check
      _
    $region27: #{_lambda_.5} parent=1 // pred_check_branch
      %26 = sbr.rel (0) target = $region29
    $region28: #{_lambda_.5} parent=1 // pred_region
      _
    $region29: #{_lambda_.5} parent=1 // pred_fallthru
      _
    %v28 = vld [vmem:[%s0] sm:$0xff]
    %v29 = vld [vmem:[%s0 + $0x8] sm:$0xff]
    %v30 = vld [vmem:[%s0 + $0x10] sm:$0xff]
    %v31 = vld [vmem:[%s0 + $0x18] sm:$0xff]
    %v32 = vld [vmem:[%s0 + $0x20] sm:$0xff]
    %v33 = vld [vmem:[%s0 + $0x28] sm:$0xff]
    %v34 = vld [vmem:[%s0 + $0x30] sm:$0xff]
    %v35 = vld [vmem:[%s0 + $0x38] sm:$0xff]
    %v36 = vld [vmem:[%s0 + $0x40] sm:$0xff]
    %v37 = vld [vmem:[%s0 + $0x48] sm:$0xff]
    %v38 = vld [vmem:[%s0 + $0x50] sm:$0xff]
    %v39 = vld [vmem:[%s0 + $0x58] sm:$0xff]
    %v40 = vld [vmem:[%s0 + $0x60] sm:$0xff]
    %v41 = vld [vmem:[%s0 + $0x68] sm:$0xff]
    %v42 = vld [vmem:[%s0 + $0x70] sm:$0xff]
    %v43 = vld [vmem:[%s0 + $0x78] sm:$0xff]
    %v44 = vld [vmem:[%s1] sm:$0xf]
    %v45 = vld [vmem:[%s1 + $0x4] sm:$0xf]
    %v46 = vld [vmem:[%s1 + $0x8] sm:$0xf]
    %v47 = vld [vmem:[%s1 + $0xc] sm:$0xf]
    %v48 = vld [vmem:[%s1 + $0x10] sm:$0xf]
    %v49 = vld [vmem:[%s1 + $0x14] sm:$0xf]
    %v50 = vld [vmem:[%s1 + $0x18] sm:$0xf]
    %v51 = vld [vmem:[%s1 + $0x1c] sm:$0xf]
    %v52 = vld [vmem:[%s1 + $0x20] sm:$0xf]
    %v53 = vld [vmem:[%s1 + $0x24] sm:$0xf]
    %v54 = vld [vmem:[%s1 + $0x28] sm:$0xf]
    %v55 = vld [vmem:[%s1 + $0x2c] sm:$0xf]
    %v56 = vld [vmem:[%s1 + $0x30] sm:$0xf]
    %v57 = vld [vmem:[%s1 + $0x34] sm:$0xf]
    %v58 = vld [vmem:[%s1 + $0x38] sm:$0xf]
    %v59 = vld [vmem:[%s1 + $0x3c] sm:$0xf]
    %v60 = vld [vmem:[%s1 + $0x40] sm:$0xf]
    %v61 = vld [vmem:[%s1 + $0x44] sm:$0xf]
    %v62 = vld [vmem:[%s1 + $0x48] sm:$0xf]
    %v63 = vld [vmem:[%s1 + $0x4c] sm:$0xf]
    %v64 = vld [vmem:[%s1 + $0x50] sm:$0xf]
    %v65 = vld [vmem:[%s1 + $0x54] sm:$0xf]
    %v66 = vld [vmem:[%s1 + $0x58] sm:$0xf]
    %v67 = vld [vmem:[%s1 + $0x5c] sm:$0xf]
    %v68 = vld [vmem:[%s2] sm:$0x1]
    %v70 = vlaneseq
    %v71 = vshrl.u32 %v70, 7
    %v72 = vsub.s32 0, %v71
    %v73 = vrot.slane %v68, %v72
    %v91 = vunpack.c.l.b16 %v28
    %v92 = vunpack.c.h.b16 %v28
    %v93 = vunpack.c.l.b16 %v29
    %v94 = vunpack.c.h.b16 %v29
    %v95 = vunpack.c.l.b16 %v30
    %v96 = vunpack.c.h.b16 %v30
    %v97 = vunpack.c.l.b16 %v31
    %v98 = vunpack.c.h.b16 %v31
    %v99 = vunpack.c.l.b16 %v32
    %v100 = vunpack.c.h.b16 %v32
    %v101 = vunpack.c.l.b16 %v33
    %v102 = vunpack.c.h.b16 %v33
    %v103 = vunpack.c.l.b16 %v34
    %v104 = vunpack.c.h.b16 %v34
    %v105 = vunpack.c.l.b16 %v35
    %v106 = vunpack.c.h.b16 %v35
    %v107 = vunpack.c.l.b16 %v36
    %v108 = vunpack.c.h.b16 %v36
    %v109 = vunpack.c.l.b16 %v37
    %v110 = vunpack.c.h.b16 %v37
    %v111 = vunpack.c.l.b16 %v38
    %v112 = vunpack.c.h.b16 %v38
    %v113 = vunpack.c.l.b16 %v39
    %v114 = vunpack.c.h.b16 %v39
    %v115 = vunpack.c.l.b16 %v40
    %v116 = vunpack.c.h.b16 %v40
    %v117 = vunpack.c.l.b16 %v41
    %v118 = vunpack.c.h.b16 %v41
    %v119 = vunpack.c.l.b16 %v42
    %v120 = vunpack.c.h.b16 %v42
    %v121 = vunpack.c.l.b16 %v43
    %v122 = vunpack.c.h.b16 %v43
    %v123 = vpack.c.b16 %v93, %v91
    %v124 = vpack.c.b16 %v94, %v92
    %v125 = vpack.c.b16 %v97, %v95
    %v126 = vpack.c.b16 %v98, %v96
    %v127 = vpack.c.b16 %v101, %v99
    %v128 = vpack.c.b16 %v102, %v100
    %v129 = vpack.c.b16 %v105, %v103
    %v130 = vpack.c.b16 %v106, %v104
    %v131 = vpack.c.b16 %v109, %v107
    %v132 = vpack.c.b16 %v110, %v108
    %v133 = vpack.c.b16 %v113, %v111
    %v134 = vpack.c.b16 %v114, %v112
    %v135 = vpack.c.b16 %v117, %v115
    %v136 = vpack.c.b16 %v118, %v116
    %v137 = vpack.c.b16 %v121, %v119
    %v138 = vpack.c.b16 %v122, %v120
    %v171 = vunpack.c.l.b16 %v44
    %v172 = vunpack.c.l.b16 %v45
    %v173 = vunpack.c.l.b16 %v46
    %v174 = vunpack.c.l.b16 %v47
    %v175 = vunpack.c.l.b16 %v48
    %v176 = vunpack.c.l.b16 %v49
    %v177 = vunpack.c.l.b16 %v50
    %v178 = vunpack.c.l.b16 %v51
    %v179 = vunpack.c.l.b16 %v52
    %v180 = vunpack.c.l.b16 %v53
    %v181 = vunpack.c.l.b16 %v54
    %v182 = vunpack.c.l.b16 %v55
    %v183 = vunpack.c.l.b16 %v56
    %v184 = vunpack.c.l.b16 %v57
    %v185 = vunpack.c.l.b16 %v58
    %v186 = vunpack.c.l.b16 %v59
    %v187 = vunpack.c.l.b16 %v60
    %v188 = vunpack.c.l.b16 %v61
    %v189 = vunpack.c.l.b16 %v62
    %v190 = vunpack.c.l.b16 %v63
    %v191 = vunpack.c.l.b16 %v64
    %v192 = vunpack.c.l.b16 %v65
    %v193 = vunpack.c.l.b16 %v66
    %v194 = vunpack.c.l.b16 %v67
    %v195 = vpack.c.b16 %v172, %v171
    %v196 = vpack.c.b16 %v174, %v173
    %v197 = vpack.c.b16 %v176, %v175
    %v198 = vpack.c.b16 %v178, %v177
    %v199 = vpack.c.b16 %v180, %v179
    %v200 = vpack.c.b16 %v182, %v181
    %v201 = vpack.c.b16 %v184, %v183
    %v202 = vpack.c.b16 %v186, %v185
    %v203 = vpack.c.b16 %v188, %v187
    %v204 = vpack.c.b16 %v190, %v189
    %v205 = vpack.c.b16 %v192, %v191
    %v206 = vpack.c.b16 %v194, %v193
    %vm219 = vcmask 523264
    %v221 = vsel %vm219, %v124, 0
    %v224 = vsel %vm219, %v126, 0
    %v227 = vsel %vm219, %v128, 0
    %v230 = vsel %vm219, %v130, 0
    %v233 = vsel %vm219, %v132, 0
    %v236 = vsel %vm219, %v134, 0
    %v239 = vsel %vm219, %v136, 0
    %v242 = vsel %vm219, %v138, 0
    %244 = vmatprep.subr.bf16.mxu0 0
    %245 = vmatpush1.bf16.msra.mxu0 %v195
    %246 = vmatprep.subr.bf16.mxu0 0
    %247 = vmatpush1.bf16.msra.mxu0 %v196
    %248 = vmatprep.subr.bf16.mxu0 0
    %249 = vmatpush1.bf16.msra.mxu0 %v197
    %250 = vmatprep.subr.bf16.mxu0 0
    %251 = vmatpush1.bf16.msra.mxu0 %v198
    %252 = vmatprep.subr.bf16.mxu0 0
    %253 = vmatpush1.bf16.msra.mxu0 %v199
    %254 = vmatprep.subr.bf16.mxu0 0
    %255 = vmatpush1.bf16.msra.mxu0 %v200
    %256 = vmatprep.subr.bf16.mxu0 0
    %257 = vmatpush1.bf16.msra.mxu0 %v201
    %258 = vmatprep.subr.bf16.mxu0 0
    %259 = vmatpush1.bf16.msra.mxu0 %v202
    %260 = vmatprep.subr.bf16.mxu0 0
    %261 = vmatpush1.bf16.msra.mxu0 %v203
    %262 = vmatprep.subr.bf16.mxu0 0
    %263 = vmatpush1.bf16.msra.mxu0 %v204
    %264 = vmatprep.subr.bf16.mxu0 0
    %265 = vmatpush1.bf16.msra.mxu0 %v205
    %266 = vmatprep.subr.bf16.mxu0 0
    %267 = vmatpush1.bf16.msra.mxu0 %v206
    %268 = vmatprep.subr.bf16.mxu0 0
    %269 = vmatpush1.bf16.msra.mxu0 0
    %270 = vmatprep.subr.bf16.mxu0 0
    %271 = vmatpush1.bf16.msra.mxu0 0
    %272 = vmatprep.subr.bf16.mxu0 0
    %273 = vmatpush1.bf16.msra.mxu0 0
    %274 = vmatprep.subr.bf16.mxu0 0
    %275 = vmatpush1.bf16.msra.mxu0 0
    %276 = vmatprep.mubr.bf16.mxu0 %v221
    %277 = vmatmul.mubr.bf16.gmra.mrb[0].mxu0 %v123
    %v278 = vpop.f32.mrb[0].mxu0
    %v279 = vadd.f32 %v73, %v278
    %v280 = vpop.f32.mrb[0].mxu0
    %v281 = vpop.f32.mrb[0].mxu0
    %v282 = vadd.f32 %v73, %v281
    %v283 = vpop.f32.mrb[0].mxu0
    %284 = vmatprep.mubr.bf16.mxu0 %v224
    %285 = vmatmul.mubr.bf16.gmra.mrb[0].mxu0 %v125
    %v286 = vpop.f32.mrb[0].mxu0
    %v287 = vadd.f32 %v73, %v286
    %v288 = vpop.f32.mrb[0].mxu0
    %v289 = vpop.f32.mrb[0].mxu0
    %v290 = vadd.f32 %v73, %v289
    %v291 = vpop.f32.mrb[0].mxu0
    %292 = vmatprep.mubr.bf16.mxu0 %v227
    %293 = vmatmul.mubr.bf16.gmra.mrb[0].mxu0 %v127
    %v294 = vpop.f32.mrb[0].mxu0
    %v295 = vadd.f32 %v73, %v294
    %v296 = vpop.f32.mrb[0].mxu0
    %v297 = vpop.f32.mrb[0].mxu0
    %v298 = vadd.f32 %v73, %v297
    %v299 = vpop.f32.mrb[0].mxu0
    %300 = vmatprep.mubr.bf16.mxu0 %v230
    %301 = vmatmul.mubr.bf16.gmra.mrb[0].mxu0 %v129
    %v302 = vpop.f32.mrb[0].mxu0
    %v303 = vadd.f32 %v73, %v302
    %v304 = vpop.f32.mrb[0].mxu0
    %v305 = vpop.f32.mrb[0].mxu0
    %v306 = vadd.f32 %v73, %v305
    %v307 = vpop.f32.mrb[0].mxu0
    %308 = vmatprep.mubr.bf16.mxu0 %v233
    %309 = vmatmul.mubr.bf16.gmra.mrb[0].mxu0 %v131
    %v310 = vpop.f32.mrb[0].mxu0
    %v311 = vadd.f32 %v73, %v310
    %v312 = vpop.f32.mrb[0].mxu0
    %v313 = vpop.f32.mrb[0].mxu0
    %v314 = vadd.f32 %v73, %v313
    %v315 = vpop.f32.mrb[0].mxu0
    %316 = vmatprep.mubr.bf16.mxu0 %v236
    %317 = vmatmul.mubr.bf16.gmra.mrb[0].mxu0 %v133
    %v318 = vpop.f32.mrb[0].mxu0
    %v319 = vadd.f32 %v73, %v318
    %v320 = vpop.f32.mrb[0].mxu0
    %v321 = vpop.f32.mrb[0].mxu0
    %v322 = vadd.f32 %v73, %v321
    %v323 = vpop.f32.mrb[0].mxu0
    %324 = vmatprep.mubr.bf16.mxu0 %v239
    %325 = vmatmul.mubr.bf16.gmra.mrb[0].mxu0 %v135
    %v326 = vpop.f32.mrb[0].mxu0
    %v327 = vadd.f32 %v73, %v326
    %v328 = vpop.f32.mrb[0].mxu0
    %v329 = vpop.f32.mrb[0].mxu0
    %v330 = vadd.f32 %v73, %v329
    %v331 = vpop.f32.mrb[0].mxu0
    %332 = vmatprep.mubr.bf16.mxu0 %v242
    %333 = vmatmul.mubr.bf16.gmra.mrb[0].mxu0 %v137
    %v334 = vpop.f32.mrb[0].mxu0
    %v335 = vadd.f32 %v73, %v334
    %v336 = vpop.f32.mrb[0].mxu0
    %v337 = vpop.f32.mrb[0].mxu0
    %v338 = vadd.f32 %v73, %v337
    %v339 = vpop.f32.mrb[0].mxu0
    %340 = vdwg.mxu0
    %v341 = vpack.c.bf16 %v282, %v279
    %v342 = vpack.c.bf16 %v290, %v287
    %v343 = vpack.c.bf16 %v298, %v295
    %v344 = vpack.c.bf16 %v306, %v303
    %v345 = vpack.c.bf16 %v314, %v311
    %v346 = vpack.c.bf16 %v322, %v319
    %v347 = vpack.c.bf16 %v330, %v327
    %v348 = vpack.c.bf16 %v338, %v335
    %v349 = vld [vmem:[%s3] sm:$0xf]
    %v350 = vld [vmem:[%s3 + $0x4] sm:$0xf]
    %v351 = vld [vmem:[%s3 + $0x8] sm:$0xf]
    %v352 = vld [vmem:[%s3 + $0xc] sm:$0xf]
    %v353 = vld [vmem:[%s3 + $0x10] sm:$0xf]
    %v354 = vld [vmem:[%s3 + $0x14] sm:$0xf]
    %v355 = vld [vmem:[%s3 + $0x18] sm:$0xf]
    %v356 = vld [vmem:[%s3 + $0x1c] sm:$0xf]
    %v357 = vld [vmem:[%s3 + $0x20] sm:$0xf]
    %v358 = vld [vmem:[%s3 + $0x24] sm:$0xf]
    %v359 = vld [vmem:[%s3 + $0x28] sm:$0xf]
    %v360 = vld [vmem:[%s3 + $0x2c] sm:$0xf]
    %v361 = vld [vmem:[%s3 + $0x30] sm:$0xf]
    %v362 = vld [vmem:[%s3 + $0x34] sm:$0xf]
    %v363 = vld [vmem:[%s3 + $0x38] sm:$0xf]
    %v364 = vld [vmem:[%s3 + $0x3c] sm:$0xf]
    %v365 = vld [vmem:[%s4] sm:$0x1]
    %v367 = vlaneseq
    %v368 = vshrl.u32 %v367, 7
    %v369 = vsub.s32 0, %v368
    %v370 = vrot.slane %v365, %v369
    %v388 = vunpack.c.l.b16 %v349
    %v389 = vunpack.c.l.b16 %v350
    %v390 = vunpack.c.l.b16 %v351
    %v391 = vunpack.c.l.b16 %v352
    %v392 = vunpack.c.l.b16 %v353
    %v393 = vunpack.c.l.b16 %v354
    %v394 = vunpack.c.l.b16 %v355
    %v395 = vunpack.c.l.b16 %v356
    %v396 = vunpack.c.l.b16 %v357
    %v397 = vunpack.c.l.b16 %v358
    %v398 = vunpack.c.l.b16 %v359
    %v399 = vunpack.c.l.b16 %v360
    %v400 = vunpack.c.l.b16 %v361
    %v401 = vunpack.c.l.b16 %v362
    %v402 = vunpack.c.l.b16 %v363
    %v403 = vunpack.c.l.b16 %v364
    %v404 = vpack.c.b16 %v389, %v388
    %v405 = vpack.c.b16 %v391, %v390
    %v406 = vpack.c.b16 %v393, %v392
    %v407 = vpack.c.b16 %v395, %v394
    %v408 = vpack.c.b16 %v397, %v396
    %v409 = vpack.c.b16 %v399, %v398
    %v410 = vpack.c.b16 %v401, %v400
    %v411 = vpack.c.b16 %v403, %v402
    %420 = vmatprep.subr.bf16.mxu0 0
    %421 = vmatpush1.bf16.msra.mxu0 %v404
    %422 = vmatprep.subr.bf16.mxu0 0
    %423 = vmatpush1.bf16.msra.mxu0 %v405
    %424 = vmatprep.subr.bf16.mxu0 0
    %425 = vmatpush1.bf16.msra.mxu0 %v406
    %426 = vmatprep.subr.bf16.mxu0 0
    %427 = vmatpush1.bf16.msra.mxu0 %v407
    %428 = vmatprep.subr.bf16.mxu0 0
    %429 = vmatpush1.bf16.msra.mxu0 %v408
    %430 = vmatprep.subr.bf16.mxu0 0
    %431 = vmatpush1.bf16.msra.mxu0 %v409
    %432 = vmatprep.subr.bf16.mxu0 0
    %433 = vmatpush1.bf16.msra.mxu0 %v410
    %434 = vmatprep.subr.bf16.mxu0 0
    %435 = vmatpush1.bf16.msra.mxu0 %v411
    %436 = vmatprep.subr.bf16.mxu0 0
    %437 = vmatpush1.bf16.msra.mxu0 0
    %438 = vmatprep.subr.bf16.mxu0 0
    %439 = vmatpush1.bf16.msra.mxu0 0
    %440 = vmatprep.subr.bf16.mxu0 0
    %441 = vmatpush1.bf16.msra.mxu0 0
    %442 = vmatprep.subr.bf16.mxu0 0
    %443 = vmatpush1.bf16.msra.mxu0 0
    %444 = vmatprep.subr.bf16.mxu0 0
    %445 = vmatpush1.bf16.msra.mxu0 0
    %446 = vmatprep.subr.bf16.mxu0 0
    %447 = vmatpush1.bf16.msra.mxu0 0
    %448 = vmatprep.subr.bf16.mxu0 0
    %449 = vmatpush1.bf16.msra.mxu0 0
    %450 = vmatprep.subr.bf16.mxu0 0
    %451 = vmatpush1.bf16.msra.mxu0 0
    %452 = vmatprep.mubr.bf16.mxu0 0
    %453 = vmatmul.mubr.bf16.gmra.mrb[0].mxu0 %v341
    %v454 = vpop.f32.mrb[0].mxu0
    %v455 = vadd.f32 %v370, %v454
    %v456 = vpop.f32.mrb[0].mxu0
    %v457 = vpop.f32.mrb[0].mxu0
    %v458 = vadd.f32 %v370, %v457
    %v459 = vpop.f32.mrb[0].mxu0
    %460 = vmatprep.mubr.bf16.mxu0 0
    %461 = vmatmul.mubr.bf16.gmra.mrb[0].mxu0 %v342
    %v462 = vpop.f32.mrb[0].mxu0
    %v463 = vadd.f32 %v370, %v462
    %v464 = vpop.f32.mrb[0].mxu0
    %v465 = vpop.f32.mrb[0].mxu0
    %v466 = vadd.f32 %v370, %v465
    %v467 = vpop.f32.mrb[0].mxu0
    %468 = vmatprep.mubr.bf16.mxu0 0
    %469 = vmatmul.mubr.bf16.gmra.mrb[0].mxu0 %v343
    %v470 = vpop.f32.mrb[0].mxu0
    %v471 = vadd.f32 %v370, %v470
    %v472 = vpop.f32.mrb[0].mxu0
    %v473 = vpop.f32.mrb[0].mxu0
    %v474 = vadd.f32 %v370, %v473
    %v475 = vpop.f32.mrb[0].mxu0
    %476 = vmatprep.mubr.bf16.mxu0 0
    %477 = vmatmul.mubr.bf16.gmra.mrb[0].mxu0 %v344
    %v478 = vpop.f32.mrb[0].mxu0
    %v479 = vadd.f32 %v370, %v478
    %v480 = vpop.f32.mrb[0].mxu0
    %v481 = vpop.f32.mrb[0].mxu0
    %v482 = vadd.f32 %v370, %v481
    %v483 = vpop.f32.mrb[0].mxu0
    %484 = vmatprep.mubr.bf16.mxu0 0
    %485 = vmatmul.mubr.bf16.gmra.mrb[0].mxu0 %v345
    %v486 = vpop.f32.mrb[0].mxu0
    %v487 = vadd.f32 %v370, %v486
    %v488 = vpop.f32.mrb[0].mxu0
    %v489 = vpop.f32.mrb[0].mxu0
    %v490 = vadd.f32 %v370, %v489
    %v491 = vpop.f32.mrb[0].mxu0
    %492 = vmatprep.mubr.bf16.mxu0 0
    %493 = vmatmul.mubr.bf16.gmra.mrb[0].mxu0 %v346
    %v494 = vpop.f32.mrb[0].mxu0
    %v495 = vadd.f32 %v370, %v494
    %v496 = vpop.f32.mrb[0].mxu0
    %v497 = vpop.f32.mrb[0].mxu0
    %v498 = vadd.f32 %v370, %v497
    %v499 = vpop.f32.mrb[0].mxu0
    %500 = vmatprep.mubr.bf16.mxu0 0
    %501 = vmatmul.mubr.bf16.gmra.mrb[0].mxu0 %v347
    %v502 = vpop.f32.mrb[0].mxu0
    %v503 = vadd.f32 %v370, %v502
    %v504 = vpop.f32.mrb[0].mxu0
    %v505 = vpop.f32.mrb[0].mxu0
    %v506 = vadd.f32 %v370, %v505
    %v507 = vpop.f32.mrb[0].mxu0
    %508 = vmatprep.mubr.bf16.mxu0 0
    %509 = vmatmul.mubr.bf16.gmra.mrb[0].mxu0 %v348
    %v510 = vpop.f32.mrb[0].mxu0
    %v511 = vadd.f32 %v370, %v510
    %v512 = vpop.f32.mrb[0].mxu0
    %v513 = vpop.f32.mrb[0].mxu0
    %v514 = vadd.f32 %v370, %v513
    %v515 = vpop.f32.mrb[0].mxu0
    %516 = vdwg.mxu0
    %v517 = vmul.f32 %v455, 0.5
    %v518 = vmul.f32 %v458, 0.5
    %v519 = vmul.f32 %v463, 0.5
    %v520 = vmul.f32 %v466, 0.5
    %v521 = vmul.f32 %v471, 0.5
    %v522 = vmul.f32 %v474, 0.5
    %v523 = vmul.f32 %v479, 0.5
    %v524 = vmul.f32 %v482, 0.5
    %v525 = vmul.f32 %v487, 0.5
    %v526 = vmul.f32 %v490, 0.5
    %v527 = vmul.f32 %v495, 0.5
    %v528 = vmul.f32 %v498, 0.5
    %v529 = vmul.f32 %v503, 0.5
    %v530 = vmul.f32 %v506, 0.5
    %v531 = vmul.f32 %v511, 0.5
    %v532 = vmul.f32 %v514, 0.5
    %v533 = vmul.f32 %v455, 0.70710677
    %v534 = vmul.f32 %v458, 0.70710677
    %v535 = vmul.f32 %v463, 0.70710677
    %v536 = vmul.f32 %v466, 0.70710677
    %v537 = vmul.f32 %v471, 0.70710677
    %v538 = vmul.f32 %v474, 0.70710677
    %v539 = vmul.f32 %v479, 0.70710677
    %v540 = vmul.f32 %v482, 0.70710677
    %v541 = vmul.f32 %v487, 0.70710677
    %v542 = vmul.f32 %v490, 0.70710677
    %v543 = vmul.f32 %v495, 0.70710677
    %v544 = vmul.f32 %v498, 0.70710677
    %v545 = vmul.f32 %v503, 0.70710677
    %v546 = vmul.f32 %v506, 0.70710677
    %v547 = vmul.f32 %v511, 0.70710677
    %v548 = vmul.f32 %v514, 0.70710677
    %v549 = verf.f32.pop %v533
    %v550 = verf.f32.pop %v534
    %v551 = verf.f32.pop %v535
    %v552 = verf.f32.pop %v536
    %v553 = verf.f32.pop %v537
    %v554 = verf.f32.pop %v538
    %v555 = verf.f32.pop %v539
    %v556 = verf.f32.pop %v540
    %v557 = verf.f32.pop %v541
    %v558 = verf.f32.pop %v542
    %v559 = verf.f32.pop %v543
    %v560 = verf.f32.pop %v544
    %v561 = verf.f32.pop %v545
    %v562 = verf.f32.pop %v546
    %v563 = verf.f32.pop %v547
    %v564 = verf.f32.pop %v548
    %v565 = vadd.f32 %v549, 1.0
    %v566 = vadd.f32 %v550, 1.0
    %v567 = vadd.f32 %v551, 1.0
    %v568 = vadd.f32 %v552, 1.0
    %v569 = vadd.f32 %v553, 1.0
    %v570 = vadd.f32 %v554, 1.0
    %v571 = vadd.f32 %v555, 1.0
    %v572 = vadd.f32 %v556, 1.0
    %v573 = vadd.f32 %v557, 1.0
    %v574 = vadd.f32 %v558, 1.0
    %v575 = vadd.f32 %v559, 1.0
    %v576 = vadd.f32 %v560, 1.0
    %v577 = vadd.f32 %v561, 1.0
    %v578 = vadd.f32 %v562, 1.0
    %v579 = vadd.f32 %v563, 1.0
    %v580 = vadd.f32 %v564, 1.0
    %v581 = vmul.f32 %v517, %v565
    %v582 = vmul.f32 %v518, %v566
    %v583 = vmul.f32 %v519, %v567
    %v584 = vmul.f32 %v520, %v568
    %v585 = vmul.f32 %v521, %v569
    %v586 = vmul.f32 %v522, %v570
    %v587 = vmul.f32 %v523, %v571
    %v588 = vmul.f32 %v524, %v572
    %v589 = vmul.f32 %v525, %v573
    %v590 = vmul.f32 %v526, %v574
    %v591 = vmul.f32 %v527, %v575
    %v592 = vmul.f32 %v528, %v576
    %v593 = vmul.f32 %v529, %v577
    %v594 = vmul.f32 %v530, %v578
    %v595 = vmul.f32 %v531, %v579
    %v596 = vmul.f32 %v532, %v580
    %v597 = vpack.c.bf16 %v582, %v581
    %v598 = vpack.c.bf16 %v584, %v583
    %v599 = vpack.c.bf16 %v586, %v585
    %v600 = vpack.c.bf16 %v588, %v587
    %v601 = vpack.c.bf16 %v590, %v589
    %v602 = vpack.c.bf16 %v592, %v591
    %v603 = vpack.c.bf16 %v594, %v593
    %v604 = vpack.c.bf16 %v596, %v595
    %v605 = vld [vmem:[%s5] sm:$0xff]
    %v606 = vld [vmem:[%s5 + $0x8] sm:$0xff]
    %v607 = vld [vmem:[%s5 + $0x10] sm:$0xff]
    %v608 = vld [vmem:[%s5 + $0x18] sm:$0xff]
    %v609 = vld [vmem:[%s5 + $0x20] sm:$0xff]
    %v610 = vld [vmem:[%s5 + $0x28] sm:$0xff]
    %v611 = vld [vmem:[%s5 + $0x30] sm:$0xff]
    %v612 = vld [vmem:[%s5 + $0x38] sm:$0xff]
    %v613 = vld [vmem:[%s5 + $0x40] sm:$0xff]
    %v614 = vld [vmem:[%s5 + $0x48] sm:$0xff]
    %v615 = vld [vmem:[%s5 + $0x50] sm:$0xff]
    %v616 = vld [vmem:[%s5 + $0x58] sm:$0xff]
    %v617 = vld [vmem:[%s5 + $0x60] sm:$0xff]
    %v618 = vld [vmem:[%s5 + $0x68] sm:$0xff]
    %v619 = vld [vmem:[%s5 + $0x70] sm:$0xff]
    %v620 = vld [vmem:[%s5 + $0x78] sm:$0xff]
    %v621 = vld [vmem:[%s6] sm:$0x3]
    %v623 = vlaneseq
    %v624 = vshrl.u32 %v623, 7
    %v625 = vsub.s32 0, %v624
    %v626 = vrot.slane %v621, %v625
    %v627 = vlaneseq
    %v628 = vshrl.u32 %v627, 7
    %v629 = vsub.s32 1, %v628
    %v630 = vrot.slane %v621, %v629
    %v649 = vunpack.c.l.b16 %v605
    %v650 = vunpack.c.h.b16 %v605
    %v651 = vunpack.c.l.b16 %v606
    %v652 = vunpack.c.h.b16 %v606
    %v653 = vunpack.c.l.b16 %v607
    %v654 = vunpack.c.h.b16 %v607
    %v655 = vunpack.c.l.b16 %v608
    %v656 = vunpack.c.h.b16 %v608
    %v657 = vunpack.c.l.b16 %v609
    %v658 = vunpack.c.h.b16 %v609
    %v659 = vunpack.c.l.b16 %v610
    %v660 = vunpack.c.h.b16 %v610
    %v661 = vunpack.c.l.b16 %v611
    %v662 = vunpack.c.h.b16 %v611
    %v663 = vunpack.c.l.b16 %v612
    %v664 = vunpack.c.h.b16 %v612
    %v665 = vunpack.c.l.b16 %v613
    %v666 = vunpack.c.h.b16 %v613
    %v667 = vunpack.c.l.b16 %v614
    %v668 = vunpack.c.h.b16 %v614
    %v669 = vunpack.c.l.b16 %v615
    %v670 = vunpack.c.h.b16 %v615
    %v671 = vunpack.c.l.b16 %v616
    %v672 = vunpack.c.h.b16 %v616
    %v673 = vunpack.c.l.b16 %v617
    %v674 = vunpack.c.h.b16 %v617
    %v675 = vunpack.c.l.b16 %v618
    %v676 = vunpack.c.h.b16 %v618
    %v677 = vunpack.c.l.b16 %v619
    %v678 = vunpack.c.h.b16 %v619
    %v679 = vunpack.c.l.b16 %v620
    %v680 = vunpack.c.h.b16 %v620
    %v681 = vpack.c.b16 %v651, %v649
    %v682 = vpack.c.b16 %v652, %v650
    %v683 = vpack.c.b16 %v655, %v653
    %v684 = vpack.c.b16 %v656, %v654
    %v685 = vpack.c.b16 %v659, %v657
    %v686 = vpack.c.b16 %v660, %v658
    %v687 = vpack.c.b16 %v663, %v661
    %v688 = vpack.c.b16 %v664, %v662
    %v689 = vpack.c.b16 %v667, %v665
    %v690 = vpack.c.b16 %v668, %v666
    %v691 = vpack.c.b16 %v671, %v669
    %v692 = vpack.c.b16 %v672, %v670
    %v693 = vpack.c.b16 %v675, %v673
    %v694 = vpack.c.b16 %v676, %v674
    %v695 = vpack.c.b16 %v679, %v677
    %v696 = vpack.c.b16 %v680, %v678
    %713 = vmatprep.subr.bf16.mxu0 %v682
    %714 = vmatpush1.bf16.msra.mxu0 %v681
    %715 = vmatprep.subr.bf16.mxu0 %v684
    %716 = vmatpush1.bf16.msra.mxu0 %v683
    %717 = vmatprep.subr.bf16.mxu0 %v686
    %718 = vmatpush1.bf16.msra.mxu0 %v685
    %719 = vmatprep.subr.bf16.mxu0 %v688
    %720 = vmatpush1.bf16.msra.mxu0 %v687
    %721 = vmatprep.subr.bf16.mxu0 %v690
    %722 = vmatpush1.bf16.msra.mxu0 %v689
    %723 = vmatprep.subr.bf16.mxu0 %v692
    %724 = vmatpush1.bf16.msra.mxu0 %v691
    %725 = vmatprep.subr.bf16.mxu0 %v694
    %726 = vmatpush1.bf16.msra.mxu0 %v693
    %727 = vmatprep.subr.bf16.mxu0 %v696
    %728 = vmatpush1.bf16.msra.mxu0 %v695
    %729 = vmatprep.subr.bf16.mxu0 0
    %730 = vmatpush1.bf16.msra.mxu0 0
    %731 = vmatprep.subr.bf16.mxu0 0
    %732 = vmatpush1.bf16.msra.mxu0 0
    %733 = vmatprep.subr.bf16.mxu0 0
    %734 = vmatpush1.bf16.msra.mxu0 0
    %735 = vmatprep.subr.bf16.mxu0 0
    %736 = vmatpush1.bf16.msra.mxu0 0
    %737 = vmatprep.subr.bf16.mxu0 0
    %738 = vmatpush1.bf16.msra.mxu0 0
    %739 = vmatprep.subr.bf16.mxu0 0
    %740 = vmatpush1.bf16.msra.mxu0 0
    %741 = vmatprep.subr.bf16.mxu0 0
    %742 = vmatpush1.bf16.msra.mxu0 0
    %743 = vmatprep.subr.bf16.mxu0 0
    %744 = vmatpush1.bf16.msra.mxu0 0
    %745 = vmatprep.mubr.bf16.mxu0 0
    %746 = vmatmul.mubr.bf16.gmra.mrb[0].mxu0 %v597
    %v747 = vpop.f32.mrb[0].mxu0
    %v748 = vadd.f32 %v626, %v747
    %v749 = vpop.f32.mrb[0].mxu0
    %v750 = vadd.f32 %v630, %v749
    %v751 = vpop.f32.mrb[0].mxu0
    %v752 = vadd.f32 %v626, %v751
    %v753 = vpop.f32.mrb[0].mxu0
    %v754 = vadd.f32 %v630, %v753
    %755 = vmatprep.mubr.bf16.mxu0 0
    %756 = vmatmul.mubr.bf16.gmra.mrb[0].mxu0 %v598
    %v757 = vpop.f32.mrb[0].mxu0
    %v758 = vadd.f32 %v626, %v757
    %v759 = vpop.f32.mrb[0].mxu0
    %v760 = vadd.f32 %v630, %v759
    %v761 = vpop.f32.mrb[0].mxu0
    %v762 = vadd.f32 %v626, %v761
    %v763 = vpop.f32.mrb[0].mxu0
    %v764 = vadd.f32 %v630, %v763
    %765 = vmatprep.mubr.bf16.mxu0 0
    %766 = vmatmul.mubr.bf16.gmra.mrb[0].mxu0 %v599
    %v767 = vpop.f32.mrb[0].mxu0
    %v768 = vadd.f32 %v626, %v767
    %v769 = vpop.f32.mrb[0].mxu0
    %v770 = vadd.f32 %v630, %v769
    %v771 = vpop.f32.mrb[0].mxu0
    %v772 = vadd.f32 %v626, %v771
    %v773 = vpop.f32.mrb[0].mxu0
    %v774 = vadd.f32 %v630, %v773
    %775 = vmatprep.mubr.bf16.mxu0 0
    %776 = vmatmul.mubr.bf16.gmra.mrb[0].mxu0 %v600
    %v777 = vpop.f32.mrb[0].mxu0
    %v778 = vadd.f32 %v626, %v777
    %v779 = vpop.f32.mrb[0].mxu0
    %v780 = vadd.f32 %v630, %v779
    %v781 = vpop.f32.mrb[0].mxu0
    %v782 = vadd.f32 %v626, %v781
    %v783 = vpop.f32.mrb[0].mxu0
    %v784 = vadd.f32 %v630, %v783
    %785 = vmatprep.mubr.bf16.mxu0 0
    %786 = vmatmul.mubr.bf16.gmra.mrb[0].mxu0 %v601
    %v787 = vpop.f32.mrb[0].mxu0
    %v788 = vadd.f32 %v626, %v787
    %v789 = vpop.f32.mrb[0].mxu0
    %v790 = vadd.f32 %v630, %v789
    %v791 = vpop.f32.mrb[0].mxu0
    %v792 = vadd.f32 %v626, %v791
    %v793 = vpop.f32.mrb[0].mxu0
    %v794 = vadd.f32 %v630, %v793
    %795 = vmatprep.mubr.bf16.mxu0 0
    %796 = vmatmul.mubr.bf16.gmra.mrb[0].mxu0 %v602
    %v797 = vpop.f32.mrb[0].mxu0
    %v798 = vadd.f32 %v626, %v797
    %v799 = vpop.f32.mrb[0].mxu0
    %v800 = vadd.f32 %v630, %v799
    %v801 = vpop.f32.mrb[0].mxu0
    %v802 = vadd.f32 %v626, %v801
    %v803 = vpop.f32.mrb[0].mxu0
    %v804 = vadd.f32 %v630, %v803
    %805 = vmatprep.mubr.bf16.mxu0 0
    %806 = vmatmul.mubr.bf16.gmra.mrb[0].mxu0 %v603
    %v807 = vpop.f32.mrb[0].mxu0
    %v808 = vadd.f32 %v626, %v807
    %v809 = vpop.f32.mrb[0].mxu0
    %v810 = vadd.f32 %v630, %v809
    %v811 = vpop.f32.mrb[0].mxu0
    %v812 = vadd.f32 %v626, %v811
    %v813 = vpop.f32.mrb[0].mxu0
    %v814 = vadd.f32 %v630, %v813
    %815 = vmatprep.mubr.bf16.mxu0 0
    %816 = vmatmul.mubr.bf16.gmra.mrb[0].mxu0 %v604
    %v817 = vpop.f32.mrb[0].mxu0
    %v818 = vadd.f32 %v626, %v817
    %v819 = vpop.f32.mrb[0].mxu0
    %v820 = vadd.f32 %v630, %v819
    %v821 = vpop.f32.mrb[0].mxu0
    %v822 = vadd.f32 %v626, %v821
    %v823 = vpop.f32.mrb[0].mxu0
    %v824 = vadd.f32 %v630, %v823
    %825 = vdwg.mxu0
    %826 = vst [vmem:[#allocation2] sm:$0xff] %v748
    %827 = vst [vmem:[#allocation2 + $0x8] sm:$0xff] %v750
    %828 = vst [vmem:[#allocation2 + $0x10] sm:$0xff] %v752
    %829 = vst [vmem:[#allocation2 + $0x18] sm:$0xff] %v754
    %830 = vst [vmem:[#allocation2 + $0x20] sm:$0xff] %v758
    %831 = vst [vmem:[#allocation2 + $0x28] sm:$0xff] %v760
    %832 = vst [vmem:[#allocation2 + $0x30] sm:$0xff] %v762
    %833 = vst [vmem:[#allocation2 + $0x38] sm:$0xff] %v764
    %834 = vst [vmem:[#allocation2 + $0x40] sm:$0xff] %v768
    %835 = vst [vmem:[#allocation2 + $0x48] sm:$0xff] %v770
    %836 = vst [vmem:[#allocation2 + $0x50] sm:$0xff] %v772
    %837 = vst [vmem:[#allocation2 + $0x58] sm:$0xff] %v774
    %838 = vst [vmem:[#allocation2 + $0x60] sm:$0xff] %v778
    %839 = vst [vmem:[#allocation2 + $0x68] sm:$0xff] %v780
    %840 = vst [vmem:[#allocation2 + $0x70] sm:$0xff] %v782
    %841 = vst [vmem:[#allocation2 + $0x78] sm:$0xff] %v784
    %842 = vst [vmem:[#allocation2 + $0x80] sm:$0xff] %v788
    %843 = vst [vmem:[#allocation2 + $0x88] sm:$0xff] %v790
    %844 = vst [vmem:[#allocation2 + $0x90] sm:$0xff] %v792
    %845 = vst [vmem:[#allocation2 + $0x98] sm:$0xff] %v794
    %846 = vst [vmem:[#allocation2 + $0xa0] sm:$0xff] %v798
    %847 = vst [vmem:[#allocation2 + $0xa8] sm:$0xff] %v800
    %848 = vst [vmem:[#allocation2 + $0xb0] sm:$0xff] %v802
    %849 = vst [vmem:[#allocation2 + $0xb8] sm:$0xff] %v804
    %850 = vst [vmem:[#allocation2 + $0xc0] sm:$0xff] %v808
    %851 = vst [vmem:[#allocation2 + $0xc8] sm:$0xff] %v810
    %852 = vst [vmem:[#allocation2 + $0xd0] sm:$0xff] %v812
    %853 = vst [vmem:[#allocation2 + $0xd8] sm:$0xff] %v814
    %854 = vst [vmem:[#allocation2 + $0xe0] sm:$0xff] %v818
    %855 = vst [vmem:[#allocation2 + $0xe8] sm:$0xff] %v820
    %856 = vst [vmem:[#allocation2 + $0xf0] sm:$0xff] %v822
    %857 = vst [vmem:[#allocation2 + $0xf8] sm:$0xff] %v824
    // Predicated region
    $region30: #{_lambda_.5} parent=1 // pred_check
      _
    $region31: #{_lambda_.5} parent=1 // pred_check_branch
      %859 = sbr.rel (0) target = $region33
    $region32: #{_lambda_.5} parent=1 // pred_region
      %s861 = ssub.s32 4096, 4096
      %862 = vsyncadd [#allocation3], %s861
      %s863 = sshll.u32 [#allocation2], 4
      %s864 = int_to_ptr.vmem [resolvable:$true] %s863
      %869 = dma.vmem_to_hbm [thread:$0]  %s864, 4096, %s7, [#allocation3], 256, 256, 16
    $region33: #{_lambda_.5} parent=1 // pred_fallthru
      _
    // Predicated region
    $region34: #{_lambda_.5} parent=1 // pred_check
      _
    $region35: #{_lambda_.5} parent=1 // pred_check_branch
      %871 = sbr.rel (0) target = $region37
    $region36: #{_lambda_.5} parent=1 // pred_region
      %872 = dma.done [#allocation3], 4096
    $region37: #{_lambda_.5} parent=1 // pred_fallthru
      _
    %873 = vsyncpa [#allocation3], 1

</llo_original>
